<compile_context>
chip_gen: v6e
topology: v6e:2x2x1
jax: 0.10.0
libtpu: 0.0.40
codegen_flags: <defaults>
</compile_context>

<pallas_src>
import functools

import jax
import jax.numpy as jnp
from jax.experimental import pallas as pl
from jax.experimental.pallas import tpu as pltpu


_PARALLEL_1D = pltpu.CompilerParams(dimension_semantics=("parallel",))


# ----------------------------------------------------------------------------
# Pallas kernels
# ----------------------------------------------------------------------------

def embed_posenc_ln_kernel(dec_ref, pos_ref, g_ref, b_ref, o_ref, *, emb_scale):
    # x = LayerNorm(dropout(emb * scale + pos_table)), dropout = identity.
    x = dec_ref[0]
    if emb_scale != 1.0:
        x = x * emb_scale
    x = x + pos_ref[...]
    mu = jnp.mean(x, axis=-1, keepdims=True)
    var = jnp.mean((x - mu) ** 2, axis=-1, keepdims=True)
    o_ref[0] = (x - mu) * jax.lax.rsqrt(var + 1e-6) * g_ref[...] + b_ref[...]


def decoder_layer_kernel(
        x_ref, enc_ref, slf_mask_ref, src_mask_ref,
        s_wq_ref, s_wk_ref, s_wv_ref, s_fc_ref, s_g_ref, s_b_ref,
        c_wq_ref, c_wk_ref, c_wv_ref, c_fc_ref, c_g_ref, c_b_ref,
        w1_ref, b1_ref, w2_ref, b2_ref, f_g_ref, f_b_ref,
        o_ref, *, n_head, d_k, d_v):
    """Fully fused decoder layer for one batch element:
       self-attn -> +res -> LN -> cross-attn -> +res -> LN -> FFN -> +res -> LN
    """
    x = x_ref[0]                 # (T, D)  f32
    enc = enc_ref[0]             # (S, D)  f32
    slf_m = slf_mask_ref[0]      # (T, T)  f32 (1 keep, 0 masked)
    src_m = src_mask_ref[0]      # (1, S)  f32, broadcasts over T in-kernel

    def layernorm(y, g_ref, b_ref):
        mu = jnp.mean(y, axis=-1, keepdims=True)
        var = jnp.mean((y - mu) ** 2, axis=-1, keepdims=True)
        return (y - mu) * jax.lax.rsqrt(var + 1e-6) * g_ref[...] + b_ref[...]

    def mha(q_in, kv_in, mask, wq_ref, wk_ref, wv_ref, fc_ref, g_ref, b_ref):
        scale = 1.0 / (d_k ** 0.5)
        q_bf = q_in.astype(jnp.bfloat16)
        kv_bf = kv_in.astype(jnp.bfloat16)
        y = q_in                                   # residual = pre-proj input
        # Head sits on a leading (non-lane) axis of the weight refs, so
        # per-head indexing below is free (no lane slicing).
        # TODO(synk): switch to lax.fori_loop(..., unroll=True) or a grid axis
        # over H once n_head grows beyond ~4 (bounds vreg live ranges).
        for h in range(n_head):
            qh = jnp.dot(q_bf, wq_ref[h],
                         preferred_element_type=jnp.float32) * scale   # (Tq,dk)
            kh = jnp.dot(kv_bf, wk_ref[h],
                         preferred_element_type=jnp.float32)           # (Tk,dk)
            vh = jnp.dot(kv_bf, wv_ref[h],
                         preferred_element_type=jnp.float32)           # (Tk,dv)
            s = jax.lax.dot_general(
                qh.astype(jnp.bfloat16), kh.astype(jnp.bfloat16),
                (((1,), (1,)), ((), ())),
                preferred_element_type=jnp.float32)                    # (Tq,Tk)
            s = jnp.where(mask == 0.0, -1e9, s)
            s = s - jnp.max(s, axis=-1, keepdims=True)
            e = jnp.exp(s)
            p = e / jnp.sum(e, axis=-1, keepdims=True)                 # exact
            ctx = jnp.dot(p.astype(jnp.bfloat16), vh.astype(jnp.bfloat16),
                          preferred_element_type=jnp.float32)          # (Tq,dv)
            # output projection accumulated per head: sum_h ctx_h @ fc_h
            y = y + jnp.dot(ctx.astype(jnp.bfloat16), fc_ref[h],
                            preferred_element_type=jnp.float32)        # (Tq,D)
        return layernorm(y, g_ref, b_ref)

    # --- self attention ------------------------------------------------------
    # TODO(synk): for long Tk, block K/V over a Tk grid axis with online
    # softmax instead of full (Tq,Tk) scores per batch element.
    x1 = mha(x, x, slf_m,
             s_wq_ref, s_wk_ref, s_wv_ref, s_fc_ref, s_g_ref, s_b_ref)

    # --- encoder-decoder attention -------------------------------------------
    x2 = mha(x1, enc, src_m,
             c_wq_ref, c_wk_ref, c_wv_ref, c_fc_ref, c_g_ref, c_b_ref)

    # --- position-wise FFN ----------------------------------------------------
    # TODO(synk): for realistic d_inner, add a reduction grid axis over d_inner
    # with an f32 VMEM accumulator so resident weights fit v7x's 64 MiB VMEM.
    h1 = jnp.dot(x2.astype(jnp.bfloat16), w1_ref[...],
                 preferred_element_type=jnp.float32) + b1_ref[...]
    h1 = jnp.maximum(h1, 0.0)
    y = jnp.dot(h1.astype(jnp.bfloat16), w2_ref[...],
                preferred_element_type=jnp.float32) + b2_ref[...]
    o_ref[0] = layernorm(y + x2, f_g_ref, f_b_ref)


# ----------------------------------------------------------------------------
# Pallas-call wrappers
# ----------------------------------------------------------------------------

def _b3(b):  # per-batch 3-D block
    return (b, 0, 0)


def _c3(b):  # resident 3-D block
    return (0, 0, 0)


def _c2(b):  # resident 2-D block
    return (0, 0)


def embed_posenc_ln(dec, pos, gamma, beta, emb_scale):
    B, T, D = dec.shape
    kernel = functools.partial(embed_posenc_ln_kernel, emb_scale=emb_scale)
    return pl.pallas_call(
        kernel,
        out_shape=jax.ShapeDtypeStruct((B, T, D), jnp.float32),
        grid=(B,),
        in_specs=[pl.BlockSpec((1, T, D), _b3),
                  pl.BlockSpec((T, D), _c2),
                  pl.BlockSpec((1, D), _c2),
                  pl.BlockSpec((1, D), _c2)],
        out_specs=pl.BlockSpec((1, T, D), _b3),
        compiler_params=_PARALLEL_1D,
    )(dec, pos, gamma, beta)


def decoder_layer(x, enc, slf_mask, src_mask, lp, *, n_head, d_k, d_v):
    # x:(B,T,D) enc:(B,S,D) slf_mask:(B,T,T) src_mask:(B,1,S)
    B, T, D = x.shape
    S = enc.shape[1]
    d_inner = lp["ffn_w1"].shape[1]
    kernel = functools.partial(decoder_layer_kernel,
                               n_head=n_head, d_k=d_k, d_v=d_v)

    def attn_weight_specs():
        return [pl.BlockSpec((n_head, D, d_k), _c3),   # wq
                pl.BlockSpec((n_head, D, d_k), _c3),   # wk
                pl.BlockSpec((n_head, D, d_v), _c3),   # wv
                pl.BlockSpec((n_head, d_v, D), _c3),   # fc
                pl.BlockSpec((1, D), _c2),             # ln gamma
                pl.BlockSpec((1, D), _c2)]             # ln beta

    in_specs = ([pl.BlockSpec((1, T, D), _b3),         # x
                 pl.BlockSpec((1, S, D), _b3),         # enc_output
                 pl.BlockSpec((1, T, T), _b3),         # self-attn mask
                 pl.BlockSpec((1, 1, S), _b3)]         # cross-attn mask
                + attn_weight_specs()                  # self-attn weights
                + attn_weight_specs()                  # cross-attn weights
                + [pl.BlockSpec((D, d_inner), _c2),    # ffn w1
                   pl.BlockSpec((1, d_inner), _c2),    # ffn b1
                   pl.BlockSpec((d_inner, D), _c2),    # ffn w2
                   pl.BlockSpec((1, D), _c2),          # ffn b2
                   pl.BlockSpec((1, D), _c2),          # ffn ln gamma
                   pl.BlockSpec((1, D), _c2)])         # ffn ln beta

    return pl.pallas_call(
        kernel,
        out_shape=jax.ShapeDtypeStruct((B, T, D), jnp.float32),
        grid=(B,),
        in_specs=in_specs,
        out_specs=pl.BlockSpec((1, T, D), _b3),
        compiler_params=_PARALLEL_1D,
    )(x, enc, slf_mask, src_mask,
      lp["slf_wq"], lp["slf_wk"], lp["slf_wv"], lp["slf_fc"],
      lp["slf_g"], lp["slf_b"],
      lp["enc_wq"], lp["enc_wk"], lp["enc_wv"], lp["enc_fc"],
      lp["enc_g"], lp["enc_b"],
      lp["ffn_w1"], lp["ffn_b1"], lp["ffn_w2"], lp["ffn_b2"],
      lp["ffn_g"], lp["ffn_b"])


# ----------------------------------------------------------------------------
# Decoder forward (glue in plain JAX, compute in Pallas)
# ----------------------------------------------------------------------------

def decoder_forward(params, cfg, trg_seq, trg_mask, enc_output, src_mask):
    B, T = trg_seq.shape
    D = cfg["d_model"]
    H, d_k, d_v = cfg["n_head"], cfg["d_k"], cfg["d_v"]

    # TODO(synk): data-dependent embedding gather stays outside Pallas
    # (not expressible with rectangular BlockSpec tiles).
    dec = params["emb"][trg_seq]                              # (B, T, D) f32
    emb_scale = float(D) ** 0.5 if cfg["scale_emb"] else 1.0

    # embedding scale + positional encoding + (identity dropout) + LayerNorm
    x = embed_posenc_ln(dec, params["pos_table"][:T],
                        params["ln_g"], params["ln_b"], emb_scale)

    slf_mask = trg_mask.astype(jnp.float32)                   # (B, T, T)
    src_m = src_mask.astype(jnp.float32)                      # (B, 1, S)

    for lp in params["layers"]:
        x = decoder_layer(x, enc_output, slf_mask, src_m, lp,
                          n_head=H, d_k=d_k, d_v=d_v)
    return (x,)


# ----------------------------------------------------------------------------
# Deterministic parameter construction
# ----------------------------------------------------------------------------

def sinusoid_table(n_position, d_hid):
    pos = jnp.arange(n_position, dtype=jnp.float32)[:, None]
    i = jnp.arange(d_hid, dtype=jnp.float32)[None, :]
    angle = pos / jnp.power(10000.0, 2.0 * jnp.floor(i / 2.0) / d_hid)
    return jnp.where((jnp.arange(d_hid) % 2 == 0)[None, :],
                     jnp.sin(angle), jnp.cos(angle)).astype(jnp.float32)


def init_params(key, cfg):
    D, H = cfg["d_model"], cfg["n_head"]
    d_k, d_v, d_inner = cfg["d_k"], cfg["d_v"], cfg["d_inner"]
    V, pad = cfg["n_trg_vocab"], cfg["pad_idx"]
    wdt = jnp.bfloat16       # matmul weights stored in bf16 (MXU-native)

    def nrm(k, shape, scale=0.05):
        return scale * jax.random.normal(k, shape, dtype=jnp.float32)

    keys = jax.random.split(key, 2 + cfg["n_layers"])
    emb = nrm(keys[0], (V, D)).at[pad].set(0.0)               # padding_idx row

    params = {
        "emb": emb,
        "pos_table": sinusoid_table(cfg["n_position"], D),
        "ln_g": jnp.ones((1, D), jnp.float32),
        "ln_b": jnp.zeros((1, D), jnp.float32),
        "layers": [],
    }
    for l in range(cfg["n_layers"]):
        lk = jax.random.split(keys[2 + l], 10)

        def attn_params(ks, prefix):
            # head-leading layouts: per-head indexing inside the kernel is a
            # free leading-axis slice, not a 16-wide lane slice.
            return {
                f"{prefix}_wq": nrm(ks[0], (H, D, d_k)).astype(wdt),
                f"{prefix}_wk": nrm(ks[1], (H, D, d_k)).astype(wdt),
                f"{prefix}_wv": nrm(ks[2], (H, D, d_v)).astype(wdt),
                f"{prefix}_fc": nrm(ks[3], (H, d_v, D)).astype(wdt),
                f"{prefix}_g": jnp.ones((1, D), jnp.float32),
                f"{prefix}_b": jnp.zeros((1, D), jnp.float32),
            }

        layer = {}
        layer.update(attn_params(lk[0:4], "slf"))
        layer.update(attn_params(lk[4:8], "enc"))
        layer.update({
            "ffn_w1": nrm(lk[8], (D, d_inner)).astype(wdt),
            "ffn_b1": jnp.zeros((1, d_inner), jnp.float32),
            "ffn_w2": nrm(lk[9], (d_inner, D)).astype(wdt),
            "ffn_b2": jnp.zeros((1, D), jnp.float32),
            "ffn_g": jnp.ones((1, D), jnp.float32),
            "ffn_b": jnp.zeros((1, D), jnp.float32),
        })
        params["layers"].append(layer)
    return params


# ----------------------------------------------------------------------------
# Main
# ----------------------------------------------------------------------------

if __name__ == "__main__":
    cfg = dict(n_trg_vocab=50, d_word_vec=32, n_layers=2, n_head=2,
               d_k=16, d_v=16, d_model=32, d_inner=64, pad_idx=0,
               n_position=200, scale_emb=False)

    B, T, S = 2, 8, 8
    key = jax.random.PRNGKey(0)
    k_par, k_trg, k_enc = jax.random.split(key, 3)

    params = init_params(k_par, cfg)

    trg_seq = jax.random.randint(k_trg, (B, T), 1, cfg["n_trg_vocab"])
    trg_seq = trg_seq.at[1, -1].set(cfg["pad_idx"])           # one padded pos
    enc_output = 0.05 * jax.random.normal(k_enc, (B, S, cfg["d_model"]),
                                          dtype=jnp.float32)

    # trg_mask = pad mask & subsequent (causal) mask  -> (B, T, T)
    pad_mask = (trg_seq != cfg["pad_idx"])[:, None, :]        # (B, 1, T)
    causal = jnp.tril(jnp.ones((T, T), dtype=bool))[None]     # (1, T, T)
    trg_mask = (pad_mask & causal).astype(jnp.float32)        # (B, T, T)
    src_mask = jnp.ones((B, 1, S), dtype=jnp.float32)         # no src padding

    fwd = jax.jit(lambda prm, ts, tm, eo, sm:
                  decoder_forward(prm, cfg, ts, tm, eo, sm))
    out, = fwd(params, trg_seq, trg_mask, enc_output, src_mask)
    jax.block_until_ready(out)
    assert out.shape == (B, T, cfg["d_model"])
    assert jnp.all(jnp.isfinite(out))
    print("KERNEL_OK")
</pallas_src>

<mosaic_0001>
module attributes {stable_mosaic.version = 11 : i64} {
  func.func @embed_posenc_ln_kernel(%arg0: i32, %arg1: memref<1x8x32xf32, #tpu.memory_space<vmem>>, %arg2: memref<8x32xf32, #tpu.memory_space<vmem>>, %arg3: memref<1x32xf32, #tpu.memory_space<vmem>>, %arg4: memref<1x32xf32, #tpu.memory_space<vmem>>, %arg5: memref<1x8x32xf32, #tpu.memory_space<vmem>>) attributes {dimension_semantics = [#tpu.dimension_semantics<parallel>], iteration_bounds = array<i64: 2>, scalar_prefetch = 0 : i64, scratch_operands = 0 : i64, tpu.core_type = #tpu.core_type<tc>, window_params = [{transform_indices = @transform_0, window_bounds = array<i64: 1, 8, 32>}, {pipeline_mode = #tpu.pipeline_mode<synchronous>, transform_indices = @transform_1, window_bounds = array<i64: 8, 32>}, {pipeline_mode = #tpu.pipeline_mode<synchronous>, transform_indices = @transform_2, window_bounds = array<i64: 1, 32>}, {pipeline_mode = #tpu.pipeline_mode<synchronous>, transform_indices = @transform_3, window_bounds = array<i64: 1, 32>}, {transform_indices = @transform_4, window_bounds = array<i64: 1, 8, 32>}]} {
    %c0 = arith.constant 0 : index
    %c0_0 = arith.constant 0 : index
    %c0_1 = arith.constant 0 : index
    %0 = vector.load %arg1[%c0, %c0_0, %c0_1] : memref<1x8x32xf32, #tpu.memory_space<vmem>>, vector<1x8x32xf32>
    %1 = vector.shape_cast %0 : vector<1x8x32xf32> to vector<8x32xf32>
    %c0_2 = arith.constant 0 : index
    %c0_3 = arith.constant 0 : index
    %2 = vector.load %arg2[%c0_2, %c0_3] : memref<8x32xf32, #tpu.memory_space<vmem>>, vector<8x32xf32>
    %3 = arith.addf %1, %2 : vector<8x32xf32>
    %cst = arith.constant dense<0.000000e+00> : vector<8xf32>
    %4 = vector.multi_reduction <add>, %3, %cst [1] : vector<8x32xf32> to vector<8xf32>
    %5 = vector.shape_cast %4 : vector<8xf32> to vector<8x1xf32>
    %cst_4 = arith.constant 3.200000e+01 : f32
    %6 = vector.broadcast %cst_4 : f32 to vector<8x1xf32>
    %7 = arith.divf %5, %6 : vector<8x1xf32>
    %8 = vector.broadcast %7 : vector<8x1xf32> to vector<8x32xf32>
    %9 = arith.subf %3, %8 : vector<8x32xf32>
    %10 = arith.mulf %9, %9 : vector<8x32xf32>
    %cst_5 = arith.constant dense<0.000000e+00> : vector<8xf32>
    %11 = vector.multi_reduction <add>, %10, %cst_5 [1] : vector<8x32xf32> to vector<8xf32>
    %12 = vector.shape_cast %11 : vector<8xf32> to vector<8x1xf32>
    %cst_6 = arith.constant 3.200000e+01 : f32
    %13 = vector.broadcast %cst_6 : f32 to vector<8x1xf32>
    %14 = arith.divf %12, %13 : vector<8x1xf32>
    %15 = vector.broadcast %7 : vector<8x1xf32> to vector<8x32xf32>
    %16 = arith.subf %3, %15 : vector<8x32xf32>
    %cst_7 = arith.constant 9.99999997E-7 : f32
    %17 = vector.broadcast %cst_7 : f32 to vector<8x1xf32>
    %18 = arith.addf %14, %17 : vector<8x1xf32>
    %19 = math.rsqrt %18 : vector<8x1xf32>
    %20 = vector.broadcast %19 : vector<8x1xf32> to vector<8x32xf32>
    %21 = arith.mulf %16, %20 : vector<8x32xf32>
    %c0_8 = arith.constant 0 : index
    %c0_9 = arith.constant 0 : index
    %22 = vector.load %arg3[%c0_8, %c0_9] : memref<1x32xf32, #tpu.memory_space<vmem>>, vector<1x32xf32>
    %23 = vector.broadcast %22 : vector<1x32xf32> to vector<8x32xf32>
    %24 = arith.mulf %21, %23 : vector<8x32xf32>
    %c0_10 = arith.constant 0 : index
    %c0_11 = arith.constant 0 : index
    %25 = vector.load %arg4[%c0_10, %c0_11] : memref<1x32xf32, #tpu.memory_space<vmem>>, vector<1x32xf32>
    %26 = vector.broadcast %25 : vector<1x32xf32> to vector<8x32xf32>
    %27 = arith.addf %24, %26 : vector<8x32xf32>
    %c0_12 = arith.constant 0 : index
    %c0_13 = arith.constant 0 : index
    %c0_14 = arith.constant 0 : index
    %28 = vector.load %arg5[%c0_12, %c0_13, %c0_14] : memref<1x8x32xf32, #tpu.memory_space<vmem>>, vector<1x8x32xf32>
    %29 = vector.shape_cast %28 : vector<1x8x32xf32> to vector<8x32xf32>
    %30 = vector.shape_cast %27 : vector<8x32xf32> to vector<1x8x32xf32>
    tpu.vector_store %arg5[%c0_12, %c0_13, %c0_14], %30 {strides = array<i32>} : memref<1x8x32xf32, #tpu.memory_space<vmem>>, vector<1x8x32xf32>,
    return
  }
  func.func @transform_0(%arg0: i32) -> (i32, i32, i32) {
    %c0_i32 = arith.constant 0 : i32
    %c0_i32_0 = arith.constant 0 : i32
    %c0_i32_1 = arith.constant 0 : i32
    return %arg0, %c0_i32, %c0_i32_0 : i32, i32, i32
  }
  func.func @transform_1(%arg0: i32) -> (i32, i32) {
    %c0_i32 = arith.constant 0 : i32
    %c0_i32_0 = arith.constant 0 : i32
    %c0_i32_1 = arith.constant 0 : i32
    return %c0_i32, %c0_i32_0 : i32, i32
  }
  func.func @transform_2(%arg0: i32) -> (i32, i32) {
    %c0_i32 = arith.constant 0 : i32
    %c0_i32_0 = arith.constant 0 : i32
    %c0_i32_1 = arith.constant 0 : i32
    return %c0_i32, %c0_i32_0 : i32, i32
  }
  func.func @transform_3(%arg0: i32) -> (i32, i32) {
    %c0_i32 = arith.constant 0 : i32
    %c0_i32_0 = arith.constant 0 : i32
    %c0_i32_1 = arith.constant 0 : i32
    return %c0_i32, %c0_i32_0 : i32, i32
  }
  func.func @transform_4(%arg0: i32) -> (i32, i32, i32) {
    %c0_i32 = arith.constant 0 : i32
    %c0_i32_0 = arith.constant 0 : i32
    %c0_i32_1 = arith.constant 0 : i32
    return %arg0, %c0_i32, %c0_i32_0 : i32, i32, i32
  }
}

module attributes {stable_mosaic.version = 11 : i64} {
  func.func @decoder_layer_kernel(%arg0: i32, %arg1: memref<1x8x32xf32, #tpu.memory_space<vmem>>, %arg2: memref<1x8x32xf32, #tpu.memory_space<vmem>>, %arg3: memref<1x8x8xf32, #tpu.memory_space<vmem>>, %arg4: memref<1x1x8xf32, #tpu.memory_space<vmem>>, %arg5: memref<2x32x16xbf16, #tpu.memory_space<vmem>>, %arg6: memref<2x32x16xbf16, #tpu.memory_space<vmem>>, %arg7: memref<2x32x16xbf16, #tpu.memory_space<vmem>>, %arg8: memref<2x16x32xbf16, #tpu.memory_space<vmem>>, %arg9: memref<1x32xf32, #tpu.memory_space<vmem>>, %arg10: memref<1x32xf32, #tpu.memory_space<vmem>>, %arg11: memref<2x32x16xbf16, #tpu.memory_space<vmem>>, %arg12: memref<2x32x16xbf16, #tpu.memory_space<vmem>>, %arg13: memref<2x32x16xbf16, #tpu.memory_space<vmem>>, %arg14: memref<2x16x32xbf16, #tpu.memory_space<vmem>>, %arg15: memref<1x32xf32, #tpu.memory_space<vmem>>, %arg16: memref<1x32xf32, #tpu.memory_space<vmem>>, %arg17: memref<32x64xbf16, #tpu.memory_space<vmem>>, %arg18: memref<1x64xf32, #tpu.memory_space<vmem>>, %arg19: memref<64x32xbf16, #tpu.memory_space<vmem>>, %arg20: memref<1x32xf32, #tpu.memory_space<vmem>>, %arg21: memref<1x32xf32, #tpu.memory_space<vmem>>, %arg22: memref<1x32xf32, #tpu.memory_space<vmem>>, %arg23: memref<1x8x32xf32, #tpu.memory_space<vmem>>) attributes {dimension_semantics = [#tpu.dimension_semantics<parallel>], iteration_bounds = array<i64: 2>, scalar_prefetch = 0 : i64, scratch_operands = 0 : i64, tpu.core_type = #tpu.core_type<tc>, window_params = [{transform_indices = @transform_0, window_bounds = array<i64: 1, 8, 32>}, {transform_indices = @transform_1, window_bounds = array<i64: 1, 8, 32>}, {transform_indices = @transform_2, window_bounds = array<i64: 1, 8, 8>}, {transform_indices = @transform_3, window_bounds = array<i64: 1, 1, 8>}, {pipeline_mode = #tpu.pipeline_mode<synchronous>, transform_indices = @transform_4, window_bounds = array<i64: 2, 32, 16>}, {pipeline_mode = #tpu.pipeline_mode<synchronous>, transform_indices = @transform_5, window_bounds = array<i64: 2, 32, 16>}, {pipeline_mode = #tpu.pipeline_mode<synchronous>, transform_indices = @transform_6, window_bounds = array<i64: 2, 32, 16>}, {pipeline_mode = #tpu.pipeline_mode<synchronous>, transform_indices = @transform_7, window_bounds = array<i64: 2, 16, 32>}, {pipeline_mode = #tpu.pipeline_mode<synchronous>, transform_indices = @transform_8, window_bounds = array<i64: 1, 32>}, {pipeline_mode = #tpu.pipeline_mode<synchronous>, transform_indices = @transform_9, window_bounds = array<i64: 1, 32>}, {pipeline_mode = #tpu.pipeline_mode<synchronous>, transform_indices = @transform_10, window_bounds = array<i64: 2, 32, 16>}, {pipeline_mode = #tpu.pipeline_mode<synchronous>, transform_indices = @transform_11, window_bounds = array<i64: 2, 32, 16>}, {pipeline_mode = #tpu.pipeline_mode<synchronous>, transform_indices = @transform_12, window_bounds = array<i64: 2, 32, 16>}, {pipeline_mode = #tpu.pipeline_mode<synchronous>, transform_indices = @transform_13, window_bounds = array<i64: 2, 16, 32>}, {pipeline_mode = #tpu.pipeline_mode<synchronous>, transform_indices = @transform_14, window_bounds = array<i64: 1, 32>}, {pipeline_mode = #tpu.pipeline_mode<synchronous>, transform_indices = @transform_15, window_bounds = array<i64: 1, 32>}, {pipeline_mode = #tpu.pipeline_mode<synchronous>, transform_indices = @transform_16, window_bounds = array<i64: 32, 64>}, {pipeline_mode = #tpu.pipeline_mode<synchronous>, transform_indices = @transform_17, window_bounds = array<i64: 1, 64>}, {pipeline_mode = #tpu.pipeline_mode<synchronous>, transform_indices = @transform_18, window_bounds = array<i64: 64, 32>}, {pipeline_mode = #tpu.pipeline_mode<synchronous>, transform_indices = @transform_19, window_bounds = array<i64: 1, 32>}, {pipeline_mode = #tpu.pipeline_mode<synchronous>, transform_indices = @transform_20, window_bounds = array<i64: 1, 32>}, {pipeline_mode = #tpu.pipeline_mode<synchronous>, transform_indices = @transform_21, window_bounds = array<i64: 1, 32>}, {transform_indices = @transform_22, window_bounds = array<i64: 1, 8, 32>}]} {
    %c0 = arith.constant 0 : index
    %c0_0 = arith.constant 0 : index
    %c0_1 = arith.constant 0 : index
    %0 = vector.load %arg1[%c0, %c0_0, %c0_1] : memref<1x8x32xf32, #tpu.memory_space<vmem>>, vector<1x8x32xf32>
    %1 = vector.shape_cast %0 : vector<1x8x32xf32> to vector<8x32xf32>
    %c0_2 = arith.constant 0 : index
    %c0_3 = arith.constant 0 : index
    %c0_4 = arith.constant 0 : index
    %2 = vector.load %arg2[%c0_2, %c0_3, %c0_4] : memref<1x8x32xf32, #tpu.memory_space<vmem>>, vector<1x8x32xf32>
    %3 = vector.shape_cast %2 : vector<1x8x32xf32> to vector<8x32xf32>
    %c0_5 = arith.constant 0 : index
    %c0_6 = arith.constant 0 : index
    %c0_7 = arith.constant 0 : index
    %4 = vector.load %arg3[%c0_5, %c0_6, %c0_7] : memref<1x8x8xf32, #tpu.memory_space<vmem>>, vector<1x8x8xf32>
    %5 = vector.shape_cast %4 : vector<1x8x8xf32> to vector<8x8xf32>
    %c0_8 = arith.constant 0 : index
    %c0_9 = arith.constant 0 : index
    %c0_10 = arith.constant 0 : index
    %6 = vector.load %arg4[%c0_8, %c0_9, %c0_10] : memref<1x1x8xf32, #tpu.memory_space<vmem>>, vector<1x1x8xf32>
    %7 = vector.shape_cast %6 : vector<1x1x8xf32> to vector<1x8xf32>
    %8 = arith.truncf %1 : vector<8x32xf32> to vector<8x32xbf16>
    %9 = arith.truncf %1 : vector<8x32xf32> to vector<8x32xbf16>
    %c0_11 = arith.constant 0 : index
    %c0_12 = arith.constant 0 : index
    %c0_13 = arith.constant 0 : index
    %10 = vector.load %arg5[%c0_11, %c0_12, %c0_13] : memref<2x32x16xbf16, #tpu.memory_space<vmem>>, vector<1x32x16xbf16>
    %11 = vector.shape_cast %10 : vector<1x32x16xbf16> to vector<32x16xbf16>
    %cst = arith.constant dense<0.000000e+00> : vector<8x16xf32>
    %12 = tpu.matmul %8, %11, %cst {dimension_numbers = #tpu.dot_dimension_numbers<[1], [0], [0], [1], [0, 0, 1, 1], [], []>} : vector<8x32xbf16>, vector<32x16xbf16>, vector<8x16xf32> -> vector<8x16xf32>
    %cst_14 = arith.constant 2.500000e-01 : f32
    %13 = vector.broadcast %cst_14 : f32 to vector<8x16xf32>
    %14 = arith.mulf %12, %13 : vector<8x16xf32>
    %c0_15 = arith.constant 0 : index
    %c0_16 = arith.constant 0 : index
    %c0_17 = arith.constant 0 : index
    %15 = vector.load %arg6[%c0_15, %c0_16, %c0_17] : memref<2x32x16xbf16, #tpu.memory_space<vmem>>, vector<1x32x16xbf16>
    %16 = vector.shape_cast %15 : vector<1x32x16xbf16> to vector<32x16xbf16>
    %cst_18 = arith.constant dense<0.000000e+00> : vector<8x16xf32>
    %17 = tpu.matmul %9, %16, %cst_18 {dimension_numbers = #tpu.dot_dimension_numbers<[1], [0], [0], [1], [0, 0, 1, 1], [], []>} : vector<8x32xbf16>, vector<32x16xbf16>, vector<8x16xf32> -> vector<8x16xf32>
    %c0_19 = arith.constant 0 : index
    %c0_20 = arith.constant 0 : index
    %c0_21 = arith.constant 0 : index
    %18 = vector.load %arg7[%c0_19, %c0_20, %c0_21] : memref<2x32x16xbf16, #tpu.memory_space<vmem>>, vector<1x32x16xbf16>
    %19 = vector.shape_cast %18 : vector<1x32x16xbf16> to vector<32x16xbf16>
    %cst_22 = arith.constant dense<0.000000e+00> : vector<8x16xf32>
    %20 = tpu.matmul %9, %19, %cst_22 {dimension_numbers = #tpu.dot_dimension_numbers<[1], [0], [0], [1], [0, 0, 1, 1], [], []>} : vector<8x32xbf16>, vector<32x16xbf16>, vector<8x16xf32> -> vector<8x16xf32>
    %21 = arith.truncf %14 : vector<8x16xf32> to vector<8x16xbf16>
    %22 = arith.truncf %17 : vector<8x16xf32> to vector<8x16xbf16>
    %cst_23 = arith.constant dense<0.000000e+00> : vector<8x8xf32>
    %23 = tpu.matmul %21, %22, %cst_23 {dimension_numbers = #tpu.dot_dimension_numbers<[1], [1], [0], [0], [0, 0, 1, 0], [], []>} : vector<8x16xbf16>, vector<8x16xbf16>, vector<8x8xf32> -> vector<8x8xf32>
    %cst_24 = arith.constant 0.000000e+00 : f32
    %24 = vector.broadcast %cst_24 : f32 to vector<8x8xf32>
    %25 = arith.cmpf oeq, %5, %24 : vector<8x8xf32>
    %cst_25 = arith.constant -1.000000e+09 : f32
    %26 = vector.broadcast %cst_25 : f32 to vector<8x8xf32>
    %27 = arith.select %25, %26, %23 : vector<8x8xi1>, vector<8x8xf32>
    %cst_26 = arith.constant dense<0xFF800000> : vector<8xf32>
    %28 = vector.multi_reduction <maximumf>, %27, %cst_26 [1] : vector<8x8xf32> to vector<8xf32>
    %29 = vector.shape_cast %28 : vector<8xf32> to vector<8x1xf32>
    %30 = vector.broadcast %29 : vector<8x1xf32> to vector<8x8xf32>
    %31 = arith.subf %27, %30 : vector<8x8xf32>
    %32 = math.exp %31 : vector<8x8xf32>
    %cst_27 = arith.constant dense<0.000000e+00> : vector<8xf32>
    %33 = vector.multi_reduction <add>, %32, %cst_27 [1] : vector<8x8xf32> to vector<8xf32>
    %34 = vector.shape_cast %33 : vector<8xf32> to vector<8x1xf32>
    %35 = vector.broadcast %34 : vector<8x1xf32> to vector<8x8xf32>
    %36 = arith.divf %32, %35 : vector<8x8xf32>
    %37 = arith.truncf %36 : vector<8x8xf32> to vector<8x8xbf16>
    %38 = arith.truncf %20 : vector<8x16xf32> to vector<8x16xbf16>
    %cst_28 = arith.constant dense<0.000000e+00> : vector<8x16xf32>
    %39 = tpu.matmul %37, %38, %cst_28 {dimension_numbers = #tpu.dot_dimension_numbers<[1], [0], [0], [1], [0, 0, 1, 1], [], []>} : vector<8x8xbf16>, vector<8x16xbf16>, vector<8x16xf32> -> vector<8x16xf32>
    %40 = arith.truncf %39 : vector<8x16xf32> to vector<8x16xbf16>
    %c0_29 = arith.constant 0 : index
    %c0_30 = arith.constant 0 : index
    %c0_31 = arith.constant 0 : index
    %41 = vector.load %arg8[%c0_29, %c0_30, %c0_31] : memref<2x16x32xbf16, #tpu.memory_space<vmem>>, vector<1x16x32xbf16>
    %42 = vector.shape_cast %41 : vector<1x16x32xbf16> to vector<16x32xbf16>
    %cst_32 = arith.constant dense<0.000000e+00> : vector<8x32xf32>
    %43 = tpu.matmul %40, %42, %cst_32 {dimension_numbers = #tpu.dot_dimension_numbers<[1], [0], [0], [1], [0, 0, 1, 1], [], []>} : vector<8x16xbf16>, vector<16x32xbf16>, vector<8x32xf32> -> vector<8x32xf32>
    %44 = arith.addf %1, %43 : vector<8x32xf32>
    %c1 = arith.constant 1 : index
    %c0_33 = arith.constant 0 : index
    %c0_34 = arith.constant 0 : index
    %45 = vector.load %arg5[%c1, %c0_33, %c0_34] : memref<2x32x16xbf16, #tpu.memory_space<vmem>>, vector<1x32x16xbf16>
    %46 = vector.shape_cast %45 : vector<1x32x16xbf16> to vector<32x16xbf16>
    %cst_35 = arith.constant dense<0.000000e+00> : vector<8x16xf32>
    %47 = tpu.matmul %8, %46, %cst_35 {dimension_numbers = #tpu.dot_dimension_numbers<[1], [0], [0], [1], [0, 0, 1, 1], [], []>} : vector<8x32xbf16>, vector<32x16xbf16>, vector<8x16xf32> -> vector<8x16xf32>
    %cst_36 = arith.constant 2.500000e-01 : f32
    %48 = vector.broadcast %cst_36 : f32 to vector<8x16xf32>
    %49 = arith.mulf %47, %48 : vector<8x16xf32>
    %c1_37 = arith.constant 1 : index
    %c0_38 = arith.constant 0 : index
    %c0_39 = arith.constant 0 : index
    %50 = vector.load %arg6[%c1_37, %c0_38, %c0_39] : memref<2x32x16xbf16, #tpu.memory_space<vmem>>, vector<1x32x16xbf16>
    %51 = vector.shape_cast %50 : vector<1x32x16xbf16> to vector<32x16xbf16>
    %cst_40 = arith.constant dense<0.000000e+00> : vector<8x16xf32>
    %52 = tpu.matmul %9, %51, %cst_40 {dimension_numbers = #tpu.dot_dimension_numbers<[1], [0], [0], [1], [0, 0, 1, 1], [], []>} : vector<8x32xbf16>, vector<32x16xbf16>, vector<8x16xf32> -> vector<8x16xf32>
    %c1_41 = arith.constant 1 : index
    %c0_42 = arith.constant 0 : index
    %c0_43 = arith.constant 0 : index
    %53 = vector.load %arg7[%c1_41, %c0_42, %c0_43] : memref<2x32x16xbf16, #tpu.memory_space<vmem>>, vector<1x32x16xbf16>
    %54 = vector.shape_cast %53 : vector<1x32x16xbf16> to vector<32x16xbf16>
    %cst_44 = arith.constant dense<0.000000e+00> : vector<8x16xf32>
    %55 = tpu.matmul %9, %54, %cst_44 {dimension_numbers = #tpu.dot_dimension_numbers<[1], [0], [0], [1], [0, 0, 1, 1], [], []>} : vector<8x32xbf16>, vector<32x16xbf16>, vector<8x16xf32> -> vector<8x16xf32>
    %56 = arith.truncf %49 : vector<8x16xf32> to vector<8x16xbf16>
    %57 = arith.truncf %52 : vector<8x16xf32> to vector<8x16xbf16>
    %cst_45 = arith.constant dense<0.000000e+00> : vector<8x8xf32>
    %58 = tpu.matmul %56, %57, %cst_45 {dimension_numbers = #tpu.dot_dimension_numbers<[1], [1], [0], [0], [0, 0, 1, 0], [], []>} : vector<8x16xbf16>, vector<8x16xbf16>, vector<8x8xf32> -> vector<8x8xf32>
    %cst_46 = arith.constant 0.000000e+00 : f32
    %59 = vector.broadcast %cst_46 : f32 to vector<8x8xf32>
    %60 = arith.cmpf oeq, %5, %59 : vector<8x8xf32>
    %cst_47 = arith.constant -1.000000e+09 : f32
    %61 = vector.broadcast %cst_47 : f32 to vector<8x8xf32>
    %62 = arith.select %60, %61, %58 : vector<8x8xi1>, vector<8x8xf32>
    %cst_48 = arith.constant dense<0xFF800000> : vector<8xf32>
    %63 = vector.multi_reduction <maximumf>, %62, %cst_48 [1] : vector<8x8xf32> to vector<8xf32>
    %64 = vector.shape_cast %63 : vector<8xf32> to vector<8x1xf32>
    %65 = vector.broadcast %64 : vector<8x1xf32> to vector<8x8xf32>
    %66 = arith.subf %62, %65 : vector<8x8xf32>
    %67 = math.exp %66 : vector<8x8xf32>
    %cst_49 = arith.constant dense<0.000000e+00> : vector<8xf32>
    %68 = vector.multi_reduction <add>, %67, %cst_49 [1] : vector<8x8xf32> to vector<8xf32>
    %69 = vector.shape_cast %68 : vector<8xf32> to vector<8x1xf32>
    %70 = vector.broadcast %69 : vector<8x1xf32> to vector<8x8xf32>
    %71 = arith.divf %67, %70 : vector<8x8xf32>
    %72 = arith.truncf %71 : vector<8x8xf32> to vector<8x8xbf16>
    %73 = arith.truncf %55 : vector<8x16xf32> to vector<8x16xbf16>
    %cst_50 = arith.constant dense<0.000000e+00> : vector<8x16xf32>
    %74 = tpu.matmul %72, %73, %cst_50 {dimension_numbers = #tpu.dot_dimension_numbers<[1], [0], [0], [1], [0, 0, 1, 1], [], []>} : vector<8x8xbf16>, vector<8x16xbf16>, vector<8x16xf32> -> vector<8x16xf32>
    %75 = arith.truncf %74 : vector<8x16xf32> to vector<8x16xbf16>
    %c1_51 = arith.constant 1 : index
    %c0_52 = arith.constant 0 : index
    %c0_53 = arith.constant 0 : index
    %76 = vector.load %arg8[%c1_51, %c0_52, %c0_53] : memref<2x16x32xbf16, #tpu.memory_space<vmem>>, vector<1x16x32xbf16>
    %77 = vector.shape_cast %76 : vector<1x16x32xbf16> to vector<16x32xbf16>
    %cst_54 = arith.constant dense<0.000000e+00> : vector<8x32xf32>
    %78 = tpu.matmul %75, %77, %cst_54 {dimension_numbers = #tpu.dot_dimension_numbers<[1], [0], [0], [1], [0, 0, 1, 1], [], []>} : vector<8x16xbf16>, vector<16x32xbf16>, vector<8x32xf32> -> vector<8x32xf32>
    %79 = arith.addf %44, %78 : vector<8x32xf32>
    %cst_55 = arith.constant dense<0.000000e+00> : vector<8xf32>
    %80 = vector.multi_reduction <add>, %79, %cst_55 [1] : vector<8x32xf32> to vector<8xf32>
    %81 = vector.shape_cast %80 : vector<8xf32> to vector<8x1xf32>
    %cst_56 = arith.constant 3.200000e+01 : f32
    %82 = vector.broadcast %cst_56 : f32 to vector<8x1xf32>
    %83 = arith.divf %81, %82 : vector<8x1xf32>
    %84 = vector.broadcast %83 : vector<8x1xf32> to vector<8x32xf32>
    %85 = arith.subf %79, %84 : vector<8x32xf32>
    %86 = arith.mulf %85, %85 : vector<8x32xf32>
    %cst_57 = arith.constant dense<0.000000e+00> : vector<8xf32>
    %87 = vector.multi_reduction <add>, %86, %cst_57 [1] : vector<8x32xf32> to vector<8xf32>
    %88 = vector.shape_cast %87 : vector<8xf32> to vector<8x1xf32>
    %cst_58 = arith.constant 3.200000e+01 : f32
    %89 = vector.broadcast %cst_58 : f32 to vector<8x1xf32>
    %90 = arith.divf %88, %89 : vector<8x1xf32>
    %91 = vector.broadcast %83 : vector<8x1xf32> to vector<8x32xf32>
    %92 = arith.subf %79, %91 : vector<8x32xf32>
    %cst_59 = arith.constant 9.99999997E-7 : f32
    %93 = vector.broadcast %cst_59 : f32 to vector<8x1xf32>
    %94 = arith.addf %90, %93 : vector<8x1xf32>
    %95 = math.rsqrt %94 : vector<8x1xf32>
    %96 = vector.broadcast %95 : vector<8x1xf32> to vector<8x32xf32>
    %97 = arith.mulf %92, %96 : vector<8x32xf32>
    %c0_60 = arith.constant 0 : index
    %c0_61 = arith.constant 0 : index
    %98 = vector.load %arg9[%c0_60, %c0_61] : memref<1x32xf32, #tpu.memory_space<vmem>>, vector<1x32xf32>
    %99 = vector.broadcast %98 : vector<1x32xf32> to vector<8x32xf32>
    %100 = arith.mulf %97, %99 : vector<8x32xf32>
    %c0_62 = arith.constant 0 : index
    %c0_63 = arith.constant 0 : index
    %101 = vector.load %arg10[%c0_62, %c0_63] : memref<1x32xf32, #tpu.memory_space<vmem>>, vector<1x32xf32>
    %102 = vector.broadcast %101 : vector<1x32xf32> to vector<8x32xf32>
    %103 = arith.addf %100, %102 : vector<8x32xf32>
    %104 = arith.truncf %103 : vector<8x32xf32> to vector<8x32xbf16>
    %105 = arith.truncf %3 : vector<8x32xf32> to vector<8x32xbf16>
    %c0_64 = arith.constant 0 : index
    %c0_65 = arith.constant 0 : index
    %c0_66 = arith.constant 0 : index
    %106 = vector.load %arg11[%c0_64, %c0_65, %c0_66] : memref<2x32x16xbf16, #tpu.memory_space<vmem>>, vector<1x32x16xbf16>
    %107 = vector.shape_cast %106 : vector<1x32x16xbf16> to vector<32x16xbf16>
    %cst_67 = arith.constant dense<0.000000e+00> : vector<8x16xf32>
    %108 = tpu.matmul %104, %107, %cst_67 {dimension_numbers = #tpu.dot_dimension_numbers<[1], [0], [0], [1], [0, 0, 1, 1], [], []>} : vector<8x32xbf16>, vector<32x16xbf16>, vector<8x16xf32> -> vector<8x16xf32>
    %cst_68 = arith.constant 2.500000e-01 : f32
    %109 = vector.broadcast %cst_68 : f32 to vector<8x16xf32>
    %110 = arith.mulf %108, %109 : vector<8x16xf32>
    %c0_69 = arith.constant 0 : index
    %c0_70 = arith.constant 0 : index
    %c0_71 = arith.constant 0 : index
    %111 = vector.load %arg12[%c0_69, %c0_70, %c0_71] : memref<2x32x16xbf16, #tpu.memory_space<vmem>>, vector<1x32x16xbf16>
    %112 = vector.shape_cast %111 : vector<1x32x16xbf16> to vector<32x16xbf16>
    %cst_72 = arith.constant dense<0.000000e+00> : vector<8x16xf32>
    %113 = tpu.matmul %105, %112, %cst_72 {dimension_numbers = #tpu.dot_dimension_numbers<[1], [0], [0], [1], [0, 0, 1, 1], [], []>} : vector<8x32xbf16>, vector<32x16xbf16>, vector<8x16xf32> -> vector<8x16xf32>
    %c0_73 = arith.constant 0 : index
    %c0_74 = arith.constant 0 : index
    %c0_75 = arith.constant 0 : index
    %114 = vector.load %arg13[%c0_73, %c0_74, %c0_75] : memref<2x32x16xbf16, #tpu.memory_space<vmem>>, vector<1x32x16xbf16>
    %115 = vector.shape_cast %114 : vector<1x32x16xbf16> to vector<32x16xbf16>
    %cst_76 = arith.constant dense<0.000000e+00> : vector<8x16xf32>
    %116 = tpu.matmul %105, %115, %cst_76 {dimension_numbers = #tpu.dot_dimension_numbers<[1], [0], [0], [1], [0, 0, 1, 1], [], []>} : vector<8x32xbf16>, vector<32x16xbf16>, vector<8x16xf32> -> vector<8x16xf32>
    %117 = arith.truncf %110 : vector<8x16xf32> to vector<8x16xbf16>
    %118 = arith.truncf %113 : vector<8x16xf32> to vector<8x16xbf16>
    %cst_77 = arith.constant dense<0.000000e+00> : vector<8x8xf32>
    %119 = tpu.matmul %117, %118, %cst_77 {dimension_numbers = #tpu.dot_dimension_numbers<[1], [1], [0], [0], [0, 0, 1, 0], [], []>} : vector<8x16xbf16>, vector<8x16xbf16>, vector<8x8xf32> -> vector<8x8xf32>
    %cst_78 = arith.constant 0.000000e+00 : f32
    %120 = vector.broadcast %cst_78 : f32 to vector<1x8xf32>
    %121 = arith.cmpf oeq, %7, %120 : vector<1x8xf32>
    %cst_79 = arith.constant -1.000000e+09 : f32
    %122 = vector.shape_cast %121 : vector<1x8xi1> to vector<1x8xi1>
    %123 = vector.broadcast %122 : vector<1x8xi1> to vector<8x8xi1>
    %124 = vector.broadcast %cst_79 : f32 to vector<8x8xf32>
    %125 = arith.select %123, %124, %119 : vector<8x8xi1>, vector<8x8xf32>
    %cst_80 = arith.constant dense<0xFF800000> : vector<8xf32>
    %126 = vector.multi_reduction <maximumf>, %125, %cst_80 [1] : vector<8x8xf32> to vector<8xf32>
    %127 = vector.shape_cast %126 : vector<8xf32> to vector<8x1xf32>
    %128 = vector.broadcast %127 : vector<8x1xf32> to vector<8x8xf32>
    %129 = arith.subf %125, %128 : vector<8x8xf32>
    %130 = math.exp %129 : vector<8x8xf32>
    %cst_81 = arith.constant dense<0.000000e+00> : vector<8xf32>
    %131 = vector.multi_reduction <add>, %130, %cst_81 [1] : vector<8x8xf32> to vector<8xf32>
    %132 = vector.shape_cast %131 : vector<8xf32> to vector<8x1xf32>
    %133 = vector.broadcast %132 : vector<8x1xf32> to vector<8x8xf32>
    %134 = arith.divf %130, %133 : vector<8x8xf32>
    %135 = arith.truncf %134 : vector<8x8xf32> to vector<8x8xbf16>
    %136 = arith.truncf %116 : vector<8x16xf32> to vector<8x16xbf16>
    %cst_82 = arith.constant dense<0.000000e+00> : vector<8x16xf32>
    %137 = tpu.matmul %135, %136, %cst_82 {dimension_numbers = #tpu.dot_dimension_numbers<[1], [0], [0], [1], [0, 0, 1, 1], [], []>} : vector<8x8xbf16>, vector<8x16xbf16>, vector<8x16xf32> -> vector<8x16xf32>
    %138 = arith.truncf %137 : vector<8x16xf32> to vector<8x16xbf16>
    %c0_83 = arith.constant 0 : index
    %c0_84 = arith.constant 0 : index
    %c0_85 = arith.constant 0 : index
    %139 = vector.load %arg14[%c0_83, %c0_84, %c0_85] : memref<2x16x32xbf16, #tpu.memory_space<vmem>>, vector<1x16x32xbf16>
    %140 = vector.shape_cast %139 : vector<1x16x32xbf16> to vector<16x32xbf16>
    %cst_86 = arith.constant dense<0.000000e+00> : vector<8x32xf32>
    %141 = tpu.matmul %138, %140, %cst_86 {dimension_numbers = #tpu.dot_dimension_numbers<[1], [0], [0], [1], [0, 0, 1, 1], [], []>} : vector<8x16xbf16>, vector<16x32xbf16>, vector<8x32xf32> -> vector<8x32xf32>
    %142 = arith.addf %103, %141 : vector<8x32xf32>
    %c1_87 = arith.constant 1 : index
    %c0_88 = arith.constant 0 : index
    %c0_89 = arith.constant 0 : index
    %143 = vector.load %arg11[%c1_87, %c0_88, %c0_89] : memref<2x32x16xbf16, #tpu.memory_space<vmem>>, vector<1x32x16xbf16>
    %144 = vector.shape_cast %143 : vector<1x32x16xbf16> to vector<32x16xbf16>
    %cst_90 = arith.constant dense<0.000000e+00> : vector<8x16xf32>
    %145 = tpu.matmul %104, %144, %cst_90 {dimension_numbers = #tpu.dot_dimension_numbers<[1], [0], [0], [1], [0, 0, 1, 1], [], []>} : vector<8x32xbf16>, vector<32x16xbf16>, vector<8x16xf32> -> vector<8x16xf32>
    %cst_91 = arith.constant 2.500000e-01 : f32
    %146 = vector.broadcast %cst_91 : f32 to vector<8x16xf32>
    %147 = arith.mulf %145, %146 : vector<8x16xf32>
    %c1_92 = arith.constant 1 : index
    %c0_93 = arith.constant 0 : index
    %c0_94 = arith.constant 0 : index
    %148 = vector.load %arg12[%c1_92, %c0_93, %c0_94] : memref<2x32x16xbf16, #tpu.memory_space<vmem>>, vector<1x32x16xbf16>
    %149 = vector.shape_cast %148 : vector<1x32x16xbf16> to vector<32x16xbf16>
    %cst_95 = arith.constant dense<0.000000e+00> : vector<8x16xf32>
    %150 = tpu.matmul %105, %149, %cst_95 {dimension_numbers = #tpu.dot_dimension_numbers<[1], [0], [0], [1], [0, 0, 1, 1], [], []>} : vector<8x32xbf16>, vector<32x16xbf16>, vector<8x16xf32> -> vector<8x16xf32>
    %c1_96 = arith.constant 1 : index
    %c0_97 = arith.constant 0 : index
    %c0_98 = arith.constant 0 : index
    %151 = vector.load %arg13[%c1_96, %c0_97, %c0_98] : memref<2x32x16xbf16, #tpu.memory_space<vmem>>, vector<1x32x16xbf16>
    %152 = vector.shape_cast %151 : vector<1x32x16xbf16> to vector<32x16xbf16>
    %cst_99 = arith.constant dense<0.000000e+00> : vector<8x16xf32>
    %153 = tpu.matmul %105, %152, %cst_99 {dimension_numbers = #tpu.dot_dimension_numbers<[1], [0], [0], [1], [0, 0, 1, 1], [], []>} : vector<8x32xbf16>, vector<32x16xbf16>, vector<8x16xf32> -> vector<8x16xf32>
    %154 = arith.truncf %147 : vector<8x16xf32> to vector<8x16xbf16>
    %155 = arith.truncf %150 : vector<8x16xf32> to vector<8x16xbf16>
    %cst_100 = arith.constant dense<0.000000e+00> : vector<8x8xf32>
    %156 = tpu.matmul %154, %155, %cst_100 {dimension_numbers = #tpu.dot_dimension_numbers<[1], [1], [0], [0], [0, 0, 1, 0], [], []>} : vector<8x16xbf16>, vector<8x16xbf16>, vector<8x8xf32> -> vector<8x8xf32>
    %cst_101 = arith.constant 0.000000e+00 : f32
    %157 = vector.broadcast %cst_101 : f32 to vector<1x8xf32>
    %158 = arith.cmpf oeq, %7, %157 : vector<1x8xf32>
    %cst_102 = arith.constant -1.000000e+09 : f32
    %159 = vector.shape_cast %158 : vector<1x8xi1> to vector<1x8xi1>
    %160 = vector.broadcast %159 : vector<1x8xi1> to vector<8x8xi1>
    %161 = vector.broadcast %cst_102 : f32 to vector<8x8xf32>
    %162 = arith.select %160, %161, %156 : vector<8x8xi1>, vector<8x8xf32>
    %cst_103 = arith.constant dense<0xFF800000> : vector<8xf32>
    %163 = vector.multi_reduction <maximumf>, %162, %cst_103 [1] : vector<8x8xf32> to vector<8xf32>
    %164 = vector.shape_cast %163 : vector<8xf32> to vector<8x1xf32>
    %165 = vector.broadcast %164 : vector<8x1xf32> to vector<8x8xf32>
    %166 = arith.subf %162, %165 : vector<8x8xf32>
    %167 = math.exp %166 : vector<8x8xf32>
    %cst_104 = arith.constant dense<0.000000e+00> : vector<8xf32>
    %168 = vector.multi_reduction <add>, %167, %cst_104 [1] : vector<8x8xf32> to vector<8xf32>
    %169 = vector.shape_cast %168 : vector<8xf32> to vector<8x1xf32>
    %170 = vector.broadcast %169 : vector<8x1xf32> to vector<8x8xf32>
    %171 = arith.divf %167, %170 : vector<8x8xf32>
    %172 = arith.truncf %171 : vector<8x8xf32> to vector<8x8xbf16>
    %173 = arith.truncf %153 : vector<8x16xf32> to vector<8x16xbf16>
    %cst_105 = arith.constant dense<0.000000e+00> : vector<8x16xf32>
    %174 = tpu.matmul %172, %173, %cst_105 {dimension_numbers = #tpu.dot_dimension_numbers<[1], [0], [0], [1], [0, 0, 1, 1], [], []>} : vector<8x8xbf16>, vector<8x16xbf16>, vector<8x16xf32> -> vector<8x16xf32>
    %175 = arith.truncf %174 : vector<8x16xf32> to vector<8x16xbf16>
    %c1_106 = arith.constant 1 : index
    %c0_107 = arith.constant 0 : index
    %c0_108 = arith.constant 0 : index
    %176 = vector.load %arg14[%c1_106, %c0_107, %c0_108] : memref<2x16x32xbf16, #tpu.memory_space<vmem>>, vector<1x16x32xbf16>
    %177 = vector.shape_cast %176 : vector<1x16x32xbf16> to vector<16x32xbf16>
    %cst_109 = arith.constant dense<0.000000e+00> : vector<8x32xf32>
    %178 = tpu.matmul %175, %177, %cst_109 {dimension_numbers = #tpu.dot_dimension_numbers<[1], [0], [0], [1], [0, 0, 1, 1], [], []>} : vector<8x16xbf16>, vector<16x32xbf16>, vector<8x32xf32> -> vector<8x32xf32>
    %179 = arith.addf %142, %178 : vector<8x32xf32>
    %cst_110 = arith.constant dense<0.000000e+00> : vector<8xf32>
    %180 = vector.multi_reduction <add>, %179, %cst_110 [1] : vector<8x32xf32> to vector<8xf32>
    %181 = vector.shape_cast %180 : vector<8xf32> to vector<8x1xf32>
    %cst_111 = arith.constant 3.200000e+01 : f32
    %182 = vector.broadcast %cst_111 : f32 to vector<8x1xf32>
    %183 = arith.divf %181, %182 : vector<8x1xf32>
    %184 = vector.broadcast %183 : vector<8x1xf32> to vector<8x32xf32>
    %185 = arith.subf %179, %184 : vector<8x32xf32>
    %186 = arith.mulf %185, %185 : vector<8x32xf32>
    %cst_112 = arith.constant dense<0.000000e+00> : vector<8xf32>
    %187 = vector.multi_reduction <add>, %186, %cst_112 [1] : vector<8x32xf32> to vector<8xf32>
    %188 = vector.shape_cast %187 : vector<8xf32> to vector<8x1xf32>
    %cst_113 = arith.constant 3.200000e+01 : f32
    %189 = vector.broadcast %cst_113 : f32 to vector<8x1xf32>
    %190 = arith.divf %188, %189 : vector<8x1xf32>
    %191 = vector.broadcast %183 : vector<8x1xf32> to vector<8x32xf32>
    %192 = arith.subf %179, %191 : vector<8x32xf32>
    %cst_114 = arith.constant 9.99999997E-7 : f32
    %193 = vector.broadcast %cst_114 : f32 to vector<8x1xf32>
    %194 = arith.addf %190, %193 : vector<8x1xf32>
    %195 = math.rsqrt %194 : vector<8x1xf32>
    %196 = vector.broadcast %195 : vector<8x1xf32> to vector<8x32xf32>
    %197 = arith.mulf %192, %196 : vector<8x32xf32>
    %c0_115 = arith.constant 0 : index
    %c0_116 = arith.constant 0 : index
    %198 = vector.load %arg15[%c0_115, %c0_116] : memref<1x32xf32, #tpu.memory_space<vmem>>, vector<1x32xf32>
    %199 = vector.broadcast %198 : vector<1x32xf32> to vector<8x32xf32>
    %200 = arith.mulf %197, %199 : vector<8x32xf32>
    %c0_117 = arith.constant 0 : index
    %c0_118 = arith.constant 0 : index
    %201 = vector.load %arg16[%c0_117, %c0_118] : memref<1x32xf32, #tpu.memory_space<vmem>>, vector<1x32xf32>
    %202 = vector.broadcast %201 : vector<1x32xf32> to vector<8x32xf32>
    %203 = arith.addf %200, %202 : vector<8x32xf32>
    %204 = arith.truncf %203 : vector<8x32xf32> to vector<8x32xbf16>
    %c0_119 = arith.constant 0 : index
    %c0_120 = arith.constant 0 : index
    %205 = vector.load %arg17[%c0_119, %c0_120] : memref<32x64xbf16, #tpu.memory_space<vmem>>, vector<32x64xbf16>
    %cst_121 = arith.constant dense<0.000000e+00> : vector<8x64xf32>
    %206 = tpu.matmul %204, %205, %cst_121 {dimension_numbers = #tpu.dot_dimension_numbers<[1], [0], [0], [1], [0, 0, 1, 1], [], []>} : vector<8x32xbf16>, vector<32x64xbf16>, vector<8x64xf32> -> vector<8x64xf32>
    %c0_122 = arith.constant 0 : index
    %c0_123 = arith.constant 0 : index
    %207 = vector.load %arg18[%c0_122, %c0_123] : memref<1x64xf32, #tpu.memory_space<vmem>>, vector<1x64xf32>
    %208 = vector.broadcast %207 : vector<1x64xf32> to vector<8x64xf32>
    %209 = arith.addf %206, %208 : vector<8x64xf32>
    %cst_124 = arith.constant 0.000000e+00 : f32
    %210 = vector.broadcast %cst_124 : f32 to vector<8x64xf32>
    %211 = arith.maximumf %209, %210 : vector<8x64xf32>
    %212 = arith.truncf %211 : vector<8x64xf32> to vector<8x64xbf16>
    %c0_125 = arith.constant 0 : index
    %c0_126 = arith.constant 0 : index
    %213 = vector.load %arg19[%c0_125, %c0_126] : memref<64x32xbf16, #tpu.memory_space<vmem>>, vector<64x32xbf16>
    %cst_127 = arith.constant dense<0.000000e+00> : vector<8x32xf32>
    %214 = tpu.matmul %212, %213, %cst_127 {dimension_numbers = #tpu.dot_dimension_numbers<[1], [0], [0], [1], [0, 0, 1, 1], [], []>} : vector<8x64xbf16>, vector<64x32xbf16>, vector<8x32xf32> -> vector<8x32xf32>
    %c0_128 = arith.constant 0 : index
    %c0_129 = arith.constant 0 : index
    %215 = vector.load %arg20[%c0_128, %c0_129] : memref<1x32xf32, #tpu.memory_space<vmem>>, vector<1x32xf32>
    %216 = vector.broadcast %215 : vector<1x32xf32> to vector<8x32xf32>
    %217 = arith.addf %214, %216 : vector<8x32xf32>
    %218 = arith.addf %217, %203 : vector<8x32xf32>
    %cst_130 = arith.constant dense<0.000000e+00> : vector<8xf32>
    %219 = vector.multi_reduction <add>, %218, %cst_130 [1] : vector<8x32xf32> to vector<8xf32>
    %220 = vector.shape_cast %219 : vector<8xf32> to vector<8x1xf32>
    %cst_131 = arith.constant 3.200000e+01 : f32
    %221 = vector.broadcast %cst_131 : f32 to vector<8x1xf32>
    %222 = arith.divf %220, %221 : vector<8x1xf32>
    %223 = vector.broadcast %222 : vector<8x1xf32> to vector<8x32xf32>
    %224 = arith.subf %218, %223 : vector<8x32xf32>
    %225 = arith.mulf %224, %224 : vector<8x32xf32>
    %cst_132 = arith.constant dense<0.000000e+00> : vector<8xf32>
    %226 = vector.multi_reduction <add>, %225, %cst_132 [1] : vector<8x32xf32> to vector<8xf32>
    %227 = vector.shape_cast %226 : vector<8xf32> to vector<8x1xf32>
    %cst_133 = arith.constant 3.200000e+01 : f32
    %228 = vector.broadcast %cst_133 : f32 to vector<8x1xf32>
    %229 = arith.divf %227, %228 : vector<8x1xf32>
    %230 = vector.broadcast %222 : vector<8x1xf32> to vector<8x32xf32>
    %231 = arith.subf %218, %230 : vector<8x32xf32>
    %cst_134 = arith.constant 9.99999997E-7 : f32
    %232 = vector.broadcast %cst_134 : f32 to vector<8x1xf32>
    %233 = arith.addf %229, %232 : vector<8x1xf32>
    %234 = math.rsqrt %233 : vector<8x1xf32>
    %235 = vector.broadcast %234 : vector<8x1xf32> to vector<8x32xf32>
    %236 = arith.mulf %231, %235 : vector<8x32xf32>
    %c0_135 = arith.constant 0 : index
    %c0_136 = arith.constant 0 : index
    %237 = vector.load %arg21[%c0_135, %c0_136] : memref<1x32xf32, #tpu.memory_space<vmem>>, vector<1x32xf32>
    %238 = vector.broadcast %237 : vector<1x32xf32> to vector<8x32xf32>
    %239 = arith.mulf %236, %238 : vector<8x32xf32>
    %c0_137 = arith.constant 0 : index
    %c0_138 = arith.constant 0 : index
    %240 = vector.load %arg22[%c0_137, %c0_138] : memref<1x32xf32, #tpu.memory_space<vmem>>, vector<1x32xf32>
    %241 = vector.broadcast %240 : vector<1x32xf32> to vector<8x32xf32>
    %242 = arith.addf %239, %241 : vector<8x32xf32>
    %c0_139 = arith.constant 0 : index
    %c0_140 = arith.constant 0 : index
    %c0_141 = arith.constant 0 : index
    %243 = vector.load %arg23[%c0_139, %c0_140, %c0_141] : memref<1x8x32xf32, #tpu.memory_space<vmem>>, vector<1x8x32xf32>
    %244 = vector.shape_cast %243 : vector<1x8x32xf32> to vector<8x32xf32>
    %245 = vector.shape_cast %242 : vector<8x32xf32> to vector<1x8x32xf32>
    tpu.vector_store %arg23[%c0_139, %c0_140, %c0_141], %245 {strides = array<i32>} : memref<1x8x32xf32, #tpu.memory_space<vmem>>, vector<1x8x32xf32>,
    return
  }
  func.func @transform_0(%arg0: i32) -> (i32, i32, i32) {
    %c0_i32 = arith.constant 0 : i32
    %c0_i32_0 = arith.constant 0 : i32
    %c0_i32_1 = arith.constant 0 : i32
    return %arg0, %c0_i32, %c0_i32_0 : i32, i32, i32
  }
  func.func @transform_1(%arg0: i32) -> (i32, i32, i32) {
    %c0_i32 = arith.constant 0 : i32
    %c0_i32_0 = arith.constant 0 : i32
    %c0_i32_1 = arith.constant 0 : i32
    return %arg0, %c0_i32, %c0_i32_0 : i32, i32, i32
  }
  func.func @transform_2(%arg0: i32) -> (i32, i32, i32) {
    %c0_i32 = arith.constant 0 : i32
    %c0_i32_0 = arith.constant 0 : i32
    %c0_i32_1 = arith.constant 0 : i32
    return %arg0, %c0_i32, %c0_i32_0 : i32, i32, i32
  }
  func.func @transform_3(%arg0: i32) -> (i32, i32, i32) {
    %c0_i32 = arith.constant 0 : i32
    %c0_i32_0 = arith.constant 0 : i32
    %c0_i32_1 = arith.constant 0 : i32
    return %arg0, %c0_i32, %c0_i32_0 : i32, i32, i32
  }
  func.func @transform_4(%arg0: i32) -> (i32, i32, i32) {
    %c0_i32 = arith.constant 0 : i32
    %c0_i32_0 = arith.constant 0 : i32
    %c0_i32_1 = arith.constant 0 : i32
    %c0_i32_2 = arith.constant 0 : i32
    return %c0_i32, %c0_i32_0, %c0_i32_1 : i32, i32, i32
  }
  func.func @transform_5(%arg0: i32) -> (i32, i32, i32) {
    %c0_i32 = arith.constant 0 : i32
    %c0_i32_0 = arith.constant 0 : i32
    %c0_i32_1 = arith.constant 0 : i32
    %c0_i32_2 = arith.constant 0 : i32
    return %c0_i32, %c0_i32_0, %c0_i32_1 : i32, i32, i32
  }
  func.func @transform_6(%arg0: i32) -> (i32, i32, i32) {
    %c0_i32 = arith.constant 0 : i32
    %c0_i32_0 = arith.constant 0 : i32
    %c0_i32_1 = arith.constant 0 : i32
    %c0_i32_2 = arith.constant 0 : i32
    return %c0_i32, %c0_i32_0, %c0_i32_1 : i32, i32, i32
  }
  func.func @transform_7(%arg0: i32) -> (i32, i32, i32) {
    %c0_i32 = arith.constant 0 : i32
    %c0_i32_0 = arith.constant 0 : i32
    %c0_i32_1 = arith.constant 0 : i32
    %c0_i32_2 = arith.constant 0 : i32
    return %c0_i32, %c0_i32_0, %c0_i32_1 : i32, i32, i32
  }
  func.func @transform_8(%arg0: i32) -> (i32, i32) {
    %c0_i32 = arith.constant 0 : i32
    %c0_i32_0 = arith.constant 0 : i32
    %c0_i32_1 = arith.constant 0 : i32
    return %c0_i32, %c0_i32_0 : i32, i32
  }
  func.func @transform_9(%arg0: i32) -> (i32, i32) {
    %c0_i32 = arith.constant 0 : i32
    %c0_i32_0 = arith.constant 0 : i32
    %c0_i32_1 = arith.constant 0 : i32
    return %c0_i32, %c0_i32_0 : i32, i32
  }
  func.func @transform_10(%arg0: i32) -> (i32, i32, i32) {
    %c0_i32 = arith.constant 0 : i32
    %c0_i32_0 = arith.constant 0 : i32
    %c0_i32_1 = arith.constant 0 : i32
    %c0_i32_2 = arith.constant 0 : i32
    return %c0_i32, %c0_i32_0, %c0_i32_1 : i32, i32, i32
  }
  func.func @transform_11(%arg0: i32) -> (i32, i32, i32) {
    %c0_i32 = arith.constant 0 : i32
    %c0_i32_0 = arith.constant 0 : i32
    %c0_i32_1 = arith.constant 0 : i32
    %c0_i32_2 = arith.constant 0 : i32
    return %c0_i32, %c0_i32_0, %c0_i32_1 : i32, i32, i32
  }
  func.func @transform_12(%arg0: i32) -> (i32, i32, i32) {
    %c0_i32 = arith.constant 0 : i32
    %c0_i32_0 = arith.constant 0 : i32
    %c0_i32_1 = arith.constant 0 : i32
    %c0_i32_2 = arith.constant 0 : i32
    return %c0_i32, %c0_i32_0, %c0_i32_1 : i32, i32, i32
  }
  func.func @transform_13(%arg0: i32) -> (i32, i32, i32) {
    %c0_i32 = arith.constant 0 : i32
    %c0_i32_0 = arith.constant 0 : i32
    %c0_i32_1 = arith.constant 0 : i32
    %c0_i32_2 = arith.constant 0 : i32
    return %c0_i32, %c0_i32_0, %c0_i32_1 : i32, i32, i32
  }
  func.func @transform_14(%arg0: i32) -> (i32, i32) {
    %c0_i32 = arith.constant 0 : i32
    %c0_i32_0 = arith.constant 0 : i32
    %c0_i32_1 = arith.constant 0 : i32
    return %c0_i32, %c0_i32_0 : i32, i32
  }
  func.func @transform_15(%arg0: i32) -> (i32, i32) {
    %c0_i32 = arith.constant 0 : i32
    %c0_i32_0 = arith.constant 0 : i32
    %c0_i32_1 = arith.constant 0 : i32
    return %c0_i32, %c0_i32_0 : i32, i32
  }
  func.func @transform_16(%arg0: i32) -> (i32, i32) {
    %c0_i32 = arith.constant 0 : i32
    %c0_i32_0 = arith.constant 0 : i32
    %c0_i32_1 = arith.constant 0 : i32
    return %c0_i32, %c0_i32_0 : i32, i32
  }
  func.func @transform_17(%arg0: i32) -> (i32, i32) {
    %c0_i32 = arith.constant 0 : i32
    %c0_i32_0 = arith.constant 0 : i32
    %c0_i32_1 = arith.constant 0 : i32
    return %c0_i32, %c0_i32_0 : i32, i32
  }
  func.func @transform_18(%arg0: i32) -> (i32, i32) {
    %c0_i32 = arith.constant 0 : i32
    %c0_i32_0 = arith.constant 0 : i32
    %c0_i32_1 = arith.constant 0 : i32
    return %c0_i32, %c0_i32_0 : i32, i32
  }
  func.func @transform_19(%arg0: i32) -> (i32, i32) {
    %c0_i32 = arith.constant 0 : i32
    %c0_i32_0 = arith.constant 0 : i32
    %c0_i32_1 = arith.constant 0 : i32
    return %c0_i32, %c0_i32_0 : i32, i32
  }
  func.func @transform_20(%arg0: i32) -> (i32, i32) {
    %c0_i32 = arith.constant 0 : i32
    %c0_i32_0 = arith.constant 0 : i32
    %c0_i32_1 = arith.constant 0 : i32
    return %c0_i32, %c0_i32_0 : i32, i32
  }
  func.func @transform_21(%arg0: i32) -> (i32, i32) {
    %c0_i32 = arith.constant 0 : i32
    %c0_i32_0 = arith.constant 0 : i32
    %c0_i32_1 = arith.constant 0 : i32
    return %c0_i32, %c0_i32_0 : i32, i32
  }
  func.func @transform_22(%arg0: i32) -> (i32, i32, i32) {
    %c0_i32 = arith.constant 0 : i32
    %c0_i32_0 = arith.constant 0 : i32
    %c0_i32_1 = arith.constant 0 : i32
    return %arg0, %c0_i32, %c0_i32_0 : i32, i32, i32
  }
}

module attributes {stable_mosaic.version = 11 : i64} {
  func.func @decoder_layer_kernel(%arg0: i32, %arg1: memref<1x8x32xf32, #tpu.memory_space<vmem>>, %arg2: memref<1x8x32xf32, #tpu.memory_space<vmem>>, %arg3: memref<1x8x8xf32, #tpu.memory_space<vmem>>, %arg4: memref<1x1x8xf32, #tpu.memory_space<vmem>>, %arg5: memref<2x32x16xbf16, #tpu.memory_space<vmem>>, %arg6: memref<2x32x16xbf16, #tpu.memory_space<vmem>>, %arg7: memref<2x32x16xbf16, #tpu.memory_space<vmem>>, %arg8: memref<2x16x32xbf16, #tpu.memory_space<vmem>>, %arg9: memref<1x32xf32, #tpu.memory_space<vmem>>, %arg10: memref<1x32xf32, #tpu.memory_space<vmem>>, %arg11: memref<2x32x16xbf16, #tpu.memory_space<vmem>>, %arg12: memref<2x32x16xbf16, #tpu.memory_space<vmem>>, %arg13: memref<2x32x16xbf16, #tpu.memory_space<vmem>>, %arg14: memref<2x16x32xbf16, #tpu.memory_space<vmem>>, %arg15: memref<1x32xf32, #tpu.memory_space<vmem>>, %arg16: memref<1x32xf32, #tpu.memory_space<vmem>>, %arg17: memref<32x64xbf16, #tpu.memory_space<vmem>>, %arg18: memref<1x64xf32, #tpu.memory_space<vmem>>, %arg19: memref<64x32xbf16, #tpu.memory_space<vmem>>, %arg20: memref<1x32xf32, #tpu.memory_space<vmem>>, %arg21: memref<1x32xf32, #tpu.memory_space<vmem>>, %arg22: memref<1x32xf32, #tpu.memory_space<vmem>>, %arg23: memref<1x8x32xf32, #tpu.memory_space<vmem>>) attributes {dimension_semantics = [#tpu.dimension_semantics<parallel>], iteration_bounds = array<i64: 2>, scalar_prefetch = 0 : i64, scratch_operands = 0 : i64, tpu.core_type = #tpu.core_type<tc>, window_params = [{transform_indices = @transform_0, window_bounds = array<i64: 1, 8, 32>}, {transform_indices = @transform_1, window_bounds = array<i64: 1, 8, 32>}, {transform_indices = @transform_2, window_bounds = array<i64: 1, 8, 8>}, {transform_indices = @transform_3, window_bounds = array<i64: 1, 1, 8>}, {pipeline_mode = #tpu.pipeline_mode<synchronous>, transform_indices = @transform_4, window_bounds = array<i64: 2, 32, 16>}, {pipeline_mode = #tpu.pipeline_mode<synchronous>, transform_indices = @transform_5, window_bounds = array<i64: 2, 32, 16>}, {pipeline_mode = #tpu.pipeline_mode<synchronous>, transform_indices = @transform_6, window_bounds = array<i64: 2, 32, 16>}, {pipeline_mode = #tpu.pipeline_mode<synchronous>, transform_indices = @transform_7, window_bounds = array<i64: 2, 16, 32>}, {pipeline_mode = #tpu.pipeline_mode<synchronous>, transform_indices = @transform_8, window_bounds = array<i64: 1, 32>}, {pipeline_mode = #tpu.pipeline_mode<synchronous>, transform_indices = @transform_9, window_bounds = array<i64: 1, 32>}, {pipeline_mode = #tpu.pipeline_mode<synchronous>, transform_indices = @transform_10, window_bounds = array<i64: 2, 32, 16>}, {pipeline_mode = #tpu.pipeline_mode<synchronous>, transform_indices = @transform_11, window_bounds = array<i64: 2, 32, 16>}, {pipeline_mode = #tpu.pipeline_mode<synchronous>, transform_indices = @transform_12, window_bounds = array<i64: 2, 32, 16>}, {pipeline_mode = #tpu.pipeline_mode<synchronous>, transform_indices = @transform_13, window_bounds = array<i64: 2, 16, 32>}, {pipeline_mode = #tpu.pipeline_mode<synchronous>, transform_indices = @transform_14, window_bounds = array<i64: 1, 32>}, {pipeline_mode = #tpu.pipeline_mode<synchronous>, transform_indices = @transform_15, window_bounds = array<i64: 1, 32>}, {pipeline_mode = #tpu.pipeline_mode<synchronous>, transform_indices = @transform_16, window_bounds = array<i64: 32, 64>}, {pipeline_mode = #tpu.pipeline_mode<synchronous>, transform_indices = @transform_17, window_bounds = array<i64: 1, 64>}, {pipeline_mode = #tpu.pipeline_mode<synchronous>, transform_indices = @transform_18, window_bounds = array<i64: 64, 32>}, {pipeline_mode = #tpu.pipeline_mode<synchronous>, transform_indices = @transform_19, window_bounds = array<i64: 1, 32>}, {pipeline_mode = #tpu.pipeline_mode<synchronous>, transform_indices = @transform_20, window_bounds = array<i64: 1, 32>}, {pipeline_mode = #tpu.pipeline_mode<synchronous>, transform_indices = @transform_21, window_bounds = array<i64: 1, 32>}, {transform_indices = @transform_22, window_bounds = array<i64: 1, 8, 32>}]} {
    %c0 = arith.constant 0 : index
    %c0_0 = arith.constant 0 : index
    %c0_1 = arith.constant 0 : index
    %0 = vector.load %arg1[%c0, %c0_0, %c0_1] : memref<1x8x32xf32, #tpu.memory_space<vmem>>, vector<1x8x32xf32>
    %1 = vector.shape_cast %0 : vector<1x8x32xf32> to vector<8x32xf32>
    %c0_2 = arith.constant 0 : index
    %c0_3 = arith.constant 0 : index
    %c0_4 = arith.constant 0 : index
    %2 = vector.load %arg2[%c0_2, %c0_3, %c0_4] : memref<1x8x32xf32, #tpu.memory_space<vmem>>, vector<1x8x32xf32>
    %3 = vector.shape_cast %2 : vector<1x8x32xf32> to vector<8x32xf32>
    %c0_5 = arith.constant 0 : index
    %c0_6 = arith.constant 0 : index
    %c0_7 = arith.constant 0 : index
    %4 = vector.load %arg3[%c0_5, %c0_6, %c0_7] : memref<1x8x8xf32, #tpu.memory_space<vmem>>, vector<1x8x8xf32>
    %5 = vector.shape_cast %4 : vector<1x8x8xf32> to vector<8x8xf32>
    %c0_8 = arith.constant 0 : index
    %c0_9 = arith.constant 0 : index
    %c0_10 = arith.constant 0 : index
    %6 = vector.load %arg4[%c0_8, %c0_9, %c0_10] : memref<1x1x8xf32, #tpu.memory_space<vmem>>, vector<1x1x8xf32>
    %7 = vector.shape_cast %6 : vector<1x1x8xf32> to vector<1x8xf32>
    %8 = arith.truncf %1 : vector<8x32xf32> to vector<8x32xbf16>
    %9 = arith.truncf %1 : vector<8x32xf32> to vector<8x32xbf16>
    %c0_11 = arith.constant 0 : index
    %c0_12 = arith.constant 0 : index
    %c0_13 = arith.constant 0 : index
    %10 = vector.load %arg5[%c0_11, %c0_12, %c0_13] : memref<2x32x16xbf16, #tpu.memory_space<vmem>>, vector<1x32x16xbf16>
    %11 = vector.shape_cast %10 : vector<1x32x16xbf16> to vector<32x16xbf16>
    %cst = arith.constant dense<0.000000e+00> : vector<8x16xf32>
    %12 = tpu.matmul %8, %11, %cst {dimension_numbers = #tpu.dot_dimension_numbers<[1], [0], [0], [1], [0, 0, 1, 1], [], []>} : vector<8x32xbf16>, vector<32x16xbf16>, vector<8x16xf32> -> vector<8x16xf32>
    %cst_14 = arith.constant 2.500000e-01 : f32
    %13 = vector.broadcast %cst_14 : f32 to vector<8x16xf32>
    %14 = arith.mulf %12, %13 : vector<8x16xf32>
    %c0_15 = arith.constant 0 : index
    %c0_16 = arith.constant 0 : index
    %c0_17 = arith.constant 0 : index
    %15 = vector.load %arg6[%c0_15, %c0_16, %c0_17] : memref<2x32x16xbf16, #tpu.memory_space<vmem>>, vector<1x32x16xbf16>
    %16 = vector.shape_cast %15 : vector<1x32x16xbf16> to vector<32x16xbf16>
    %cst_18 = arith.constant dense<0.000000e+00> : vector<8x16xf32>
    %17 = tpu.matmul %9, %16, %cst_18 {dimension_numbers = #tpu.dot_dimension_numbers<[1], [0], [0], [1], [0, 0, 1, 1], [], []>} : vector<8x32xbf16>, vector<32x16xbf16>, vector<8x16xf32> -> vector<8x16xf32>
    %c0_19 = arith.constant 0 : index
    %c0_20 = arith.constant 0 : index
    %c0_21 = arith.constant 0 : index
    %18 = vector.load %arg7[%c0_19, %c0_20, %c0_21] : memref<2x32x16xbf16, #tpu.memory_space<vmem>>, vector<1x32x16xbf16>
    %19 = vector.shape_cast %18 : vector<1x32x16xbf16> to vector<32x16xbf16>
    %cst_22 = arith.constant dense<0.000000e+00> : vector<8x16xf32>
    %20 = tpu.matmul %9, %19, %cst_22 {dimension_numbers = #tpu.dot_dimension_numbers<[1], [0], [0], [1], [0, 0, 1, 1], [], []>} : vector<8x32xbf16>, vector<32x16xbf16>, vector<8x16xf32> -> vector<8x16xf32>
    %21 = arith.truncf %14 : vector<8x16xf32> to vector<8x16xbf16>
    %22 = arith.truncf %17 : vector<8x16xf32> to vector<8x16xbf16>
    %cst_23 = arith.constant dense<0.000000e+00> : vector<8x8xf32>
    %23 = tpu.matmul %21, %22, %cst_23 {dimension_numbers = #tpu.dot_dimension_numbers<[1], [1], [0], [0], [0, 0, 1, 0], [], []>} : vector<8x16xbf16>, vector<8x16xbf16>, vector<8x8xf32> -> vector<8x8xf32>
    %cst_24 = arith.constant 0.000000e+00 : f32
    %24 = vector.broadcast %cst_24 : f32 to vector<8x8xf32>
    %25 = arith.cmpf oeq, %5, %24 : vector<8x8xf32>
    %cst_25 = arith.constant -1.000000e+09 : f32
    %26 = vector.broadcast %cst_25 : f32 to vector<8x8xf32>
    %27 = arith.select %25, %26, %23 : vector<8x8xi1>, vector<8x8xf32>
    %cst_26 = arith.constant dense<0xFF800000> : vector<8xf32>
    %28 = vector.multi_reduction <maximumf>, %27, %cst_26 [1] : vector<8x8xf32> to vector<8xf32>
    %29 = vector.shape_cast %28 : vector<8xf32> to vector<8x1xf32>
    %30 = vector.broadcast %29 : vector<8x1xf32> to vector<8x8xf32>
    %31 = arith.subf %27, %30 : vector<8x8xf32>
    %32 = math.exp %31 : vector<8x8xf32>
    %cst_27 = arith.constant dense<0.000000e+00> : vector<8xf32>
    %33 = vector.multi_reduction <add>, %32, %cst_27 [1] : vector<8x8xf32> to vector<8xf32>
    %34 = vector.shape_cast %33 : vector<8xf32> to vector<8x1xf32>
    %35 = vector.broadcast %34 : vector<8x1xf32> to vector<8x8xf32>
    %36 = arith.divf %32, %35 : vector<8x8xf32>
    %37 = arith.truncf %36 : vector<8x8xf32> to vector<8x8xbf16>
    %38 = arith.truncf %20 : vector<8x16xf32> to vector<8x16xbf16>
    %cst_28 = arith.constant dense<0.000000e+00> : vector<8x16xf32>
    %39 = tpu.matmul %37, %38, %cst_28 {dimension_numbers = #tpu.dot_dimension_numbers<[1], [0], [0], [1], [0, 0, 1, 1], [], []>} : vector<8x8xbf16>, vector<8x16xbf16>, vector<8x16xf32> -> vector<8x16xf32>
    %40 = arith.truncf %39 : vector<8x16xf32> to vector<8x16xbf16>
    %c0_29 = arith.constant 0 : index
    %c0_30 = arith.constant 0 : index
    %c0_31 = arith.constant 0 : index
    %41 = vector.load %arg8[%c0_29, %c0_30, %c0_31] : memref<2x16x32xbf16, #tpu.memory_space<vmem>>, vector<1x16x32xbf16>
    %42 = vector.shape_cast %41 : vector<1x16x32xbf16> to vector<16x32xbf16>
    %cst_32 = arith.constant dense<0.000000e+00> : vector<8x32xf32>
    %43 = tpu.matmul %40, %42, %cst_32 {dimension_numbers = #tpu.dot_dimension_numbers<[1], [0], [0], [1], [0, 0, 1, 1], [], []>} : vector<8x16xbf16>, vector<16x32xbf16>, vector<8x32xf32> -> vector<8x32xf32>
    %44 = arith.addf %1, %43 : vector<8x32xf32>
    %c1 = arith.constant 1 : index
    %c0_33 = arith.constant 0 : index
    %c0_34 = arith.constant 0 : index
    %45 = vector.load %arg5[%c1, %c0_33, %c0_34] : memref<2x32x16xbf16, #tpu.memory_space<vmem>>, vector<1x32x16xbf16>
    %46 = vector.shape_cast %45 : vector<1x32x16xbf16> to vector<32x16xbf16>
    %cst_35 = arith.constant dense<0.000000e+00> : vector<8x16xf32>
    %47 = tpu.matmul %8, %46, %cst_35 {dimension_numbers = #tpu.dot_dimension_numbers<[1], [0], [0], [1], [0, 0, 1, 1], [], []>} : vector<8x32xbf16>, vector<32x16xbf16>, vector<8x16xf32> -> vector<8x16xf32>
    %cst_36 = arith.constant 2.500000e-01 : f32
    %48 = vector.broadcast %cst_36 : f32 to vector<8x16xf32>
    %49 = arith.mulf %47, %48 : vector<8x16xf32>
    %c1_37 = arith.constant 1 : index
    %c0_38 = arith.constant 0 : index
    %c0_39 = arith.constant 0 : index
    %50 = vector.load %arg6[%c1_37, %c0_38, %c0_39] : memref<2x32x16xbf16, #tpu.memory_space<vmem>>, vector<1x32x16xbf16>
    %51 = vector.shape_cast %50 : vector<1x32x16xbf16> to vector<32x16xbf16>
    %cst_40 = arith.constant dense<0.000000e+00> : vector<8x16xf32>
    %52 = tpu.matmul %9, %51, %cst_40 {dimension_numbers = #tpu.dot_dimension_numbers<[1], [0], [0], [1], [0, 0, 1, 1], [], []>} : vector<8x32xbf16>, vector<32x16xbf16>, vector<8x16xf32> -> vector<8x16xf32>
    %c1_41 = arith.constant 1 : index
    %c0_42 = arith.constant 0 : index
    %c0_43 = arith.constant 0 : index
    %53 = vector.load %arg7[%c1_41, %c0_42, %c0_43] : memref<2x32x16xbf16, #tpu.memory_space<vmem>>, vector<1x32x16xbf16>
    %54 = vector.shape_cast %53 : vector<1x32x16xbf16> to vector<32x16xbf16>
    %cst_44 = arith.constant dense<0.000000e+00> : vector<8x16xf32>
    %55 = tpu.matmul %9, %54, %cst_44 {dimension_numbers = #tpu.dot_dimension_numbers<[1], [0], [0], [1], [0, 0, 1, 1], [], []>} : vector<8x32xbf16>, vector<32x16xbf16>, vector<8x16xf32> -> vector<8x16xf32>
    %56 = arith.truncf %49 : vector<8x16xf32> to vector<8x16xbf16>
    %57 = arith.truncf %52 : vector<8x16xf32> to vector<8x16xbf16>
    %cst_45 = arith.constant dense<0.000000e+00> : vector<8x8xf32>
    %58 = tpu.matmul %56, %57, %cst_45 {dimension_numbers = #tpu.dot_dimension_numbers<[1], [1], [0], [0], [0, 0, 1, 0], [], []>} : vector<8x16xbf16>, vector<8x16xbf16>, vector<8x8xf32> -> vector<8x8xf32>
    %cst_46 = arith.constant 0.000000e+00 : f32
    %59 = vector.broadcast %cst_46 : f32 to vector<8x8xf32>
    %60 = arith.cmpf oeq, %5, %59 : vector<8x8xf32>
    %cst_47 = arith.constant -1.000000e+09 : f32
    %61 = vector.broadcast %cst_47 : f32 to vector<8x8xf32>
    %62 = arith.select %60, %61, %58 : vector<8x8xi1>, vector<8x8xf32>
    %cst_48 = arith.constant dense<0xFF800000> : vector<8xf32>
    %63 = vector.multi_reduction <maximumf>, %62, %cst_48 [1] : vector<8x8xf32> to vector<8xf32>
    %64 = vector.shape_cast %63 : vector<8xf32> to vector<8x1xf32>
    %65 = vector.broadcast %64 : vector<8x1xf32> to vector<8x8xf32>
    %66 = arith.subf %62, %65 : vector<8x8xf32>
    %67 = math.exp %66 : vector<8x8xf32>
    %cst_49 = arith.constant dense<0.000000e+00> : vector<8xf32>
    %68 = vector.multi_reduction <add>, %67, %cst_49 [1] : vector<8x8xf32> to vector<8xf32>
    %69 = vector.shape_cast %68 : vector<8xf32> to vector<8x1xf32>
    %70 = vector.broadcast %69 : vector<8x1xf32> to vector<8x8xf32>
    %71 = arith.divf %67, %70 : vector<8x8xf32>
    %72 = arith.truncf %71 : vector<8x8xf32> to vector<8x8xbf16>
    %73 = arith.truncf %55 : vector<8x16xf32> to vector<8x16xbf16>
    %cst_50 = arith.constant dense<0.000000e+00> : vector<8x16xf32>
    %74 = tpu.matmul %72, %73, %cst_50 {dimension_numbers = #tpu.dot_dimension_numbers<[1], [0], [0], [1], [0, 0, 1, 1], [], []>} : vector<8x8xbf16>, vector<8x16xbf16>, vector<8x16xf32> -> vector<8x16xf32>
    %75 = arith.truncf %74 : vector<8x16xf32> to vector<8x16xbf16>
    %c1_51 = arith.constant 1 : index
    %c0_52 = arith.constant 0 : index
    %c0_53 = arith.constant 0 : index
    %76 = vector.load %arg8[%c1_51, %c0_52, %c0_53] : memref<2x16x32xbf16, #tpu.memory_space<vmem>>, vector<1x16x32xbf16>
    %77 = vector.shape_cast %76 : vector<1x16x32xbf16> to vector<16x32xbf16>
    %cst_54 = arith.constant dense<0.000000e+00> : vector<8x32xf32>
    %78 = tpu.matmul %75, %77, %cst_54 {dimension_numbers = #tpu.dot_dimension_numbers<[1], [0], [0], [1], [0, 0, 1, 1], [], []>} : vector<8x16xbf16>, vector<16x32xbf16>, vector<8x32xf32> -> vector<8x32xf32>
    %79 = arith.addf %44, %78 : vector<8x32xf32>
    %cst_55 = arith.constant dense<0.000000e+00> : vector<8xf32>
    %80 = vector.multi_reduction <add>, %79, %cst_55 [1] : vector<8x32xf32> to vector<8xf32>
    %81 = vector.shape_cast %80 : vector<8xf32> to vector<8x1xf32>
    %cst_56 = arith.constant 3.200000e+01 : f32
    %82 = vector.broadcast %cst_56 : f32 to vector<8x1xf32>
    %83 = arith.divf %81, %82 : vector<8x1xf32>
    %84 = vector.broadcast %83 : vector<8x1xf32> to vector<8x32xf32>
    %85 = arith.subf %79, %84 : vector<8x32xf32>
    %86 = arith.mulf %85, %85 : vector<8x32xf32>
    %cst_57 = arith.constant dense<0.000000e+00> : vector<8xf32>
    %87 = vector.multi_reduction <add>, %86, %cst_57 [1] : vector<8x32xf32> to vector<8xf32>
    %88 = vector.shape_cast %87 : vector<8xf32> to vector<8x1xf32>
    %cst_58 = arith.constant 3.200000e+01 : f32
    %89 = vector.broadcast %cst_58 : f32 to vector<8x1xf32>
    %90 = arith.divf %88, %89 : vector<8x1xf32>
    %91 = vector.broadcast %83 : vector<8x1xf32> to vector<8x32xf32>
    %92 = arith.subf %79, %91 : vector<8x32xf32>
    %cst_59 = arith.constant 9.99999997E-7 : f32
    %93 = vector.broadcast %cst_59 : f32 to vector<8x1xf32>
    %94 = arith.addf %90, %93 : vector<8x1xf32>
    %95 = math.rsqrt %94 : vector<8x1xf32>
    %96 = vector.broadcast %95 : vector<8x1xf32> to vector<8x32xf32>
    %97 = arith.mulf %92, %96 : vector<8x32xf32>
    %c0_60 = arith.constant 0 : index
    %c0_61 = arith.constant 0 : index
    %98 = vector.load %arg9[%c0_60, %c0_61] : memref<1x32xf32, #tpu.memory_space<vmem>>, vector<1x32xf32>
    %99 = vector.broadcast %98 : vector<1x32xf32> to vector<8x32xf32>
    %100 = arith.mulf %97, %99 : vector<8x32xf32>
    %c0_62 = arith.constant 0 : index
    %c0_63 = arith.constant 0 : index
    %101 = vector.load %arg10[%c0_62, %c0_63] : memref<1x32xf32, #tpu.memory_space<vmem>>, vector<1x32xf32>
    %102 = vector.broadcast %101 : vector<1x32xf32> to vector<8x32xf32>
    %103 = arith.addf %100, %102 : vector<8x32xf32>
    %104 = arith.truncf %103 : vector<8x32xf32> to vector<8x32xbf16>
    %105 = arith.truncf %3 : vector<8x32xf32> to vector<8x32xbf16>
    %c0_64 = arith.constant 0 : index
    %c0_65 = arith.constant 0 : index
    %c0_66 = arith.constant 0 : index
    %106 = vector.load %arg11[%c0_64, %c0_65, %c0_66] : memref<2x32x16xbf16, #tpu.memory_space<vmem>>, vector<1x32x16xbf16>
    %107 = vector.shape_cast %106 : vector<1x32x16xbf16> to vector<32x16xbf16>
    %cst_67 = arith.constant dense<0.000000e+00> : vector<8x16xf32>
    %108 = tpu.matmul %104, %107, %cst_67 {dimension_numbers = #tpu.dot_dimension_numbers<[1], [0], [0], [1], [0, 0, 1, 1], [], []>} : vector<8x32xbf16>, vector<32x16xbf16>, vector<8x16xf32> -> vector<8x16xf32>
    %cst_68 = arith.constant 2.500000e-01 : f32
    %109 = vector.broadcast %cst_68 : f32 to vector<8x16xf32>
    %110 = arith.mulf %108, %109 : vector<8x16xf32>
    %c0_69 = arith.constant 0 : index
    %c0_70 = arith.constant 0 : index
    %c0_71 = arith.constant 0 : index
    %111 = vector.load %arg12[%c0_69, %c0_70, %c0_71] : memref<2x32x16xbf16, #tpu.memory_space<vmem>>, vector<1x32x16xbf16>
    %112 = vector.shape_cast %111 : vector<1x32x16xbf16> to vector<32x16xbf16>
    %cst_72 = arith.constant dense<0.000000e+00> : vector<8x16xf32>
    %113 = tpu.matmul %105, %112, %cst_72 {dimension_numbers = #tpu.dot_dimension_numbers<[1], [0], [0], [1], [0, 0, 1, 1], [], []>} : vector<8x32xbf16>, vector<32x16xbf16>, vector<8x16xf32> -> vector<8x16xf32>
    %c0_73 = arith.constant 0 : index
    %c0_74 = arith.constant 0 : index
    %c0_75 = arith.constant 0 : index
    %114 = vector.load %arg13[%c0_73, %c0_74, %c0_75] : memref<2x32x16xbf16, #tpu.memory_space<vmem>>, vector<1x32x16xbf16>
    %115 = vector.shape_cast %114 : vector<1x32x16xbf16> to vector<32x16xbf16>
    %cst_76 = arith.constant dense<0.000000e+00> : vector<8x16xf32>
    %116 = tpu.matmul %105, %115, %cst_76 {dimension_numbers = #tpu.dot_dimension_numbers<[1], [0], [0], [1], [0, 0, 1, 1], [], []>} : vector<8x32xbf16>, vector<32x16xbf16>, vector<8x16xf32> -> vector<8x16xf32>
    %117 = arith.truncf %110 : vector<8x16xf32> to vector<8x16xbf16>
    %118 = arith.truncf %113 : vector<8x16xf32> to vector<8x16xbf16>
    %cst_77 = arith.constant dense<0.000000e+00> : vector<8x8xf32>
    %119 = tpu.matmul %117, %118, %cst_77 {dimension_numbers = #tpu.dot_dimension_numbers<[1], [1], [0], [0], [0, 0, 1, 0], [], []>} : vector<8x16xbf16>, vector<8x16xbf16>, vector<8x8xf32> -> vector<8x8xf32>
    %cst_78 = arith.constant 0.000000e+00 : f32
    %120 = vector.broadcast %cst_78 : f32 to vector<1x8xf32>
    %121 = arith.cmpf oeq, %7, %120 : vector<1x8xf32>
    %cst_79 = arith.constant -1.000000e+09 : f32
    %122 = vector.shape_cast %121 : vector<1x8xi1> to vector<1x8xi1>
    %123 = vector.broadcast %122 : vector<1x8xi1> to vector<8x8xi1>
    %124 = vector.broadcast %cst_79 : f32 to vector<8x8xf32>
    %125 = arith.select %123, %124, %119 : vector<8x8xi1>, vector<8x8xf32>
    %cst_80 = arith.constant dense<0xFF800000> : vector<8xf32>
    %126 = vector.multi_reduction <maximumf>, %125, %cst_80 [1] : vector<8x8xf32> to vector<8xf32>
    %127 = vector.shape_cast %126 : vector<8xf32> to vector<8x1xf32>
    %128 = vector.broadcast %127 : vector<8x1xf32> to vector<8x8xf32>
    %129 = arith.subf %125, %128 : vector<8x8xf32>
    %130 = math.exp %129 : vector<8x8xf32>
    %cst_81 = arith.constant dense<0.000000e+00> : vector<8xf32>
    %131 = vector.multi_reduction <add>, %130, %cst_81 [1] : vector<8x8xf32> to vector<8xf32>
    %132 = vector.shape_cast %131 : vector<8xf32> to vector<8x1xf32>
    %133 = vector.broadcast %132 : vector<8x1xf32> to vector<8x8xf32>
    %134 = arith.divf %130, %133 : vector<8x8xf32>
    %135 = arith.truncf %134 : vector<8x8xf32> to vector<8x8xbf16>
    %136 = arith.truncf %116 : vector<8x16xf32> to vector<8x16xbf16>
    %cst_82 = arith.constant dense<0.000000e+00> : vector<8x16xf32>
    %137 = tpu.matmul %135, %136, %cst_82 {dimension_numbers = #tpu.dot_dimension_numbers<[1], [0], [0], [1], [0, 0, 1, 1], [], []>} : vector<8x8xbf16>, vector<8x16xbf16>, vector<8x16xf32> -> vector<8x16xf32>
    %138 = arith.truncf %137 : vector<8x16xf32> to vector<8x16xbf16>
    %c0_83 = arith.constant 0 : index
    %c0_84 = arith.constant 0 : index
    %c0_85 = arith.constant 0 : index
    %139 = vector.load %arg14[%c0_83, %c0_84, %c0_85] : memref<2x16x32xbf16, #tpu.memory_space<vmem>>, vector<1x16x32xbf16>
    %140 = vector.shape_cast %139 : vector<1x16x32xbf16> to vector<16x32xbf16>
    %cst_86 = arith.constant dense<0.000000e+00> : vector<8x32xf32>
    %141 = tpu.matmul %138, %140, %cst_86 {dimension_numbers = #tpu.dot_dimension_numbers<[1], [0], [0], [1], [0, 0, 1, 1], [], []>} : vector<8x16xbf16>, vector<16x32xbf16>, vector<8x32xf32> -> vector<8x32xf32>
    %142 = arith.addf %103, %141 : vector<8x32xf32>
    %c1_87 = arith.constant 1 : index
    %c0_88 = arith.constant 0 : index
    %c0_89 = arith.constant 0 : index
    %143 = vector.load %arg11[%c1_87, %c0_88, %c0_89] : memref<2x32x16xbf16, #tpu.memory_space<vmem>>, vector<1x32x16xbf16>
    %144 = vector.shape_cast %143 : vector<1x32x16xbf16> to vector<32x16xbf16>
    %cst_90 = arith.constant dense<0.000000e+00> : vector<8x16xf32>
    %145 = tpu.matmul %104, %144, %cst_90 {dimension_numbers = #tpu.dot_dimension_numbers<[1], [0], [0], [1], [0, 0, 1, 1], [], []>} : vector<8x32xbf16>, vector<32x16xbf16>, vector<8x16xf32> -> vector<8x16xf32>
    %cst_91 = arith.constant 2.500000e-01 : f32
    %146 = vector.broadcast %cst_91 : f32 to vector<8x16xf32>
    %147 = arith.mulf %145, %146 : vector<8x16xf32>
    %c1_92 = arith.constant 1 : index
    %c0_93 = arith.constant 0 : index
    %c0_94 = arith.constant 0 : index
    %148 = vector.load %arg12[%c1_92, %c0_93, %c0_94] : memref<2x32x16xbf16, #tpu.memory_space<vmem>>, vector<1x32x16xbf16>
    %149 = vector.shape_cast %148 : vector<1x32x16xbf16> to vector<32x16xbf16>
    %cst_95 = arith.constant dense<0.000000e+00> : vector<8x16xf32>
    %150 = tpu.matmul %105, %149, %cst_95 {dimension_numbers = #tpu.dot_dimension_numbers<[1], [0], [0], [1], [0, 0, 1, 1], [], []>} : vector<8x32xbf16>, vector<32x16xbf16>, vector<8x16xf32> -> vector<8x16xf32>
    %c1_96 = arith.constant 1 : index
    %c0_97 = arith.constant 0 : index
    %c0_98 = arith.constant 0 : index
    %151 = vector.load %arg13[%c1_96, %c0_97, %c0_98] : memref<2x32x16xbf16, #tpu.memory_space<vmem>>, vector<1x32x16xbf16>
    %152 = vector.shape_cast %151 : vector<1x32x16xbf16> to vector<32x16xbf16>
    %cst_99 = arith.constant dense<0.000000e+00> : vector<8x16xf32>
    %153 = tpu.matmul %105, %152, %cst_99 {dimension_numbers = #tpu.dot_dimension_numbers<[1], [0], [0], [1], [0, 0, 1, 1], [], []>} : vector<8x32xbf16>, vector<32x16xbf16>, vector<8x16xf32> -> vector<8x16xf32>
    %154 = arith.truncf %147 : vector<8x16xf32> to vector<8x16xbf16>
    %155 = arith.truncf %150 : vector<8x16xf32> to vector<8x16xbf16>
    %cst_100 = arith.constant dense<0.000000e+00> : vector<8x8xf32>
    %156 = tpu.matmul %154, %155, %cst_100 {dimension_numbers = #tpu.dot_dimension_numbers<[1], [1], [0], [0], [0, 0, 1, 0], [], []>} : vector<8x16xbf16>, vector<8x16xbf16>, vector<8x8xf32> -> vector<8x8xf32>
    %cst_101 = arith.constant 0.000000e+00 : f32
    %157 = vector.broadcast %cst_101 : f32 to vector<1x8xf32>
    %158 = arith.cmpf oeq, %7, %157 : vector<1x8xf32>
    %cst_102 = arith.constant -1.000000e+09 : f32
    %159 = vector.shape_cast %158 : vector<1x8xi1> to vector<1x8xi1>
    %160 = vector.broadcast %159 : vector<1x8xi1> to vector<8x8xi1>
    %161 = vector.broadcast %cst_102 : f32 to vector<8x8xf32>
    %162 = arith.select %160, %161, %156 : vector<8x8xi1>, vector<8x8xf32>
    %cst_103 = arith.constant dense<0xFF800000> : vector<8xf32>
    %163 = vector.multi_reduction <maximumf>, %162, %cst_103 [1] : vector<8x8xf32> to vector<8xf32>
    %164 = vector.shape_cast %163 : vector<8xf32> to vector<8x1xf32>
    %165 = vector.broadcast %164 : vector<8x1xf32> to vector<8x8xf32>
    %166 = arith.subf %162, %165 : vector<8x8xf32>
    %167 = math.exp %166 : vector<8x8xf32>
    %cst_104 = arith.constant dense<0.000000e+00> : vector<8xf32>
    %168 = vector.multi_reduction <add>, %167, %cst_104 [1] : vector<8x8xf32> to vector<8xf32>
    %169 = vector.shape_cast %168 : vector<8xf32> to vector<8x1xf32>
    %170 = vector.broadcast %169 : vector<8x1xf32> to vector<8x8xf32>
    %171 = arith.divf %167, %170 : vector<8x8xf32>
    %172 = arith.truncf %171 : vector<8x8xf32> to vector<8x8xbf16>
    %173 = arith.truncf %153 : vector<8x16xf32> to vector<8x16xbf16>
    %cst_105 = arith.constant dense<0.000000e+00> : vector<8x16xf32>
    %174 = tpu.matmul %172, %173, %cst_105 {dimension_numbers = #tpu.dot_dimension_numbers<[1], [0], [0], [1], [0, 0, 1, 1], [], []>} : vector<8x8xbf16>, vector<8x16xbf16>, vector<8x16xf32> -> vector<8x16xf32>
    %175 = arith.truncf %174 : vector<8x16xf32> to vector<8x16xbf16>
    %c1_106 = arith.constant 1 : index
    %c0_107 = arith.constant 0 : index
    %c0_108 = arith.constant 0 : index
    %176 = vector.load %arg14[%c1_106, %c0_107, %c0_108] : memref<2x16x32xbf16, #tpu.memory_space<vmem>>, vector<1x16x32xbf16>
    %177 = vector.shape_cast %176 : vector<1x16x32xbf16> to vector<16x32xbf16>
    %cst_109 = arith.constant dense<0.000000e+00> : vector<8x32xf32>
    %178 = tpu.matmul %175, %177, %cst_109 {dimension_numbers = #tpu.dot_dimension_numbers<[1], [0], [0], [1], [0, 0, 1, 1], [], []>} : vector<8x16xbf16>, vector<16x32xbf16>, vector<8x32xf32> -> vector<8x32xf32>
    %179 = arith.addf %142, %178 : vector<8x32xf32>
    %cst_110 = arith.constant dense<0.000000e+00> : vector<8xf32>
    %180 = vector.multi_reduction <add>, %179, %cst_110 [1] : vector<8x32xf32> to vector<8xf32>
    %181 = vector.shape_cast %180 : vector<8xf32> to vector<8x1xf32>
    %cst_111 = arith.constant 3.200000e+01 : f32
    %182 = vector.broadcast %cst_111 : f32 to vector<8x1xf32>
    %183 = arith.divf %181, %182 : vector<8x1xf32>
    %184 = vector.broadcast %183 : vector<8x1xf32> to vector<8x32xf32>
    %185 = arith.subf %179, %184 : vector<8x32xf32>
    %186 = arith.mulf %185, %185 : vector<8x32xf32>
    %cst_112 = arith.constant dense<0.000000e+00> : vector<8xf32>
    %187 = vector.multi_reduction <add>, %186, %cst_112 [1] : vector<8x32xf32> to vector<8xf32>
    %188 = vector.shape_cast %187 : vector<8xf32> to vector<8x1xf32>
    %cst_113 = arith.constant 3.200000e+01 : f32
    %189 = vector.broadcast %cst_113 : f32 to vector<8x1xf32>
    %190 = arith.divf %188, %189 : vector<8x1xf32>
    %191 = vector.broadcast %183 : vector<8x1xf32> to vector<8x32xf32>
    %192 = arith.subf %179, %191 : vector<8x32xf32>
    %cst_114 = arith.constant 9.99999997E-7 : f32
    %193 = vector.broadcast %cst_114 : f32 to vector<8x1xf32>
    %194 = arith.addf %190, %193 : vector<8x1xf32>
    %195 = math.rsqrt %194 : vector<8x1xf32>
    %196 = vector.broadcast %195 : vector<8x1xf32> to vector<8x32xf32>
    %197 = arith.mulf %192, %196 : vector<8x32xf32>
    %c0_115 = arith.constant 0 : index
    %c0_116 = arith.constant 0 : index
    %198 = vector.load %arg15[%c0_115, %c0_116] : memref<1x32xf32, #tpu.memory_space<vmem>>, vector<1x32xf32>
    %199 = vector.broadcast %198 : vector<1x32xf32> to vector<8x32xf32>
    %200 = arith.mulf %197, %199 : vector<8x32xf32>
    %c0_117 = arith.constant 0 : index
    %c0_118 = arith.constant 0 : index
    %201 = vector.load %arg16[%c0_117, %c0_118] : memref<1x32xf32, #tpu.memory_space<vmem>>, vector<1x32xf32>
    %202 = vector.broadcast %201 : vector<1x32xf32> to vector<8x32xf32>
    %203 = arith.addf %200, %202 : vector<8x32xf32>
    %204 = arith.truncf %203 : vector<8x32xf32> to vector<8x32xbf16>
    %c0_119 = arith.constant 0 : index
    %c0_120 = arith.constant 0 : index
    %205 = vector.load %arg17[%c0_119, %c0_120] : memref<32x64xbf16, #tpu.memory_space<vmem>>, vector<32x64xbf16>
    %cst_121 = arith.constant dense<0.000000e+00> : vector<8x64xf32>
    %206 = tpu.matmul %204, %205, %cst_121 {dimension_numbers = #tpu.dot_dimension_numbers<[1], [0], [0], [1], [0, 0, 1, 1], [], []>} : vector<8x32xbf16>, vector<32x64xbf16>, vector<8x64xf32> -> vector<8x64xf32>
    %c0_122 = arith.constant 0 : index
    %c0_123 = arith.constant 0 : index
    %207 = vector.load %arg18[%c0_122, %c0_123] : memref<1x64xf32, #tpu.memory_space<vmem>>, vector<1x64xf32>
    %208 = vector.broadcast %207 : vector<1x64xf32> to vector<8x64xf32>
    %209 = arith.addf %206, %208 : vector<8x64xf32>
    %cst_124 = arith.constant 0.000000e+00 : f32
    %210 = vector.broadcast %cst_124 : f32 to vector<8x64xf32>
    %211 = arith.maximumf %209, %210 : vector<8x64xf32>
    %212 = arith.truncf %211 : vector<8x64xf32> to vector<8x64xbf16>
    %c0_125 = arith.constant 0 : index
    %c0_126 = arith.constant 0 : index
    %213 = vector.load %arg19[%c0_125, %c0_126] : memref<64x32xbf16, #tpu.memory_space<vmem>>, vector<64x32xbf16>
    %cst_127 = arith.constant dense<0.000000e+00> : vector<8x32xf32>
    %214 = tpu.matmul %212, %213, %cst_127 {dimension_numbers = #tpu.dot_dimension_numbers<[1], [0], [0], [1], [0, 0, 1, 1], [], []>} : vector<8x64xbf16>, vector<64x32xbf16>, vector<8x32xf32> -> vector<8x32xf32>
    %c0_128 = arith.constant 0 : index
    %c0_129 = arith.constant 0 : index
    %215 = vector.load %arg20[%c0_128, %c0_129] : memref<1x32xf32, #tpu.memory_space<vmem>>, vector<1x32xf32>
    %216 = vector.broadcast %215 : vector<1x32xf32> to vector<8x32xf32>
    %217 = arith.addf %214, %216 : vector<8x32xf32>
    %218 = arith.addf %217, %203 : vector<8x32xf32>
    %cst_130 = arith.constant dense<0.000000e+00> : vector<8xf32>
    %219 = vector.multi_reduction <add>, %218, %cst_130 [1] : vector<8x32xf32> to vector<8xf32>
    %220 = vector.shape_cast %219 : vector<8xf32> to vector<8x1xf32>
    %cst_131 = arith.constant 3.200000e+01 : f32
    %221 = vector.broadcast %cst_131 : f32 to vector<8x1xf32>
    %222 = arith.divf %220, %221 : vector<8x1xf32>
    %223 = vector.broadcast %222 : vector<8x1xf32> to vector<8x32xf32>
    %224 = arith.subf %218, %223 : vector<8x32xf32>
    %225 = arith.mulf %224, %224 : vector<8x32xf32>
    %cst_132 = arith.constant dense<0.000000e+00> : vector<8xf32>
    %226 = vector.multi_reduction <add>, %225, %cst_132 [1] : vector<8x32xf32> to vector<8xf32>
    %227 = vector.shape_cast %226 : vector<8xf32> to vector<8x1xf32>
    %cst_133 = arith.constant 3.200000e+01 : f32
    %228 = vector.broadcast %cst_133 : f32 to vector<8x1xf32>
    %229 = arith.divf %227, %228 : vector<8x1xf32>
    %230 = vector.broadcast %222 : vector<8x1xf32> to vector<8x32xf32>
    %231 = arith.subf %218, %230 : vector<8x32xf32>
    %cst_134 = arith.constant 9.99999997E-7 : f32
    %232 = vector.broadcast %cst_134 : f32 to vector<8x1xf32>
    %233 = arith.addf %229, %232 : vector<8x1xf32>
    %234 = math.rsqrt %233 : vector<8x1xf32>
    %235 = vector.broadcast %234 : vector<8x1xf32> to vector<8x32xf32>
    %236 = arith.mulf %231, %235 : vector<8x32xf32>
    %c0_135 = arith.constant 0 : index
    %c0_136 = arith.constant 0 : index
    %237 = vector.load %arg21[%c0_135, %c0_136] : memref<1x32xf32, #tpu.memory_space<vmem>>, vector<1x32xf32>
    %238 = vector.broadcast %237 : vector<1x32xf32> to vector<8x32xf32>
    %239 = arith.mulf %236, %238 : vector<8x32xf32>
    %c0_137 = arith.constant 0 : index
    %c0_138 = arith.constant 0 : index
    %240 = vector.load %arg22[%c0_137, %c0_138] : memref<1x32xf32, #tpu.memory_space<vmem>>, vector<1x32xf32>
    %241 = vector.broadcast %240 : vector<1x32xf32> to vector<8x32xf32>
    %242 = arith.addf %239, %241 : vector<8x32xf32>
    %c0_139 = arith.constant 0 : index
    %c0_140 = arith.constant 0 : index
    %c0_141 = arith.constant 0 : index
    %243 = vector.load %arg23[%c0_139, %c0_140, %c0_141] : memref<1x8x32xf32, #tpu.memory_space<vmem>>, vector<1x8x32xf32>
    %244 = vector.shape_cast %243 : vector<1x8x32xf32> to vector<8x32xf32>
    %245 = vector.shape_cast %242 : vector<8x32xf32> to vector<1x8x32xf32>
    tpu.vector_store %arg23[%c0_139, %c0_140, %c0_141], %245 {strides = array<i32>} : memref<1x8x32xf32, #tpu.memory_space<vmem>>, vector<1x8x32xf32>,
    return
  }
  func.func @transform_0(%arg0: i32) -> (i32, i32, i32) {
    %c0_i32 = arith.constant 0 : i32
    %c0_i32_0 = arith.constant 0 : i32
    %c0_i32_1 = arith.constant 0 : i32
    return %arg0, %c0_i32, %c0_i32_0 : i32, i32, i32
  }
  func.func @transform_1(%arg0: i32) -> (i32, i32, i32) {
    %c0_i32 = arith.constant 0 : i32
    %c0_i32_0 = arith.constant 0 : i32
    %c0_i32_1 = arith.constant 0 : i32
    return %arg0, %c0_i32, %c0_i32_0 : i32, i32, i32
  }
  func.func @transform_2(%arg0: i32) -> (i32, i32, i32) {
    %c0_i32 = arith.constant 0 : i32
    %c0_i32_0 = arith.constant 0 : i32
    %c0_i32_1 = arith.constant 0 : i32
    return %arg0, %c0_i32, %c0_i32_0 : i32, i32, i32
  }
  func.func @transform_3(%arg0: i32) -> (i32, i32, i32) {
    %c0_i32 = arith.constant 0 : i32
    %c0_i32_0 = arith.constant 0 : i32
    %c0_i32_1 = arith.constant 0 : i32
    return %arg0, %c0_i32, %c0_i32_0 : i32, i32, i32
  }
  func.func @transform_4(%arg0: i32) -> (i32, i32, i32) {
    %c0_i32 = arith.constant 0 : i32
    %c0_i32_0 = arith.constant 0 : i32
    %c0_i32_1 = arith.constant 0 : i32
    %c0_i32_2 = arith.constant 0 : i32
    return %c0_i32, %c0_i32_0, %c0_i32_1 : i32, i32, i32
  }
  func.func @transform_5(%arg0: i32) -> (i32, i32, i32) {
    %c0_i32 = arith.constant 0 : i32
    %c0_i32_0 = arith.constant 0 : i32
    %c0_i32_1 = arith.constant 0 : i32
    %c0_i32_2 = arith.constant 0 : i32
    return %c0_i32, %c0_i32_0, %c0_i32_1 : i32, i32, i32
  }
  func.func @transform_6(%arg0: i32) -> (i32, i32, i32) {
    %c0_i32 = arith.constant 0 : i32
    %c0_i32_0 = arith.constant 0 : i32
    %c0_i32_1 = arith.constant 0 : i32
    %c0_i32_2 = arith.constant 0 : i32
    return %c0_i32, %c0_i32_0, %c0_i32_1 : i32, i32, i32
  }
  func.func @transform_7(%arg0: i32) -> (i32, i32, i32) {
    %c0_i32 = arith.constant 0 : i32
    %c0_i32_0 = arith.constant 0 : i32
    %c0_i32_1 = arith.constant 0 : i32
    %c0_i32_2 = arith.constant 0 : i32
    return %c0_i32, %c0_i32_0, %c0_i32_1 : i32, i32, i32
  }
  func.func @transform_8(%arg0: i32) -> (i32, i32) {
    %c0_i32 = arith.constant 0 : i32
    %c0_i32_0 = arith.constant 0 : i32
    %c0_i32_1 = arith.constant 0 : i32
    return %c0_i32, %c0_i32_0 : i32, i32
  }
  func.func @transform_9(%arg0: i32) -> (i32, i32) {
    %c0_i32 = arith.constant 0 : i32
    %c0_i32_0 = arith.constant 0 : i32
    %c0_i32_1 = arith.constant 0 : i32
    return %c0_i32, %c0_i32_0 : i32, i32
  }
  func.func @transform_10(%arg0: i32) -> (i32, i32, i32) {
    %c0_i32 = arith.constant 0 : i32
    %c0_i32_0 = arith.constant 0 : i32
    %c0_i32_1 = arith.constant 0 : i32
    %c0_i32_2 = arith.constant 0 : i32
    return %c0_i32, %c0_i32_0, %c0_i32_1 : i32, i32, i32
  }
  func.func @transform_11(%arg0: i32) -> (i32, i32, i32) {
    %c0_i32 = arith.constant 0 : i32
    %c0_i32_0 = arith.constant 0 : i32
    %c0_i32_1 = arith.constant 0 : i32
    %c0_i32_2 = arith.constant 0 : i32
    return %c0_i32, %c0_i32_0, %c0_i32_1 : i32, i32, i32
  }
  func.func @transform_12(%arg0: i32) -> (i32, i32, i32) {
    %c0_i32 = arith.constant 0 : i32
    %c0_i32_0 = arith.constant 0 : i32
    %c0_i32_1 = arith.constant 0 : i32
    %c0_i32_2 = arith.constant 0 : i32
    return %c0_i32, %c0_i32_0, %c0_i32_1 : i32, i32, i32
  }
  func.func @transform_13(%arg0: i32) -> (i32, i32, i32) {
    %c0_i32 = arith.constant 0 : i32
    %c0_i32_0 = arith.constant 0 : i32
    %c0_i32_1 = arith.constant 0 : i32
    %c0_i32_2 = arith.constant 0 : i32
    return %c0_i32, %c0_i32_0, %c0_i32_1 : i32, i32, i32
  }
  func.func @transform_14(%arg0: i32) -> (i32, i32) {
    %c0_i32 = arith.constant 0 : i32
    %c0_i32_0 = arith.constant 0 : i32
    %c0_i32_1 = arith.constant 0 : i32
    return %c0_i32, %c0_i32_0 : i32, i32
  }
  func.func @transform_15(%arg0: i32) -> (i32, i32) {
    %c0_i32 = arith.constant 0 : i32
    %c0_i32_0 = arith.constant 0 : i32
    %c0_i32_1 = arith.constant 0 : i32
    return %c0_i32, %c0_i32_0 : i32, i32
  }
  func.func @transform_16(%arg0: i32) -> (i32, i32) {
    %c0_i32 = arith.constant 0 : i32
    %c0_i32_0 = arith.constant 0 : i32
    %c0_i32_1 = arith.constant 0 : i32
    return %c0_i32, %c0_i32_0 : i32, i32
  }
  func.func @transform_17(%arg0: i32) -> (i32, i32) {
    %c0_i32 = arith.constant 0 : i32
    %c0_i32_0 = arith.constant 0 : i32
    %c0_i32_1 = arith.constant 0 : i32
    return %c0_i32, %c0_i32_0 : i32, i32
  }
  func.func @transform_18(%arg0: i32) -> (i32, i32) {
    %c0_i32 = arith.constant 0 : i32
    %c0_i32_0 = arith.constant 0 : i32
    %c0_i32_1 = arith.constant 0 : i32
    return %c0_i32, %c0_i32_0 : i32, i32
  }
  func.func @transform_19(%arg0: i32) -> (i32, i32) {
    %c0_i32 = arith.constant 0 : i32
    %c0_i32_0 = arith.constant 0 : i32
    %c0_i32_1 = arith.constant 0 : i32
    return %c0_i32, %c0_i32_0 : i32, i32
  }
  func.func @transform_20(%arg0: i32) -> (i32, i32) {
    %c0_i32 = arith.constant 0 : i32
    %c0_i32_0 = arith.constant 0 : i32
    %c0_i32_1 = arith.constant 0 : i32
    return %c0_i32, %c0_i32_0 : i32, i32
  }
  func.func @transform_21(%arg0: i32) -> (i32, i32) {
    %c0_i32 = arith.constant 0 : i32
    %c0_i32_0 = arith.constant 0 : i32
    %c0_i32_1 = arith.constant 0 : i32
    return %c0_i32, %c0_i32_0 : i32, i32
  }
  func.func @transform_22(%arg0: i32) -> (i32, i32, i32) {
    %c0_i32 = arith.constant 0 : i32
    %c0_i32_0 = arith.constant 0 : i32
    %c0_i32_1 = arith.constant 0 : i32
    return %arg0, %c0_i32, %c0_i32_0 : i32, i32, i32
  }
}

</mosaic_0001>

<llo_original>
// kernel: _lambda_.3
$region0: #{_lambda_.3}
  #allocation0 [shape = 'u32[]', space=smem, size = 0x4, offset = 0x4, fixed_abs, tag = 'smem constant byte address 0x4 - core index']
  #allocation1 [shape = 'u32[144,128]{1,0:T(1,128)}', space=vmem, size = 0x12000, scoped, tag = 'internal scratch']
  %s0 = inlined_call_operand.vmem [shape: f32[2,8,32], index: 0, kind: input, shape index: {}]
  %s1 = inlined_call_operand.vmem [shape: f32[8,32], index: 1, kind: input, shape index: {}]
  %s2 = inlined_call_operand.vmem [shape: f32[1,32], index: 2, kind: input, shape index: {}]
  %s3 = inlined_call_operand.vmem [shape: f32[1,32], index: 3, kind: input, shape index: {}]
  %s4 = inlined_call_operand.vmem [shape: f32[2,8,32], index: 4, kind: output, shape index: {}]
  %s5 = sld [smem:[#allocation0]]
  $region49: #{_lambda_.3} parent=0
    _
  %s7 = ssub.s32 1, %s5
  %s8 = scalar_select 0, %s7, %s5
  loop: start=0, step=1, limit=4
  $region2: #{_lambda_.3} parent=0 // loop_pre_header
    _
  $region3: #{_lambda_.3} parent=0 // loop_header
    %s10 = sphi 0, %s14
    %p11 = scmp.ge.s32.totalorder %s10, 4
    %s20 = sphi 0, %s22
    %s23 = sphi 0, %s20
    %s24 = sphi 0, %s23
    %s40 = sphi 0, %s24
    %s44 = sphi 0, %s44
    %s46 = sphi 0, %s44
    %s47 = sphi 0, %s46
    %s61 = sphi 0, %s47
    %s65 = sphi 0, %s65
    %s67 = sphi 0, %s65
    %s68 = sphi 0, %s67
    %s82 = sphi 0, %s68
    %s86 = sphi 0, %s86
    %s88 = sphi 0, %s86
    %s89 = sphi 0, %s88
    %s103 = sphi 0, %s89
    %s109 = sphi 0, %s111
    %s112 = sphi 0, %s109
    %s113 = sphi 0, %s112
    %s129 = sphi 0, %s113
  $region4: #{_lambda_.3} parent=0 // loop_header_branch
    %13 = sbr.rel (%p11) target = $region8
  $region5: #{_lambda_.3} parent=0 // loop_body
    %s15 = ssub.s32 %s10, 1
    %s16 = ssub.s32 %s10, 2
    %s17 = sadd.s32 %s10, 1
    %s18 = ssub.s32 %s10, %s17
    %p19 = scmp.eq.s32.totalorder %s18, 0
    %s21 = sadd.s32 %s20, 1
    %s22 = scalar_select %p19, %s20, %s21
    %p25 = pneg %p19
    %p26 = scmp.eq.s32.totalorder %s10, 1
    %p27 = por %p25, %p26
    %p28 = scmp.ne.s32.totalorder %s20, %s23
    %p29 = scmp.eq.s32.totalorder %s10, 0
    %p30 = por %p28, %p29
    %p31 = scmp.ne.s32.totalorder %s20, %s23
    %p32 = scmp.eq.s32.totalorder %s15, 1
    %p33 = por %p31, %p32
    %p34 = scmp.ne.s32.totalorder %s23, %s24
    %p35 = scmp.eq.s32.totalorder %s15, 0
    %p36 = por %p34, %p35
    %p37 = scmp.ne.s32.totalorder %s23, %s24
    %p38 = scmp.eq.s32.totalorder %s16, 1
    %p39 = por %p37, %p38
    %p41 = scmp.ne.s32.totalorder %s24, %s40
    %p42 = scmp.eq.s32.totalorder %s16, 0
    %p43 = por %p41, %p42
    %s45 = sadd.s32 %s44, 1
    %p48 = scmp.eq.s32.totalorder %s10, 1
    %p49 = scmp.ne.s32.totalorder %s44, %s46
    %p50 = scmp.eq.s32.totalorder %s10, 0
    %p51 = por %p49, %p50
    %p52 = scmp.ne.s32.totalorder %s44, %s46
    %p53 = scmp.eq.s32.totalorder %s15, 1
    %p54 = por %p52, %p53
    %p55 = scmp.ne.s32.totalorder %s46, %s47
    %p56 = scmp.eq.s32.totalorder %s15, 0
    %p57 = por %p55, %p56
    %p58 = scmp.ne.s32.totalorder %s46, %s47
    %p59 = scmp.eq.s32.totalorder %s16, 1
    %p60 = por %p58, %p59
    %p62 = scmp.ne.s32.totalorder %s47, %s61
    %p63 = scmp.eq.s32.totalorder %s16, 0
    %p64 = por %p62, %p63
    %s66 = sadd.s32 %s65, 1
    %p69 = scmp.eq.s32.totalorder %s10, 1
    %p70 = scmp.ne.s32.totalorder %s65, %s67
    %p71 = scmp.eq.s32.totalorder %s10, 0
    %p72 = por %p70, %p71
    %p73 = scmp.ne.s32.totalorder %s65, %s67
    %p74 = scmp.eq.s32.totalorder %s15, 1
    %p75 = por %p73, %p74
    %p76 = scmp.ne.s32.totalorder %s67, %s68
    %p77 = scmp.eq.s32.totalorder %s15, 0
    %p78 = por %p76, %p77
    %p79 = scmp.ne.s32.totalorder %s67, %s68
    %p80 = scmp.eq.s32.totalorder %s16, 1
    %p81 = por %p79, %p80
    %p83 = scmp.ne.s32.totalorder %s68, %s82
    %p84 = scmp.eq.s32.totalorder %s16, 0
    %p85 = por %p83, %p84
    %s87 = sadd.s32 %s86, 1
    %p90 = scmp.eq.s32.totalorder %s10, 1
    %p91 = scmp.ne.s32.totalorder %s86, %s88
    %p92 = scmp.eq.s32.totalorder %s10, 0
    %p93 = por %p91, %p92
    %p94 = scmp.ne.s32.totalorder %s86, %s88
    %p95 = scmp.eq.s32.totalorder %s15, 1
    %p96 = por %p94, %p95
    %p97 = scmp.ne.s32.totalorder %s88, %s89
    %p98 = scmp.eq.s32.totalorder %s15, 0
    %p99 = por %p97, %p98
    %p100 = scmp.ne.s32.totalorder %s88, %s89
    %p101 = scmp.eq.s32.totalorder %s16, 1
    %p102 = por %p100, %p101
    %p104 = scmp.ne.s32.totalorder %s89, %s103
    %p105 = scmp.eq.s32.totalorder %s16, 0
    %p106 = por %p104, %p105
    %s107 = ssub.s32 %s10, %s17
    %p108 = scmp.eq.s32.totalorder %s107, 0
    %s110 = sadd.s32 %s109, 1
    %s111 = scalar_select %p108, %s109, %s110
    %p114 = pneg %p108
    %p115 = scmp.eq.s32.totalorder %s10, 1
    %p116 = por %p114, %p115
    %p117 = scmp.ne.s32.totalorder %s109, %s112
    %p118 = scmp.eq.s32.totalorder %s10, 0
    %p119 = por %p117, %p118
    %p120 = scmp.ne.s32.totalorder %s109, %s112
    %p121 = scmp.eq.s32.totalorder %s15, 1
    %p122 = por %p120, %p121
    %p123 = scmp.ne.s32.totalorder %s112, %s113
    %p124 = scmp.eq.s32.totalorder %s15, 0
    %p125 = por %p123, %p124
    %p126 = scmp.ne.s32.totalorder %s112, %s113
    %p127 = scmp.eq.s32.totalorder %s16, 1
    %p128 = por %p126, %p127
    %p130 = scmp.ne.s32.totalorder %s113, %s129
    %p131 = scmp.eq.s32.totalorder %s16, 0
    %p132 = por %p130, %p131
    %p133 = scmp.le.s32.totalorder 1, %s10
    %p134 = scmp.lt.s32.totalorder %s10, 3
    %p135 = pnand %p133, %p134
    %p136 = pneg %p135
    // Predicated region
    $region9: #{_lambda_.3} parent=5 // pred_check
      _
    $region10: #{_lambda_.3} parent=5 // pred_check_branch
      %138 = sbr.rel (%p135) target = $region12
    $region11: #{_lambda_.3} parent=5 // pred_region
      %s139 = ssub.s32 %s10, 1
      // Predicated region
      $region13: #{_lambda_.3} parent=11 // pred_check
        %p140 = pneg %p57
      $region14: #{_lambda_.3} parent=11 // pred_check_branch
        %142 = sbr.rel (%p140) target = $region16
      $region15: #{_lambda_.3} parent=11 // pred_region
        _
      $region16: #{_lambda_.3} parent=11 // pred_fallthru
        _
      // Predicated region
      $region17: #{_lambda_.3} parent=11 // pred_check
        %p143 = pneg %p78
      $region18: #{_lambda_.3} parent=11 // pred_check_branch
        %145 = sbr.rel (%p143) target = $region20
      $region19: #{_lambda_.3} parent=11 // pred_region
        _
      $region20: #{_lambda_.3} parent=11 // pred_fallthru
        _
      // Predicated region
      $region21: #{_lambda_.3} parent=11 // pred_check
        %p146 = pneg %p99
      $region22: #{_lambda_.3} parent=11 // pred_check_branch
        %148 = sbr.rel (%p146) target = $region24
      $region23: #{_lambda_.3} parent=11 // pred_region
        _
      $region24: #{_lambda_.3} parent=11 // pred_fallthru
        _
    $region12: #{_lambda_.3} parent=5 // pred_fallthru
      _
    %p149 = scmp.lt.s32.totalorder %s10, 2
    // Predicated region
    $region25: #{_lambda_.3} parent=5 // pred_check
      %p150 = pneg %p149
    $region26: #{_lambda_.3} parent=5 // pred_check_branch
      %152 = sbr.rel (%p150) target = $region28
    $region27: #{_lambda_.3} parent=5 // pred_region
      // Predicated region
      $region29: #{_lambda_.3} parent=27 // pred_check
        %p153 = pneg %p30
      $region30: #{_lambda_.3} parent=27 // pred_check_branch
        %155 = sbr.rel (%p153) target = $region32
      $region31: #{_lambda_.3} parent=27 // pred_region
        %p156 = scmp.lt.s32.totalorder %s10, 1
        %s157 = scalar_select %p156, %s10, 1
        %s158 = smul.addr %s157, 8
        %s159 = scalar_lea.vmem %s0, %s158
      $region32: #{_lambda_.3} parent=27 // pred_fallthru
        _
    $region28: #{_lambda_.3} parent=5 // pred_fallthru
      _
    %p160 = scmp.le.s32.totalorder 1, %s10
    %p161 = scmp.lt.s32.totalorder %s10, 3
    %p162 = pnand %p160, %p161
    %p163 = pneg %p162
    // Predicated region
    $region33: #{_lambda_.3} parent=5 // pred_check
      _
    $region34: #{_lambda_.3} parent=5 // pred_check_branch
      %165 = sbr.rel (%p162) target = $region36
    $region35: #{_lambda_.3} parent=5 // pred_region
      %s166 = ssub.s32 %s10, 1
      %p167 = scmp.lt.s32.totalorder %s15, 1
      %s168 = scalar_select %p167, %s15, 1
      %s169 = smul.addr %s168, 8
      %s170 = scalar_lea.vmem %s0, %s169
      %p171 = pneg %p36
      %p172 = pneg %p33
      %p173 = pneg %p57
      %p174 = pneg %p54
      %p175 = pneg %p78
      %p176 = pneg %p75
      %p177 = pneg %p99
      %p178 = pneg %p96
      %p179 = pneg %p125
      %p180 = pneg %p122
      %p181 = scmp.lt.s32.totalorder %s15, 1
      %s182 = scalar_select %p181, %s15, 1
      %s183 = smul.addr %s182, 8
      %s184 = scalar_lea.vmem %s4, %s183
      %p185 = scmp.lt.s32.totalorder %s15, 1
      %s186 = scalar_select %p185, %s15, 1
      %s187 = smul.addr %s186, 8
      %s188 = scalar_lea.vmem %s0, %s187
      %p189 = scmp.lt.s32.totalorder %s15, 1
      %s190 = scalar_select %p189, %s15, 1
      %s191 = smul.addr %s190, 8
      %s192 = scalar_lea.vmem %s4, %s191
      %v193 = vld [vmem:[%s188] sm:$0xff]
      %v194 = vld [vmem:[%s1] sm:$0xff]
      %v195 = vadd.f32 %v193, %v194
      %vm196 = vcmask 261120
      %v197 = vsel %vm196, %v195, 0.0
      %198 = vadd.xlane.f32.xlu0 %v197
      %v199 = vpop.xlane.xlu0 %198
      %v200 = vrcp.pop 32.0
      %v201 = vmul.f32 %v199, %v200
      %v202 = vsub.f32 %v195, %v201
      %v203 = vmul.f32 %v202, %v202
      %v204 = vsel %vm196, %v203, 0.0
      %205 = vadd.xlane.f32.xlu0 %v204
      %v206 = vpop.xlane.xlu0 %205
      %v207 = vmul.f32 %v206, %v200
      %v208 = vadd.f32 %v207, 1e-06
      %v209 = vrsqrt.pop %v208
      %v210 = vmul.f32 %v202, %v209
      %v211 = vld [vmem:[%s2] sm:$0x1]
      %v213 = vlaneseq
      %v214 = vshrl.u32 %v213, 7
      %v215 = vsub.s32 0, %v214
      %v216 = vrot.slane %v211, %v215
      %v218 = vmul.f32 %v210, %v216
      %v219 = vld [vmem:[%s3] sm:$0x1]
      %v221 = vlaneseq
      %v222 = vshrl.u32 %v221, 7
      %v223 = vsub.s32 0, %v222
      %v224 = vrot.slane %v219, %v223
      %v226 = vadd.f32 %v218, %v224
      %227 = vst.msk [vmem:[%s192] sm:$0xff] %vm196, %v226
      %p228 = scmp.lt.s32.totalorder %s15, 1
      %s229 = scalar_select %p228, %s15, 1
      %s230 = smul.addr %s229, 8
      %s231 = scalar_lea.vmem %s4, %s230
      // Predicated region
      $region37: #{_lambda_.3} parent=35 // pred_check
        %p232 = pneg %p122
      $region38: #{_lambda_.3} parent=35 // pred_check_branch
        %234 = sbr.rel (%p232) target = $region40
      $region39: #{_lambda_.3} parent=35 // pred_region
        _
      $region40: #{_lambda_.3} parent=35 // pred_fallthru
        _
    $region36: #{_lambda_.3} parent=5 // pred_fallthru
      _
    %p235 = scmp.le.s32.totalorder 2, %s10
    // Predicated region
    $region41: #{_lambda_.3} parent=5 // pred_check
      %p236 = pneg %p235
    $region42: #{_lambda_.3} parent=5 // pred_check_branch
      %238 = sbr.rel (%p236) target = $region44
    $region43: #{_lambda_.3} parent=5 // pred_region
      %s239 = ssub.s32 %s10, 2
      // Predicated region
      $region45: #{_lambda_.3} parent=43 // pred_check
        %p240 = pneg %p128
      $region46: #{_lambda_.3} parent=43 // pred_check_branch
        %242 = sbr.rel (%p240) target = $region48
      $region47: #{_lambda_.3} parent=43 // pred_region
        %p243 = scmp.lt.s32.totalorder %s16, 1
        %s244 = scalar_select %p243, %s16, 1
        %s245 = smul.addr %s244, 8
        %s246 = scalar_lea.vmem %s4, %s245
      $region48: #{_lambda_.3} parent=43 // pred_fallthru
        _
    $region44: #{_lambda_.3} parent=5 // pred_fallthru
      _
  $region6: #{_lambda_.3} parent=0 // loop_footer
    %s14 = sadd.s32 1, %s10
  $region7: #{_lambda_.3} parent=0 // loop_footer_branch
    %9 = sbr.rel target = $region3
  $region8: #{_lambda_.3} parent=0 // loop_exit
    _

// kernel: _lambda_.5
$region0: #{_lambda_.5}
  #allocation0 [shape = 'u32[]', space=smem, size = 0x4, offset = 0x4, fixed_abs, tag = 'smem constant byte address 0x4 - core index']
  #allocation1 [shape = 'u32[144,128]{1,0:T(1,128)}', space=vmem, size = 0x12000, scoped, tag = 'internal scratch']
  %s0 = inlined_call_operand.vmem [shape: f32[2,8,32], index: 0, kind: input, shape index: {}]
  %s1 = inlined_call_operand.vmem [shape: f32[2,8,32], index: 1, kind: input, shape index: {}]
  %s2 = inlined_call_operand.vmem [shape: f32[2,8,8], index: 2, kind: input, shape index: {}]
  %s3 = inlined_call_operand.vmem [shape: f32[2,1,8], index: 3, kind: input, shape index: {}]
  %s4 = inlined_call_operand.vmem [shape: bf16[2,32,16], index: 4, kind: input, shape index: {}]
  %s5 = inlined_call_operand.vmem [shape: bf16[2,32,16], index: 5, kind: input, shape index: {}]
  %s6 = inlined_call_operand.vmem [shape: bf16[2,32,16], index: 6, kind: input, shape index: {}]
  %s7 = inlined_call_operand.vmem [shape: bf16[2,16,32], index: 7, kind: input, shape index: {}]
  %s8 = inlined_call_operand.vmem [shape: f32[1,32], index: 8, kind: input, shape index: {}]
  %s9 = inlined_call_operand.vmem [shape: f32[1,32], index: 9, kind: input, shape index: {}]
  %s10 = inlined_call_operand.vmem [shape: bf16[2,32,16], index: 10, kind: input, shape index: {}]
  %s11 = inlined_call_operand.vmem [shape: bf16[2,32,16], index: 11, kind: input, shape index: {}]
  %s12 = inlined_call_operand.vmem [shape: bf16[2,32,16], index: 12, kind: input, shape index: {}]
  %s13 = inlined_call_operand.vmem [shape: bf16[2,16,32], index: 13, kind: input, shape index: {}]
  %s14 = inlined_call_operand.vmem [shape: f32[1,32], index: 14, kind: input, shape index: {}]
  %s15 = inlined_call_operand.vmem [shape: f32[1,32], index: 15, kind: input, shape index: {}]
  %s16 = inlined_call_operand.vmem [shape: bf16[32,64], index: 16, kind: input, shape index: {}]
  %s17 = inlined_call_operand.vmem [shape: f32[1,64], index: 17, kind: input, shape index: {}]
  %s18 = inlined_call_operand.vmem [shape: bf16[64,32], index: 18, kind: input, shape index: {}]
  %s19 = inlined_call_operand.vmem [shape: f32[1,32], index: 19, kind: input, shape index: {}]
  %s20 = inlined_call_operand.vmem [shape: f32[1,32], index: 20, kind: input, shape index: {}]
  %s21 = inlined_call_operand.vmem [shape: f32[1,32], index: 21, kind: input, shape index: {}]
  %s22 = inlined_call_operand.hbm [shape: f32[2,8,32], index: 22, kind: output, shape index: {}]
  %s23 = sld [smem:[#allocation0]]
  $region121: #{_lambda_.5} parent=0
    _
  %s25 = ssub.s32 1, %s23
  %s26 = scalar_select 0, %s25, %s23
  $region1: #{_lambda_.5} parent=0
    #allocation2 [shape = 'u8[8192]{0}', space=vmem, size = 0x2000, scoped, tag = 'output window, operand 0']
    #allocation3 [shape = 's32[2]{0}', space=sflag, size = 0x8, scoped, tag = 'scoped memory for _lambda_.5']
    %27 = vsyncpa [#allocation3], 0
    %s28 = scalar_lea.sflag [#allocation3], 1
    %29 = vsyncpa %s28, 0
    loop: start=0, step=1, limit=4
    $region2: #{_lambda_.5} parent=1 // loop_pre_header
      _
    $region3: #{_lambda_.5} parent=1 // loop_header
      %s31 = sphi 0, %s35
      %p32 = scmp.ge.s32.totalorder %s31, 4
      %s41 = sphi 0, %s43
      %s44 = sphi 0, %s41
      %s45 = sphi 0, %s44
      %s61 = sphi 0, %s45
      %s67 = sphi 0, %s69
      %s70 = sphi 0, %s67
      %s71 = sphi 0, %s70
      %s87 = sphi 0, %s71
      %s93 = sphi 0, %s95
      %s96 = sphi 0, %s93
      %s97 = sphi 0, %s96
      %s113 = sphi 0, %s97
      %s119 = sphi 0, %s121
      %s122 = sphi 0, %s119
      %s123 = sphi 0, %s122
      %s139 = sphi 0, %s123
      %s143 = sphi 0, %s143
      %s145 = sphi 0, %s143
      %s146 = sphi 0, %s145
      %s160 = sphi 0, %s146
      %s164 = sphi 0, %s164
      %s166 = sphi 0, %s164
      %s167 = sphi 0, %s166
      %s181 = sphi 0, %s167
      %s185 = sphi 0, %s185
      %s187 = sphi 0, %s185
      %s188 = sphi 0, %s187
      %s202 = sphi 0, %s188
      %s206 = sphi 0, %s206
      %s208 = sphi 0, %s206
      %s209 = sphi 0, %s208
      %s223 = sphi 0, %s209
      %s227 = sphi 0, %s227
      %s229 = sphi 0, %s227
      %s230 = sphi 0, %s229
      %s244 = sphi 0, %s230
      %s248 = sphi 0, %s248
      %s250 = sphi 0, %s248
      %s251 = sphi 0, %s250
      %s265 = sphi 0, %s251
      %s269 = sphi 0, %s269
      %s271 = sphi 0, %s269
      %s272 = sphi 0, %s271
      %s286 = sphi 0, %s272
      %s290 = sphi 0, %s290
      %s292 = sphi 0, %s290
      %s293 = sphi 0, %s292
      %s307 = sphi 0, %s293
      %s311 = sphi 0, %s311
      %s313 = sphi 0, %s311
      %s314 = sphi 0, %s313
      %s328 = sphi 0, %s314
      %s332 = sphi 0, %s332
      %s334 = sphi 0, %s332
      %s335 = sphi 0, %s334
      %s349 = sphi 0, %s335
      %s353 = sphi 0, %s353
      %s355 = sphi 0, %s353
      %s356 = sphi 0, %s355
      %s370 = sphi 0, %s356
      %s374 = sphi 0, %s374
      %s376 = sphi 0, %s374
      %s377 = sphi 0, %s376
      %s391 = sphi 0, %s377
      %s395 = sphi 0, %s395
      %s397 = sphi 0, %s395
      %s398 = sphi 0, %s397
      %s412 = sphi 0, %s398
      %s416 = sphi 0, %s416
      %s418 = sphi 0, %s416
      %s419 = sphi 0, %s418
      %s433 = sphi 0, %s419
      %s437 = sphi 0, %s437
      %s439 = sphi 0, %s437
      %s440 = sphi 0, %s439
      %s454 = sphi 0, %s440
      %s458 = sphi 0, %s458
      %s460 = sphi 0, %s458
      %s461 = sphi 0, %s460
      %s475 = sphi 0, %s461
      %s479 = sphi 0, %s479
      %s481 = sphi 0, %s479
      %s482 = sphi 0, %s481
      %s496 = sphi 0, %s482
      %s500 = sphi 0, %s500
      %s502 = sphi 0, %s500
      %s503 = sphi 0, %s502
      %s517 = sphi 0, %s503
      %s523 = sphi 0, %s525
      %s526 = sphi 0, %s523
      %s527 = sphi 0, %s526
      %s543 = sphi 0, %s527
    $region4: #{_lambda_.5} parent=1 // loop_header_branch
      %34 = sbr.rel (%p32) target = $region8
    $region5: #{_lambda_.5} parent=1 // loop_body
      %s36 = ssub.s32 %s31, 1
      %s37 = ssub.s32 %s31, 2
      %s38 = sadd.s32 %s31, 1
      %s39 = ssub.s32 %s31, %s38
      %p40 = scmp.eq.s32.totalorder %s39, 0
      %s42 = sadd.s32 %s41, 1
      %s43 = scalar_select %p40, %s41, %s42
      %p46 = pneg %p40
      %p47 = scmp.eq.s32.totalorder %s31, 1
      %p48 = por %p46, %p47
      %p49 = scmp.ne.s32.totalorder %s41, %s44
      %p50 = scmp.eq.s32.totalorder %s31, 0
      %p51 = por %p49, %p50
      %p52 = scmp.ne.s32.totalorder %s41, %s44
      %p53 = scmp.eq.s32.totalorder %s36, 1
      %p54 = por %p52, %p53
      %p55 = scmp.ne.s32.totalorder %s44, %s45
      %p56 = scmp.eq.s32.totalorder %s36, 0
      %p57 = por %p55, %p56
      %p58 = scmp.ne.s32.totalorder %s44, %s45
      %p59 = scmp.eq.s32.totalorder %s37, 1
      %p60 = por %p58, %p59
      %p62 = scmp.ne.s32.totalorder %s45, %s61
      %p63 = scmp.eq.s32.totalorder %s37, 0
      %p64 = por %p62, %p63
      %s65 = ssub.s32 %s31, %s38
      %p66 = scmp.eq.s32.totalorder %s65, 0
      %s68 = sadd.s32 %s67, 1
      %s69 = scalar_select %p66, %s67, %s68
      %p72 = pneg %p66
      %p73 = scmp.eq.s32.totalorder %s31, 1
      %p74 = por %p72, %p73
      %p75 = scmp.ne.s32.totalorder %s67, %s70
      %p76 = scmp.eq.s32.totalorder %s31, 0
      %p77 = por %p75, %p76
      %p78 = scmp.ne.s32.totalorder %s67, %s70
      %p79 = scmp.eq.s32.totalorder %s36, 1
      %p80 = por %p78, %p79
      %p81 = scmp.ne.s32.totalorder %s70, %s71
      %p82 = scmp.eq.s32.totalorder %s36, 0
      %p83 = por %p81, %p82
      %p84 = scmp.ne.s32.totalorder %s70, %s71
      %p85 = scmp.eq.s32.totalorder %s37, 1
      %p86 = por %p84, %p85
      %p88 = scmp.ne.s32.totalorder %s71, %s87
      %p89 = scmp.eq.s32.totalorder %s37, 0
      %p90 = por %p88, %p89
      %s91 = ssub.s32 %s31, %s38
      %p92 = scmp.eq.s32.totalorder %s91, 0
      %s94 = sadd.s32 %s93, 1
      %s95 = scalar_select %p92, %s93, %s94
      %p98 = pneg %p92
      %p99 = scmp.eq.s32.totalorder %s31, 1
      %p100 = por %p98, %p99
      %p101 = scmp.ne.s32.totalorder %s93, %s96
      %p102 = scmp.eq.s32.totalorder %s31, 0
      %p103 = por %p101, %p102
      %p104 = scmp.ne.s32.totalorder %s93, %s96
      %p105 = scmp.eq.s32.totalorder %s36, 1
      %p106 = por %p104, %p105
      %p107 = scmp.ne.s32.totalorder %s96, %s97
      %p108 = scmp.eq.s32.totalorder %s36, 0
      %p109 = por %p107, %p108
      %p110 = scmp.ne.s32.totalorder %s96, %s97
      %p111 = scmp.eq.s32.totalorder %s37, 1
      %p112 = por %p110, %p111
      %p114 = scmp.ne.s32.totalorder %s97, %s113
      %p115 = scmp.eq.s32.totalorder %s37, 0
      %p116 = por %p114, %p115
      %s117 = ssub.s32 %s31, %s38
      %p118 = scmp.eq.s32.totalorder %s117, 0
      %s120 = sadd.s32 %s119, 1
      %s121 = scalar_select %p118, %s119, %s120
      %p124 = pneg %p118
      %p125 = scmp.eq.s32.totalorder %s31, 1
      %p126 = por %p124, %p125
      %p127 = scmp.ne.s32.totalorder %s119, %s122
      %p128 = scmp.eq.s32.totalorder %s31, 0
      %p129 = por %p127, %p128
      %p130 = scmp.ne.s32.totalorder %s119, %s122
      %p131 = scmp.eq.s32.totalorder %s36, 1
      %p132 = por %p130, %p131
      %p133 = scmp.ne.s32.totalorder %s122, %s123
      %p134 = scmp.eq.s32.totalorder %s36, 0
      %p135 = por %p133, %p134
      %p136 = scmp.ne.s32.totalorder %s122, %s123
      %p137 = scmp.eq.s32.totalorder %s37, 1
      %p138 = por %p136, %p137
      %p140 = scmp.ne.s32.totalorder %s123, %s139
      %p141 = scmp.eq.s32.totalorder %s37, 0
      %p142 = por %p140, %p141
      %s144 = sadd.s32 %s143, 1
      %p147 = scmp.eq.s32.totalorder %s31, 1
      %p148 = scmp.ne.s32.totalorder %s143, %s145
      %p149 = scmp.eq.s32.totalorder %s31, 0
      %p150 = por %p148, %p149
      %p151 = scmp.ne.s32.totalorder %s143, %s145
      %p152 = scmp.eq.s32.totalorder %s36, 1
      %p153 = por %p151, %p152
      %p154 = scmp.ne.s32.totalorder %s145, %s146
      %p155 = scmp.eq.s32.totalorder %s36, 0
      %p156 = por %p154, %p155
      %p157 = scmp.ne.s32.totalorder %s145, %s146
      %p158 = scmp.eq.s32.totalorder %s37, 1
      %p159 = por %p157, %p158
      %p161 = scmp.ne.s32.totalorder %s146, %s160
      %p162 = scmp.eq.s32.totalorder %s37, 0
      %p163 = por %p161, %p162
      %s165 = sadd.s32 %s164, 1
      %p168 = scmp.eq.s32.totalorder %s31, 1
      %p169 = scmp.ne.s32.totalorder %s164, %s166
      %p170 = scmp.eq.s32.totalorder %s31, 0
      %p171 = por %p169, %p170
      %p172 = scmp.ne.s32.totalorder %s164, %s166
      %p173 = scmp.eq.s32.totalorder %s36, 1
      %p174 = por %p172, %p173
      %p175 = scmp.ne.s32.totalorder %s166, %s167
      %p176 = scmp.eq.s32.totalorder %s36, 0
      %p177 = por %p175, %p176
      %p178 = scmp.ne.s32.totalorder %s166, %s167
      %p179 = scmp.eq.s32.totalorder %s37, 1
      %p180 = por %p178, %p179
      %p182 = scmp.ne.s32.totalorder %s167, %s181
      %p183 = scmp.eq.s32.totalorder %s37, 0
      %p184 = por %p182, %p183
      %s186 = sadd.s32 %s185, 1
      %p189 = scmp.eq.s32.totalorder %s31, 1
      %p190 = scmp.ne.s32.totalorder %s185, %s187
      %p191 = scmp.eq.s32.totalorder %s31, 0
      %p192 = por %p190, %p191
      %p193 = scmp.ne.s32.totalorder %s185, %s187
      %p194 = scmp.eq.s32.totalorder %s36, 1
      %p195 = por %p193, %p194
      %p196 = scmp.ne.s32.totalorder %s187, %s188
      %p197 = scmp.eq.s32.totalorder %s36, 0
      %p198 = por %p196, %p197
      %p199 = scmp.ne.s32.totalorder %s187, %s188
      %p200 = scmp.eq.s32.totalorder %s37, 1
      %p201 = por %p199, %p200
      %p203 = scmp.ne.s32.totalorder %s188, %s202
      %p204 = scmp.eq.s32.totalorder %s37, 0
      %p205 = por %p203, %p204
      %s207 = sadd.s32 %s206, 1
      %p210 = scmp.eq.s32.totalorder %s31, 1
      %p211 = scmp.ne.s32.totalorder %s206, %s208
      %p212 = scmp.eq.s32.totalorder %s31, 0
      %p213 = por %p211, %p212
      %p214 = scmp.ne.s32.totalorder %s206, %s208
      %p215 = scmp.eq.s32.totalorder %s36, 1
      %p216 = por %p214, %p215
      %p217 = scmp.ne.s32.totalorder %s208, %s209
      %p218 = scmp.eq.s32.totalorder %s36, 0
      %p219 = por %p217, %p218
      %p220 = scmp.ne.s32.totalorder %s208, %s209
      %p221 = scmp.eq.s32.totalorder %s37, 1
      %p222 = por %p220, %p221
      %p224 = scmp.ne.s32.totalorder %s209, %s223
      %p225 = scmp.eq.s32.totalorder %s37, 0
      %p226 = por %p224, %p225
      %s228 = sadd.s32 %s227, 1
      %p231 = scmp.eq.s32.totalorder %s31, 1
      %p232 = scmp.ne.s32.totalorder %s227, %s229
      %p233 = scmp.eq.s32.totalorder %s31, 0
      %p234 = por %p232, %p233
      %p235 = scmp.ne.s32.totalorder %s227, %s229
      %p236 = scmp.eq.s32.totalorder %s36, 1
      %p237 = por %p235, %p236
      %p238 = scmp.ne.s32.totalorder %s229, %s230
      %p239 = scmp.eq.s32.totalorder %s36, 0
      %p240 = por %p238, %p239
      %p241 = scmp.ne.s32.totalorder %s229, %s230
      %p242 = scmp.eq.s32.totalorder %s37, 1
      %p243 = por %p241, %p242
      %p245 = scmp.ne.s32.totalorder %s230, %s244
      %p246 = scmp.eq.s32.totalorder %s37, 0
      %p247 = por %p245, %p246
      %s249 = sadd.s32 %s248, 1
      %p252 = scmp.eq.s32.totalorder %s31, 1
      %p253 = scmp.ne.s32.totalorder %s248, %s250
      %p254 = scmp.eq.s32.totalorder %s31, 0
      %p255 = por %p253, %p254
      %p256 = scmp.ne.s32.totalorder %s248, %s250
      %p257 = scmp.eq.s32.totalorder %s36, 1
      %p258 = por %p256, %p257
      %p259 = scmp.ne.s32.totalorder %s250, %s251
      %p260 = scmp.eq.s32.totalorder %s36, 0
      %p261 = por %p259, %p260
      %p262 = scmp.ne.s32.totalorder %s250, %s251
      %p263 = scmp.eq.s32.totalorder %s37, 1
      %p264 = por %p262, %p263
      %p266 = scmp.ne.s32.totalorder %s251, %s265
      %p267 = scmp.eq.s32.totalorder %s37, 0
      %p268 = por %p266, %p267
      %s270 = sadd.s32 %s269, 1
      %p273 = scmp.eq.s32.totalorder %s31, 1
      %p274 = scmp.ne.s32.totalorder %s269, %s271
      %p275 = scmp.eq.s32.totalorder %s31, 0
      %p276 = por %p274, %p275
      %p277 = scmp.ne.s32.totalorder %s269, %s271
      %p278 = scmp.eq.s32.totalorder %s36, 1
      %p279 = por %p277, %p278
      %p280 = scmp.ne.s32.totalorder %s271, %s272
      %p281 = scmp.eq.s32.totalorder %s36, 0
      %p282 = por %p280, %p281
      %p283 = scmp.ne.s32.totalorder %s271, %s272
      %p284 = scmp.eq.s32.totalorder %s37, 1
      %p285 = por %p283, %p284
      %p287 = scmp.ne.s32.totalorder %s272, %s286
      %p288 = scmp.eq.s32.totalorder %s37, 0
      %p289 = por %p287, %p288
      %s291 = sadd.s32 %s290, 1
      %p294 = scmp.eq.s32.totalorder %s31, 1
      %p295 = scmp.ne.s32.totalorder %s290, %s292
      %p296 = scmp.eq.s32.totalorder %s31, 0
      %p297 = por %p295, %p296
      %p298 = scmp.ne.s32.totalorder %s290, %s292
      %p299 = scmp.eq.s32.totalorder %s36, 1
      %p300 = por %p298, %p299
      %p301 = scmp.ne.s32.totalorder %s292, %s293
      %p302 = scmp.eq.s32.totalorder %s36, 0
      %p303 = por %p301, %p302
      %p304 = scmp.ne.s32.totalorder %s292, %s293
      %p305 = scmp.eq.s32.totalorder %s37, 1
      %p306 = por %p304, %p305
      %p308 = scmp.ne.s32.totalorder %s293, %s307
      %p309 = scmp.eq.s32.totalorder %s37, 0
      %p310 = por %p308, %p309
      %s312 = sadd.s32 %s311, 1
      %p315 = scmp.eq.s32.totalorder %s31, 1
      %p316 = scmp.ne.s32.totalorder %s311, %s313
      %p317 = scmp.eq.s32.totalorder %s31, 0
      %p318 = por %p316, %p317
      %p319 = scmp.ne.s32.totalorder %s311, %s313
      %p320 = scmp.eq.s32.totalorder %s36, 1
      %p321 = por %p319, %p320
      %p322 = scmp.ne.s32.totalorder %s313, %s314
      %p323 = scmp.eq.s32.totalorder %s36, 0
      %p324 = por %p322, %p323
      %p325 = scmp.ne.s32.totalorder %s313, %s314
      %p326 = scmp.eq.s32.totalorder %s37, 1
      %p327 = por %p325, %p326
      %p329 = scmp.ne.s32.totalorder %s314, %s328
      %p330 = scmp.eq.s32.totalorder %s37, 0
      %p331 = por %p329, %p330
      %s333 = sadd.s32 %s332, 1
      %p336 = scmp.eq.s32.totalorder %s31, 1
      %p337 = scmp.ne.s32.totalorder %s332, %s334
      %p338 = scmp.eq.s32.totalorder %s31, 0
      %p339 = por %p337, %p338
      %p340 = scmp.ne.s32.totalorder %s332, %s334
      %p341 = scmp.eq.s32.totalorder %s36, 1
      %p342 = por %p340, %p341
      %p343 = scmp.ne.s32.totalorder %s334, %s335
      %p344 = scmp.eq.s32.totalorder %s36, 0
      %p345 = por %p343, %p344
      %p346 = scmp.ne.s32.totalorder %s334, %s335
      %p347 = scmp.eq.s32.totalorder %s37, 1
      %p348 = por %p346, %p347
      %p350 = scmp.ne.s32.totalorder %s335, %s349
      %p351 = scmp.eq.s32.totalorder %s37, 0
      %p352 = por %p350, %p351
      %s354 = sadd.s32 %s353, 1
      %p357 = scmp.eq.s32.totalorder %s31, 1
      %p358 = scmp.ne.s32.totalorder %s353, %s355
      %p359 = scmp.eq.s32.totalorder %s31, 0
      %p360 = por %p358, %p359
      %p361 = scmp.ne.s32.totalorder %s353, %s355
      %p362 = scmp.eq.s32.totalorder %s36, 1
      %p363 = por %p361, %p362
      %p364 = scmp.ne.s32.totalorder %s355, %s356
      %p365 = scmp.eq.s32.totalorder %s36, 0
      %p366 = por %p364, %p365
      %p367 = scmp.ne.s32.totalorder %s355, %s356
      %p368 = scmp.eq.s32.totalorder %s37, 1
      %p369 = por %p367, %p368
      %p371 = scmp.ne.s32.totalorder %s356, %s370
      %p372 = scmp.eq.s32.totalorder %s37, 0
      %p373 = por %p371, %p372
      %s375 = sadd.s32 %s374, 1
      %p378 = scmp.eq.s32.totalorder %s31, 1
      %p379 = scmp.ne.s32.totalorder %s374, %s376
      %p380 = scmp.eq.s32.totalorder %s31, 0
      %p381 = por %p379, %p380
      %p382 = scmp.ne.s32.totalorder %s374, %s376
      %p383 = scmp.eq.s32.totalorder %s36, 1
      %p384 = por %p382, %p383
      %p385 = scmp.ne.s32.totalorder %s376, %s377
      %p386 = scmp.eq.s32.totalorder %s36, 0
      %p387 = por %p385, %p386
      %p388 = scmp.ne.s32.totalorder %s376, %s377
      %p389 = scmp.eq.s32.totalorder %s37, 1
      %p390 = por %p388, %p389
      %p392 = scmp.ne.s32.totalorder %s377, %s391
      %p393 = scmp.eq.s32.totalorder %s37, 0
      %p394 = por %p392, %p393
      %s396 = sadd.s32 %s395, 1
      %p399 = scmp.eq.s32.totalorder %s31, 1
      %p400 = scmp.ne.s32.totalorder %s395, %s397
      %p401 = scmp.eq.s32.totalorder %s31, 0
      %p402 = por %p400, %p401
      %p403 = scmp.ne.s32.totalorder %s395, %s397
      %p404 = scmp.eq.s32.totalorder %s36, 1
      %p405 = por %p403, %p404
      %p406 = scmp.ne.s32.totalorder %s397, %s398
      %p407 = scmp.eq.s32.totalorder %s36, 0
      %p408 = por %p406, %p407
      %p409 = scmp.ne.s32.totalorder %s397, %s398
      %p410 = scmp.eq.s32.totalorder %s37, 1
      %p411 = por %p409, %p410
      %p413 = scmp.ne.s32.totalorder %s398, %s412
      %p414 = scmp.eq.s32.totalorder %s37, 0
      %p415 = por %p413, %p414
      %s417 = sadd.s32 %s416, 1
      %p420 = scmp.eq.s32.totalorder %s31, 1
      %p421 = scmp.ne.s32.totalorder %s416, %s418
      %p422 = scmp.eq.s32.totalorder %s31, 0
      %p423 = por %p421, %p422
      %p424 = scmp.ne.s32.totalorder %s416, %s418
      %p425 = scmp.eq.s32.totalorder %s36, 1
      %p426 = por %p424, %p425
      %p427 = scmp.ne.s32.totalorder %s418, %s419
      %p428 = scmp.eq.s32.totalorder %s36, 0
      %p429 = por %p427, %p428
      %p430 = scmp.ne.s32.totalorder %s418, %s419
      %p431 = scmp.eq.s32.totalorder %s37, 1
      %p432 = por %p430, %p431
      %p434 = scmp.ne.s32.totalorder %s419, %s433
      %p435 = scmp.eq.s32.totalorder %s37, 0
      %p436 = por %p434, %p435
      %s438 = sadd.s32 %s437, 1
      %p441 = scmp.eq.s32.totalorder %s31, 1
      %p442 = scmp.ne.s32.totalorder %s437, %s439
      %p443 = scmp.eq.s32.totalorder %s31, 0
      %p444 = por %p442, %p443
      %p445 = scmp.ne.s32.totalorder %s437, %s439
      %p446 = scmp.eq.s32.totalorder %s36, 1
      %p447 = por %p445, %p446
      %p448 = scmp.ne.s32.totalorder %s439, %s440
      %p449 = scmp.eq.s32.totalorder %s36, 0
      %p450 = por %p448, %p449
      %p451 = scmp.ne.s32.totalorder %s439, %s440
      %p452 = scmp.eq.s32.totalorder %s37, 1
      %p453 = por %p451, %p452
      %p455 = scmp.ne.s32.totalorder %s440, %s454
      %p456 = scmp.eq.s32.totalorder %s37, 0
      %p457 = por %p455, %p456
      %s459 = sadd.s32 %s458, 1
      %p462 = scmp.eq.s32.totalorder %s31, 1
      %p463 = scmp.ne.s32.totalorder %s458, %s460
      %p464 = scmp.eq.s32.totalorder %s31, 0
      %p465 = por %p463, %p464
      %p466 = scmp.ne.s32.totalorder %s458, %s460
      %p467 = scmp.eq.s32.totalorder %s36, 1
      %p468 = por %p466, %p467
      %p469 = scmp.ne.s32.totalorder %s460, %s461
      %p470 = scmp.eq.s32.totalorder %s36, 0
      %p471 = por %p469, %p470
      %p472 = scmp.ne.s32.totalorder %s460, %s461
      %p473 = scmp.eq.s32.totalorder %s37, 1
      %p474 = por %p472, %p473
      %p476 = scmp.ne.s32.totalorder %s461, %s475
      %p477 = scmp.eq.s32.totalorder %s37, 0
      %p478 = por %p476, %p477
      %s480 = sadd.s32 %s479, 1
      %p483 = scmp.eq.s32.totalorder %s31, 1
      %p484 = scmp.ne.s32.totalorder %s479, %s481
      %p485 = scmp.eq.s32.totalorder %s31, 0
      %p486 = por %p484, %p485
      %p487 = scmp.ne.s32.totalorder %s479, %s481
      %p488 = scmp.eq.s32.totalorder %s36, 1
      %p489 = por %p487, %p488
      %p490 = scmp.ne.s32.totalorder %s481, %s482
      %p491 = scmp.eq.s32.totalorder %s36, 0
      %p492 = por %p490, %p491
      %p493 = scmp.ne.s32.totalorder %s481, %s482
      %p494 = scmp.eq.s32.totalorder %s37, 1
      %p495 = por %p493, %p494
      %p497 = scmp.ne.s32.totalorder %s482, %s496
      %p498 = scmp.eq.s32.totalorder %s37, 0
      %p499 = por %p497, %p498
      %s501 = sadd.s32 %s500, 1
      %p504 = scmp.eq.s32.totalorder %s31, 1
      %p505 = scmp.ne.s32.totalorder %s500, %s502
      %p506 = scmp.eq.s32.totalorder %s31, 0
      %p507 = por %p505, %p506
      %p508 = scmp.ne.s32.totalorder %s500, %s502
      %p509 = scmp.eq.s32.totalorder %s36, 1
      %p510 = por %p508, %p509
      %p511 = scmp.ne.s32.totalorder %s502, %s503
      %p512 = scmp.eq.s32.totalorder %s36, 0
      %p513 = por %p511, %p512
      %p514 = scmp.ne.s32.totalorder %s502, %s503
      %p515 = scmp.eq.s32.totalorder %s37, 1
      %p516 = por %p514, %p515
      %p518 = scmp.ne.s32.totalorder %s503, %s517
      %p519 = scmp.eq.s32.totalorder %s37, 0
      %p520 = por %p518, %p519
      %s521 = ssub.s32 %s31, %s38
      %p522 = scmp.eq.s32.totalorder %s521, 0
      %s524 = sadd.s32 %s523, 1
      %s525 = scalar_select %p522, %s523, %s524
      %p528 = pneg %p522
      %p529 = scmp.eq.s32.totalorder %s31, 1
      %p530 = por %p528, %p529
      %p531 = scmp.ne.s32.totalorder %s523, %s526
      %p532 = scmp.eq.s32.totalorder %s31, 0
      %p533 = por %p531, %p532
      %p534 = scmp.ne.s32.totalorder %s523, %s526
      %p535 = scmp.eq.s32.totalorder %s36, 1
      %p536 = por %p534, %p535
      %p537 = scmp.ne.s32.totalorder %s526, %s527
      %p538 = scmp.eq.s32.totalorder %s36, 0
      %p539 = por %p537, %p538
      %p540 = scmp.ne.s32.totalorder %s526, %s527
      %p541 = scmp.eq.s32.totalorder %s37, 1
      %p542 = por %p540, %p541
      %p544 = scmp.ne.s32.totalorder %s527, %s543
      %p545 = scmp.eq.s32.totalorder %s37, 0
      %p546 = por %p544, %p545
      %p547 = scmp.le.s32.totalorder 1, %s31
      %p548 = scmp.lt.s32.totalorder %s31, 3
      %p549 = pnand %p547, %p548
      %p550 = pneg %p549
      // Predicated region
      $region9: #{_lambda_.5} parent=5 // pred_check
        _
      $region10: #{_lambda_.5} parent=5 // pred_check_branch
        %552 = sbr.rel (%p549) target = $region12
      $region11: #{_lambda_.5} parent=5 // pred_region
        %s553 = ssub.s32 %s31, 1
        // Predicated region
        $region13: #{_lambda_.5} parent=11 // pred_check
          %p554 = pneg %p156
        $region14: #{_lambda_.5} parent=11 // pred_check_branch
          %556 = sbr.rel (%p554) target = $region16
        $region15: #{_lambda_.5} parent=11 // pred_region
          _
        $region16: #{_lambda_.5} parent=11 // pred_fallthru
          _
        // Predicated region
        $region17: #{_lambda_.5} parent=11 // pred_check
          %p557 = pneg %p177
        $region18: #{_lambda_.5} parent=11 // pred_check_branch
          %559 = sbr.rel (%p557) target = $region20
        $region19: #{_lambda_.5} parent=11 // pred_region
          _
        $region20: #{_lambda_.5} parent=11 // pred_fallthru
          _
        // Predicated region
        $region21: #{_lambda_.5} parent=11 // pred_check
          %p560 = pneg %p198
        $region22: #{_lambda_.5} parent=11 // pred_check_branch
          %562 = sbr.rel (%p560) target = $region24
        $region23: #{_lambda_.5} parent=11 // pred_region
          _
        $region24: #{_lambda_.5} parent=11 // pred_fallthru
          _
        // Predicated region
        $region25: #{_lambda_.5} parent=11 // pred_check
          %p563 = pneg %p219
        $region26: #{_lambda_.5} parent=11 // pred_check_branch
          %565 = sbr.rel (%p563) target = $region28
        $region27: #{_lambda_.5} parent=11 // pred_region
          _
        $region28: #{_lambda_.5} parent=11 // pred_fallthru
          _
        // Predicated region
        $region29: #{_lambda_.5} parent=11 // pred_check
          %p566 = pneg %p240
        $region30: #{_lambda_.5} parent=11 // pred_check_branch
          %568 = sbr.rel (%p566) target = $region32
        $region31: #{_lambda_.5} parent=11 // pred_region
          _
        $region32: #{_lambda_.5} parent=11 // pred_fallthru
          _
        // Predicated region
        $region33: #{_lambda_.5} parent=11 // pred_check
          %p569 = pneg %p261
        $region34: #{_lambda_.5} parent=11 // pred_check_branch
          %571 = sbr.rel (%p569) target = $region36
        $region35: #{_lambda_.5} parent=11 // pred_region
          _
        $region36: #{_lambda_.5} parent=11 // pred_fallthru
          _
        // Predicated region
        $region37: #{_lambda_.5} parent=11 // pred_check
          %p572 = pneg %p282
        $region38: #{_lambda_.5} parent=11 // pred_check_branch
          %574 = sbr.rel (%p572) target = $region40
        $region39: #{_lambda_.5} parent=11 // pred_region
          _
        $region40: #{_lambda_.5} parent=11 // pred_fallthru
          _
        // Predicated region
        $region41: #{_lambda_.5} parent=11 // pred_check
          %p575 = pneg %p303
        $region42: #{_lambda_.5} parent=11 // pred_check_branch
          %577 = sbr.rel (%p575) target = $region44
        $region43: #{_lambda_.5} parent=11 // pred_region
          _
        $region44: #{_lambda_.5} parent=11 // pred_fallthru
          _
        // Predicated region
        $region45: #{_lambda_.5} parent=11 // pred_check
          %p578 = pneg %p324
        $region46: #{_lambda_.5} parent=11 // pred_check_branch
          %580 = sbr.rel (%p578) target = $region48
        $region47: #{_lambda_.5} parent=11 // pred_region
          _
        $region48: #{_lambda_.5} parent=11 // pred_fallthru
          _
        // Predicated region
        $region49: #{_lambda_.5} parent=11 // pred_check
          %p581 = pneg %p345
        $region50: #{_lambda_.5} parent=11 // pred_check_branch
          %583 = sbr.rel (%p581) target = $region52
        $region51: #{_lambda_.5} parent=11 // pred_region
          _
        $region52: #{_lambda_.5} parent=11 // pred_fallthru
          _
        // Predicated region
        $region53: #{_lambda_.5} parent=11 // pred_check
          %p584 = pneg %p366
        $region54: #{_lambda_.5} parent=11 // pred_check_branch
          %586 = sbr.rel (%p584) target = $region56
        $region55: #{_lambda_.5} parent=11 // pred_region
          _
        $region56: #{_lambda_.5} parent=11 // pred_fallthru
          _
        // Predicated region
        $region57: #{_lambda_.5} parent=11 // pred_check
          %p587 = pneg %p387
        $region58: #{_lambda_.5} parent=11 // pred_check_branch
          %589 = sbr.rel (%p587) target = $region60
        $region59: #{_lambda_.5} parent=11 // pred_region
          _
        $region60: #{_lambda_.5} parent=11 // pred_fallthru
          _
        // Predicated region
        $region61: #{_lambda_.5} parent=11 // pred_check
          %p590 = pneg %p408
        $region62: #{_lambda_.5} parent=11 // pred_check_branch
          %592 = sbr.rel (%p590) target = $region64
        $region63: #{_lambda_.5} parent=11 // pred_region
          _
        $region64: #{_lambda_.5} parent=11 // pred_fallthru
          _
        // Predicated region
        $region65: #{_lambda_.5} parent=11 // pred_check
          %p593 = pneg %p429
        $region66: #{_lambda_.5} parent=11 // pred_check_branch
          %595 = sbr.rel (%p593) target = $region68
        $region67: #{_lambda_.5} parent=11 // pred_region
          _
        $region68: #{_lambda_.5} parent=11 // pred_fallthru
          _
        // Predicated region
        $region69: #{_lambda_.5} parent=11 // pred_check
          %p596 = pneg %p450
        $region70: #{_lambda_.5} parent=11 // pred_check_branch
          %598 = sbr.rel (%p596) target = $region72
        $region71: #{_lambda_.5} parent=11 // pred_region
          _
        $region72: #{_lambda_.5} parent=11 // pred_fallthru
          _
        // Predicated region
        $region73: #{_lambda_.5} parent=11 // pred_check
          %p599 = pneg %p471
        $region74: #{_lambda_.5} parent=11 // pred_check_branch
          %601 = sbr.rel (%p599) target = $region76
        $region75: #{_lambda_.5} parent=11 // pred_region
          _
        $region76: #{_lambda_.5} parent=11 // pred_fallthru
          _
        // Predicated region
        $region77: #{_lambda_.5} parent=11 // pred_check
          %p602 = pneg %p492
        $region78: #{_lambda_.5} parent=11 // pred_check_branch
          %604 = sbr.rel (%p602) target = $region80
        $region79: #{_lambda_.5} parent=11 // pred_region
          _
        $region80: #{_lambda_.5} parent=11 // pred_fallthru
          _
        // Predicated region
        $region81: #{_lambda_.5} parent=11 // pred_check
          %p605 = pneg %p513
        $region82: #{_lambda_.5} parent=11 // pred_check_branch
          %607 = sbr.rel (%p605) target = $region84
        $region83: #{_lambda_.5} parent=11 // pred_region
          _
        $region84: #{_lambda_.5} parent=11 // pred_fallthru
          _
      $region12: #{_lambda_.5} parent=5 // pred_fallthru
        _
      %p608 = scmp.lt.s32.totalorder %s31, 2
      // Predicated region
      $region85: #{_lambda_.5} parent=5 // pred_check
        %p609 = pneg %p608
      $region86: #{_lambda_.5} parent=5 // pred_check_branch
        %611 = sbr.rel (%p609) target = $region88
      $region87: #{_lambda_.5} parent=5 // pred_region
        // Predicated region
        $region89: #{_lambda_.5} parent=87 // pred_check
          %p612 = pneg %p51
        $region90: #{_lambda_.5} parent=87 // pred_check_branch
          %614 = sbr.rel (%p612) target = $region92
        $region91: #{_lambda_.5} parent=87 // pred_region
          %p615 = scmp.lt.s32.totalorder %s31, 1
          %s616 = scalar_select %p615, %s31, 1
          %s617 = smul.addr %s616, 8
          %s618 = scalar_lea.vmem %s0, %s617
        $region92: #{_lambda_.5} parent=87 // pred_fallthru
          _
        // Predicated region
        $region93: #{_lambda_.5} parent=87 // pred_check
          %p619 = pneg %p77
        $region94: #{_lambda_.5} parent=87 // pred_check_branch
          %621 = sbr.rel (%p619) target = $region96
        $region95: #{_lambda_.5} parent=87 // pred_region
          %p622 = scmp.lt.s32.totalorder %s31, 1
          %s623 = scalar_select %p622, %s31, 1
          %s624 = smul.addr %s623, 8
          %s625 = scalar_lea.vmem %s1, %s624
        $region96: #{_lambda_.5} parent=87 // pred_fallthru
          _
        // Predicated region
        $region97: #{_lambda_.5} parent=87 // pred_check
          %p626 = pneg %p103
        $region98: #{_lambda_.5} parent=87 // pred_check_branch
          %628 = sbr.rel (%p626) target = $region100
        $region99: #{_lambda_.5} parent=87 // pred_region
          %p629 = scmp.lt.s32.totalorder %s31, 1
          %s630 = scalar_select %p629, %s31, 1
          %s631 = smul.addr %s630, 8
          %s632 = scalar_lea.vmem %s2, %s631
        $region100: #{_lambda_.5} parent=87 // pred_fallthru
          _
        // Predicated region
        $region101: #{_lambda_.5} parent=87 // pred_check
          %p633 = pneg %p129
        $region102: #{_lambda_.5} parent=87 // pred_check_branch
          %635 = sbr.rel (%p633) target = $region104
        $region103: #{_lambda_.5} parent=87 // pred_region
          %p636 = scmp.lt.s32.totalorder %s31, 1
          %s637 = scalar_select %p636, %s31, 1
          %s638 = scalar_lea.vmem %s3, %s637
        $region104: #{_lambda_.5} parent=87 // pred_fallthru
          _
      $region88: #{_lambda_.5} parent=5 // pred_fallthru
        _
      %p639 = scmp.le.s32.totalorder 1, %s31
      %p640 = scmp.lt.s32.totalorder %s31, 3
      %p641 = pnand %p639, %p640
      %p642 = pneg %p641
      // Predicated region
      $region105: #{_lambda_.5} parent=5 // pred_check
        _
      $region106: #{_lambda_.5} parent=5 // pred_check_branch
        %644 = sbr.rel (%p641) target = $region108
      $region107: #{_lambda_.5} parent=5 // pred_region
        %s645 = ssub.s32 %s31, 1
        %p646 = scmp.lt.s32.totalorder %s36, 1
        %s647 = scalar_select %p646, %s36, 1
        %s648 = smul.addr %s647, 8
        %s649 = scalar_lea.vmem %s0, %s648
        %p650 = pneg %p57
        %p651 = pneg %p54
        %p652 = scmp.lt.s32.totalorder %s36, 1
        %s653 = scalar_select %p652, %s36, 1
        %s654 = smul.addr %s653, 8
        %s655 = scalar_lea.vmem %s1, %s654
        %p656 = pneg %p83
        %p657 = pneg %p80
        %p658 = scmp.lt.s32.totalorder %s36, 1
        %s659 = scalar_select %p658, %s36, 1
        %s660 = smul.addr %s659, 8
        %s661 = scalar_lea.vmem %s2, %s660
        %p662 = pneg %p109
        %p663 = pneg %p106
        %p664 = scmp.lt.s32.totalorder %s36, 1
        %s665 = scalar_select %p664, %s36, 1
        %s666 = scalar_lea.vmem %s3, %s665
        %p667 = pneg %p135
        %p668 = pneg %p132
        %p669 = pneg %p156
        %p670 = pneg %p153
        %p671 = pneg %p177
        %p672 = pneg %p174
        %p673 = pneg %p198
        %p674 = pneg %p195
        %p675 = pneg %p219
        %p676 = pneg %p216
        %p677 = pneg %p240
        %p678 = pneg %p237
        %p679 = pneg %p261
        %p680 = pneg %p258
        %p681 = pneg %p282
        %p682 = pneg %p279
        %p683 = pneg %p303
        %p684 = pneg %p300
        %p685 = pneg %p324
        %p686 = pneg %p321
        %p687 = pneg %p345
        %p688 = pneg %p342
        %p689 = pneg %p366
        %p690 = pneg %p363
        %p691 = pneg %p387
        %p692 = pneg %p384
        %p693 = pneg %p408
        %p694 = pneg %p405
        %p695 = pneg %p429
        %p696 = pneg %p426
        %p697 = pneg %p450
        %p698 = pneg %p447
        %p699 = pneg %p471
        %p700 = pneg %p468
        %p701 = pneg %p492
        %p702 = pneg %p489
        %p703 = pneg %p513
        %p704 = pneg %p510
        %p705 = pneg %p539
        %p706 = pneg %p536
        %s707 = sand.u32 %s526, 1
        %s708 = scalar_lea.sflag [#allocation3], %s707
        %s709 = sand.u32 %s526, 1
        %s710 = smul.addr %s709, 8
        %s711 = scalar_lea.vmem [#allocation2], %s710
        %p712 = scmp.lt.s32.totalorder %s36, 1
        %s713 = scalar_select %p712, %s36, 1
        %s714 = smul.addr %s713, 8
        %s715 = scalar_lea.vmem %s0, %s714
        %p716 = scmp.lt.s32.totalorder %s36, 1
        %s717 = scalar_select %p716, %s36, 1
        %s718 = smul.addr %s717, 8
        %s719 = scalar_lea.vmem %s1, %s718
        %p720 = scmp.lt.s32.totalorder %s36, 1
        %s721 = scalar_select %p720, %s36, 1
        %s722 = smul.addr %s721, 8
        %s723 = scalar_lea.vmem %s2, %s722
        %p724 = scmp.lt.s32.totalorder %s36, 1
        %s725 = scalar_select %p724, %s36, 1
        %s726 = scalar_lea.vmem %s3, %s725
        %v728 = vld [vmem:[%s715] sm:$0xff]
        %v729 = vld [vmem:[%s719] sm:$0xff]
        %v730 = vld [vmem:[%s723] sm:$0xff]
        %v731 = vld [vmem:[%s726] sm:$0x1]
        %v732 = vpack.c.bf16 %v728, %v728
        %v733 = vld [vmem:[%s4] sm:$0xf]
        %v734 = vld [vmem:[%s4 + $0x4] sm:$0xf]
        %v735 = vld [vmem:[%s4 + $0x8] sm:$0xf]
        %v736 = vld [vmem:[%s4 + $0xc] sm:$0xf]
        %v741 = vunpack.c.l.b16 %v733
        %v742 = vunpack.c.l.b16 %v734
        %v743 = vunpack.c.l.b16 %v735
        %v744 = vunpack.c.l.b16 %v736
        %v745 = vpack.c.b16 %v742, %v741
        %v746 = vpack.c.b16 %v744, %v743
        %vm749 = vcmask 261120
        %v751 = vsel %vm749, %v732, 0
        %753 = vmatprep.subr.bf16.mxu0 0
        %754 = vmatpush1.bf16.msra.mxu0 0
        %755 = vmatprep.subr.bf16.mxu0 0
        %756 = vmatpush1.bf16.msra.mxu0 0
        %757 = vmatprep.subr.bf16.mxu0 0
        %758 = vmatpush1.bf16.msra.mxu0 0
        %759 = vmatprep.subr.bf16.mxu0 0
        %760 = vmatpush1.bf16.msra.mxu0 0
        %761 = vmatprep.subr.bf16.mxu0 0
        %762 = vmatpush1.bf16.msra.mxu0 0
        %763 = vmatprep.subr.bf16.mxu0 0
        %764 = vmatpush1.bf16.msra.mxu0 0
        %765 = vmatprep.subr.bf16.mxu0 0
        %766 = vmatpush1.bf16.msra.mxu0 %v746
        %767 = vmatprep.subr.bf16.mxu0 0
        %768 = vmatpush1.bf16.msra.mxu0 %v745
        %769 = vmatprep.subr.bf16.mxu0 0
        %770 = vmatpush2.bf16.msra.mxu0 0
        %771 = vmatprep.subr.bf16.mxu0 0
        %772 = vmatpush2.bf16.msra.mxu0 0
        %773 = vmatprep.subr.bf16.mxu0 0
        %774 = vmatpush2.bf16.msra.mxu0 0
        %775 = vmatprep.subr.bf16.mxu0 0
        %776 = vmatpush2.bf16.msra.mxu0 0
        %777 = vmatprep.subr.bf16.mxu0 0
        %778 = vmatpush2.bf16.msra.mxu0 0
        %779 = vmatprep.subr.bf16.mxu0 0
        %780 = vmatpush2.bf16.msra.mxu0 0
        %781 = vmatprep.subr.bf16.mxu0 0
        %782 = vmatpush2.bf16.msra.mxu0 0
        %783 = vmatprep.subr.bf16.mxu0 0
        %784 = vmatpush2.bf16.msra.mxu0 0
        %785 = vmatprep.mubr.bf16.mxu0 0
        %786 = vmatmul.mubr.bf16.gmra.mxu0 %v751
        %v787 = vpop.f32.mrf.mxu0
        %v788 = vadd.f32 0.0, %v787
        %v789 = vpop.f32.mrf.mxu0
        %v790 = vpop.f32.mrf.mxu0
        %v791 = vpop.f32.mrf.mxu0
        %792 = vdwg.mxu0
        %v793 = vmul.f32 %v788, 0.25
        %v794 = vld [vmem:[%s5] sm:$0xf]
        %v795 = vld [vmem:[%s5 + $0x4] sm:$0xf]
        %v796 = vld [vmem:[%s5 + $0x8] sm:$0xf]
        %v797 = vld [vmem:[%s5 + $0xc] sm:$0xf]
        %v802 = vunpack.c.l.b16 %v794
        %v803 = vunpack.c.l.b16 %v795
        %v804 = vunpack.c.l.b16 %v796
        %v805 = vunpack.c.l.b16 %v797
        %v806 = vpack.c.b16 %v803, %v802
        %v807 = vpack.c.b16 %v805, %v804
        %810 = vmatprep.subr.bf16.mxu0 0
        %811 = vmatpush1.bf16.msra.mxu0 0
        %812 = vmatprep.subr.bf16.mxu0 0
        %813 = vmatpush1.bf16.msra.mxu0 0
        %814 = vmatprep.subr.bf16.mxu0 0
        %815 = vmatpush1.bf16.msra.mxu0 0
        %816 = vmatprep.subr.bf16.mxu0 0
        %817 = vmatpush1.bf16.msra.mxu0 0
        %818 = vmatprep.subr.bf16.mxu0 0
        %819 = vmatpush1.bf16.msra.mxu0 0
        %820 = vmatprep.subr.bf16.mxu0 0
        %821 = vmatpush1.bf16.msra.mxu0 0
        %822 = vmatprep.subr.bf16.mxu0 0
        %823 = vmatpush1.bf16.msra.mxu0 %v807
        %824 = vmatprep.subr.bf16.mxu0 0
        %825 = vmatpush1.bf16.msra.mxu0 %v806
        %826 = vmatprep.subr.bf16.mxu0 0
        %827 = vmatpush2.bf16.msra.mxu0 0
        %828 = vmatprep.subr.bf16.mxu0 0
        %829 = vmatpush2.bf16.msra.mxu0 0
        %830 = vmatprep.subr.bf16.mxu0 0
        %831 = vmatpush2.bf16.msra.mxu0 0
        %832 = vmatprep.subr.bf16.mxu0 0
        %833 = vmatpush2.bf16.msra.mxu0 0
        %834 = vmatprep.subr.bf16.mxu0 0
        %835 = vmatpush2.bf16.msra.mxu0 0
        %836 = vmatprep.subr.bf16.mxu0 0
        %837 = vmatpush2.bf16.msra.mxu0 0
        %838 = vmatprep.subr.bf16.mxu0 0
        %839 = vmatpush2.bf16.msra.mxu0 0
        %840 = vmatprep.subr.bf16.mxu0 0
        %841 = vmatpush2.bf16.msra.mxu0 0
        %842 = vmatprep.mubr.bf16.mxu0 0
        %843 = vmatmul.mubr.bf16.gmra.mxu0 %v751
        %v844 = vpop.f32.mrf.mxu0
        %v845 = vadd.f32 0.0, %v844
        %v846 = vpop.f32.mrf.mxu0
        %v847 = vpop.f32.mrf.mxu0
        %v848 = vpop.f32.mrf.mxu0
        %849 = vdwg.mxu0
        %v850 = vld [vmem:[%s6] sm:$0xf]
        %v851 = vld [vmem:[%s6 + $0x4] sm:$0xf]
        %v852 = vld [vmem:[%s6 + $0x8] sm:$0xf]
        %v853 = vld [vmem:[%s6 + $0xc] sm:$0xf]
        %v858 = vunpack.c.l.b16 %v850
        %v859 = vunpack.c.l.b16 %v851
        %v860 = vunpack.c.l.b16 %v852
        %v861 = vunpack.c.l.b16 %v853
        %v862 = vpack.c.b16 %v859, %v858
        %v863 = vpack.c.b16 %v861, %v860
        %866 = vmatprep.subr.bf16.mxu0 0
        %867 = vmatpush1.bf16.msra.mxu0 0
        %868 = vmatprep.subr.bf16.mxu0 0
        %869 = vmatpush1.bf16.msra.mxu0 0
        %870 = vmatprep.subr.bf16.mxu0 0
        %871 = vmatpush1.bf16.msra.mxu0 0
        %872 = vmatprep.subr.bf16.mxu0 0
        %873 = vmatpush1.bf16.msra.mxu0 0
        %874 = vmatprep.subr.bf16.mxu0 0
        %875 = vmatpush1.bf16.msra.mxu0 0
        %876 = vmatprep.subr.bf16.mxu0 0
        %877 = vmatpush1.bf16.msra.mxu0 0
        %878 = vmatprep.subr.bf16.mxu0 0
        %879 = vmatpush1.bf16.msra.mxu0 %v863
        %880 = vmatprep.subr.bf16.mxu0 0
        %881 = vmatpush1.bf16.msra.mxu0 %v862
        %882 = vmatprep.subr.bf16.mxu0 0
        %883 = vmatpush2.bf16.msra.mxu0 0
        %884 = vmatprep.subr.bf16.mxu0 0
        %885 = vmatpush2.bf16.msra.mxu0 0
        %886 = vmatprep.subr.bf16.mxu0 0
        %887 = vmatpush2.bf16.msra.mxu0 0
        %888 = vmatprep.subr.bf16.mxu0 0
        %889 = vmatpush2.bf16.msra.mxu0 0
        %890 = vmatprep.subr.bf16.mxu0 0
        %891 = vmatpush2.bf16.msra.mxu0 0
        %892 = vmatprep.subr.bf16.mxu0 0
        %893 = vmatpush2.bf16.msra.mxu0 0
        %894 = vmatprep.subr.bf16.mxu0 0
        %895 = vmatpush2.bf16.msra.mxu0 0
        %896 = vmatprep.subr.bf16.mxu0 0
        %897 = vmatpush2.bf16.msra.mxu0 0
        %898 = vmatprep.mubr.bf16.mxu0 0
        %899 = vmatmul.mubr.bf16.gmra.mxu0 %v751
        %v900 = vpop.f32.mrf.mxu0
        %v901 = vadd.f32 0.0, %v900
        %v902 = vpop.f32.mrf.mxu0
        %v903 = vpop.f32.mrf.mxu0
        %v904 = vpop.f32.mrf.mxu0
        %905 = vdwg.mxu0
        %v906 = vpack.c.bf16 %v793, %v793
        %v907 = vpack.c.bf16 %v845, %v845
        %vm908 = vcmask 130048
        %v910 = vsel %vm908, %v906, 0
        %v913 = vsel %vm908, %v907, 0
        %915 = vmatprep.subr.bf16.mxu0 0
        %916 = vmatpush1.bf16.xpose.msra.mxu0 0
        %917 = vmatprep.subr.bf16.mxu0 0
        %918 = vmatpush1.bf16.xpose.msra.mxu0 0
        %919 = vmatprep.subr.bf16.mxu0 0
        %920 = vmatpush1.bf16.xpose.msra.mxu0 0
        %921 = vmatprep.subr.bf16.mxu0 0
        %922 = vmatpush1.bf16.xpose.msra.mxu0 0
        %923 = vmatprep.subr.bf16.mxu0 0
        %924 = vmatpush1.bf16.xpose.msra.mxu0 0
        %925 = vmatprep.subr.bf16.mxu0 0
        %926 = vmatpush1.bf16.xpose.msra.mxu0 0
        %927 = vmatprep.subr.bf16.mxu0 0
        %928 = vmatpush1.bf16.xpose.msra.mxu0 0
        %929 = vmatprep.subr.bf16.mxu0 0
        %930 = vmatpush1.bf16.xpose.msra.mxu0 %v913
        %931 = vmatprep.subr.bf16.mxu0 0
        %932 = vmatpush2.bf16.xpose.msra.mxu0 0
        %933 = vmatprep.subr.bf16.mxu0 0
        %934 = vmatpush2.bf16.xpose.msra.mxu0 0
        %935 = vmatprep.subr.bf16.mxu0 0
        %936 = vmatpush2.bf16.xpose.msra.mxu0 0
        %937 = vmatprep.subr.bf16.mxu0 0
        %938 = vmatpush2.bf16.xpose.msra.mxu0 0
        %939 = vmatprep.subr.bf16.mxu0 0
        %940 = vmatpush2.bf16.xpose.msra.mxu0 0
        %941 = vmatprep.subr.bf16.mxu0 0
        %942 = vmatpush2.bf16.xpose.msra.mxu0 0
        %943 = vmatprep.subr.bf16.mxu0 0
        %944 = vmatpush2.bf16.xpose.msra.mxu0 0
        %945 = vmatprep.subr.bf16.mxu0 0
        %946 = vmatpush2.bf16.xpose.msra.mxu0 0
        %947 = vmatprep.mubr.bf16.mxu0 0
        %948 = vmatmul.mubr.bf16.gmra.mxu0 %v910
        %v949 = vpop.f32.mrf.mxu0
        %v950 = vadd.f32 0.0, %v949
        %v951 = vpop.f32.mrf.mxu0
        %v952 = vpop.f32.mrf.mxu0
        %v953 = vpop.f32.mrf.mxu0
        %954 = vdwg.mxu0
        %vm955 = vcmp.eq.f32.partialorder %v730, 0.0
        %v956 = vsel %vm955, -1e+09, %v950
        %vm957 = vcmask 64512
        %v958 = vsel %vm957, %v956, -inf
        %959 = vmax.xlane.f32.xlu0 %v958
        %v960 = vpop.xlane.xlu0 %959
        %v961 = vsub.f32 %v956, %v960
        %v962 = vmul.f32 %v961, 1.442695
        %v963 = vpow.pop %v962
        %v964 = vsel %vm957, %v963, 0.0
        %965 = vadd.xlane.f32.xlu0 %v964
        %v966 = vpop.xlane.xlu0 %965
        %v967 = vrcp.pop %v966
        %v968 = vmul.f32 %v963, %v967
        %v969 = vpack.c.bf16 %v968, %v968
        %v970 = vpack.c.bf16 %v901, %v901
        %v972 = vsel %vm957, %v969, 0
        %vm974 = vcmask 1043456
        %v976 = vsel %vm974, %v970, 0
        %978 = vmatprep.subr.bf16.mxu0 0
        %979 = vmatpush1.bf16.msra.mxu0 0
        %980 = vmatprep.subr.bf16.mxu0 0
        %981 = vmatpush1.bf16.msra.mxu0 0
        %982 = vmatprep.subr.bf16.mxu0 0
        %983 = vmatpush1.bf16.msra.mxu0 0
        %984 = vmatprep.subr.bf16.mxu0 0
        %985 = vmatpush1.bf16.msra.mxu0 0
        %986 = vmatprep.subr.bf16.mxu0 0
        %987 = vmatpush1.bf16.msra.mxu0 0
        %988 = vmatprep.subr.bf16.mxu0 0
        %989 = vmatpush1.bf16.msra.mxu0 0
        %990 = vmatprep.subr.bf16.mxu0 0
        %991 = vmatpush1.bf16.msra.mxu0 0
        %992 = vmatprep.subr.bf16.mxu0 0
        %993 = vmatpush1.bf16.msra.mxu0 %v976
        %994 = vmatprep.subr.bf16.mxu0 0
        %995 = vmatpush2.bf16.msra.mxu0 0
        %996 = vmatprep.subr.bf16.mxu0 0
        %997 = vmatpush2.bf16.msra.mxu0 0
        %998 = vmatprep.subr.bf16.mxu0 0
        %999 = vmatpush2.bf16.msra.mxu0 0
        %1000 = vmatprep.subr.bf16.mxu0 0
        %1001 = vmatpush2.bf16.msra.mxu0 0
        %1002 = vmatprep.subr.bf16.mxu0 0
        %1003 = vmatpush2.bf16.msra.mxu0 0
        %1004 = vmatprep.subr.bf16.mxu0 0
        %1005 = vmatpush2.bf16.msra.mxu0 0
        %1006 = vmatprep.subr.bf16.mxu0 0
        %1007 = vmatpush2.bf16.msra.mxu0 0
        %1008 = vmatprep.subr.bf16.mxu0 0
        %1009 = vmatpush2.bf16.msra.mxu0 0
        %1010 = vmatprep.mubr.bf16.mxu0 0
        %1011 = vmatmul.mubr.bf16.gmra.mxu0 %v972
        %v1012 = vpop.f32.mrf.mxu0
        %v1013 = vadd.f32 0.0, %v1012
        %v1014 = vpop.f32.mrf.mxu0
        %v1015 = vpop.f32.mrf.mxu0
        %v1016 = vpop.f32.mrf.mxu0
        %1017 = vdwg.mxu0
        %v1018 = vpack.c.bf16 %v1013, %v1013
        %v1019 = vld [vmem:[%s7] sm:$0xf]
        %v1020 = vld [vmem:[%s7 + $0x4] sm:$0xf]
        %v1023 = vunpack.c.l.b16 %v1019
        %v1024 = vunpack.c.l.b16 %v1020
        %v1025 = vpack.c.b16 %v1024, %v1023
        %v1028 = vsel %vm908, %v1018, 0
        %1030 = vmatprep.subr.bf16.mxu0 0
        %1031 = vmatpush1.bf16.msra.mxu0 0
        %1032 = vmatprep.subr.bf16.mxu0 0
        %1033 = vmatpush1.bf16.msra.mxu0 0
        %1034 = vmatprep.subr.bf16.mxu0 0
        %1035 = vmatpush1.bf16.msra.mxu0 0
        %1036 = vmatprep.subr.bf16.mxu0 0
        %1037 = vmatpush1.bf16.msra.mxu0 0
        %1038 = vmatprep.subr.bf16.mxu0 0
        %1039 = vmatpush1.bf16.msra.mxu0 0
        %1040 = vmatprep.subr.bf16.mxu0 0
        %1041 = vmatpush1.bf16.msra.mxu0 0
        %1042 = vmatprep.subr.bf16.mxu0 0
        %1043 = vmatpush1.bf16.msra.mxu0 0
        %1044 = vmatprep.subr.bf16.mxu0 0
        %1045 = vmatpush1.bf16.msra.mxu0 %v1025
        %1046 = vmatprep.subr.bf16.mxu0 0
        %1047 = vmatpush2.bf16.msra.mxu0 0
        %1048 = vmatprep.subr.bf16.mxu0 0
        %1049 = vmatpush2.bf16.msra.mxu0 0
        %1050 = vmatprep.subr.bf16.mxu0 0
        %1051 = vmatpush2.bf16.msra.mxu0 0
        %1052 = vmatprep.subr.bf16.mxu0 0
        %1053 = vmatpush2.bf16.msra.mxu0 0
        %1054 = vmatprep.subr.bf16.mxu0 0
        %1055 = vmatpush2.bf16.msra.mxu0 0
        %1056 = vmatprep.subr.bf16.mxu0 0
        %1057 = vmatpush2.bf16.msra.mxu0 0
        %1058 = vmatprep.subr.bf16.mxu0 0
        %1059 = vmatpush2.bf16.msra.mxu0 0
        %1060 = vmatprep.subr.bf16.mxu0 0
        %1061 = vmatpush2.bf16.msra.mxu0 0
        %1062 = vmatprep.mubr.bf16.mxu0 0
        %1063 = vmatmul.mubr.bf16.gmra.mxu0 %v1028
        %v1064 = vpop.f32.mrf.mxu0
        %v1065 = vadd.f32 0.0, %v1064
        %v1066 = vpop.f32.mrf.mxu0
        %v1067 = vpop.f32.mrf.mxu0
        %v1068 = vpop.f32.mrf.mxu0
        %1069 = vdwg.mxu0
        %v1070 = vadd.f32 %v728, %v1065
        %s1071 = scalar_lea.vmem %s4, 16
        %v1072 = vld [vmem:[%s1071] sm:$0xf]
        %v1073 = vld [vmem:[%s1071 + $0x4] sm:$0xf]
        %v1074 = vld [vmem:[%s1071 + $0x8] sm:$0xf]
        %v1075 = vld [vmem:[%s1071 + $0xc] sm:$0xf]
        %v1080 = vunpack.c.l.b16 %v1072
        %v1081 = vunpack.c.l.b16 %v1073
        %v1082 = vunpack.c.l.b16 %v1074
        %v1083 = vunpack.c.l.b16 %v1075
        %v1084 = vpack.c.b16 %v1081, %v1080
        %v1085 = vpack.c.b16 %v1083, %v1082
        %1088 = vmatprep.subr.bf16.mxu0 0
        %1089 = vmatpush1.bf16.msra.mxu0 0
        %1090 = vmatprep.subr.bf16.mxu0 0
        %1091 = vmatpush1.bf16.msra.mxu0 0
        %1092 = vmatprep.subr.bf16.mxu0 0
        %1093 = vmatpush1.bf16.msra.mxu0 0
        %1094 = vmatprep.subr.bf16.mxu0 0
        %1095 = vmatpush1.bf16.msra.mxu0 0
        %1096 = vmatprep.subr.bf16.mxu0 0
        %1097 = vmatpush1.bf16.msra.mxu0 0
        %1098 = vmatprep.subr.bf16.mxu0 0
        %1099 = vmatpush1.bf16.msra.mxu0 0
        %1100 = vmatprep.subr.bf16.mxu0 0
        %1101 = vmatpush1.bf16.msra.mxu0 %v1085
        %1102 = vmatprep.subr.bf16.mxu0 0
        %1103 = vmatpush1.bf16.msra.mxu0 %v1084
        %1104 = vmatprep.subr.bf16.mxu0 0
        %1105 = vmatpush2.bf16.msra.mxu0 0
        %1106 = vmatprep.subr.bf16.mxu0 0
        %1107 = vmatpush2.bf16.msra.mxu0 0
        %1108 = vmatprep.subr.bf16.mxu0 0
        %1109 = vmatpush2.bf16.msra.mxu0 0
        %1110 = vmatprep.subr.bf16.mxu0 0
        %1111 = vmatpush2.bf16.msra.mxu0 0
        %1112 = vmatprep.subr.bf16.mxu0 0
        %1113 = vmatpush2.bf16.msra.mxu0 0
        %1114 = vmatprep.subr.bf16.mxu0 0
        %1115 = vmatpush2.bf16.msra.mxu0 0
        %1116 = vmatprep.subr.bf16.mxu0 0
        %1117 = vmatpush2.bf16.msra.mxu0 0
        %1118 = vmatprep.subr.bf16.mxu0 0
        %1119 = vmatpush2.bf16.msra.mxu0 0
        %1120 = vmatprep.mubr.bf16.mxu0 0
        %1121 = vmatmul.mubr.bf16.gmra.mxu0 %v751
        %v1122 = vpop.f32.mrf.mxu0
        %v1123 = vadd.f32 0.0, %v1122
        %v1124 = vpop.f32.mrf.mxu0
        %v1125 = vpop.f32.mrf.mxu0
        %v1126 = vpop.f32.mrf.mxu0
        %1127 = vdwg.mxu0
        %v1128 = vmul.f32 %v1123, 0.25
        %s1129 = scalar_lea.vmem %s5, 16
        %v1130 = vld [vmem:[%s1129] sm:$0xf]
        %v1131 = vld [vmem:[%s1129 + $0x4] sm:$0xf]
        %v1132 = vld [vmem:[%s1129 + $0x8] sm:$0xf]
        %v1133 = vld [vmem:[%s1129 + $0xc] sm:$0xf]
        %v1138 = vunpack.c.l.b16 %v1130
        %v1139 = vunpack.c.l.b16 %v1131
        %v1140 = vunpack.c.l.b16 %v1132
        %v1141 = vunpack.c.l.b16 %v1133
        %v1142 = vpack.c.b16 %v1139, %v1138
        %v1143 = vpack.c.b16 %v1141, %v1140
        %1146 = vmatprep.subr.bf16.mxu0 0
        %1147 = vmatpush1.bf16.msra.mxu0 0
        %1148 = vmatprep.subr.bf16.mxu0 0
        %1149 = vmatpush1.bf16.msra.mxu0 0
        %1150 = vmatprep.subr.bf16.mxu0 0
        %1151 = vmatpush1.bf16.msra.mxu0 0
        %1152 = vmatprep.subr.bf16.mxu0 0
        %1153 = vmatpush1.bf16.msra.mxu0 0
        %1154 = vmatprep.subr.bf16.mxu0 0
        %1155 = vmatpush1.bf16.msra.mxu0 0
        %1156 = vmatprep.subr.bf16.mxu0 0
        %1157 = vmatpush1.bf16.msra.mxu0 0
        %1158 = vmatprep.subr.bf16.mxu0 0
        %1159 = vmatpush1.bf16.msra.mxu0 %v1143
        %1160 = vmatprep.subr.bf16.mxu0 0
        %1161 = vmatpush1.bf16.msra.mxu0 %v1142
        %1162 = vmatprep.subr.bf16.mxu0 0
        %1163 = vmatpush2.bf16.msra.mxu0 0
        %1164 = vmatprep.subr.bf16.mxu0 0
        %1165 = vmatpush2.bf16.msra.mxu0 0
        %1166 = vmatprep.subr.bf16.mxu0 0
        %1167 = vmatpush2.bf16.msra.mxu0 0
        %1168 = vmatprep.subr.bf16.mxu0 0
        %1169 = vmatpush2.bf16.msra.mxu0 0
        %1170 = vmatprep.subr.bf16.mxu0 0
        %1171 = vmatpush2.bf16.msra.mxu0 0
        %1172 = vmatprep.subr.bf16.mxu0 0
        %1173 = vmatpush2.bf16.msra.mxu0 0
        %1174 = vmatprep.subr.bf16.mxu0 0
        %1175 = vmatpush2.bf16.msra.mxu0 0
        %1176 = vmatprep.subr.bf16.mxu0 0
        %1177 = vmatpush2.bf16.msra.mxu0 0
        %1178 = vmatprep.mubr.bf16.mxu0 0
        %1179 = vmatmul.mubr.bf16.gmra.mxu0 %v751
        %v1180 = vpop.f32.mrf.mxu0
        %v1181 = vadd.f32 0.0, %v1180
        %v1182 = vpop.f32.mrf.mxu0
        %v1183 = vpop.f32.mrf.mxu0
        %v1184 = vpop.f32.mrf.mxu0
        %1185 = vdwg.mxu0
        %s1186 = scalar_lea.vmem %s6, 16
        %v1187 = vld [vmem:[%s1186] sm:$0xf]
        %v1188 = vld [vmem:[%s1186 + $0x4] sm:$0xf]
        %v1189 = vld [vmem:[%s1186 + $0x8] sm:$0xf]
        %v1190 = vld [vmem:[%s1186 + $0xc] sm:$0xf]
        %v1195 = vunpack.c.l.b16 %v1187
        %v1196 = vunpack.c.l.b16 %v1188
        %v1197 = vunpack.c.l.b16 %v1189
        %v1198 = vunpack.c.l.b16 %v1190
        %v1199 = vpack.c.b16 %v1196, %v1195
        %v1200 = vpack.c.b16 %v1198, %v1197
        %1203 = vmatprep.subr.bf16.mxu0 0
        %1204 = vmatpush1.bf16.msra.mxu0 0
        %1205 = vmatprep.subr.bf16.mxu0 0
        %1206 = vmatpush1.bf16.msra.mxu0 0
        %1207 = vmatprep.subr.bf16.mxu0 0
        %1208 = vmatpush1.bf16.msra.mxu0 0
        %1209 = vmatprep.subr.bf16.mxu0 0
        %1210 = vmatpush1.bf16.msra.mxu0 0
        %1211 = vmatprep.subr.bf16.mxu0 0
        %1212 = vmatpush1.bf16.msra.mxu0 0
        %1213 = vmatprep.subr.bf16.mxu0 0
        %1214 = vmatpush1.bf16.msra.mxu0 0
        %1215 = vmatprep.subr.bf16.mxu0 0
        %1216 = vmatpush1.bf16.msra.mxu0 %v1200
        %1217 = vmatprep.subr.bf16.mxu0 0
        %1218 = vmatpush1.bf16.msra.mxu0 %v1199
        %1219 = vmatprep.subr.bf16.mxu0 0
        %1220 = vmatpush2.bf16.msra.mxu0 0
        %1221 = vmatprep.subr.bf16.mxu0 0
        %1222 = vmatpush2.bf16.msra.mxu0 0
        %1223 = vmatprep.subr.bf16.mxu0 0
        %1224 = vmatpush2.bf16.msra.mxu0 0
        %1225 = vmatprep.subr.bf16.mxu0 0
        %1226 = vmatpush2.bf16.msra.mxu0 0
        %1227 = vmatprep.subr.bf16.mxu0 0
        %1228 = vmatpush2.bf16.msra.mxu0 0
        %1229 = vmatprep.subr.bf16.mxu0 0
        %1230 = vmatpush2.bf16.msra.mxu0 0
        %1231 = vmatprep.subr.bf16.mxu0 0
        %1232 = vmatpush2.bf16.msra.mxu0 0
        %1233 = vmatprep.subr.bf16.mxu0 0
        %1234 = vmatpush2.bf16.msra.mxu0 0
        %1235 = vmatprep.mubr.bf16.mxu0 0
        %1236 = vmatmul.mubr.bf16.gmra.mxu0 %v751
        %v1237 = vpop.f32.mrf.mxu0
        %v1238 = vadd.f32 0.0, %v1237
        %v1239 = vpop.f32.mrf.mxu0
        %v1240 = vpop.f32.mrf.mxu0
        %v1241 = vpop.f32.mrf.mxu0
        %1242 = vdwg.mxu0
        %v1243 = vpack.c.bf16 %v1128, %v1128
        %v1244 = vpack.c.bf16 %v1181, %v1181
        %v1246 = vsel %vm908, %v1243, 0
        %v1249 = vsel %vm908, %v1244, 0
        %1251 = vmatprep.subr.bf16.mxu0 0
        %1252 = vmatpush1.bf16.xpose.msra.mxu0 0
        %1253 = vmatprep.subr.bf16.mxu0 0
        %1254 = vmatpush1.bf16.xpose.msra.mxu0 0
        %1255 = vmatprep.subr.bf16.mxu0 0
        %1256 = vmatpush1.bf16.xpose.msra.mxu0 0
        %1257 = vmatprep.subr.bf16.mxu0 0
        %1258 = vmatpush1.bf16.xpose.msra.mxu0 0
        %1259 = vmatprep.subr.bf16.mxu0 0
        %1260 = vmatpush1.bf16.xpose.msra.mxu0 0
        %1261 = vmatprep.subr.bf16.mxu0 0
        %1262 = vmatpush1.bf16.xpose.msra.mxu0 0
        %1263 = vmatprep.subr.bf16.mxu0 0
        %1264 = vmatpush1.bf16.xpose.msra.mxu0 0
        %1265 = vmatprep.subr.bf16.mxu0 0
        %1266 = vmatpush1.bf16.xpose.msra.mxu0 %v1249
        %1267 = vmatprep.subr.bf16.mxu0 0
        %1268 = vmatpush2.bf16.xpose.msra.mxu0 0
        %1269 = vmatprep.subr.bf16.mxu0 0
        %1270 = vmatpush2.bf16.xpose.msra.mxu0 0
        %1271 = vmatprep.subr.bf16.mxu0 0
        %1272 = vmatpush2.bf16.xpose.msra.mxu0 0
        %1273 = vmatprep.subr.bf16.mxu0 0
        %1274 = vmatpush2.bf16.xpose.msra.mxu0 0
        %1275 = vmatprep.subr.bf16.mxu0 0
        %1276 = vmatpush2.bf16.xpose.msra.mxu0 0
        %1277 = vmatprep.subr.bf16.mxu0 0
        %1278 = vmatpush2.bf16.xpose.msra.mxu0 0
        %1279 = vmatprep.subr.bf16.mxu0 0
        %1280 = vmatpush2.bf16.xpose.msra.mxu0 0
        %1281 = vmatprep.subr.bf16.mxu0 0
        %1282 = vmatpush2.bf16.xpose.msra.mxu0 0
        %1283 = vmatprep.mubr.bf16.mxu0 0
        %1284 = vmatmul.mubr.bf16.gmra.mxu0 %v1246
        %v1285 = vpop.f32.mrf.mxu0
        %v1286 = vadd.f32 0.0, %v1285
        %v1287 = vpop.f32.mrf.mxu0
        %v1288 = vpop.f32.mrf.mxu0
        %v1289 = vpop.f32.mrf.mxu0
        %1290 = vdwg.mxu0
        %v1291 = vsel %vm955, -1e+09, %v1286
        %v1292 = vsel %vm957, %v1291, -inf
        %1293 = vmax.xlane.f32.xlu0 %v1292
        %v1294 = vpop.xlane.xlu0 %1293
        %v1295 = vsub.f32 %v1291, %v1294
        %v1296 = vmul.f32 %v1295, 1.442695
        %v1297 = vpow.pop %v1296
        %v1298 = vsel %vm957, %v1297, 0.0
        %1299 = vadd.xlane.f32.xlu0 %v1298
        %v1300 = vpop.xlane.xlu0 %1299
        %v1301 = vrcp.pop %v1300
        %v1302 = vmul.f32 %v1297, %v1301
        %v1303 = vpack.c.bf16 %v1302, %v1302
        %v1304 = vpack.c.bf16 %v1238, %v1238
        %v1306 = vsel %vm957, %v1303, 0
        %v1309 = vsel %vm974, %v1304, 0
        %1311 = vmatprep.subr.bf16.mxu0 0
        %1312 = vmatpush1.bf16.msra.mxu0 0
        %1313 = vmatprep.subr.bf16.mxu0 0
        %1314 = vmatpush1.bf16.msra.mxu0 0
        %1315 = vmatprep.subr.bf16.mxu0 0
        %1316 = vmatpush1.bf16.msra.mxu0 0
        %1317 = vmatprep.subr.bf16.mxu0 0
        %1318 = vmatpush1.bf16.msra.mxu0 0
        %1319 = vmatprep.subr.bf16.mxu0 0
        %1320 = vmatpush1.bf16.msra.mxu0 0
        %1321 = vmatprep.subr.bf16.mxu0 0
        %1322 = vmatpush1.bf16.msra.mxu0 0
        %1323 = vmatprep.subr.bf16.mxu0 0
        %1324 = vmatpush1.bf16.msra.mxu0 0
        %1325 = vmatprep.subr.bf16.mxu0 0
        %1326 = vmatpush1.bf16.msra.mxu0 %v1309
        %1327 = vmatprep.subr.bf16.mxu0 0
        %1328 = vmatpush2.bf16.msra.mxu0 0
        %1329 = vmatprep.subr.bf16.mxu0 0
        %1330 = vmatpush2.bf16.msra.mxu0 0
        %1331 = vmatprep.subr.bf16.mxu0 0
        %1332 = vmatpush2.bf16.msra.mxu0 0
        %1333 = vmatprep.subr.bf16.mxu0 0
        %1334 = vmatpush2.bf16.msra.mxu0 0
        %1335 = vmatprep.subr.bf16.mxu0 0
        %1336 = vmatpush2.bf16.msra.mxu0 0
        %1337 = vmatprep.subr.bf16.mxu0 0
        %1338 = vmatpush2.bf16.msra.mxu0 0
        %1339 = vmatprep.subr.bf16.mxu0 0
        %1340 = vmatpush2.bf16.msra.mxu0 0
        %1341 = vmatprep.subr.bf16.mxu0 0
        %1342 = vmatpush2.bf16.msra.mxu0 0
        %1343 = vmatprep.mubr.bf16.mxu0 0
        %1344 = vmatmul.mubr.bf16.gmra.mxu0 %v1306
        %v1345 = vpop.f32.mrf.mxu0
        %v1346 = vadd.f32 0.0, %v1345
        %v1347 = vpop.f32.mrf.mxu0
        %v1348 = vpop.f32.mrf.mxu0
        %v1349 = vpop.f32.mrf.mxu0
        %1350 = vdwg.mxu0
        %v1351 = vpack.c.bf16 %v1346, %v1346
        %s1352 = scalar_lea.vmem %s7, 8
        %v1353 = vld [vmem:[%s1352] sm:$0xf]
        %v1354 = vld [vmem:[%s1352 + $0x4] sm:$0xf]
        %v1357 = vunpack.c.l.b16 %v1353
        %v1358 = vunpack.c.l.b16 %v1354
        %v1359 = vpack.c.b16 %v1358, %v1357
        %v1362 = vsel %vm908, %v1351, 0
        %1364 = vmatprep.subr.bf16.mxu0 0
        %1365 = vmatpush1.bf16.msra.mxu0 0
        %1366 = vmatprep.subr.bf16.mxu0 0
        %1367 = vmatpush1.bf16.msra.mxu0 0
        %1368 = vmatprep.subr.bf16.mxu0 0
        %1369 = vmatpush1.bf16.msra.mxu0 0
        %1370 = vmatprep.subr.bf16.mxu0 0
        %1371 = vmatpush1.bf16.msra.mxu0 0
        %1372 = vmatprep.subr.bf16.mxu0 0
        %1373 = vmatpush1.bf16.msra.mxu0 0
        %1374 = vmatprep.subr.bf16.mxu0 0
        %1375 = vmatpush1.bf16.msra.mxu0 0
        %1376 = vmatprep.subr.bf16.mxu0 0
        %1377 = vmatpush1.bf16.msra.mxu0 0
        %1378 = vmatprep.subr.bf16.mxu0 0
        %1379 = vmatpush1.bf16.msra.mxu0 %v1359
        %1380 = vmatprep.subr.bf16.mxu0 0
        %1381 = vmatpush2.bf16.msra.mxu0 0
        %1382 = vmatprep.subr.bf16.mxu0 0
        %1383 = vmatpush2.bf16.msra.mxu0 0
        %1384 = vmatprep.subr.bf16.mxu0 0
        %1385 = vmatpush2.bf16.msra.mxu0 0
        %1386 = vmatprep.subr.bf16.mxu0 0
        %1387 = vmatpush2.bf16.msra.mxu0 0
        %1388 = vmatprep.subr.bf16.mxu0 0
        %1389 = vmatpush2.bf16.msra.mxu0 0
        %1390 = vmatprep.subr.bf16.mxu0 0
        %1391 = vmatpush2.bf16.msra.mxu0 0
        %1392 = vmatprep.subr.bf16.mxu0 0
        %1393 = vmatpush2.bf16.msra.mxu0 0
        %1394 = vmatprep.subr.bf16.mxu0 0
        %1395 = vmatpush2.bf16.msra.mxu0 0
        %1396 = vmatprep.mubr.bf16.mxu0 0
        %1397 = vmatmul.mubr.bf16.gmra.mxu0 %v1362
        %v1398 = vpop.f32.mrf.mxu0
        %v1399 = vadd.f32 0.0, %v1398
        %v1400 = vpop.f32.mrf.mxu0
        %v1401 = vpop.f32.mrf.mxu0
        %v1402 = vpop.f32.mrf.mxu0
        %1403 = vdwg.mxu0
        %v1404 = vadd.f32 %v1070, %v1399
        %v1405 = vsel %vm749, %v1404, 0.0
        %1406 = vadd.xlane.f32.xlu0 %v1405
        %v1407 = vpop.xlane.xlu0 %1406
        %v1408 = vrcp.pop 32.0
        %v1409 = vmul.f32 %v1407, %v1408
        %v1410 = vsub.f32 %v1404, %v1409
        %v1411 = vmul.f32 %v1410, %v1410
        %v1412 = vsel %vm749, %v1411, 0.0
        %1413 = vadd.xlane.f32.xlu0 %v1412
        %v1414 = vpop.xlane.xlu0 %1413
        %v1415 = vmul.f32 %v1414, %v1408
        %v1416 = vadd.f32 %v1415, 1e-06
        %v1417 = vrsqrt.pop %v1416
        %v1418 = vmul.f32 %v1410, %v1417
        %v1419 = vld [vmem:[%s8] sm:$0x1]
        %v1421 = vlaneseq
        %v1422 = vshrl.u32 %v1421, 7
        %v1423 = vsub.s32 0, %v1422
        %v1424 = vrot.slane %v1419, %v1423
        %v1426 = vmul.f32 %v1418, %v1424
        %v1427 = vld [vmem:[%s9] sm:$0x1]
        %v1429 = vlaneseq
        %v1430 = vshrl.u32 %v1429, 7
        %v1431 = vsub.s32 0, %v1430
        %v1432 = vrot.slane %v1427, %v1431
        %v1434 = vadd.f32 %v1426, %v1432
        %v1435 = vpack.c.bf16 %v1434, %v1434
        %v1436 = vpack.c.bf16 %v729, %v729
        %v1437 = vld [vmem:[%s10] sm:$0xf]
        %v1438 = vld [vmem:[%s10 + $0x4] sm:$0xf]
        %v1439 = vld [vmem:[%s10 + $0x8] sm:$0xf]
        %v1440 = vld [vmem:[%s10 + $0xc] sm:$0xf]
        %v1445 = vunpack.c.l.b16 %v1437
        %v1446 = vunpack.c.l.b16 %v1438
        %v1447 = vunpack.c.l.b16 %v1439
        %v1448 = vunpack.c.l.b16 %v1440
        %v1449 = vpack.c.b16 %v1446, %v1445
        %v1450 = vpack.c.b16 %v1448, %v1447
        %v1454 = vsel %vm749, %v1435, 0
        %1456 = vmatprep.subr.bf16.mxu0 0
        %1457 = vmatpush1.bf16.msra.mxu0 0
        %1458 = vmatprep.subr.bf16.mxu0 0
        %1459 = vmatpush1.bf16.msra.mxu0 0
        %1460 = vmatprep.subr.bf16.mxu0 0
        %1461 = vmatpush1.bf16.msra.mxu0 0
        %1462 = vmatprep.subr.bf16.mxu0 0
        %1463 = vmatpush1.bf16.msra.mxu0 0
        %1464 = vmatprep.subr.bf16.mxu0 0
        %1465 = vmatpush1.bf16.msra.mxu0 0
        %1466 = vmatprep.subr.bf16.mxu0 0
        %1467 = vmatpush1.bf16.msra.mxu0 0
        %1468 = vmatprep.subr.bf16.mxu0 0
        %1469 = vmatpush1.bf16.msra.mxu0 %v1450
        %1470 = vmatprep.subr.bf16.mxu0 0
        %1471 = vmatpush1.bf16.msra.mxu0 %v1449
        %1472 = vmatprep.subr.bf16.mxu0 0
        %1473 = vmatpush2.bf16.msra.mxu0 0
        %1474 = vmatprep.subr.bf16.mxu0 0
        %1475 = vmatpush2.bf16.msra.mxu0 0
        %1476 = vmatprep.subr.bf16.mxu0 0
        %1477 = vmatpush2.bf16.msra.mxu0 0
        %1478 = vmatprep.subr.bf16.mxu0 0
        %1479 = vmatpush2.bf16.msra.mxu0 0
        %1480 = vmatprep.subr.bf16.mxu0 0
        %1481 = vmatpush2.bf16.msra.mxu0 0
        %1482 = vmatprep.subr.bf16.mxu0 0
        %1483 = vmatpush2.bf16.msra.mxu0 0
        %1484 = vmatprep.subr.bf16.mxu0 0
        %1485 = vmatpush2.bf16.msra.mxu0 0
        %1486 = vmatprep.subr.bf16.mxu0 0
        %1487 = vmatpush2.bf16.msra.mxu0 0
        %1488 = vmatprep.mubr.bf16.mxu0 0
        %1489 = vmatmul.mubr.bf16.gmra.mxu0 %v1454
        %v1490 = vpop.f32.mrf.mxu0
        %v1491 = vadd.f32 0.0, %v1490
        %v1492 = vpop.f32.mrf.mxu0
        %v1493 = vpop.f32.mrf.mxu0
        %v1494 = vpop.f32.mrf.mxu0
        %1495 = vdwg.mxu0
        %v1496 = vmul.f32 %v1491, 0.25
        %v1497 = vld [vmem:[%s11] sm:$0xf]
        %v1498 = vld [vmem:[%s11 + $0x4] sm:$0xf]
        %v1499 = vld [vmem:[%s11 + $0x8] sm:$0xf]
        %v1500 = vld [vmem:[%s11 + $0xc] sm:$0xf]
        %v1505 = vunpack.c.l.b16 %v1497
        %v1506 = vunpack.c.l.b16 %v1498
        %v1507 = vunpack.c.l.b16 %v1499
        %v1508 = vunpack.c.l.b16 %v1500
        %v1509 = vpack.c.b16 %v1506, %v1505
        %v1510 = vpack.c.b16 %v1508, %v1507
        %v1514 = vsel %vm749, %v1436, 0
        %1516 = vmatprep.subr.bf16.mxu0 0
        %1517 = vmatpush1.bf16.msra.mxu0 0
        %1518 = vmatprep.subr.bf16.mxu0 0
        %1519 = vmatpush1.bf16.msra.mxu0 0
        %1520 = vmatprep.subr.bf16.mxu0 0
        %1521 = vmatpush1.bf16.msra.mxu0 0
        %1522 = vmatprep.subr.bf16.mxu0 0
        %1523 = vmatpush1.bf16.msra.mxu0 0
        %1524 = vmatprep.subr.bf16.mxu0 0
        %1525 = vmatpush1.bf16.msra.mxu0 0
        %1526 = vmatprep.subr.bf16.mxu0 0
        %1527 = vmatpush1.bf16.msra.mxu0 0
        %1528 = vmatprep.subr.bf16.mxu0 0
        %1529 = vmatpush1.bf16.msra.mxu0 %v1510
        %1530 = vmatprep.subr.bf16.mxu0 0
        %1531 = vmatpush1.bf16.msra.mxu0 %v1509
        %1532 = vmatprep.subr.bf16.mxu0 0
        %1533 = vmatpush2.bf16.msra.mxu0 0
        %1534 = vmatprep.subr.bf16.mxu0 0
        %1535 = vmatpush2.bf16.msra.mxu0 0
        %1536 = vmatprep.subr.bf16.mxu0 0
        %1537 = vmatpush2.bf16.msra.mxu0 0
        %1538 = vmatprep.subr.bf16.mxu0 0
        %1539 = vmatpush2.bf16.msra.mxu0 0
        %1540 = vmatprep.subr.bf16.mxu0 0
        %1541 = vmatpush2.bf16.msra.mxu0 0
        %1542 = vmatprep.subr.bf16.mxu0 0
        %1543 = vmatpush2.bf16.msra.mxu0 0
        %1544 = vmatprep.subr.bf16.mxu0 0
        %1545 = vmatpush2.bf16.msra.mxu0 0
        %1546 = vmatprep.subr.bf16.mxu0 0
        %1547 = vmatpush2.bf16.msra.mxu0 0
        %1548 = vmatprep.mubr.bf16.mxu0 0
        %1549 = vmatmul.mubr.bf16.gmra.mxu0 %v1514
        %v1550 = vpop.f32.mrf.mxu0
        %v1551 = vadd.f32 0.0, %v1550
        %v1552 = vpop.f32.mrf.mxu0
        %v1553 = vpop.f32.mrf.mxu0
        %v1554 = vpop.f32.mrf.mxu0
        %1555 = vdwg.mxu0
        %v1556 = vld [vmem:[%s12] sm:$0xf]
        %v1557 = vld [vmem:[%s12 + $0x4] sm:$0xf]
        %v1558 = vld [vmem:[%s12 + $0x8] sm:$0xf]
        %v1559 = vld [vmem:[%s12 + $0xc] sm:$0xf]
        %v1564 = vunpack.c.l.b16 %v1556
        %v1565 = vunpack.c.l.b16 %v1557
        %v1566 = vunpack.c.l.b16 %v1558
        %v1567 = vunpack.c.l.b16 %v1559
        %v1568 = vpack.c.b16 %v1565, %v1564
        %v1569 = vpack.c.b16 %v1567, %v1566
        %1572 = vmatprep.subr.bf16.mxu0 0
        %1573 = vmatpush1.bf16.msra.mxu0 0
        %1574 = vmatprep.subr.bf16.mxu0 0
        %1575 = vmatpush1.bf16.msra.mxu0 0
        %1576 = vmatprep.subr.bf16.mxu0 0
        %1577 = vmatpush1.bf16.msra.mxu0 0
        %1578 = vmatprep.subr.bf16.mxu0 0
        %1579 = vmatpush1.bf16.msra.mxu0 0
        %1580 = vmatprep.subr.bf16.mxu0 0
        %1581 = vmatpush1.bf16.msra.mxu0 0
        %1582 = vmatprep.subr.bf16.mxu0 0
        %1583 = vmatpush1.bf16.msra.mxu0 0
        %1584 = vmatprep.subr.bf16.mxu0 0
        %1585 = vmatpush1.bf16.msra.mxu0 %v1569
        %1586 = vmatprep.subr.bf16.mxu0 0
        %1587 = vmatpush1.bf16.msra.mxu0 %v1568
        %1588 = vmatprep.subr.bf16.mxu0 0
        %1589 = vmatpush2.bf16.msra.mxu0 0
        %1590 = vmatprep.subr.bf16.mxu0 0
        %1591 = vmatpush2.bf16.msra.mxu0 0
        %1592 = vmatprep.subr.bf16.mxu0 0
        %1593 = vmatpush2.bf16.msra.mxu0 0
        %1594 = vmatprep.subr.bf16.mxu0 0
        %1595 = vmatpush2.bf16.msra.mxu0 0
        %1596 = vmatprep.subr.bf16.mxu0 0
        %1597 = vmatpush2.bf16.msra.mxu0 0
        %1598 = vmatprep.subr.bf16.mxu0 0
        %1599 = vmatpush2.bf16.msra.mxu0 0
        %1600 = vmatprep.subr.bf16.mxu0 0
        %1601 = vmatpush2.bf16.msra.mxu0 0
        %1602 = vmatprep.subr.bf16.mxu0 0
        %1603 = vmatpush2.bf16.msra.mxu0 0
        %1604 = vmatprep.mubr.bf16.mxu0 0
        %1605 = vmatmul.mubr.bf16.gmra.mxu0 %v1514
        %v1606 = vpop.f32.mrf.mxu0
        %v1607 = vadd.f32 0.0, %v1606
        %v1608 = vpop.f32.mrf.mxu0
        %v1609 = vpop.f32.mrf.mxu0
        %v1610 = vpop.f32.mrf.mxu0
        %1611 = vdwg.mxu0
        %v1612 = vpack.c.bf16 %v1496, %v1496
        %v1613 = vpack.c.bf16 %v1551, %v1551
        %v1615 = vsel %vm908, %v1612, 0
        %v1618 = vsel %vm908, %v1613, 0
        %1620 = vmatprep.subr.bf16.mxu0 0
        %1621 = vmatpush1.bf16.xpose.msra.mxu0 0
        %1622 = vmatprep.subr.bf16.mxu0 0
        %1623 = vmatpush1.bf16.xpose.msra.mxu0 0
        %1624 = vmatprep.subr.bf16.mxu0 0
        %1625 = vmatpush1.bf16.xpose.msra.mxu0 0
        %1626 = vmatprep.subr.bf16.mxu0 0
        %1627 = vmatpush1.bf16.xpose.msra.mxu0 0
        %1628 = vmatprep.subr.bf16.mxu0 0
        %1629 = vmatpush1.bf16.xpose.msra.mxu0 0
        %1630 = vmatprep.subr.bf16.mxu0 0
        %1631 = vmatpush1.bf16.xpose.msra.mxu0 0
        %1632 = vmatprep.subr.bf16.mxu0 0
        %1633 = vmatpush1.bf16.xpose.msra.mxu0 0
        %1634 = vmatprep.subr.bf16.mxu0 0
        %1635 = vmatpush1.bf16.xpose.msra.mxu0 %v1618
        %1636 = vmatprep.subr.bf16.mxu0 0
        %1637 = vmatpush2.bf16.xpose.msra.mxu0 0
        %1638 = vmatprep.subr.bf16.mxu0 0
        %1639 = vmatpush2.bf16.xpose.msra.mxu0 0
        %1640 = vmatprep.subr.bf16.mxu0 0
        %1641 = vmatpush2.bf16.xpose.msra.mxu0 0
        %1642 = vmatprep.subr.bf16.mxu0 0
        %1643 = vmatpush2.bf16.xpose.msra.mxu0 0
        %1644 = vmatprep.subr.bf16.mxu0 0
        %1645 = vmatpush2.bf16.xpose.msra.mxu0 0
        %1646 = vmatprep.subr.bf16.mxu0 0
        %1647 = vmatpush2.bf16.xpose.msra.mxu0 0
        %1648 = vmatprep.subr.bf16.mxu0 0
        %1649 = vmatpush2.bf16.xpose.msra.mxu0 0
        %1650 = vmatprep.subr.bf16.mxu0 0
        %1651 = vmatpush2.bf16.xpose.msra.mxu0 0
        %1652 = vmatprep.mubr.bf16.mxu0 0
        %1653 = vmatmul.mubr.bf16.gmra.mxu0 %v1615
        %v1654 = vpop.f32.mrf.mxu0
        %v1655 = vadd.f32 0.0, %v1654
        %v1656 = vpop.f32.mrf.mxu0
        %v1657 = vpop.f32.mrf.mxu0
        %v1658 = vpop.f32.mrf.mxu0
        %1659 = vdwg.mxu0
        %vm1660 = vcmp.eq.f32.partialorder %v731, 0.0
        %v1661 = vsel %vm1660, 1, 0
        %v1662 = vlaneseq
        %v1663 = vshrl.u32 %v1662, 7
        %v1664 = vsub.s32 0, %v1663
        %v1665 = vrot.slane %v1661, %v1664
        %vm1666 = vcmp.eq.s32.totalorder %v1665, 1
        %v1667 = vsel %vm1666, -1e+09, %v1655
        %v1668 = vsel %vm957, %v1667, -inf
        %1669 = vmax.xlane.f32.xlu0 %v1668
        %v1670 = vpop.xlane.xlu0 %1669
        %v1671 = vsub.f32 %v1667, %v1670
        %v1672 = vmul.f32 %v1671, 1.442695
        %v1673 = vpow.pop %v1672
        %v1674 = vsel %vm957, %v1673, 0.0
        %1675 = vadd.xlane.f32.xlu0 %v1674
        %v1676 = vpop.xlane.xlu0 %1675
        %v1677 = vrcp.pop %v1676
        %v1678 = vmul.f32 %v1673, %v1677
        %v1679 = vpack.c.bf16 %v1678, %v1678
        %v1680 = vpack.c.bf16 %v1607, %v1607
        %v1682 = vsel %vm957, %v1679, 0
        %v1685 = vsel %vm974, %v1680, 0
        %1687 = vmatprep.subr.bf16.mxu0 0
        %1688 = vmatpush1.bf16.msra.mxu0 0
        %1689 = vmatprep.subr.bf16.mxu0 0
        %1690 = vmatpush1.bf16.msra.mxu0 0
        %1691 = vmatprep.subr.bf16.mxu0 0
        %1692 = vmatpush1.bf16.msra.mxu0 0
        %1693 = vmatprep.subr.bf16.mxu0 0
        %1694 = vmatpush1.bf16.msra.mxu0 0
        %1695 = vmatprep.subr.bf16.mxu0 0
        %1696 = vmatpush1.bf16.msra.mxu0 0
        %1697 = vmatprep.subr.bf16.mxu0 0
        %1698 = vmatpush1.bf16.msra.mxu0 0
        %1699 = vmatprep.subr.bf16.mxu0 0
        %1700 = vmatpush1.bf16.msra.mxu0 0
        %1701 = vmatprep.subr.bf16.mxu0 0
        %1702 = vmatpush1.bf16.msra.mxu0 %v1685
        %1703 = vmatprep.subr.bf16.mxu0 0
        %1704 = vmatpush2.bf16.msra.mxu0 0
        %1705 = vmatprep.subr.bf16.mxu0 0
        %1706 = vmatpush2.bf16.msra.mxu0 0
        %1707 = vmatprep.subr.bf16.mxu0 0
        %1708 = vmatpush2.bf16.msra.mxu0 0
        %1709 = vmatprep.subr.bf16.mxu0 0
        %1710 = vmatpush2.bf16.msra.mxu0 0
        %1711 = vmatprep.subr.bf16.mxu0 0
        %1712 = vmatpush2.bf16.msra.mxu0 0
        %1713 = vmatprep.subr.bf16.mxu0 0
        %1714 = vmatpush2.bf16.msra.mxu0 0
        %1715 = vmatprep.subr.bf16.mxu0 0
        %1716 = vmatpush2.bf16.msra.mxu0 0
        %1717 = vmatprep.subr.bf16.mxu0 0
        %1718 = vmatpush2.bf16.msra.mxu0 0
        %1719 = vmatprep.mubr.bf16.mxu0 0
        %1720 = vmatmul.mubr.bf16.gmra.mxu0 %v1682
        %v1721 = vpop.f32.mrf.mxu0
        %v1722 = vadd.f32 0.0, %v1721
        %v1723 = vpop.f32.mrf.mxu0
        %v1724 = vpop.f32.mrf.mxu0
        %v1725 = vpop.f32.mrf.mxu0
        %1726 = vdwg.mxu0
        %v1727 = vpack.c.bf16 %v1722, %v1722
        %v1728 = vld [vmem:[%s13] sm:$0xf]
        %v1729 = vld [vmem:[%s13 + $0x4] sm:$0xf]
        %v1732 = vunpack.c.l.b16 %v1728
        %v1733 = vunpack.c.l.b16 %v1729
        %v1734 = vpack.c.b16 %v1733, %v1732
        %v1737 = vsel %vm908, %v1727, 0
        %1739 = vmatprep.subr.bf16.mxu0 0
        %1740 = vmatpush1.bf16.msra.mxu0 0
        %1741 = vmatprep.subr.bf16.mxu0 0
        %1742 = vmatpush1.bf16.msra.mxu0 0
        %1743 = vmatprep.subr.bf16.mxu0 0
        %1744 = vmatpush1.bf16.msra.mxu0 0
        %1745 = vmatprep.subr.bf16.mxu0 0
        %1746 = vmatpush1.bf16.msra.mxu0 0
        %1747 = vmatprep.subr.bf16.mxu0 0
        %1748 = vmatpush1.bf16.msra.mxu0 0
        %1749 = vmatprep.subr.bf16.mxu0 0
        %1750 = vmatpush1.bf16.msra.mxu0 0
        %1751 = vmatprep.subr.bf16.mxu0 0
        %1752 = vmatpush1.bf16.msra.mxu0 0
        %1753 = vmatprep.subr.bf16.mxu0 0
        %1754 = vmatpush1.bf16.msra.mxu0 %v1734
        %1755 = vmatprep.subr.bf16.mxu0 0
        %1756 = vmatpush2.bf16.msra.mxu0 0
        %1757 = vmatprep.subr.bf16.mxu0 0
        %1758 = vmatpush2.bf16.msra.mxu0 0
        %1759 = vmatprep.subr.bf16.mxu0 0
        %1760 = vmatpush2.bf16.msra.mxu0 0
        %1761 = vmatprep.subr.bf16.mxu0 0
        %1762 = vmatpush2.bf16.msra.mxu0 0
        %1763 = vmatprep.subr.bf16.mxu0 0
        %1764 = vmatpush2.bf16.msra.mxu0 0
        %1765 = vmatprep.subr.bf16.mxu0 0
        %1766 = vmatpush2.bf16.msra.mxu0 0
        %1767 = vmatprep.subr.bf16.mxu0 0
        %1768 = vmatpush2.bf16.msra.mxu0 0
        %1769 = vmatprep.subr.bf16.mxu0 0
        %1770 = vmatpush2.bf16.msra.mxu0 0
        %1771 = vmatprep.mubr.bf16.mxu0 0
        %1772 = vmatmul.mubr.bf16.gmra.mxu0 %v1737
        %v1773 = vpop.f32.mrf.mxu0
        %v1774 = vadd.f32 0.0, %v1773
        %v1775 = vpop.f32.mrf.mxu0
        %v1776 = vpop.f32.mrf.mxu0
        %v1777 = vpop.f32.mrf.mxu0
        %1778 = vdwg.mxu0
        %v1779 = vadd.f32 %v1434, %v1774
        %s1780 = scalar_lea.vmem %s10, 16
        %v1781 = vld [vmem:[%s1780] sm:$0xf]
        %v1782 = vld [vmem:[%s1780 + $0x4] sm:$0xf]
        %v1783 = vld [vmem:[%s1780 + $0x8] sm:$0xf]
        %v1784 = vld [vmem:[%s1780 + $0xc] sm:$0xf]
        %v1789 = vunpack.c.l.b16 %v1781
        %v1790 = vunpack.c.l.b16 %v1782
        %v1791 = vunpack.c.l.b16 %v1783
        %v1792 = vunpack.c.l.b16 %v1784
        %v1793 = vpack.c.b16 %v1790, %v1789
        %v1794 = vpack.c.b16 %v1792, %v1791
        %1797 = vmatprep.subr.bf16.mxu0 0
        %1798 = vmatpush1.bf16.msra.mxu0 0
        %1799 = vmatprep.subr.bf16.mxu0 0
        %1800 = vmatpush1.bf16.msra.mxu0 0
        %1801 = vmatprep.subr.bf16.mxu0 0
        %1802 = vmatpush1.bf16.msra.mxu0 0
        %1803 = vmatprep.subr.bf16.mxu0 0
        %1804 = vmatpush1.bf16.msra.mxu0 0
        %1805 = vmatprep.subr.bf16.mxu0 0
        %1806 = vmatpush1.bf16.msra.mxu0 0
        %1807 = vmatprep.subr.bf16.mxu0 0
        %1808 = vmatpush1.bf16.msra.mxu0 0
        %1809 = vmatprep.subr.bf16.mxu0 0
        %1810 = vmatpush1.bf16.msra.mxu0 %v1794
        %1811 = vmatprep.subr.bf16.mxu0 0
        %1812 = vmatpush1.bf16.msra.mxu0 %v1793
        %1813 = vmatprep.subr.bf16.mxu0 0
        %1814 = vmatpush2.bf16.msra.mxu0 0
        %1815 = vmatprep.subr.bf16.mxu0 0
        %1816 = vmatpush2.bf16.msra.mxu0 0
        %1817 = vmatprep.subr.bf16.mxu0 0
        %1818 = vmatpush2.bf16.msra.mxu0 0
        %1819 = vmatprep.subr.bf16.mxu0 0
        %1820 = vmatpush2.bf16.msra.mxu0 0
        %1821 = vmatprep.subr.bf16.mxu0 0
        %1822 = vmatpush2.bf16.msra.mxu0 0
        %1823 = vmatprep.subr.bf16.mxu0 0
        %1824 = vmatpush2.bf16.msra.mxu0 0
        %1825 = vmatprep.subr.bf16.mxu0 0
        %1826 = vmatpush2.bf16.msra.mxu0 0
        %1827 = vmatprep.subr.bf16.mxu0 0
        %1828 = vmatpush2.bf16.msra.mxu0 0
        %1829 = vmatprep.mubr.bf16.mxu0 0
        %1830 = vmatmul.mubr.bf16.gmra.mxu0 %v1454
        %v1831 = vpop.f32.mrf.mxu0
        %v1832 = vadd.f32 0.0, %v1831
        %v1833 = vpop.f32.mrf.mxu0
        %v1834 = vpop.f32.mrf.mxu0
        %v1835 = vpop.f32.mrf.mxu0
        %1836 = vdwg.mxu0
        %v1837 = vmul.f32 %v1832, 0.25
        %s1838 = scalar_lea.vmem %s11, 16
        %v1839 = vld [vmem:[%s1838] sm:$0xf]
        %v1840 = vld [vmem:[%s1838 + $0x4] sm:$0xf]
        %v1841 = vld [vmem:[%s1838 + $0x8] sm:$0xf]
        %v1842 = vld [vmem:[%s1838 + $0xc] sm:$0xf]
        %v1847 = vunpack.c.l.b16 %v1839
        %v1848 = vunpack.c.l.b16 %v1840
        %v1849 = vunpack.c.l.b16 %v1841
        %v1850 = vunpack.c.l.b16 %v1842
        %v1851 = vpack.c.b16 %v1848, %v1847
        %v1852 = vpack.c.b16 %v1850, %v1849
        %1855 = vmatprep.subr.bf16.mxu0 0
        %1856 = vmatpush1.bf16.msra.mxu0 0
        %1857 = vmatprep.subr.bf16.mxu0 0
        %1858 = vmatpush1.bf16.msra.mxu0 0
        %1859 = vmatprep.subr.bf16.mxu0 0
        %1860 = vmatpush1.bf16.msra.mxu0 0
        %1861 = vmatprep.subr.bf16.mxu0 0
        %1862 = vmatpush1.bf16.msra.mxu0 0
        %1863 = vmatprep.subr.bf16.mxu0 0
        %1864 = vmatpush1.bf16.msra.mxu0 0
        %1865 = vmatprep.subr.bf16.mxu0 0
        %1866 = vmatpush1.bf16.msra.mxu0 0
        %1867 = vmatprep.subr.bf16.mxu0 0
        %1868 = vmatpush1.bf16.msra.mxu0 %v1852
        %1869 = vmatprep.subr.bf16.mxu0 0
        %1870 = vmatpush1.bf16.msra.mxu0 %v1851
        %1871 = vmatprep.subr.bf16.mxu0 0
        %1872 = vmatpush2.bf16.msra.mxu0 0
        %1873 = vmatprep.subr.bf16.mxu0 0
        %1874 = vmatpush2.bf16.msra.mxu0 0
        %1875 = vmatprep.subr.bf16.mxu0 0
        %1876 = vmatpush2.bf16.msra.mxu0 0
        %1877 = vmatprep.subr.bf16.mxu0 0
        %1878 = vmatpush2.bf16.msra.mxu0 0
        %1879 = vmatprep.subr.bf16.mxu0 0
        %1880 = vmatpush2.bf16.msra.mxu0 0
        %1881 = vmatprep.subr.bf16.mxu0 0
        %1882 = vmatpush2.bf16.msra.mxu0 0
        %1883 = vmatprep.subr.bf16.mxu0 0
        %1884 = vmatpush2.bf16.msra.mxu0 0
        %1885 = vmatprep.subr.bf16.mxu0 0
        %1886 = vmatpush2.bf16.msra.mxu0 0
        %1887 = vmatprep.mubr.bf16.mxu0 0
        %1888 = vmatmul.mubr.bf16.gmra.mxu0 %v1514
        %v1889 = vpop.f32.mrf.mxu0
        %v1890 = vadd.f32 0.0, %v1889
        %v1891 = vpop.f32.mrf.mxu0
        %v1892 = vpop.f32.mrf.mxu0
        %v1893 = vpop.f32.mrf.mxu0
        %1894 = vdwg.mxu0
        %s1895 = scalar_lea.vmem %s12, 16
        %v1896 = vld [vmem:[%s1895] sm:$0xf]
        %v1897 = vld [vmem:[%s1895 + $0x4] sm:$0xf]
        %v1898 = vld [vmem:[%s1895 + $0x8] sm:$0xf]
        %v1899 = vld [vmem:[%s1895 + $0xc] sm:$0xf]
        %v1904 = vunpack.c.l.b16 %v1896
        %v1905 = vunpack.c.l.b16 %v1897
        %v1906 = vunpack.c.l.b16 %v1898
        %v1907 = vunpack.c.l.b16 %v1899
        %v1908 = vpack.c.b16 %v1905, %v1904
        %v1909 = vpack.c.b16 %v1907, %v1906
        %1912 = vmatprep.subr.bf16.mxu0 0
        %1913 = vmatpush1.bf16.msra.mxu0 0
        %1914 = vmatprep.subr.bf16.mxu0 0
        %1915 = vmatpush1.bf16.msra.mxu0 0
        %1916 = vmatprep.subr.bf16.mxu0 0
        %1917 = vmatpush1.bf16.msra.mxu0 0
        %1918 = vmatprep.subr.bf16.mxu0 0
        %1919 = vmatpush1.bf16.msra.mxu0 0
        %1920 = vmatprep.subr.bf16.mxu0 0
        %1921 = vmatpush1.bf16.msra.mxu0 0
        %1922 = vmatprep.subr.bf16.mxu0 0
        %1923 = vmatpush1.bf16.msra.mxu0 0
        %1924 = vmatprep.subr.bf16.mxu0 0
        %1925 = vmatpush1.bf16.msra.mxu0 %v1909
        %1926 = vmatprep.subr.bf16.mxu0 0
        %1927 = vmatpush1.bf16.msra.mxu0 %v1908
        %1928 = vmatprep.subr.bf16.mxu0 0
        %1929 = vmatpush2.bf16.msra.mxu0 0
        %1930 = vmatprep.subr.bf16.mxu0 0
        %1931 = vmatpush2.bf16.msra.mxu0 0
        %1932 = vmatprep.subr.bf16.mxu0 0
        %1933 = vmatpush2.bf16.msra.mxu0 0
        %1934 = vmatprep.subr.bf16.mxu0 0
        %1935 = vmatpush2.bf16.msra.mxu0 0
        %1936 = vmatprep.subr.bf16.mxu0 0
        %1937 = vmatpush2.bf16.msra.mxu0 0
        %1938 = vmatprep.subr.bf16.mxu0 0
        %1939 = vmatpush2.bf16.msra.mxu0 0
        %1940 = vmatprep.subr.bf16.mxu0 0
        %1941 = vmatpush2.bf16.msra.mxu0 0
        %1942 = vmatprep.subr.bf16.mxu0 0
        %1943 = vmatpush2.bf16.msra.mxu0 0
        %1944 = vmatprep.mubr.bf16.mxu0 0
        %1945 = vmatmul.mubr.bf16.gmra.mxu0 %v1514
        %v1946 = vpop.f32.mrf.mxu0
        %v1947 = vadd.f32 0.0, %v1946
        %v1948 = vpop.f32.mrf.mxu0
        %v1949 = vpop.f32.mrf.mxu0
        %v1950 = vpop.f32.mrf.mxu0
        %1951 = vdwg.mxu0
        %v1952 = vpack.c.bf16 %v1837, %v1837
        %v1953 = vpack.c.bf16 %v1890, %v1890
        %v1955 = vsel %vm908, %v1952, 0
        %v1958 = vsel %vm908, %v1953, 0
        %1960 = vmatprep.subr.bf16.mxu0 0
        %1961 = vmatpush1.bf16.xpose.msra.mxu0 0
        %1962 = vmatprep.subr.bf16.mxu0 0
        %1963 = vmatpush1.bf16.xpose.msra.mxu0 0
        %1964 = vmatprep.subr.bf16.mxu0 0
        %1965 = vmatpush1.bf16.xpose.msra.mxu0 0
        %1966 = vmatprep.subr.bf16.mxu0 0
        %1967 = vmatpush1.bf16.xpose.msra.mxu0 0
        %1968 = vmatprep.subr.bf16.mxu0 0
        %1969 = vmatpush1.bf16.xpose.msra.mxu0 0
        %1970 = vmatprep.subr.bf16.mxu0 0
        %1971 = vmatpush1.bf16.xpose.msra.mxu0 0
        %1972 = vmatprep.subr.bf16.mxu0 0
        %1973 = vmatpush1.bf16.xpose.msra.mxu0 0
        %1974 = vmatprep.subr.bf16.mxu0 0
        %1975 = vmatpush1.bf16.xpose.msra.mxu0 %v1958
        %1976 = vmatprep.subr.bf16.mxu0 0
        %1977 = vmatpush2.bf16.xpose.msra.mxu0 0
        %1978 = vmatprep.subr.bf16.mxu0 0
        %1979 = vmatpush2.bf16.xpose.msra.mxu0 0
        %1980 = vmatprep.subr.bf16.mxu0 0
        %1981 = vmatpush2.bf16.xpose.msra.mxu0 0
        %1982 = vmatprep.subr.bf16.mxu0 0
        %1983 = vmatpush2.bf16.xpose.msra.mxu0 0
        %1984 = vmatprep.subr.bf16.mxu0 0
        %1985 = vmatpush2.bf16.xpose.msra.mxu0 0
        %1986 = vmatprep.subr.bf16.mxu0 0
        %1987 = vmatpush2.bf16.xpose.msra.mxu0 0
        %1988 = vmatprep.subr.bf16.mxu0 0
        %1989 = vmatpush2.bf16.xpose.msra.mxu0 0
        %1990 = vmatprep.subr.bf16.mxu0 0
        %1991 = vmatpush2.bf16.xpose.msra.mxu0 0
        %1992 = vmatprep.mubr.bf16.mxu0 0
        %1993 = vmatmul.mubr.bf16.gmra.mxu0 %v1955
        %v1994 = vpop.f32.mrf.mxu0
        %v1995 = vadd.f32 0.0, %v1994
        %v1996 = vpop.f32.mrf.mxu0
        %v1997 = vpop.f32.mrf.mxu0
        %v1998 = vpop.f32.mrf.mxu0
        %1999 = vdwg.mxu0
        %v2000 = vsel %vm1666, -1e+09, %v1995
        %v2001 = vsel %vm957, %v2000, -inf
        %2002 = vmax.xlane.f32.xlu0 %v2001
        %v2003 = vpop.xlane.xlu0 %2002
        %v2004 = vsub.f32 %v2000, %v2003
        %v2005 = vmul.f32 %v2004, 1.442695
        %v2006 = vpow.pop %v2005
        %v2007 = vsel %vm957, %v2006, 0.0
        %2008 = vadd.xlane.f32.xlu0 %v2007
        %v2009 = vpop.xlane.xlu0 %2008
        %v2010 = vrcp.pop %v2009
        %v2011 = vmul.f32 %v2006, %v2010
        %v2012 = vpack.c.bf16 %v2011, %v2011
        %v2013 = vpack.c.bf16 %v1947, %v1947
        %v2015 = vsel %vm957, %v2012, 0
        %v2018 = vsel %vm974, %v2013, 0
        %2020 = vmatprep.subr.bf16.mxu0 0
        %2021 = vmatpush1.bf16.msra.mxu0 0
        %2022 = vmatprep.subr.bf16.mxu0 0
        %2023 = vmatpush1.bf16.msra.mxu0 0
        %2024 = vmatprep.subr.bf16.mxu0 0
        %2025 = vmatpush1.bf16.msra.mxu0 0
        %2026 = vmatprep.subr.bf16.mxu0 0
        %2027 = vmatpush1.bf16.msra.mxu0 0
        %2028 = vmatprep.subr.bf16.mxu0 0
        %2029 = vmatpush1.bf16.msra.mxu0 0
        %2030 = vmatprep.subr.bf16.mxu0 0
        %2031 = vmatpush1.bf16.msra.mxu0 0
        %2032 = vmatprep.subr.bf16.mxu0 0
        %2033 = vmatpush1.bf16.msra.mxu0 0
        %2034 = vmatprep.subr.bf16.mxu0 0
        %2035 = vmatpush1.bf16.msra.mxu0 %v2018
        %2036 = vmatprep.subr.bf16.mxu0 0
        %2037 = vmatpush2.bf16.msra.mxu0 0
        %2038 = vmatprep.subr.bf16.mxu0 0
        %2039 = vmatpush2.bf16.msra.mxu0 0
        %2040 = vmatprep.subr.bf16.mxu0 0
        %2041 = vmatpush2.bf16.msra.mxu0 0
        %2042 = vmatprep.subr.bf16.mxu0 0
        %2043 = vmatpush2.bf16.msra.mxu0 0
        %2044 = vmatprep.subr.bf16.mxu0 0
        %2045 = vmatpush2.bf16.msra.mxu0 0
        %2046 = vmatprep.subr.bf16.mxu0 0
        %2047 = vmatpush2.bf16.msra.mxu0 0
        %2048 = vmatprep.subr.bf16.mxu0 0
        %2049 = vmatpush2.bf16.msra.mxu0 0
        %2050 = vmatprep.subr.bf16.mxu0 0
        %2051 = vmatpush2.bf16.msra.mxu0 0
        %2052 = vmatprep.mubr.bf16.mxu0 0
        %2053 = vmatmul.mubr.bf16.gmra.mxu0 %v2015
        %v2054 = vpop.f32.mrf.mxu0
        %v2055 = vadd.f32 0.0, %v2054
        %v2056 = vpop.f32.mrf.mxu0
        %v2057 = vpop.f32.mrf.mxu0
        %v2058 = vpop.f32.mrf.mxu0
        %2059 = vdwg.mxu0
        %v2060 = vpack.c.bf16 %v2055, %v2055
        %s2061 = scalar_lea.vmem %s13, 8
        %v2062 = vld [vmem:[%s2061] sm:$0xf]
        %v2063 = vld [vmem:[%s2061 + $0x4] sm:$0xf]
        %v2066 = vunpack.c.l.b16 %v2062
        %v2067 = vunpack.c.l.b16 %v2063
        %v2068 = vpack.c.b16 %v2067, %v2066
        %v2071 = vsel %vm908, %v2060, 0
        %2073 = vmatprep.subr.bf16.mxu0 0
        %2074 = vmatpush1.bf16.msra.mxu0 0
        %2075 = vmatprep.subr.bf16.mxu0 0
        %2076 = vmatpush1.bf16.msra.mxu0 0
        %2077 = vmatprep.subr.bf16.mxu0 0
        %2078 = vmatpush1.bf16.msra.mxu0 0
        %2079 = vmatprep.subr.bf16.mxu0 0
        %2080 = vmatpush1.bf16.msra.mxu0 0
        %2081 = vmatprep.subr.bf16.mxu0 0
        %2082 = vmatpush1.bf16.msra.mxu0 0
        %2083 = vmatprep.subr.bf16.mxu0 0
        %2084 = vmatpush1.bf16.msra.mxu0 0
        %2085 = vmatprep.subr.bf16.mxu0 0
        %2086 = vmatpush1.bf16.msra.mxu0 0
        %2087 = vmatprep.subr.bf16.mxu0 0
        %2088 = vmatpush1.bf16.msra.mxu0 %v2068
        %2089 = vmatprep.subr.bf16.mxu0 0
        %2090 = vmatpush2.bf16.msra.mxu0 0
        %2091 = vmatprep.subr.bf16.mxu0 0
        %2092 = vmatpush2.bf16.msra.mxu0 0
        %2093 = vmatprep.subr.bf16.mxu0 0
        %2094 = vmatpush2.bf16.msra.mxu0 0
        %2095 = vmatprep.subr.bf16.mxu0 0
        %2096 = vmatpush2.bf16.msra.mxu0 0
        %2097 = vmatprep.subr.bf16.mxu0 0
        %2098 = vmatpush2.bf16.msra.mxu0 0
        %2099 = vmatprep.subr.bf16.mxu0 0
        %2100 = vmatpush2.bf16.msra.mxu0 0
        %2101 = vmatprep.subr.bf16.mxu0 0
        %2102 = vmatpush2.bf16.msra.mxu0 0
        %2103 = vmatprep.subr.bf16.mxu0 0
        %2104 = vmatpush2.bf16.msra.mxu0 0
        %2105 = vmatprep.mubr.bf16.mxu0 0
        %2106 = vmatmul.mubr.bf16.gmra.mxu0 %v2071
        %v2107 = vpop.f32.mrf.mxu0
        %v2108 = vadd.f32 0.0, %v2107
        %v2109 = vpop.f32.mrf.mxu0
        %v2110 = vpop.f32.mrf.mxu0
        %v2111 = vpop.f32.mrf.mxu0
        %2112 = vdwg.mxu0
        %v2113 = vadd.f32 %v1779, %v2108
        %v2114 = vsel %vm749, %v2113, 0.0
        %2115 = vadd.xlane.f32.xlu0 %v2114
        %v2116 = vpop.xlane.xlu0 %2115
        %v2117 = vmul.f32 %v2116, %v1408
        %v2118 = vsub.f32 %v2113, %v2117
        %v2119 = vmul.f32 %v2118, %v2118
        %v2120 = vsel %vm749, %v2119, 0.0
        %2121 = vadd.xlane.f32.xlu0 %v2120
        %v2122 = vpop.xlane.xlu0 %2121
        %v2123 = vmul.f32 %v2122, %v1408
        %v2124 = vadd.f32 %v2123, 1e-06
        %v2125 = vrsqrt.pop %v2124
        %v2126 = vmul.f32 %v2118, %v2125
        %v2127 = vld [vmem:[%s14] sm:$0x1]
        %v2129 = vlaneseq
        %v2130 = vshrl.u32 %v2129, 7
        %v2131 = vsub.s32 0, %v2130
        %v2132 = vrot.slane %v2127, %v2131
        %v2134 = vmul.f32 %v2126, %v2132
        %v2135 = vld [vmem:[%s15] sm:$0x1]
        %v2137 = vlaneseq
        %v2138 = vshrl.u32 %v2137, 7
        %v2139 = vsub.s32 0, %v2138
        %v2140 = vrot.slane %v2135, %v2139
        %v2142 = vadd.f32 %v2134, %v2140
        %v2143 = vpack.c.bf16 %v2142, %v2142
        %v2144 = vld [vmem:[%s16] sm:$0xf]
        %v2145 = vld [vmem:[%s16 + $0x4] sm:$0xf]
        %v2146 = vld [vmem:[%s16 + $0x8] sm:$0xf]
        %v2147 = vld [vmem:[%s16 + $0xc] sm:$0xf]
        %v2148 = vld [vmem:[%s17] sm:$0x1]
        %v2150 = vlaneseq
        %v2151 = vshrl.u32 %v2150, 7
        %v2152 = vsub.s32 0, %v2151
        %v2153 = vrot.slane %v2148, %v2152
        %v2159 = vunpack.c.l.b16 %v2144
        %v2160 = vunpack.c.l.b16 %v2145
        %v2161 = vunpack.c.l.b16 %v2146
        %v2162 = vunpack.c.l.b16 %v2147
        %v2163 = vpack.c.b16 %v2160, %v2159
        %v2164 = vpack.c.b16 %v2162, %v2161
        %v2168 = vsel %vm749, %v2143, 0
        %2170 = vmatprep.subr.bf16.mxu0 0
        %2171 = vmatpush1.bf16.msra.mxu0 0
        %2172 = vmatprep.subr.bf16.mxu0 0
        %2173 = vmatpush1.bf16.msra.mxu0 0
        %2174 = vmatprep.subr.bf16.mxu0 0
        %2175 = vmatpush1.bf16.msra.mxu0 0
        %2176 = vmatprep.subr.bf16.mxu0 0
        %2177 = vmatpush1.bf16.msra.mxu0 0
        %2178 = vmatprep.subr.bf16.mxu0 0
        %2179 = vmatpush1.bf16.msra.mxu0 0
        %2180 = vmatprep.subr.bf16.mxu0 0
        %2181 = vmatpush1.bf16.msra.mxu0 0
        %2182 = vmatprep.subr.bf16.mxu0 0
        %2183 = vmatpush1.bf16.msra.mxu0 %v2164
        %2184 = vmatprep.subr.bf16.mxu0 0
        %2185 = vmatpush1.bf16.msra.mxu0 %v2163
        %2186 = vmatprep.subr.bf16.mxu0 0
        %2187 = vmatpush2.bf16.msra.mxu0 0
        %2188 = vmatprep.subr.bf16.mxu0 0
        %2189 = vmatpush2.bf16.msra.mxu0 0
        %2190 = vmatprep.subr.bf16.mxu0 0
        %2191 = vmatpush2.bf16.msra.mxu0 0
        %2192 = vmatprep.subr.bf16.mxu0 0
        %2193 = vmatpush2.bf16.msra.mxu0 0
        %2194 = vmatprep.subr.bf16.mxu0 0
        %2195 = vmatpush2.bf16.msra.mxu0 0
        %2196 = vmatprep.subr.bf16.mxu0 0
        %2197 = vmatpush2.bf16.msra.mxu0 0
        %2198 = vmatprep.subr.bf16.mxu0 0
        %2199 = vmatpush2.bf16.msra.mxu0 0
        %2200 = vmatprep.subr.bf16.mxu0 0
        %2201 = vmatpush2.bf16.msra.mxu0 0
        %2202 = vmatprep.mubr.bf16.mxu0 0
        %2203 = vmatmul.mubr.bf16.gmra.mxu0 %v2168
        %v2204 = vpop.f32.mrf.mxu0
        %v2205 = vadd.f32 %v2153, %v2204
        %v2206 = vpop.f32.mrf.mxu0
        %v2207 = vpop.f32.mrf.mxu0
        %v2208 = vpop.f32.mrf.mxu0
        %2209 = vdwg.mxu0
        %v2210 = vmax.f32 %v2205, 0.0
        %v2211 = vpack.c.bf16 %v2210, %v2210
        %v2212 = vld [vmem:[%s18] sm:$0xf]
        %v2213 = vld [vmem:[%s18 + $0x4] sm:$0xf]
        %v2214 = vld [vmem:[%s18 + $0x8] sm:$0xf]
        %v2215 = vld [vmem:[%s18 + $0xc] sm:$0xf]
        %v2216 = vld [vmem:[%s18 + $0x10] sm:$0xf]
        %v2217 = vld [vmem:[%s18 + $0x14] sm:$0xf]
        %v2218 = vld [vmem:[%s18 + $0x18] sm:$0xf]
        %v2219 = vld [vmem:[%s18 + $0x1c] sm:$0xf]
        %v2220 = vld [vmem:[%s19] sm:$0x1]
        %v2222 = vlaneseq
        %v2223 = vshrl.u32 %v2222, 7
        %v2224 = vsub.s32 0, %v2223
        %v2225 = vrot.slane %v2220, %v2224
        %v2235 = vunpack.c.l.b16 %v2212
        %v2236 = vunpack.c.l.b16 %v2213
        %v2237 = vunpack.c.l.b16 %v2214
        %v2238 = vunpack.c.l.b16 %v2215
        %v2239 = vunpack.c.l.b16 %v2216
        %v2240 = vunpack.c.l.b16 %v2217
        %v2241 = vunpack.c.l.b16 %v2218
        %v2242 = vunpack.c.l.b16 %v2219
        %v2243 = vpack.c.b16 %v2236, %v2235
        %v2244 = vpack.c.b16 %v2238, %v2237
        %v2245 = vpack.c.b16 %v2240, %v2239
        %v2246 = vpack.c.b16 %v2242, %v2241
        %vm2251 = vcmask 523264
        %v2253 = vsel %vm2251, %v2211, 0
        %2255 = vmatprep.subr.bf16.mxu0 0
        %2256 = vmatpush1.bf16.msra.mxu0 0
        %2257 = vmatprep.subr.bf16.mxu0 0
        %2258 = vmatpush1.bf16.msra.mxu0 0
        %2259 = vmatprep.subr.bf16.mxu0 0
        %2260 = vmatpush1.bf16.msra.mxu0 0
        %2261 = vmatprep.subr.bf16.mxu0 0
        %2262 = vmatpush1.bf16.msra.mxu0 0
        %2263 = vmatprep.subr.bf16.mxu0 0
        %2264 = vmatpush1.bf16.msra.mxu0 %v2246
        %2265 = vmatprep.subr.bf16.mxu0 0
        %2266 = vmatpush1.bf16.msra.mxu0 %v2245
        %2267 = vmatprep.subr.bf16.mxu0 0
        %2268 = vmatpush1.bf16.msra.mxu0 %v2244
        %2269 = vmatprep.subr.bf16.mxu0 0
        %2270 = vmatpush1.bf16.msra.mxu0 %v2243
        %2271 = vmatprep.subr.bf16.mxu0 0
        %2272 = vmatpush2.bf16.msra.mxu0 0
        %2273 = vmatprep.subr.bf16.mxu0 0
        %2274 = vmatpush2.bf16.msra.mxu0 0
        %2275 = vmatprep.subr.bf16.mxu0 0
        %2276 = vmatpush2.bf16.msra.mxu0 0
        %2277 = vmatprep.subr.bf16.mxu0 0
        %2278 = vmatpush2.bf16.msra.mxu0 0
        %2279 = vmatprep.subr.bf16.mxu0 0
        %2280 = vmatpush2.bf16.msra.mxu0 0
        %2281 = vmatprep.subr.bf16.mxu0 0
        %2282 = vmatpush2.bf16.msra.mxu0 0
        %2283 = vmatprep.subr.bf16.mxu0 0
        %2284 = vmatpush2.bf16.msra.mxu0 0
        %2285 = vmatprep.subr.bf16.mxu0 0
        %2286 = vmatpush2.bf16.msra.mxu0 0
        %2287 = vmatprep.mubr.bf16.mxu0 0
        %2288 = vmatmul.mubr.bf16.gmra.mxu0 %v2253
        %v2289 = vpop.f32.mrf.mxu0
        %v2290 = vadd.f32 %v2225, %v2289
        %v2291 = vpop.f32.mrf.mxu0
        %v2292 = vpop.f32.mrf.mxu0
        %v2293 = vpop.f32.mrf.mxu0
        %2294 = vdwg.mxu0
        %v2295 = vadd.f32 %v2290, %v2142
        %v2296 = vsel %vm749, %v2295, 0.0
        %2297 = vadd.xlane.f32.xlu0 %v2296
        %v2298 = vpop.xlane.xlu0 %2297
        %v2299 = vmul.f32 %v2298, %v1408
        %v2300 = vsub.f32 %v2295, %v2299
        %v2301 = vmul.f32 %v2300, %v2300
        %v2302 = vsel %vm749, %v2301, 0.0
        %2303 = vadd.xlane.f32.xlu0 %v2302
        %v2304 = vpop.xlane.xlu0 %2303
        %v2305 = vmul.f32 %v2304, %v1408
        %v2306 = vadd.f32 %v2305, 1e-06
        %v2307 = vrsqrt.pop %v2306
        %v2308 = vmul.f32 %v2300, %v2307
        %v2309 = vld [vmem:[%s20] sm:$0x1]
        %v2311 = vlaneseq
        %v2312 = vshrl.u32 %v2311, 7
        %v2313 = vsub.s32 0, %v2312
        %v2314 = vrot.slane %v2309, %v2313
        %v2316 = vmul.f32 %v2308, %v2314
        %v2317 = vld [vmem:[%s21] sm:$0x1]
        %v2319 = vlaneseq
        %v2320 = vshrl.u32 %v2319, 7
        %v2321 = vsub.s32 0, %v2320
        %v2322 = vrot.slane %v2317, %v2321
        %v2324 = vadd.f32 %v2316, %v2322
        %2325 = vst.msk [vmem:[%s711] sm:$0xff] %vm749, %v2324
        %s2326 = sand.u32 %s526, 1
        %s2327 = scalar_lea.sflag [#allocation3], %s2326
        %s2328 = sand.u32 %s526, 1
        %s2329 = smul.addr %s2328, 8
        %s2330 = scalar_lea.vmem [#allocation2], %s2329
        // Predicated region
        $region109: #{_lambda_.5} parent=107 // pred_check
          %p2331 = pneg %p536
        $region110: #{_lambda_.5} parent=107 // pred_check_branch
          %2333 = sbr.rel (%p2331) target = $region112
        $region111: #{_lambda_.5} parent=107 // pred_region
          %s2335 = ssub.s32 128, 128
          %2336 = vsyncadd %s2327, %s2335
          %s2337 = smul.addr %s36, 128
          %s2338 = scalar_lea.hbm %s22, %s2337
          %s2340 = sshll.u32 %s2330, 4
          %s2341 = int_to_ptr.vmem [resolvable:$true] %s2340
          %2343 = dma.vmem_to_hbm [thread:$0]  %s2341, 128, %s2338, %s2327
        $region112: #{_lambda_.5} parent=107 // pred_fallthru
          _
      $region108: #{_lambda_.5} parent=5 // pred_fallthru
        _
      %p2344 = scmp.le.s32.totalorder 2, %s31
      // Predicated region
      $region113: #{_lambda_.5} parent=5 // pred_check
        %p2345 = pneg %p2344
      $region114: #{_lambda_.5} parent=5 // pred_check_branch
        %2347 = sbr.rel (%p2345) target = $region116
      $region115: #{_lambda_.5} parent=5 // pred_region
        %s2348 = ssub.s32 %s31, 2
        // Predicated region
        $region117: #{_lambda_.5} parent=115 // pred_check
          %p2349 = pneg %p542
        $region118: #{_lambda_.5} parent=115 // pred_check_branch
          %2351 = sbr.rel (%p2349) target = $region120
        $region119: #{_lambda_.5} parent=115 // pred_region
          %s2352 = sand.u32 %s527, 1
          %s2353 = scalar_lea.sflag [#allocation3], %s2352
          %s2354 = sand.u32 %s527, 1
          %s2355 = smul.addr %s2354, 8
          %s2356 = scalar_lea.vmem [#allocation2], %s2355
          %2357 = dma.done %s2353, 128
        $region120: #{_lambda_.5} parent=115 // pred_fallthru
          _
      $region116: #{_lambda_.5} parent=5 // pred_fallthru
        _
    $region6: #{_lambda_.5} parent=1 // loop_footer
      %s35 = sadd.s32 1, %s31
    $region7: #{_lambda_.5} parent=1 // loop_footer_branch
      %30 = sbr.rel target = $region3
    $region8: #{_lambda_.5} parent=1 // loop_exit
      _
    %2358 = vsyncpa [#allocation3], 1
    %s2359 = scalar_lea.sflag [#allocation3], 1
    %2360 = vsyncpa %s2359, 1

// kernel: _lambda_.4
$region0: #{_lambda_.4}
  #allocation0 [shape = 'u32[]', space=smem, size = 0x4, offset = 0x4, fixed_abs, tag = 'smem constant byte address 0x4 - core index']
  #allocation1 [shape = 'u32[144,128]{1,0:T(1,128)}', space=vmem, size = 0x12000, scoped, tag = 'internal scratch']
  %s0 = inlined_call_operand.vmem [shape: f32[2,8,32], index: 0, kind: input, shape index: {}]
  %s1 = inlined_call_operand.vmem [shape: f32[2,8,32], index: 1, kind: input, shape index: {}]
  %s2 = inlined_call_operand.vmem [shape: f32[2,8,8], index: 2, kind: input, shape index: {}]
  %s3 = inlined_call_operand.vmem [shape: f32[2,1,8], index: 3, kind: input, shape index: {}]
  %s4 = inlined_call_operand.vmem [shape: bf16[2,32,16], index: 4, kind: input, shape index: {}]
  %s5 = inlined_call_operand.vmem [shape: bf16[2,32,16], index: 5, kind: input, shape index: {}]
  %s6 = inlined_call_operand.vmem [shape: bf16[2,32,16], index: 6, kind: input, shape index: {}]
  %s7 = inlined_call_operand.vmem [shape: bf16[2,16,32], index: 7, kind: input, shape index: {}]
  %s8 = inlined_call_operand.vmem [shape: f32[1,32], index: 8, kind: input, shape index: {}]
  %s9 = inlined_call_operand.vmem [shape: f32[1,32], index: 9, kind: input, shape index: {}]
  %s10 = inlined_call_operand.vmem [shape: bf16[2,32,16], index: 10, kind: input, shape index: {}]
  %s11 = inlined_call_operand.vmem [shape: bf16[2,32,16], index: 11, kind: input, shape index: {}]
  %s12 = inlined_call_operand.vmem [shape: bf16[2,32,16], index: 12, kind: input, shape index: {}]
  %s13 = inlined_call_operand.vmem [shape: bf16[2,16,32], index: 13, kind: input, shape index: {}]
  %s14 = inlined_call_operand.vmem [shape: f32[1,32], index: 14, kind: input, shape index: {}]
  %s15 = inlined_call_operand.vmem [shape: f32[1,32], index: 15, kind: input, shape index: {}]
  %s16 = inlined_call_operand.vmem [shape: bf16[32,64], index: 16, kind: input, shape index: {}]
  %s17 = inlined_call_operand.vmem [shape: f32[1,64], index: 17, kind: input, shape index: {}]
  %s18 = inlined_call_operand.vmem [shape: bf16[64,32], index: 18, kind: input, shape index: {}]
  %s19 = inlined_call_operand.vmem [shape: f32[1,32], index: 19, kind: input, shape index: {}]
  %s20 = inlined_call_operand.vmem [shape: f32[1,32], index: 20, kind: input, shape index: {}]
  %s21 = inlined_call_operand.vmem [shape: f32[1,32], index: 21, kind: input, shape index: {}]
  %s22 = inlined_call_operand.vmem [shape: f32[2,8,32], index: 22, kind: output, shape index: {}]
  %s23 = sld [smem:[#allocation0]]
  $region121: #{_lambda_.4} parent=0
    _
  %s25 = ssub.s32 1, %s23
  %s26 = scalar_select 0, %s25, %s23
  loop: start=0, step=1, limit=4
  $region2: #{_lambda_.4} parent=0 // loop_pre_header
    _
  $region3: #{_lambda_.4} parent=0 // loop_header
    %s28 = sphi 0, %s32
    %p29 = scmp.ge.s32.totalorder %s28, 4
    %s38 = sphi 0, %s40
    %s41 = sphi 0, %s38
    %s42 = sphi 0, %s41
    %s58 = sphi 0, %s42
    %s64 = sphi 0, %s66
    %s67 = sphi 0, %s64
    %s68 = sphi 0, %s67
    %s84 = sphi 0, %s68
    %s90 = sphi 0, %s92
    %s93 = sphi 0, %s90
    %s94 = sphi 0, %s93
    %s110 = sphi 0, %s94
    %s116 = sphi 0, %s118
    %s119 = sphi 0, %s116
    %s120 = sphi 0, %s119
    %s136 = sphi 0, %s120
    %s140 = sphi 0, %s140
    %s142 = sphi 0, %s140
    %s143 = sphi 0, %s142
    %s157 = sphi 0, %s143
    %s161 = sphi 0, %s161
    %s163 = sphi 0, %s161
    %s164 = sphi 0, %s163
    %s178 = sphi 0, %s164
    %s182 = sphi 0, %s182
    %s184 = sphi 0, %s182
    %s185 = sphi 0, %s184
    %s199 = sphi 0, %s185
    %s203 = sphi 0, %s203
    %s205 = sphi 0, %s203
    %s206 = sphi 0, %s205
    %s220 = sphi 0, %s206
    %s224 = sphi 0, %s224
    %s226 = sphi 0, %s224
    %s227 = sphi 0, %s226
    %s241 = sphi 0, %s227
    %s245 = sphi 0, %s245
    %s247 = sphi 0, %s245
    %s248 = sphi 0, %s247
    %s262 = sphi 0, %s248
    %s266 = sphi 0, %s266
    %s268 = sphi 0, %s266
    %s269 = sphi 0, %s268
    %s283 = sphi 0, %s269
    %s287 = sphi 0, %s287
    %s289 = sphi 0, %s287
    %s290 = sphi 0, %s289
    %s304 = sphi 0, %s290
    %s308 = sphi 0, %s308
    %s310 = sphi 0, %s308
    %s311 = sphi 0, %s310
    %s325 = sphi 0, %s311
    %s329 = sphi 0, %s329
    %s331 = sphi 0, %s329
    %s332 = sphi 0, %s331
    %s346 = sphi 0, %s332
    %s350 = sphi 0, %s350
    %s352 = sphi 0, %s350
    %s353 = sphi 0, %s352
    %s367 = sphi 0, %s353
    %s371 = sphi 0, %s371
    %s373 = sphi 0, %s371
    %s374 = sphi 0, %s373
    %s388 = sphi 0, %s374
    %s392 = sphi 0, %s392
    %s394 = sphi 0, %s392
    %s395 = sphi 0, %s394
    %s409 = sphi 0, %s395
    %s413 = sphi 0, %s413
    %s415 = sphi 0, %s413
    %s416 = sphi 0, %s415
    %s430 = sphi 0, %s416
    %s434 = sphi 0, %s434
    %s436 = sphi 0, %s434
    %s437 = sphi 0, %s436
    %s451 = sphi 0, %s437
    %s455 = sphi 0, %s455
    %s457 = sphi 0, %s455
    %s458 = sphi 0, %s457
    %s472 = sphi 0, %s458
    %s476 = sphi 0, %s476
    %s478 = sphi 0, %s476
    %s479 = sphi 0, %s478
    %s493 = sphi 0, %s479
    %s497 = sphi 0, %s497
    %s499 = sphi 0, %s497
    %s500 = sphi 0, %s499
    %s514 = sphi 0, %s500
    %s520 = sphi 0, %s522
    %s523 = sphi 0, %s520
    %s524 = sphi 0, %s523
    %s540 = sphi 0, %s524
  $region4: #{_lambda_.4} parent=0 // loop_header_branch
    %31 = sbr.rel (%p29) target = $region8
  $region5: #{_lambda_.4} parent=0 // loop_body
    %s33 = ssub.s32 %s28, 1
    %s34 = ssub.s32 %s28, 2
    %s35 = sadd.s32 %s28, 1
    %s36 = ssub.s32 %s28, %s35
    %p37 = scmp.eq.s32.totalorder %s36, 0
    %s39 = sadd.s32 %s38, 1
    %s40 = scalar_select %p37, %s38, %s39
    %p43 = pneg %p37
    %p44 = scmp.eq.s32.totalorder %s28, 1
    %p45 = por %p43, %p44
    %p46 = scmp.ne.s32.totalorder %s38, %s41
    %p47 = scmp.eq.s32.totalorder %s28, 0
    %p48 = por %p46, %p47
    %p49 = scmp.ne.s32.totalorder %s38, %s41
    %p50 = scmp.eq.s32.totalorder %s33, 1
    %p51 = por %p49, %p50
    %p52 = scmp.ne.s32.totalorder %s41, %s42
    %p53 = scmp.eq.s32.totalorder %s33, 0
    %p54 = por %p52, %p53
    %p55 = scmp.ne.s32.totalorder %s41, %s42
    %p56 = scmp.eq.s32.totalorder %s34, 1
    %p57 = por %p55, %p56
    %p59 = scmp.ne.s32.totalorder %s42, %s58
    %p60 = scmp.eq.s32.totalorder %s34, 0
    %p61 = por %p59, %p60
    %s62 = ssub.s32 %s28, %s35
    %p63 = scmp.eq.s32.totalorder %s62, 0
    %s65 = sadd.s32 %s64, 1
    %s66 = scalar_select %p63, %s64, %s65
    %p69 = pneg %p63
    %p70 = scmp.eq.s32.totalorder %s28, 1
    %p71 = por %p69, %p70
    %p72 = scmp.ne.s32.totalorder %s64, %s67
    %p73 = scmp.eq.s32.totalorder %s28, 0
    %p74 = por %p72, %p73
    %p75 = scmp.ne.s32.totalorder %s64, %s67
    %p76 = scmp.eq.s32.totalorder %s33, 1
    %p77 = por %p75, %p76
    %p78 = scmp.ne.s32.totalorder %s67, %s68
    %p79 = scmp.eq.s32.totalorder %s33, 0
    %p80 = por %p78, %p79
    %p81 = scmp.ne.s32.totalorder %s67, %s68
    %p82 = scmp.eq.s32.totalorder %s34, 1
    %p83 = por %p81, %p82
    %p85 = scmp.ne.s32.totalorder %s68, %s84
    %p86 = scmp.eq.s32.totalorder %s34, 0
    %p87 = por %p85, %p86
    %s88 = ssub.s32 %s28, %s35
    %p89 = scmp.eq.s32.totalorder %s88, 0
    %s91 = sadd.s32 %s90, 1
    %s92 = scalar_select %p89, %s90, %s91
    %p95 = pneg %p89
    %p96 = scmp.eq.s32.totalorder %s28, 1
    %p97 = por %p95, %p96
    %p98 = scmp.ne.s32.totalorder %s90, %s93
    %p99 = scmp.eq.s32.totalorder %s28, 0
    %p100 = por %p98, %p99
    %p101 = scmp.ne.s32.totalorder %s90, %s93
    %p102 = scmp.eq.s32.totalorder %s33, 1
    %p103 = por %p101, %p102
    %p104 = scmp.ne.s32.totalorder %s93, %s94
    %p105 = scmp.eq.s32.totalorder %s33, 0
    %p106 = por %p104, %p105
    %p107 = scmp.ne.s32.totalorder %s93, %s94
    %p108 = scmp.eq.s32.totalorder %s34, 1
    %p109 = por %p107, %p108
    %p111 = scmp.ne.s32.totalorder %s94, %s110
    %p112 = scmp.eq.s32.totalorder %s34, 0
    %p113 = por %p111, %p112
    %s114 = ssub.s32 %s28, %s35
    %p115 = scmp.eq.s32.totalorder %s114, 0
    %s117 = sadd.s32 %s116, 1
    %s118 = scalar_select %p115, %s116, %s117
    %p121 = pneg %p115
    %p122 = scmp.eq.s32.totalorder %s28, 1
    %p123 = por %p121, %p122
    %p124 = scmp.ne.s32.totalorder %s116, %s119
    %p125 = scmp.eq.s32.totalorder %s28, 0
    %p126 = por %p124, %p125
    %p127 = scmp.ne.s32.totalorder %s116, %s119
    %p128 = scmp.eq.s32.totalorder %s33, 1
    %p129 = por %p127, %p128
    %p130 = scmp.ne.s32.totalorder %s119, %s120
    %p131 = scmp.eq.s32.totalorder %s33, 0
    %p132 = por %p130, %p131
    %p133 = scmp.ne.s32.totalorder %s119, %s120
    %p134 = scmp.eq.s32.totalorder %s34, 1
    %p135 = por %p133, %p134
    %p137 = scmp.ne.s32.totalorder %s120, %s136
    %p138 = scmp.eq.s32.totalorder %s34, 0
    %p139 = por %p137, %p138
    %s141 = sadd.s32 %s140, 1
    %p144 = scmp.eq.s32.totalorder %s28, 1
    %p145 = scmp.ne.s32.totalorder %s140, %s142
    %p146 = scmp.eq.s32.totalorder %s28, 0
    %p147 = por %p145, %p146
    %p148 = scmp.ne.s32.totalorder %s140, %s142
    %p149 = scmp.eq.s32.totalorder %s33, 1
    %p150 = por %p148, %p149
    %p151 = scmp.ne.s32.totalorder %s142, %s143
    %p152 = scmp.eq.s32.totalorder %s33, 0
    %p153 = por %p151, %p152
    %p154 = scmp.ne.s32.totalorder %s142, %s143
    %p155 = scmp.eq.s32.totalorder %s34, 1
    %p156 = por %p154, %p155
    %p158 = scmp.ne.s32.totalorder %s143, %s157
    %p159 = scmp.eq.s32.totalorder %s34, 0
    %p160 = por %p158, %p159
    %s162 = sadd.s32 %s161, 1
    %p165 = scmp.eq.s32.totalorder %s28, 1
    %p166 = scmp.ne.s32.totalorder %s161, %s163
    %p167 = scmp.eq.s32.totalorder %s28, 0
    %p168 = por %p166, %p167
    %p169 = scmp.ne.s32.totalorder %s161, %s163
    %p170 = scmp.eq.s32.totalorder %s33, 1
    %p171 = por %p169, %p170
    %p172 = scmp.ne.s32.totalorder %s163, %s164
    %p173 = scmp.eq.s32.totalorder %s33, 0
    %p174 = por %p172, %p173
    %p175 = scmp.ne.s32.totalorder %s163, %s164
    %p176 = scmp.eq.s32.totalorder %s34, 1
    %p177 = por %p175, %p176
    %p179 = scmp.ne.s32.totalorder %s164, %s178
    %p180 = scmp.eq.s32.totalorder %s34, 0
    %p181 = por %p179, %p180
    %s183 = sadd.s32 %s182, 1
    %p186 = scmp.eq.s32.totalorder %s28, 1
    %p187 = scmp.ne.s32.totalorder %s182, %s184
    %p188 = scmp.eq.s32.totalorder %s28, 0
    %p189 = por %p187, %p188
    %p190 = scmp.ne.s32.totalorder %s182, %s184
    %p191 = scmp.eq.s32.totalorder %s33, 1
    %p192 = por %p190, %p191
    %p193 = scmp.ne.s32.totalorder %s184, %s185
    %p194 = scmp.eq.s32.totalorder %s33, 0
    %p195 = por %p193, %p194
    %p196 = scmp.ne.s32.totalorder %s184, %s185
    %p197 = scmp.eq.s32.totalorder %s34, 1
    %p198 = por %p196, %p197
    %p200 = scmp.ne.s32.totalorder %s185, %s199
    %p201 = scmp.eq.s32.totalorder %s34, 0
    %p202 = por %p200, %p201
    %s204 = sadd.s32 %s203, 1
    %p207 = scmp.eq.s32.totalorder %s28, 1
    %p208 = scmp.ne.s32.totalorder %s203, %s205
    %p209 = scmp.eq.s32.totalorder %s28, 0
    %p210 = por %p208, %p209
    %p211 = scmp.ne.s32.totalorder %s203, %s205
    %p212 = scmp.eq.s32.totalorder %s33, 1
    %p213 = por %p211, %p212
    %p214 = scmp.ne.s32.totalorder %s205, %s206
    %p215 = scmp.eq.s32.totalorder %s33, 0
    %p216 = por %p214, %p215
    %p217 = scmp.ne.s32.totalorder %s205, %s206
    %p218 = scmp.eq.s32.totalorder %s34, 1
    %p219 = por %p217, %p218
    %p221 = scmp.ne.s32.totalorder %s206, %s220
    %p222 = scmp.eq.s32.totalorder %s34, 0
    %p223 = por %p221, %p222
    %s225 = sadd.s32 %s224, 1
    %p228 = scmp.eq.s32.totalorder %s28, 1
    %p229 = scmp.ne.s32.totalorder %s224, %s226
    %p230 = scmp.eq.s32.totalorder %s28, 0
    %p231 = por %p229, %p230
    %p232 = scmp.ne.s32.totalorder %s224, %s226
    %p233 = scmp.eq.s32.totalorder %s33, 1
    %p234 = por %p232, %p233
    %p235 = scmp.ne.s32.totalorder %s226, %s227
    %p236 = scmp.eq.s32.totalorder %s33, 0
    %p237 = por %p235, %p236
    %p238 = scmp.ne.s32.totalorder %s226, %s227
    %p239 = scmp.eq.s32.totalorder %s34, 1
    %p240 = por %p238, %p239
    %p242 = scmp.ne.s32.totalorder %s227, %s241
    %p243 = scmp.eq.s32.totalorder %s34, 0
    %p244 = por %p242, %p243
    %s246 = sadd.s32 %s245, 1
    %p249 = scmp.eq.s32.totalorder %s28, 1
    %p250 = scmp.ne.s32.totalorder %s245, %s247
    %p251 = scmp.eq.s32.totalorder %s28, 0
    %p252 = por %p250, %p251
    %p253 = scmp.ne.s32.totalorder %s245, %s247
    %p254 = scmp.eq.s32.totalorder %s33, 1
    %p255 = por %p253, %p254
    %p256 = scmp.ne.s32.totalorder %s247, %s248
    %p257 = scmp.eq.s32.totalorder %s33, 0
    %p258 = por %p256, %p257
    %p259 = scmp.ne.s32.totalorder %s247, %s248
    %p260 = scmp.eq.s32.totalorder %s34, 1
    %p261 = por %p259, %p260
    %p263 = scmp.ne.s32.totalorder %s248, %s262
    %p264 = scmp.eq.s32.totalorder %s34, 0
    %p265 = por %p263, %p264
    %s267 = sadd.s32 %s266, 1
    %p270 = scmp.eq.s32.totalorder %s28, 1
    %p271 = scmp.ne.s32.totalorder %s266, %s268
    %p272 = scmp.eq.s32.totalorder %s28, 0
    %p273 = por %p271, %p272
    %p274 = scmp.ne.s32.totalorder %s266, %s268
    %p275 = scmp.eq.s32.totalorder %s33, 1
    %p276 = por %p274, %p275
    %p277 = scmp.ne.s32.totalorder %s268, %s269
    %p278 = scmp.eq.s32.totalorder %s33, 0
    %p279 = por %p277, %p278
    %p280 = scmp.ne.s32.totalorder %s268, %s269
    %p281 = scmp.eq.s32.totalorder %s34, 1
    %p282 = por %p280, %p281
    %p284 = scmp.ne.s32.totalorder %s269, %s283
    %p285 = scmp.eq.s32.totalorder %s34, 0
    %p286 = por %p284, %p285
    %s288 = sadd.s32 %s287, 1
    %p291 = scmp.eq.s32.totalorder %s28, 1
    %p292 = scmp.ne.s32.totalorder %s287, %s289
    %p293 = scmp.eq.s32.totalorder %s28, 0
    %p294 = por %p292, %p293
    %p295 = scmp.ne.s32.totalorder %s287, %s289
    %p296 = scmp.eq.s32.totalorder %s33, 1
    %p297 = por %p295, %p296
    %p298 = scmp.ne.s32.totalorder %s289, %s290
    %p299 = scmp.eq.s32.totalorder %s33, 0
    %p300 = por %p298, %p299
    %p301 = scmp.ne.s32.totalorder %s289, %s290
    %p302 = scmp.eq.s32.totalorder %s34, 1
    %p303 = por %p301, %p302
    %p305 = scmp.ne.s32.totalorder %s290, %s304
    %p306 = scmp.eq.s32.totalorder %s34, 0
    %p307 = por %p305, %p306
    %s309 = sadd.s32 %s308, 1
    %p312 = scmp.eq.s32.totalorder %s28, 1
    %p313 = scmp.ne.s32.totalorder %s308, %s310
    %p314 = scmp.eq.s32.totalorder %s28, 0
    %p315 = por %p313, %p314
    %p316 = scmp.ne.s32.totalorder %s308, %s310
    %p317 = scmp.eq.s32.totalorder %s33, 1
    %p318 = por %p316, %p317
    %p319 = scmp.ne.s32.totalorder %s310, %s311
    %p320 = scmp.eq.s32.totalorder %s33, 0
    %p321 = por %p319, %p320
    %p322 = scmp.ne.s32.totalorder %s310, %s311
    %p323 = scmp.eq.s32.totalorder %s34, 1
    %p324 = por %p322, %p323
    %p326 = scmp.ne.s32.totalorder %s311, %s325
    %p327 = scmp.eq.s32.totalorder %s34, 0
    %p328 = por %p326, %p327
    %s330 = sadd.s32 %s329, 1
    %p333 = scmp.eq.s32.totalorder %s28, 1
    %p334 = scmp.ne.s32.totalorder %s329, %s331
    %p335 = scmp.eq.s32.totalorder %s28, 0
    %p336 = por %p334, %p335
    %p337 = scmp.ne.s32.totalorder %s329, %s331
    %p338 = scmp.eq.s32.totalorder %s33, 1
    %p339 = por %p337, %p338
    %p340 = scmp.ne.s32.totalorder %s331, %s332
    %p341 = scmp.eq.s32.totalorder %s33, 0
    %p342 = por %p340, %p341
    %p343 = scmp.ne.s32.totalorder %s331, %s332
    %p344 = scmp.eq.s32.totalorder %s34, 1
    %p345 = por %p343, %p344
    %p347 = scmp.ne.s32.totalorder %s332, %s346
    %p348 = scmp.eq.s32.totalorder %s34, 0
    %p349 = por %p347, %p348
    %s351 = sadd.s32 %s350, 1
    %p354 = scmp.eq.s32.totalorder %s28, 1
    %p355 = scmp.ne.s32.totalorder %s350, %s352
    %p356 = scmp.eq.s32.totalorder %s28, 0
    %p357 = por %p355, %p356
    %p358 = scmp.ne.s32.totalorder %s350, %s352
    %p359 = scmp.eq.s32.totalorder %s33, 1
    %p360 = por %p358, %p359
    %p361 = scmp.ne.s32.totalorder %s352, %s353
    %p362 = scmp.eq.s32.totalorder %s33, 0
    %p363 = por %p361, %p362
    %p364 = scmp.ne.s32.totalorder %s352, %s353
    %p365 = scmp.eq.s32.totalorder %s34, 1
    %p366 = por %p364, %p365
    %p368 = scmp.ne.s32.totalorder %s353, %s367
    %p369 = scmp.eq.s32.totalorder %s34, 0
    %p370 = por %p368, %p369
    %s372 = sadd.s32 %s371, 1
    %p375 = scmp.eq.s32.totalorder %s28, 1
    %p376 = scmp.ne.s32.totalorder %s371, %s373
    %p377 = scmp.eq.s32.totalorder %s28, 0
    %p378 = por %p376, %p377
    %p379 = scmp.ne.s32.totalorder %s371, %s373
    %p380 = scmp.eq.s32.totalorder %s33, 1
    %p381 = por %p379, %p380
    %p382 = scmp.ne.s32.totalorder %s373, %s374
    %p383 = scmp.eq.s32.totalorder %s33, 0
    %p384 = por %p382, %p383
    %p385 = scmp.ne.s32.totalorder %s373, %s374
    %p386 = scmp.eq.s32.totalorder %s34, 1
    %p387 = por %p385, %p386
    %p389 = scmp.ne.s32.totalorder %s374, %s388
    %p390 = scmp.eq.s32.totalorder %s34, 0
    %p391 = por %p389, %p390
    %s393 = sadd.s32 %s392, 1
    %p396 = scmp.eq.s32.totalorder %s28, 1
    %p397 = scmp.ne.s32.totalorder %s392, %s394
    %p398 = scmp.eq.s32.totalorder %s28, 0
    %p399 = por %p397, %p398
    %p400 = scmp.ne.s32.totalorder %s392, %s394
    %p401 = scmp.eq.s32.totalorder %s33, 1
    %p402 = por %p400, %p401
    %p403 = scmp.ne.s32.totalorder %s394, %s395
    %p404 = scmp.eq.s32.totalorder %s33, 0
    %p405 = por %p403, %p404
    %p406 = scmp.ne.s32.totalorder %s394, %s395
    %p407 = scmp.eq.s32.totalorder %s34, 1
    %p408 = por %p406, %p407
    %p410 = scmp.ne.s32.totalorder %s395, %s409
    %p411 = scmp.eq.s32.totalorder %s34, 0
    %p412 = por %p410, %p411
    %s414 = sadd.s32 %s413, 1
    %p417 = scmp.eq.s32.totalorder %s28, 1
    %p418 = scmp.ne.s32.totalorder %s413, %s415
    %p419 = scmp.eq.s32.totalorder %s28, 0
    %p420 = por %p418, %p419
    %p421 = scmp.ne.s32.totalorder %s413, %s415
    %p422 = scmp.eq.s32.totalorder %s33, 1
    %p423 = por %p421, %p422
    %p424 = scmp.ne.s32.totalorder %s415, %s416
    %p425 = scmp.eq.s32.totalorder %s33, 0
    %p426 = por %p424, %p425
    %p427 = scmp.ne.s32.totalorder %s415, %s416
    %p428 = scmp.eq.s32.totalorder %s34, 1
    %p429 = por %p427, %p428
    %p431 = scmp.ne.s32.totalorder %s416, %s430
    %p432 = scmp.eq.s32.totalorder %s34, 0
    %p433 = por %p431, %p432
    %s435 = sadd.s32 %s434, 1
    %p438 = scmp.eq.s32.totalorder %s28, 1
    %p439 = scmp.ne.s32.totalorder %s434, %s436
    %p440 = scmp.eq.s32.totalorder %s28, 0
    %p441 = por %p439, %p440
    %p442 = scmp.ne.s32.totalorder %s434, %s436
    %p443 = scmp.eq.s32.totalorder %s33, 1
    %p444 = por %p442, %p443
    %p445 = scmp.ne.s32.totalorder %s436, %s437
    %p446 = scmp.eq.s32.totalorder %s33, 0
    %p447 = por %p445, %p446
    %p448 = scmp.ne.s32.totalorder %s436, %s437
    %p449 = scmp.eq.s32.totalorder %s34, 1
    %p450 = por %p448, %p449
    %p452 = scmp.ne.s32.totalorder %s437, %s451
    %p453 = scmp.eq.s32.totalorder %s34, 0
    %p454 = por %p452, %p453
    %s456 = sadd.s32 %s455, 1
    %p459 = scmp.eq.s32.totalorder %s28, 1
    %p460 = scmp.ne.s32.totalorder %s455, %s457
    %p461 = scmp.eq.s32.totalorder %s28, 0
    %p462 = por %p460, %p461
    %p463 = scmp.ne.s32.totalorder %s455, %s457
    %p464 = scmp.eq.s32.totalorder %s33, 1
    %p465 = por %p463, %p464
    %p466 = scmp.ne.s32.totalorder %s457, %s458
    %p467 = scmp.eq.s32.totalorder %s33, 0
    %p468 = por %p466, %p467
    %p469 = scmp.ne.s32.totalorder %s457, %s458
    %p470 = scmp.eq.s32.totalorder %s34, 1
    %p471 = por %p469, %p470
    %p473 = scmp.ne.s32.totalorder %s458, %s472
    %p474 = scmp.eq.s32.totalorder %s34, 0
    %p475 = por %p473, %p474
    %s477 = sadd.s32 %s476, 1
    %p480 = scmp.eq.s32.totalorder %s28, 1
    %p481 = scmp.ne.s32.totalorder %s476, %s478
    %p482 = scmp.eq.s32.totalorder %s28, 0
    %p483 = por %p481, %p482
    %p484 = scmp.ne.s32.totalorder %s476, %s478
    %p485 = scmp.eq.s32.totalorder %s33, 1
    %p486 = por %p484, %p485
    %p487 = scmp.ne.s32.totalorder %s478, %s479
    %p488 = scmp.eq.s32.totalorder %s33, 0
    %p489 = por %p487, %p488
    %p490 = scmp.ne.s32.totalorder %s478, %s479
    %p491 = scmp.eq.s32.totalorder %s34, 1
    %p492 = por %p490, %p491
    %p494 = scmp.ne.s32.totalorder %s479, %s493
    %p495 = scmp.eq.s32.totalorder %s34, 0
    %p496 = por %p494, %p495
    %s498 = sadd.s32 %s497, 1
    %p501 = scmp.eq.s32.totalorder %s28, 1
    %p502 = scmp.ne.s32.totalorder %s497, %s499
    %p503 = scmp.eq.s32.totalorder %s28, 0
    %p504 = por %p502, %p503
    %p505 = scmp.ne.s32.totalorder %s497, %s499
    %p506 = scmp.eq.s32.totalorder %s33, 1
    %p507 = por %p505, %p506
    %p508 = scmp.ne.s32.totalorder %s499, %s500
    %p509 = scmp.eq.s32.totalorder %s33, 0
    %p510 = por %p508, %p509
    %p511 = scmp.ne.s32.totalorder %s499, %s500
    %p512 = scmp.eq.s32.totalorder %s34, 1
    %p513 = por %p511, %p512
    %p515 = scmp.ne.s32.totalorder %s500, %s514
    %p516 = scmp.eq.s32.totalorder %s34, 0
    %p517 = por %p515, %p516
    %s518 = ssub.s32 %s28, %s35
    %p519 = scmp.eq.s32.totalorder %s518, 0
    %s521 = sadd.s32 %s520, 1
    %s522 = scalar_select %p519, %s520, %s521
    %p525 = pneg %p519
    %p526 = scmp.eq.s32.totalorder %s28, 1
    %p527 = por %p525, %p526
    %p528 = scmp.ne.s32.totalorder %s520, %s523
    %p529 = scmp.eq.s32.totalorder %s28, 0
    %p530 = por %p528, %p529
    %p531 = scmp.ne.s32.totalorder %s520, %s523
    %p532 = scmp.eq.s32.totalorder %s33, 1
    %p533 = por %p531, %p532
    %p534 = scmp.ne.s32.totalorder %s523, %s524
    %p535 = scmp.eq.s32.totalorder %s33, 0
    %p536 = por %p534, %p535
    %p537 = scmp.ne.s32.totalorder %s523, %s524
    %p538 = scmp.eq.s32.totalorder %s34, 1
    %p539 = por %p537, %p538
    %p541 = scmp.ne.s32.totalorder %s524, %s540
    %p542 = scmp.eq.s32.totalorder %s34, 0
    %p543 = por %p541, %p542
    %p544 = scmp.le.s32.totalorder 1, %s28
    %p545 = scmp.lt.s32.totalorder %s28, 3
    %p546 = pnand %p544, %p545
    %p547 = pneg %p546
    // Predicated region
    $region9: #{_lambda_.4} parent=5 // pred_check
      _
    $region10: #{_lambda_.4} parent=5 // pred_check_branch
      %549 = sbr.rel (%p546) target = $region12
    $region11: #{_lambda_.4} parent=5 // pred_region
      %s550 = ssub.s32 %s28, 1
      // Predicated region
      $region13: #{_lambda_.4} parent=11 // pred_check
        %p551 = pneg %p153
      $region14: #{_lambda_.4} parent=11 // pred_check_branch
        %553 = sbr.rel (%p551) target = $region16
      $region15: #{_lambda_.4} parent=11 // pred_region
        _
      $region16: #{_lambda_.4} parent=11 // pred_fallthru
        _
      // Predicated region
      $region17: #{_lambda_.4} parent=11 // pred_check
        %p554 = pneg %p174
      $region18: #{_lambda_.4} parent=11 // pred_check_branch
        %556 = sbr.rel (%p554) target = $region20
      $region19: #{_lambda_.4} parent=11 // pred_region
        _
      $region20: #{_lambda_.4} parent=11 // pred_fallthru
        _
      // Predicated region
      $region21: #{_lambda_.4} parent=11 // pred_check
        %p557 = pneg %p195
      $region22: #{_lambda_.4} parent=11 // pred_check_branch
        %559 = sbr.rel (%p557) target = $region24
      $region23: #{_lambda_.4} parent=11 // pred_region
        _
      $region24: #{_lambda_.4} parent=11 // pred_fallthru
        _
      // Predicated region
      $region25: #{_lambda_.4} parent=11 // pred_check
        %p560 = pneg %p216
      $region26: #{_lambda_.4} parent=11 // pred_check_branch
        %562 = sbr.rel (%p560) target = $region28
      $region27: #{_lambda_.4} parent=11 // pred_region
        _
      $region28: #{_lambda_.4} parent=11 // pred_fallthru
        _
      // Predicated region
      $region29: #{_lambda_.4} parent=11 // pred_check
        %p563 = pneg %p237
      $region30: #{_lambda_.4} parent=11 // pred_check_branch
        %565 = sbr.rel (%p563) target = $region32
      $region31: #{_lambda_.4} parent=11 // pred_region
        _
      $region32: #{_lambda_.4} parent=11 // pred_fallthru
        _
      // Predicated region
      $region33: #{_lambda_.4} parent=11 // pred_check
        %p566 = pneg %p258
      $region34: #{_lambda_.4} parent=11 // pred_check_branch
        %568 = sbr.rel (%p566) target = $region36
      $region35: #{_lambda_.4} parent=11 // pred_region
        _
      $region36: #{_lambda_.4} parent=11 // pred_fallthru
        _
      // Predicated region
      $region37: #{_lambda_.4} parent=11 // pred_check
        %p569 = pneg %p279
      $region38: #{_lambda_.4} parent=11 // pred_check_branch
        %571 = sbr.rel (%p569) target = $region40
      $region39: #{_lambda_.4} parent=11 // pred_region
        _
      $region40: #{_lambda_.4} parent=11 // pred_fallthru
        _
      // Predicated region
      $region41: #{_lambda_.4} parent=11 // pred_check
        %p572 = pneg %p300
      $region42: #{_lambda_.4} parent=11 // pred_check_branch
        %574 = sbr.rel (%p572) target = $region44
      $region43: #{_lambda_.4} parent=11 // pred_region
        _
      $region44: #{_lambda_.4} parent=11 // pred_fallthru
        _
      // Predicated region
      $region45: #{_lambda_.4} parent=11 // pred_check
        %p575 = pneg %p321
      $region46: #{_lambda_.4} parent=11 // pred_check_branch
        %577 = sbr.rel (%p575) target = $region48
      $region47: #{_lambda_.4} parent=11 // pred_region
        _
      $region48: #{_lambda_.4} parent=11 // pred_fallthru
        _
      // Predicated region
      $region49: #{_lambda_.4} parent=11 // pred_check
        %p578 = pneg %p342
      $region50: #{_lambda_.4} parent=11 // pred_check_branch
        %580 = sbr.rel (%p578) target = $region52
      $region51: #{_lambda_.4} parent=11 // pred_region
        _
      $region52: #{_lambda_.4} parent=11 // pred_fallthru
        _
      // Predicated region
      $region53: #{_lambda_.4} parent=11 // pred_check
        %p581 = pneg %p363
      $region54: #{_lambda_.4} parent=11 // pred_check_branch
        %583 = sbr.rel (%p581) target = $region56
      $region55: #{_lambda_.4} parent=11 // pred_region
        _
      $region56: #{_lambda_.4} parent=11 // pred_fallthru
        _
      // Predicated region
      $region57: #{_lambda_.4} parent=11 // pred_check
        %p584 = pneg %p384
      $region58: #{_lambda_.4} parent=11 // pred_check_branch
        %586 = sbr.rel (%p584) target = $region60
      $region59: #{_lambda_.4} parent=11 // pred_region
        _
      $region60: #{_lambda_.4} parent=11 // pred_fallthru
        _
      // Predicated region
      $region61: #{_lambda_.4} parent=11 // pred_check
        %p587 = pneg %p405
      $region62: #{_lambda_.4} parent=11 // pred_check_branch
        %589 = sbr.rel (%p587) target = $region64
      $region63: #{_lambda_.4} parent=11 // pred_region
        _
      $region64: #{_lambda_.4} parent=11 // pred_fallthru
        _
      // Predicated region
      $region65: #{_lambda_.4} parent=11 // pred_check
        %p590 = pneg %p426
      $region66: #{_lambda_.4} parent=11 // pred_check_branch
        %592 = sbr.rel (%p590) target = $region68
      $region67: #{_lambda_.4} parent=11 // pred_region
        _
      $region68: #{_lambda_.4} parent=11 // pred_fallthru
        _
      // Predicated region
      $region69: #{_lambda_.4} parent=11 // pred_check
        %p593 = pneg %p447
      $region70: #{_lambda_.4} parent=11 // pred_check_branch
        %595 = sbr.rel (%p593) target = $region72
      $region71: #{_lambda_.4} parent=11 // pred_region
        _
      $region72: #{_lambda_.4} parent=11 // pred_fallthru
        _
      // Predicated region
      $region73: #{_lambda_.4} parent=11 // pred_check
        %p596 = pneg %p468
      $region74: #{_lambda_.4} parent=11 // pred_check_branch
        %598 = sbr.rel (%p596) target = $region76
      $region75: #{_lambda_.4} parent=11 // pred_region
        _
      $region76: #{_lambda_.4} parent=11 // pred_fallthru
        _
      // Predicated region
      $region77: #{_lambda_.4} parent=11 // pred_check
        %p599 = pneg %p489
      $region78: #{_lambda_.4} parent=11 // pred_check_branch
        %601 = sbr.rel (%p599) target = $region80
      $region79: #{_lambda_.4} parent=11 // pred_region
        _
      $region80: #{_lambda_.4} parent=11 // pred_fallthru
        _
      // Predicated region
      $region81: #{_lambda_.4} parent=11 // pred_check
        %p602 = pneg %p510
      $region82: #{_lambda_.4} parent=11 // pred_check_branch
        %604 = sbr.rel (%p602) target = $region84
      $region83: #{_lambda_.4} parent=11 // pred_region
        _
      $region84: #{_lambda_.4} parent=11 // pred_fallthru
        _
    $region12: #{_lambda_.4} parent=5 // pred_fallthru
      _
    %p605 = scmp.lt.s32.totalorder %s28, 2
    // Predicated region
    $region85: #{_lambda_.4} parent=5 // pred_check
      %p606 = pneg %p605
    $region86: #{_lambda_.4} parent=5 // pred_check_branch
      %608 = sbr.rel (%p606) target = $region88
    $region87: #{_lambda_.4} parent=5 // pred_region
      // Predicated region
      $region89: #{_lambda_.4} parent=87 // pred_check
        %p609 = pneg %p48
      $region90: #{_lambda_.4} parent=87 // pred_check_branch
        %611 = sbr.rel (%p609) target = $region92
      $region91: #{_lambda_.4} parent=87 // pred_region
        %p612 = scmp.lt.s32.totalorder %s28, 1
        %s613 = scalar_select %p612, %s28, 1
        %s614 = smul.addr %s613, 8
        %s615 = scalar_lea.vmem %s0, %s614
      $region92: #{_lambda_.4} parent=87 // pred_fallthru
        _
      // Predicated region
      $region93: #{_lambda_.4} parent=87 // pred_check
        %p616 = pneg %p74
      $region94: #{_lambda_.4} parent=87 // pred_check_branch
        %618 = sbr.rel (%p616) target = $region96
      $region95: #{_lambda_.4} parent=87 // pred_region
        %p619 = scmp.lt.s32.totalorder %s28, 1
        %s620 = scalar_select %p619, %s28, 1
        %s621 = smul.addr %s620, 8
        %s622 = scalar_lea.vmem %s1, %s621
      $region96: #{_lambda_.4} parent=87 // pred_fallthru
        _
      // Predicated region
      $region97: #{_lambda_.4} parent=87 // pred_check
        %p623 = pneg %p100
      $region98: #{_lambda_.4} parent=87 // pred_check_branch
        %625 = sbr.rel (%p623) target = $region100
      $region99: #{_lambda_.4} parent=87 // pred_region
        %p626 = scmp.lt.s32.totalorder %s28, 1
        %s627 = scalar_select %p626, %s28, 1
        %s628 = smul.addr %s627, 8
        %s629 = scalar_lea.vmem %s2, %s628
      $region100: #{_lambda_.4} parent=87 // pred_fallthru
        _
      // Predicated region
      $region101: #{_lambda_.4} parent=87 // pred_check
        %p630 = pneg %p126
      $region102: #{_lambda_.4} parent=87 // pred_check_branch
        %632 = sbr.rel (%p630) target = $region104
      $region103: #{_lambda_.4} parent=87 // pred_region
        %p633 = scmp.lt.s32.totalorder %s28, 1
        %s634 = scalar_select %p633, %s28, 1
        %s635 = scalar_lea.vmem %s3, %s634
      $region104: #{_lambda_.4} parent=87 // pred_fallthru
        _
    $region88: #{_lambda_.4} parent=5 // pred_fallthru
      _
    %p636 = scmp.le.s32.totalorder 1, %s28
    %p637 = scmp.lt.s32.totalorder %s28, 3
    %p638 = pnand %p636, %p637
    %p639 = pneg %p638
    // Predicated region
    $region105: #{_lambda_.4} parent=5 // pred_check
      _
    $region106: #{_lambda_.4} parent=5 // pred_check_branch
      %641 = sbr.rel (%p638) target = $region108
    $region107: #{_lambda_.4} parent=5 // pred_region
      %s642 = ssub.s32 %s28, 1
      %p643 = scmp.lt.s32.totalorder %s33, 1
      %s644 = scalar_select %p643, %s33, 1
      %s645 = smul.addr %s644, 8
      %s646 = scalar_lea.vmem %s0, %s645
      %p647 = pneg %p54
      %p648 = pneg %p51
      %p649 = scmp.lt.s32.totalorder %s33, 1
      %s650 = scalar_select %p649, %s33, 1
      %s651 = smul.addr %s650, 8
      %s652 = scalar_lea.vmem %s1, %s651
      %p653 = pneg %p80
      %p654 = pneg %p77
      %p655 = scmp.lt.s32.totalorder %s33, 1
      %s656 = scalar_select %p655, %s33, 1
      %s657 = smul.addr %s656, 8
      %s658 = scalar_lea.vmem %s2, %s657
      %p659 = pneg %p106
      %p660 = pneg %p103
      %p661 = scmp.lt.s32.totalorder %s33, 1
      %s662 = scalar_select %p661, %s33, 1
      %s663 = scalar_lea.vmem %s3, %s662
      %p664 = pneg %p132
      %p665 = pneg %p129
      %p666 = pneg %p153
      %p667 = pneg %p150
      %p668 = pneg %p174
      %p669 = pneg %p171
      %p670 = pneg %p195
      %p671 = pneg %p192
      %p672 = pneg %p216
      %p673 = pneg %p213
      %p674 = pneg %p237
      %p675 = pneg %p234
      %p676 = pneg %p258
      %p677 = pneg %p255
      %p678 = pneg %p279
      %p679 = pneg %p276
      %p680 = pneg %p300
      %p681 = pneg %p297
      %p682 = pneg %p321
      %p683 = pneg %p318
      %p684 = pneg %p342
      %p685 = pneg %p339
      %p686 = pneg %p363
      %p687 = pneg %p360
      %p688 = pneg %p384
      %p689 = pneg %p381
      %p690 = pneg %p405
      %p691 = pneg %p402
      %p692 = pneg %p426
      %p693 = pneg %p423
      %p694 = pneg %p447
      %p695 = pneg %p444
      %p696 = pneg %p468
      %p697 = pneg %p465
      %p698 = pneg %p489
      %p699 = pneg %p486
      %p700 = pneg %p510
      %p701 = pneg %p507
      %p702 = pneg %p536
      %p703 = pneg %p533
      %p704 = scmp.lt.s32.totalorder %s33, 1
      %s705 = scalar_select %p704, %s33, 1
      %s706 = smul.addr %s705, 8
      %s707 = scalar_lea.vmem %s22, %s706
      %p708 = scmp.lt.s32.totalorder %s33, 1
      %s709 = scalar_select %p708, %s33, 1
      %s710 = smul.addr %s709, 8
      %s711 = scalar_lea.vmem %s0, %s710
      %p712 = scmp.lt.s32.totalorder %s33, 1
      %s713 = scalar_select %p712, %s33, 1
      %s714 = smul.addr %s713, 8
      %s715 = scalar_lea.vmem %s1, %s714
      %p716 = scmp.lt.s32.totalorder %s33, 1
      %s717 = scalar_select %p716, %s33, 1
      %s718 = smul.addr %s717, 8
      %s719 = scalar_lea.vmem %s2, %s718
      %p720 = scmp.lt.s32.totalorder %s33, 1
      %s721 = scalar_select %p720, %s33, 1
      %s722 = scalar_lea.vmem %s3, %s721
      %p723 = scmp.lt.s32.totalorder %s33, 1
      %s724 = scalar_select %p723, %s33, 1
      %s725 = smul.addr %s724, 8
      %s726 = scalar_lea.vmem %s22, %s725
      %v728 = vld [vmem:[%s711] sm:$0xff]
      %v729 = vld [vmem:[%s715] sm:$0xff]
      %v730 = vld [vmem:[%s719] sm:$0xff]
      %v731 = vld [vmem:[%s722] sm:$0x1]
      %v732 = vpack.c.bf16 %v728, %v728
      %v733 = vld [vmem:[%s4] sm:$0xf]
      %v734 = vld [vmem:[%s4 + $0x4] sm:$0xf]
      %v735 = vld [vmem:[%s4 + $0x8] sm:$0xf]
      %v736 = vld [vmem:[%s4 + $0xc] sm:$0xf]
      %v741 = vunpack.c.l.b16 %v733
      %v742 = vunpack.c.l.b16 %v734
      %v743 = vunpack.c.l.b16 %v735
      %v744 = vunpack.c.l.b16 %v736
      %v745 = vpack.c.b16 %v742, %v741
      %v746 = vpack.c.b16 %v744, %v743
      %vm749 = vcmask 261120
      %v751 = vsel %vm749, %v732, 0
      %753 = vmatprep.subr.bf16.mxu0 0
      %754 = vmatpush1.bf16.msra.mxu0 0
      %755 = vmatprep.subr.bf16.mxu0 0
      %756 = vmatpush1.bf16.msra.mxu0 0
      %757 = vmatprep.subr.bf16.mxu0 0
      %758 = vmatpush1.bf16.msra.mxu0 0
      %759 = vmatprep.subr.bf16.mxu0 0
      %760 = vmatpush1.bf16.msra.mxu0 0
      %761 = vmatprep.subr.bf16.mxu0 0
      %762 = vmatpush1.bf16.msra.mxu0 0
      %763 = vmatprep.subr.bf16.mxu0 0
      %764 = vmatpush1.bf16.msra.mxu0 0
      %765 = vmatprep.subr.bf16.mxu0 0
      %766 = vmatpush1.bf16.msra.mxu0 %v746
      %767 = vmatprep.subr.bf16.mxu0 0
      %768 = vmatpush1.bf16.msra.mxu0 %v745
      %769 = vmatprep.subr.bf16.mxu0 0
      %770 = vmatpush2.bf16.msra.mxu0 0
      %771 = vmatprep.subr.bf16.mxu0 0
      %772 = vmatpush2.bf16.msra.mxu0 0
      %773 = vmatprep.subr.bf16.mxu0 0
      %774 = vmatpush2.bf16.msra.mxu0 0
      %775 = vmatprep.subr.bf16.mxu0 0
      %776 = vmatpush2.bf16.msra.mxu0 0
      %777 = vmatprep.subr.bf16.mxu0 0
      %778 = vmatpush2.bf16.msra.mxu0 0
      %779 = vmatprep.subr.bf16.mxu0 0
      %780 = vmatpush2.bf16.msra.mxu0 0
      %781 = vmatprep.subr.bf16.mxu0 0
      %782 = vmatpush2.bf16.msra.mxu0 0
      %783 = vmatprep.subr.bf16.mxu0 0
      %784 = vmatpush2.bf16.msra.mxu0 0
      %785 = vmatprep.mubr.bf16.mxu0 0
      %786 = vmatmul.mubr.bf16.gmra.mxu0 %v751
      %v787 = vpop.f32.mrf.mxu0
      %v788 = vadd.f32 0.0, %v787
      %v789 = vpop.f32.mrf.mxu0
      %v790 = vpop.f32.mrf.mxu0
      %v791 = vpop.f32.mrf.mxu0
      %792 = vdwg.mxu0
      %v793 = vmul.f32 %v788, 0.25
      %v794 = vld [vmem:[%s5] sm:$0xf]
      %v795 = vld [vmem:[%s5 + $0x4] sm:$0xf]
      %v796 = vld [vmem:[%s5 + $0x8] sm:$0xf]
      %v797 = vld [vmem:[%s5 + $0xc] sm:$0xf]
      %v802 = vunpack.c.l.b16 %v794
      %v803 = vunpack.c.l.b16 %v795
      %v804 = vunpack.c.l.b16 %v796
      %v805 = vunpack.c.l.b16 %v797
      %v806 = vpack.c.b16 %v803, %v802
      %v807 = vpack.c.b16 %v805, %v804
      %810 = vmatprep.subr.bf16.mxu0 0
      %811 = vmatpush1.bf16.msra.mxu0 0
      %812 = vmatprep.subr.bf16.mxu0 0
      %813 = vmatpush1.bf16.msra.mxu0 0
      %814 = vmatprep.subr.bf16.mxu0 0
      %815 = vmatpush1.bf16.msra.mxu0 0
      %816 = vmatprep.subr.bf16.mxu0 0
      %817 = vmatpush1.bf16.msra.mxu0 0
      %818 = vmatprep.subr.bf16.mxu0 0
      %819 = vmatpush1.bf16.msra.mxu0 0
      %820 = vmatprep.subr.bf16.mxu0 0
      %821 = vmatpush1.bf16.msra.mxu0 0
      %822 = vmatprep.subr.bf16.mxu0 0
      %823 = vmatpush1.bf16.msra.mxu0 %v807
      %824 = vmatprep.subr.bf16.mxu0 0
      %825 = vmatpush1.bf16.msra.mxu0 %v806
      %826 = vmatprep.subr.bf16.mxu0 0
      %827 = vmatpush2.bf16.msra.mxu0 0
      %828 = vmatprep.subr.bf16.mxu0 0
      %829 = vmatpush2.bf16.msra.mxu0 0
      %830 = vmatprep.subr.bf16.mxu0 0
      %831 = vmatpush2.bf16.msra.mxu0 0
      %832 = vmatprep.subr.bf16.mxu0 0
      %833 = vmatpush2.bf16.msra.mxu0 0
      %834 = vmatprep.subr.bf16.mxu0 0
      %835 = vmatpush2.bf16.msra.mxu0 0
      %836 = vmatprep.subr.bf16.mxu0 0
      %837 = vmatpush2.bf16.msra.mxu0 0
      %838 = vmatprep.subr.bf16.mxu0 0
      %839 = vmatpush2.bf16.msra.mxu0 0
      %840 = vmatprep.subr.bf16.mxu0 0
      %841 = vmatpush2.bf16.msra.mxu0 0
      %842 = vmatprep.mubr.bf16.mxu0 0
      %843 = vmatmul.mubr.bf16.gmra.mxu0 %v751
      %v844 = vpop.f32.mrf.mxu0
      %v845 = vadd.f32 0.0, %v844
      %v846 = vpop.f32.mrf.mxu0
      %v847 = vpop.f32.mrf.mxu0
      %v848 = vpop.f32.mrf.mxu0
      %849 = vdwg.mxu0
      %v850 = vld [vmem:[%s6] sm:$0xf]
      %v851 = vld [vmem:[%s6 + $0x4] sm:$0xf]
      %v852 = vld [vmem:[%s6 + $0x8] sm:$0xf]
      %v853 = vld [vmem:[%s6 + $0xc] sm:$0xf]
      %v858 = vunpack.c.l.b16 %v850
      %v859 = vunpack.c.l.b16 %v851
      %v860 = vunpack.c.l.b16 %v852
      %v861 = vunpack.c.l.b16 %v853
      %v862 = vpack.c.b16 %v859, %v858
      %v863 = vpack.c.b16 %v861, %v860
      %866 = vmatprep.subr.bf16.mxu0 0
      %867 = vmatpush1.bf16.msra.mxu0 0
      %868 = vmatprep.subr.bf16.mxu0 0
      %869 = vmatpush1.bf16.msra.mxu0 0
      %870 = vmatprep.subr.bf16.mxu0 0
      %871 = vmatpush1.bf16.msra.mxu0 0
      %872 = vmatprep.subr.bf16.mxu0 0
      %873 = vmatpush1.bf16.msra.mxu0 0
      %874 = vmatprep.subr.bf16.mxu0 0
      %875 = vmatpush1.bf16.msra.mxu0 0
      %876 = vmatprep.subr.bf16.mxu0 0
      %877 = vmatpush1.bf16.msra.mxu0 0
      %878 = vmatprep.subr.bf16.mxu0 0
      %879 = vmatpush1.bf16.msra.mxu0 %v863
      %880 = vmatprep.subr.bf16.mxu0 0
      %881 = vmatpush1.bf16.msra.mxu0 %v862
      %882 = vmatprep.subr.bf16.mxu0 0
      %883 = vmatpush2.bf16.msra.mxu0 0
      %884 = vmatprep.subr.bf16.mxu0 0
      %885 = vmatpush2.bf16.msra.mxu0 0
      %886 = vmatprep.subr.bf16.mxu0 0
      %887 = vmatpush2.bf16.msra.mxu0 0
      %888 = vmatprep.subr.bf16.mxu0 0
      %889 = vmatpush2.bf16.msra.mxu0 0
      %890 = vmatprep.subr.bf16.mxu0 0
      %891 = vmatpush2.bf16.msra.mxu0 0
      %892 = vmatprep.subr.bf16.mxu0 0
      %893 = vmatpush2.bf16.msra.mxu0 0
      %894 = vmatprep.subr.bf16.mxu0 0
      %895 = vmatpush2.bf16.msra.mxu0 0
      %896 = vmatprep.subr.bf16.mxu0 0
      %897 = vmatpush2.bf16.msra.mxu0 0
      %898 = vmatprep.mubr.bf16.mxu0 0
      %899 = vmatmul.mubr.bf16.gmra.mxu0 %v751
      %v900 = vpop.f32.mrf.mxu0
      %v901 = vadd.f32 0.0, %v900
      %v902 = vpop.f32.mrf.mxu0
      %v903 = vpop.f32.mrf.mxu0
      %v904 = vpop.f32.mrf.mxu0
      %905 = vdwg.mxu0
      %v906 = vpack.c.bf16 %v793, %v793
      %v907 = vpack.c.bf16 %v845, %v845
      %vm908 = vcmask 130048
      %v910 = vsel %vm908, %v906, 0
      %v913 = vsel %vm908, %v907, 0
      %915 = vmatprep.subr.bf16.mxu0 0
      %916 = vmatpush1.bf16.xpose.msra.mxu0 0
      %917 = vmatprep.subr.bf16.mxu0 0
      %918 = vmatpush1.bf16.xpose.msra.mxu0 0
      %919 = vmatprep.subr.bf16.mxu0 0
      %920 = vmatpush1.bf16.xpose.msra.mxu0 0
      %921 = vmatprep.subr.bf16.mxu0 0
      %922 = vmatpush1.bf16.xpose.msra.mxu0 0
      %923 = vmatprep.subr.bf16.mxu0 0
      %924 = vmatpush1.bf16.xpose.msra.mxu0 0
      %925 = vmatprep.subr.bf16.mxu0 0
      %926 = vmatpush1.bf16.xpose.msra.mxu0 0
      %927 = vmatprep.subr.bf16.mxu0 0
      %928 = vmatpush1.bf16.xpose.msra.mxu0 0
      %929 = vmatprep.subr.bf16.mxu0 0
      %930 = vmatpush1.bf16.xpose.msra.mxu0 %v913
      %931 = vmatprep.subr.bf16.mxu0 0
      %932 = vmatpush2.bf16.xpose.msra.mxu0 0
      %933 = vmatprep.subr.bf16.mxu0 0
      %934 = vmatpush2.bf16.xpose.msra.mxu0 0
      %935 = vmatprep.subr.bf16.mxu0 0
      %936 = vmatpush2.bf16.xpose.msra.mxu0 0
      %937 = vmatprep.subr.bf16.mxu0 0
      %938 = vmatpush2.bf16.xpose.msra.mxu0 0
      %939 = vmatprep.subr.bf16.mxu0 0
      %940 = vmatpush2.bf16.xpose.msra.mxu0 0
      %941 = vmatprep.subr.bf16.mxu0 0
      %942 = vmatpush2.bf16.xpose.msra.mxu0 0
      %943 = vmatprep.subr.bf16.mxu0 0
      %944 = vmatpush2.bf16.xpose.msra.mxu0 0
      %945 = vmatprep.subr.bf16.mxu0 0
      %946 = vmatpush2.bf16.xpose.msra.mxu0 0
      %947 = vmatprep.mubr.bf16.mxu0 0
      %948 = vmatmul.mubr.bf16.gmra.mxu0 %v910
      %v949 = vpop.f32.mrf.mxu0
      %v950 = vadd.f32 0.0, %v949
      %v951 = vpop.f32.mrf.mxu0
      %v952 = vpop.f32.mrf.mxu0
      %v953 = vpop.f32.mrf.mxu0
      %954 = vdwg.mxu0
      %vm955 = vcmp.eq.f32.partialorder %v730, 0.0
      %v956 = vsel %vm955, -1e+09, %v950
      %vm957 = vcmask 64512
      %v958 = vsel %vm957, %v956, -inf
      %959 = vmax.xlane.f32.xlu0 %v958
      %v960 = vpop.xlane.xlu0 %959
      %v961 = vsub.f32 %v956, %v960
      %v962 = vmul.f32 %v961, 1.442695
      %v963 = vpow.pop %v962
      %v964 = vsel %vm957, %v963, 0.0
      %965 = vadd.xlane.f32.xlu0 %v964
      %v966 = vpop.xlane.xlu0 %965
      %v967 = vrcp.pop %v966
      %v968 = vmul.f32 %v963, %v967
      %v969 = vpack.c.bf16 %v968, %v968
      %v970 = vpack.c.bf16 %v901, %v901
      %v972 = vsel %vm957, %v969, 0
      %vm974 = vcmask 1043456
      %v976 = vsel %vm974, %v970, 0
      %978 = vmatprep.subr.bf16.mxu0 0
      %979 = vmatpush1.bf16.msra.mxu0 0
      %980 = vmatprep.subr.bf16.mxu0 0
      %981 = vmatpush1.bf16.msra.mxu0 0
      %982 = vmatprep.subr.bf16.mxu0 0
      %983 = vmatpush1.bf16.msra.mxu0 0
      %984 = vmatprep.subr.bf16.mxu0 0
      %985 = vmatpush1.bf16.msra.mxu0 0
      %986 = vmatprep.subr.bf16.mxu0 0
      %987 = vmatpush1.bf16.msra.mxu0 0
      %988 = vmatprep.subr.bf16.mxu0 0
      %989 = vmatpush1.bf16.msra.mxu0 0
      %990 = vmatprep.subr.bf16.mxu0 0
      %991 = vmatpush1.bf16.msra.mxu0 0
      %992 = vmatprep.subr.bf16.mxu0 0
      %993 = vmatpush1.bf16.msra.mxu0 %v976
      %994 = vmatprep.subr.bf16.mxu0 0
      %995 = vmatpush2.bf16.msra.mxu0 0
      %996 = vmatprep.subr.bf16.mxu0 0
      %997 = vmatpush2.bf16.msra.mxu0 0
      %998 = vmatprep.subr.bf16.mxu0 0
      %999 = vmatpush2.bf16.msra.mxu0 0
      %1000 = vmatprep.subr.bf16.mxu0 0
      %1001 = vmatpush2.bf16.msra.mxu0 0
      %1002 = vmatprep.subr.bf16.mxu0 0
      %1003 = vmatpush2.bf16.msra.mxu0 0
      %1004 = vmatprep.subr.bf16.mxu0 0
      %1005 = vmatpush2.bf16.msra.mxu0 0
      %1006 = vmatprep.subr.bf16.mxu0 0
      %1007 = vmatpush2.bf16.msra.mxu0 0
      %1008 = vmatprep.subr.bf16.mxu0 0
      %1009 = vmatpush2.bf16.msra.mxu0 0
      %1010 = vmatprep.mubr.bf16.mxu0 0
      %1011 = vmatmul.mubr.bf16.gmra.mxu0 %v972
      %v1012 = vpop.f32.mrf.mxu0
      %v1013 = vadd.f32 0.0, %v1012
      %v1014 = vpop.f32.mrf.mxu0
      %v1015 = vpop.f32.mrf.mxu0
      %v1016 = vpop.f32.mrf.mxu0
      %1017 = vdwg.mxu0
      %v1018 = vpack.c.bf16 %v1013, %v1013
      %v1019 = vld [vmem:[%s7] sm:$0xf]
      %v1020 = vld [vmem:[%s7 + $0x4] sm:$0xf]
      %v1023 = vunpack.c.l.b16 %v1019
      %v1024 = vunpack.c.l.b16 %v1020
      %v1025 = vpack.c.b16 %v1024, %v1023
      %v1028 = vsel %vm908, %v1018, 0
      %1030 = vmatprep.subr.bf16.mxu0 0
      %1031 = vmatpush1.bf16.msra.mxu0 0
      %1032 = vmatprep.subr.bf16.mxu0 0
      %1033 = vmatpush1.bf16.msra.mxu0 0
      %1034 = vmatprep.subr.bf16.mxu0 0
      %1035 = vmatpush1.bf16.msra.mxu0 0
      %1036 = vmatprep.subr.bf16.mxu0 0
      %1037 = vmatpush1.bf16.msra.mxu0 0
      %1038 = vmatprep.subr.bf16.mxu0 0
      %1039 = vmatpush1.bf16.msra.mxu0 0
      %1040 = vmatprep.subr.bf16.mxu0 0
      %1041 = vmatpush1.bf16.msra.mxu0 0
      %1042 = vmatprep.subr.bf16.mxu0 0
      %1043 = vmatpush1.bf16.msra.mxu0 0
      %1044 = vmatprep.subr.bf16.mxu0 0
      %1045 = vmatpush1.bf16.msra.mxu0 %v1025
      %1046 = vmatprep.subr.bf16.mxu0 0
      %1047 = vmatpush2.bf16.msra.mxu0 0
      %1048 = vmatprep.subr.bf16.mxu0 0
      %1049 = vmatpush2.bf16.msra.mxu0 0
      %1050 = vmatprep.subr.bf16.mxu0 0
      %1051 = vmatpush2.bf16.msra.mxu0 0
      %1052 = vmatprep.subr.bf16.mxu0 0
      %1053 = vmatpush2.bf16.msra.mxu0 0
      %1054 = vmatprep.subr.bf16.mxu0 0
      %1055 = vmatpush2.bf16.msra.mxu0 0
      %1056 = vmatprep.subr.bf16.mxu0 0
      %1057 = vmatpush2.bf16.msra.mxu0 0
      %1058 = vmatprep.subr.bf16.mxu0 0
      %1059 = vmatpush2.bf16.msra.mxu0 0
      %1060 = vmatprep.subr.bf16.mxu0 0
      %1061 = vmatpush2.bf16.msra.mxu0 0
      %1062 = vmatprep.mubr.bf16.mxu0 0
      %1063 = vmatmul.mubr.bf16.gmra.mxu0 %v1028
      %v1064 = vpop.f32.mrf.mxu0
      %v1065 = vadd.f32 0.0, %v1064
      %v1066 = vpop.f32.mrf.mxu0
      %v1067 = vpop.f32.mrf.mxu0
      %v1068 = vpop.f32.mrf.mxu0
      %1069 = vdwg.mxu0
      %v1070 = vadd.f32 %v728, %v1065
      %s1071 = scalar_lea.vmem %s4, 16
      %v1072 = vld [vmem:[%s1071] sm:$0xf]
      %v1073 = vld [vmem:[%s1071 + $0x4] sm:$0xf]
      %v1074 = vld [vmem:[%s1071 + $0x8] sm:$0xf]
      %v1075 = vld [vmem:[%s1071 + $0xc] sm:$0xf]
      %v1080 = vunpack.c.l.b16 %v1072
      %v1081 = vunpack.c.l.b16 %v1073
      %v1082 = vunpack.c.l.b16 %v1074
      %v1083 = vunpack.c.l.b16 %v1075
      %v1084 = vpack.c.b16 %v1081, %v1080
      %v1085 = vpack.c.b16 %v1083, %v1082
      %1088 = vmatprep.subr.bf16.mxu0 0
      %1089 = vmatpush1.bf16.msra.mxu0 0
      %1090 = vmatprep.subr.bf16.mxu0 0
      %1091 = vmatpush1.bf16.msra.mxu0 0
      %1092 = vmatprep.subr.bf16.mxu0 0
      %1093 = vmatpush1.bf16.msra.mxu0 0
      %1094 = vmatprep.subr.bf16.mxu0 0
      %1095 = vmatpush1.bf16.msra.mxu0 0
      %1096 = vmatprep.subr.bf16.mxu0 0
      %1097 = vmatpush1.bf16.msra.mxu0 0
      %1098 = vmatprep.subr.bf16.mxu0 0
      %1099 = vmatpush1.bf16.msra.mxu0 0
      %1100 = vmatprep.subr.bf16.mxu0 0
      %1101 = vmatpush1.bf16.msra.mxu0 %v1085
      %1102 = vmatprep.subr.bf16.mxu0 0
      %1103 = vmatpush1.bf16.msra.mxu0 %v1084
      %1104 = vmatprep.subr.bf16.mxu0 0
      %1105 = vmatpush2.bf16.msra.mxu0 0
      %1106 = vmatprep.subr.bf16.mxu0 0
      %1107 = vmatpush2.bf16.msra.mxu0 0
      %1108 = vmatprep.subr.bf16.mxu0 0
      %1109 = vmatpush2.bf16.msra.mxu0 0
      %1110 = vmatprep.subr.bf16.mxu0 0
      %1111 = vmatpush2.bf16.msra.mxu0 0
      %1112 = vmatprep.subr.bf16.mxu0 0
      %1113 = vmatpush2.bf16.msra.mxu0 0
      %1114 = vmatprep.subr.bf16.mxu0 0
      %1115 = vmatpush2.bf16.msra.mxu0 0
      %1116 = vmatprep.subr.bf16.mxu0 0
      %1117 = vmatpush2.bf16.msra.mxu0 0
      %1118 = vmatprep.subr.bf16.mxu0 0
      %1119 = vmatpush2.bf16.msra.mxu0 0
      %1120 = vmatprep.mubr.bf16.mxu0 0
      %1121 = vmatmul.mubr.bf16.gmra.mxu0 %v751
      %v1122 = vpop.f32.mrf.mxu0
      %v1123 = vadd.f32 0.0, %v1122
      %v1124 = vpop.f32.mrf.mxu0
      %v1125 = vpop.f32.mrf.mxu0
      %v1126 = vpop.f32.mrf.mxu0
      %1127 = vdwg.mxu0
      %v1128 = vmul.f32 %v1123, 0.25
      %s1129 = scalar_lea.vmem %s5, 16
      %v1130 = vld [vmem:[%s1129] sm:$0xf]
      %v1131 = vld [vmem:[%s1129 + $0x4] sm:$0xf]
      %v1132 = vld [vmem:[%s1129 + $0x8] sm:$0xf]
      %v1133 = vld [vmem:[%s1129 + $0xc] sm:$0xf]
      %v1138 = vunpack.c.l.b16 %v1130
      %v1139 = vunpack.c.l.b16 %v1131
      %v1140 = vunpack.c.l.b16 %v1132
      %v1141 = vunpack.c.l.b16 %v1133
      %v1142 = vpack.c.b16 %v1139, %v1138
      %v1143 = vpack.c.b16 %v1141, %v1140
      %1146 = vmatprep.subr.bf16.mxu0 0
      %1147 = vmatpush1.bf16.msra.mxu0 0
      %1148 = vmatprep.subr.bf16.mxu0 0
      %1149 = vmatpush1.bf16.msra.mxu0 0
      %1150 = vmatprep.subr.bf16.mxu0 0
      %1151 = vmatpush1.bf16.msra.mxu0 0
      %1152 = vmatprep.subr.bf16.mxu0 0
      %1153 = vmatpush1.bf16.msra.mxu0 0
      %1154 = vmatprep.subr.bf16.mxu0 0
      %1155 = vmatpush1.bf16.msra.mxu0 0
      %1156 = vmatprep.subr.bf16.mxu0 0
      %1157 = vmatpush1.bf16.msra.mxu0 0
      %1158 = vmatprep.subr.bf16.mxu0 0
      %1159 = vmatpush1.bf16.msra.mxu0 %v1143
      %1160 = vmatprep.subr.bf16.mxu0 0
      %1161 = vmatpush1.bf16.msra.mxu0 %v1142
      %1162 = vmatprep.subr.bf16.mxu0 0
      %1163 = vmatpush2.bf16.msra.mxu0 0
      %1164 = vmatprep.subr.bf16.mxu0 0
      %1165 = vmatpush2.bf16.msra.mxu0 0
      %1166 = vmatprep.subr.bf16.mxu0 0
      %1167 = vmatpush2.bf16.msra.mxu0 0
      %1168 = vmatprep.subr.bf16.mxu0 0
      %1169 = vmatpush2.bf16.msra.mxu0 0
      %1170 = vmatprep.subr.bf16.mxu0 0
      %1171 = vmatpush2.bf16.msra.mxu0 0
      %1172 = vmatprep.subr.bf16.mxu0 0
      %1173 = vmatpush2.bf16.msra.mxu0 0
      %1174 = vmatprep.subr.bf16.mxu0 0
      %1175 = vmatpush2.bf16.msra.mxu0 0
      %1176 = vmatprep.subr.bf16.mxu0 0
      %1177 = vmatpush2.bf16.msra.mxu0 0
      %1178 = vmatprep.mubr.bf16.mxu0 0
      %1179 = vmatmul.mubr.bf16.gmra.mxu0 %v751
      %v1180 = vpop.f32.mrf.mxu0
      %v1181 = vadd.f32 0.0, %v1180
      %v1182 = vpop.f32.mrf.mxu0
      %v1183 = vpop.f32.mrf.mxu0
      %v1184 = vpop.f32.mrf.mxu0
      %1185 = vdwg.mxu0
      %s1186 = scalar_lea.vmem %s6, 16
      %v1187 = vld [vmem:[%s1186] sm:$0xf]
      %v1188 = vld [vmem:[%s1186 + $0x4] sm:$0xf]
      %v1189 = vld [vmem:[%s1186 + $0x8] sm:$0xf]
      %v1190 = vld [vmem:[%s1186 + $0xc] sm:$0xf]
      %v1195 = vunpack.c.l.b16 %v1187
      %v1196 = vunpack.c.l.b16 %v1188
      %v1197 = vunpack.c.l.b16 %v1189
      %v1198 = vunpack.c.l.b16 %v1190
      %v1199 = vpack.c.b16 %v1196, %v1195
      %v1200 = vpack.c.b16 %v1198, %v1197
      %1203 = vmatprep.subr.bf16.mxu0 0
      %1204 = vmatpush1.bf16.msra.mxu0 0
      %1205 = vmatprep.subr.bf16.mxu0 0
      %1206 = vmatpush1.bf16.msra.mxu0 0
      %1207 = vmatprep.subr.bf16.mxu0 0
      %1208 = vmatpush1.bf16.msra.mxu0 0
      %1209 = vmatprep.subr.bf16.mxu0 0
      %1210 = vmatpush1.bf16.msra.mxu0 0
      %1211 = vmatprep.subr.bf16.mxu0 0
      %1212 = vmatpush1.bf16.msra.mxu0 0
      %1213 = vmatprep.subr.bf16.mxu0 0
      %1214 = vmatpush1.bf16.msra.mxu0 0
      %1215 = vmatprep.subr.bf16.mxu0 0
      %1216 = vmatpush1.bf16.msra.mxu0 %v1200
      %1217 = vmatprep.subr.bf16.mxu0 0
      %1218 = vmatpush1.bf16.msra.mxu0 %v1199
      %1219 = vmatprep.subr.bf16.mxu0 0
      %1220 = vmatpush2.bf16.msra.mxu0 0
      %1221 = vmatprep.subr.bf16.mxu0 0
      %1222 = vmatpush2.bf16.msra.mxu0 0
      %1223 = vmatprep.subr.bf16.mxu0 0
      %1224 = vmatpush2.bf16.msra.mxu0 0
      %1225 = vmatprep.subr.bf16.mxu0 0
      %1226 = vmatpush2.bf16.msra.mxu0 0
      %1227 = vmatprep.subr.bf16.mxu0 0
      %1228 = vmatpush2.bf16.msra.mxu0 0
      %1229 = vmatprep.subr.bf16.mxu0 0
      %1230 = vmatpush2.bf16.msra.mxu0 0
      %1231 = vmatprep.subr.bf16.mxu0 0
      %1232 = vmatpush2.bf16.msra.mxu0 0
      %1233 = vmatprep.subr.bf16.mxu0 0
      %1234 = vmatpush2.bf16.msra.mxu0 0
      %1235 = vmatprep.mubr.bf16.mxu0 0
      %1236 = vmatmul.mubr.bf16.gmra.mxu0 %v751
      %v1237 = vpop.f32.mrf.mxu0
      %v1238 = vadd.f32 0.0, %v1237
      %v1239 = vpop.f32.mrf.mxu0
      %v1240 = vpop.f32.mrf.mxu0
      %v1241 = vpop.f32.mrf.mxu0
      %1242 = vdwg.mxu0
      %v1243 = vpack.c.bf16 %v1128, %v1128
      %v1244 = vpack.c.bf16 %v1181, %v1181
      %v1246 = vsel %vm908, %v1243, 0
      %v1249 = vsel %vm908, %v1244, 0
      %1251 = vmatprep.subr.bf16.mxu0 0
      %1252 = vmatpush1.bf16.xpose.msra.mxu0 0
      %1253 = vmatprep.subr.bf16.mxu0 0
      %1254 = vmatpush1.bf16.xpose.msra.mxu0 0
      %1255 = vmatprep.subr.bf16.mxu0 0
      %1256 = vmatpush1.bf16.xpose.msra.mxu0 0
      %1257 = vmatprep.subr.bf16.mxu0 0
      %1258 = vmatpush1.bf16.xpose.msra.mxu0 0
      %1259 = vmatprep.subr.bf16.mxu0 0
      %1260 = vmatpush1.bf16.xpose.msra.mxu0 0
      %1261 = vmatprep.subr.bf16.mxu0 0
      %1262 = vmatpush1.bf16.xpose.msra.mxu0 0
      %1263 = vmatprep.subr.bf16.mxu0 0
      %1264 = vmatpush1.bf16.xpose.msra.mxu0 0
      %1265 = vmatprep.subr.bf16.mxu0 0
      %1266 = vmatpush1.bf16.xpose.msra.mxu0 %v1249
      %1267 = vmatprep.subr.bf16.mxu0 0
      %1268 = vmatpush2.bf16.xpose.msra.mxu0 0
      %1269 = vmatprep.subr.bf16.mxu0 0
      %1270 = vmatpush2.bf16.xpose.msra.mxu0 0
      %1271 = vmatprep.subr.bf16.mxu0 0
      %1272 = vmatpush2.bf16.xpose.msra.mxu0 0
      %1273 = vmatprep.subr.bf16.mxu0 0
      %1274 = vmatpush2.bf16.xpose.msra.mxu0 0
      %1275 = vmatprep.subr.bf16.mxu0 0
      %1276 = vmatpush2.bf16.xpose.msra.mxu0 0
      %1277 = vmatprep.subr.bf16.mxu0 0
      %1278 = vmatpush2.bf16.xpose.msra.mxu0 0
      %1279 = vmatprep.subr.bf16.mxu0 0
      %1280 = vmatpush2.bf16.xpose.msra.mxu0 0
      %1281 = vmatprep.subr.bf16.mxu0 0
      %1282 = vmatpush2.bf16.xpose.msra.mxu0 0
      %1283 = vmatprep.mubr.bf16.mxu0 0
      %1284 = vmatmul.mubr.bf16.gmra.mxu0 %v1246
      %v1285 = vpop.f32.mrf.mxu0
      %v1286 = vadd.f32 0.0, %v1285
      %v1287 = vpop.f32.mrf.mxu0
      %v1288 = vpop.f32.mrf.mxu0
      %v1289 = vpop.f32.mrf.mxu0
      %1290 = vdwg.mxu0
      %v1291 = vsel %vm955, -1e+09, %v1286
      %v1292 = vsel %vm957, %v1291, -inf
      %1293 = vmax.xlane.f32.xlu0 %v1292
      %v1294 = vpop.xlane.xlu0 %1293
      %v1295 = vsub.f32 %v1291, %v1294
      %v1296 = vmul.f32 %v1295, 1.442695
      %v1297 = vpow.pop %v1296
      %v1298 = vsel %vm957, %v1297, 0.0
      %1299 = vadd.xlane.f32.xlu0 %v1298
      %v1300 = vpop.xlane.xlu0 %1299
      %v1301 = vrcp.pop %v1300
      %v1302 = vmul.f32 %v1297, %v1301
      %v1303 = vpack.c.bf16 %v1302, %v1302
      %v1304 = vpack.c.bf16 %v1238, %v1238
      %v1306 = vsel %vm957, %v1303, 0
      %v1309 = vsel %vm974, %v1304, 0
      %1311 = vmatprep.subr.bf16.mxu0 0
      %1312 = vmatpush1.bf16.msra.mxu0 0
      %1313 = vmatprep.subr.bf16.mxu0 0
      %1314 = vmatpush1.bf16.msra.mxu0 0
      %1315 = vmatprep.subr.bf16.mxu0 0
      %1316 = vmatpush1.bf16.msra.mxu0 0
      %1317 = vmatprep.subr.bf16.mxu0 0
      %1318 = vmatpush1.bf16.msra.mxu0 0
      %1319 = vmatprep.subr.bf16.mxu0 0
      %1320 = vmatpush1.bf16.msra.mxu0 0
      %1321 = vmatprep.subr.bf16.mxu0 0
      %1322 = vmatpush1.bf16.msra.mxu0 0
      %1323 = vmatprep.subr.bf16.mxu0 0
      %1324 = vmatpush1.bf16.msra.mxu0 0
      %1325 = vmatprep.subr.bf16.mxu0 0
      %1326 = vmatpush1.bf16.msra.mxu0 %v1309
      %1327 = vmatprep.subr.bf16.mxu0 0
      %1328 = vmatpush2.bf16.msra.mxu0 0
      %1329 = vmatprep.subr.bf16.mxu0 0
      %1330 = vmatpush2.bf16.msra.mxu0 0
      %1331 = vmatprep.subr.bf16.mxu0 0
      %1332 = vmatpush2.bf16.msra.mxu0 0
      %1333 = vmatprep.subr.bf16.mxu0 0
      %1334 = vmatpush2.bf16.msra.mxu0 0
      %1335 = vmatprep.subr.bf16.mxu0 0
      %1336 = vmatpush2.bf16.msra.mxu0 0
      %1337 = vmatprep.subr.bf16.mxu0 0
      %1338 = vmatpush2.bf16.msra.mxu0 0
      %1339 = vmatprep.subr.bf16.mxu0 0
      %1340 = vmatpush2.bf16.msra.mxu0 0
      %1341 = vmatprep.subr.bf16.mxu0 0
      %1342 = vmatpush2.bf16.msra.mxu0 0
      %1343 = vmatprep.mubr.bf16.mxu0 0
      %1344 = vmatmul.mubr.bf16.gmra.mxu0 %v1306
      %v1345 = vpop.f32.mrf.mxu0
      %v1346 = vadd.f32 0.0, %v1345
      %v1347 = vpop.f32.mrf.mxu0
      %v1348 = vpop.f32.mrf.mxu0
      %v1349 = vpop.f32.mrf.mxu0
      %1350 = vdwg.mxu0
      %v1351 = vpack.c.bf16 %v1346, %v1346
      %s1352 = scalar_lea.vmem %s7, 8
      %v1353 = vld [vmem:[%s1352] sm:$0xf]
      %v1354 = vld [vmem:[%s1352 + $0x4] sm:$0xf]
      %v1357 = vunpack.c.l.b16 %v1353
      %v1358 = vunpack.c.l.b16 %v1354
      %v1359 = vpack.c.b16 %v1358, %v1357
      %v1362 = vsel %vm908, %v1351, 0
      %1364 = vmatprep.subr.bf16.mxu0 0
      %1365 = vmatpush1.bf16.msra.mxu0 0
      %1366 = vmatprep.subr.bf16.mxu0 0
      %1367 = vmatpush1.bf16.msra.mxu0 0
      %1368 = vmatprep.subr.bf16.mxu0 0
      %1369 = vmatpush1.bf16.msra.mxu0 0
      %1370 = vmatprep.subr.bf16.mxu0 0
      %1371 = vmatpush1.bf16.msra.mxu0 0
      %1372 = vmatprep.subr.bf16.mxu0 0
      %1373 = vmatpush1.bf16.msra.mxu0 0
      %1374 = vmatprep.subr.bf16.mxu0 0
      %1375 = vmatpush1.bf16.msra.mxu0 0
      %1376 = vmatprep.subr.bf16.mxu0 0
      %1377 = vmatpush1.bf16.msra.mxu0 0
      %1378 = vmatprep.subr.bf16.mxu0 0
      %1379 = vmatpush1.bf16.msra.mxu0 %v1359
      %1380 = vmatprep.subr.bf16.mxu0 0
      %1381 = vmatpush2.bf16.msra.mxu0 0
      %1382 = vmatprep.subr.bf16.mxu0 0
      %1383 = vmatpush2.bf16.msra.mxu0 0
      %1384 = vmatprep.subr.bf16.mxu0 0
      %1385 = vmatpush2.bf16.msra.mxu0 0
      %1386 = vmatprep.subr.bf16.mxu0 0
      %1387 = vmatpush2.bf16.msra.mxu0 0
      %1388 = vmatprep.subr.bf16.mxu0 0
      %1389 = vmatpush2.bf16.msra.mxu0 0
      %1390 = vmatprep.subr.bf16.mxu0 0
      %1391 = vmatpush2.bf16.msra.mxu0 0
      %1392 = vmatprep.subr.bf16.mxu0 0
      %1393 = vmatpush2.bf16.msra.mxu0 0
      %1394 = vmatprep.subr.bf16.mxu0 0
      %1395 = vmatpush2.bf16.msra.mxu0 0
      %1396 = vmatprep.mubr.bf16.mxu0 0
      %1397 = vmatmul.mubr.bf16.gmra.mxu0 %v1362
      %v1398 = vpop.f32.mrf.mxu0
      %v1399 = vadd.f32 0.0, %v1398
      %v1400 = vpop.f32.mrf.mxu0
      %v1401 = vpop.f32.mrf.mxu0
      %v1402 = vpop.f32.mrf.mxu0
      %1403 = vdwg.mxu0
      %v1404 = vadd.f32 %v1070, %v1399
      %v1405 = vsel %vm749, %v1404, 0.0
      %1406 = vadd.xlane.f32.xlu0 %v1405
      %v1407 = vpop.xlane.xlu0 %1406
      %v1408 = vrcp.pop 32.0
      %v1409 = vmul.f32 %v1407, %v1408
      %v1410 = vsub.f32 %v1404, %v1409
      %v1411 = vmul.f32 %v1410, %v1410
      %v1412 = vsel %vm749, %v1411, 0.0
      %1413 = vadd.xlane.f32.xlu0 %v1412
      %v1414 = vpop.xlane.xlu0 %1413
      %v1415 = vmul.f32 %v1414, %v1408
      %v1416 = vadd.f32 %v1415, 1e-06
      %v1417 = vrsqrt.pop %v1416
      %v1418 = vmul.f32 %v1410, %v1417
      %v1419 = vld [vmem:[%s8] sm:$0x1]
      %v1421 = vlaneseq
      %v1422 = vshrl.u32 %v1421, 7
      %v1423 = vsub.s32 0, %v1422
      %v1424 = vrot.slane %v1419, %v1423
      %v1426 = vmul.f32 %v1418, %v1424
      %v1427 = vld [vmem:[%s9] sm:$0x1]
      %v1429 = vlaneseq
      %v1430 = vshrl.u32 %v1429, 7
      %v1431 = vsub.s32 0, %v1430
      %v1432 = vrot.slane %v1427, %v1431
      %v1434 = vadd.f32 %v1426, %v1432
      %v1435 = vpack.c.bf16 %v1434, %v1434
      %v1436 = vpack.c.bf16 %v729, %v729
      %v1437 = vld [vmem:[%s10] sm:$0xf]
      %v1438 = vld [vmem:[%s10 + $0x4] sm:$0xf]
      %v1439 = vld [vmem:[%s10 + $0x8] sm:$0xf]
      %v1440 = vld [vmem:[%s10 + $0xc] sm:$0xf]
      %v1445 = vunpack.c.l.b16 %v1437
      %v1446 = vunpack.c.l.b16 %v1438
      %v1447 = vunpack.c.l.b16 %v1439
      %v1448 = vunpack.c.l.b16 %v1440
      %v1449 = vpack.c.b16 %v1446, %v1445
      %v1450 = vpack.c.b16 %v1448, %v1447
      %v1454 = vsel %vm749, %v1435, 0
      %1456 = vmatprep.subr.bf16.mxu0 0
      %1457 = vmatpush1.bf16.msra.mxu0 0
      %1458 = vmatprep.subr.bf16.mxu0 0
      %1459 = vmatpush1.bf16.msra.mxu0 0
      %1460 = vmatprep.subr.bf16.mxu0 0
      %1461 = vmatpush1.bf16.msra.mxu0 0
      %1462 = vmatprep.subr.bf16.mxu0 0
      %1463 = vmatpush1.bf16.msra.mxu0 0
      %1464 = vmatprep.subr.bf16.mxu0 0
      %1465 = vmatpush1.bf16.msra.mxu0 0
      %1466 = vmatprep.subr.bf16.mxu0 0
      %1467 = vmatpush1.bf16.msra.mxu0 0
      %1468 = vmatprep.subr.bf16.mxu0 0
      %1469 = vmatpush1.bf16.msra.mxu0 %v1450
      %1470 = vmatprep.subr.bf16.mxu0 0
      %1471 = vmatpush1.bf16.msra.mxu0 %v1449
      %1472 = vmatprep.subr.bf16.mxu0 0
      %1473 = vmatpush2.bf16.msra.mxu0 0
      %1474 = vmatprep.subr.bf16.mxu0 0
      %1475 = vmatpush2.bf16.msra.mxu0 0
      %1476 = vmatprep.subr.bf16.mxu0 0
      %1477 = vmatpush2.bf16.msra.mxu0 0
      %1478 = vmatprep.subr.bf16.mxu0 0
      %1479 = vmatpush2.bf16.msra.mxu0 0
      %1480 = vmatprep.subr.bf16.mxu0 0
      %1481 = vmatpush2.bf16.msra.mxu0 0
      %1482 = vmatprep.subr.bf16.mxu0 0
      %1483 = vmatpush2.bf16.msra.mxu0 0
      %1484 = vmatprep.subr.bf16.mxu0 0
      %1485 = vmatpush2.bf16.msra.mxu0 0
      %1486 = vmatprep.subr.bf16.mxu0 0
      %1487 = vmatpush2.bf16.msra.mxu0 0
      %1488 = vmatprep.mubr.bf16.mxu0 0
      %1489 = vmatmul.mubr.bf16.gmra.mxu0 %v1454
      %v1490 = vpop.f32.mrf.mxu0
      %v1491 = vadd.f32 0.0, %v1490
      %v1492 = vpop.f32.mrf.mxu0
      %v1493 = vpop.f32.mrf.mxu0
      %v1494 = vpop.f32.mrf.mxu0
      %1495 = vdwg.mxu0
      %v1496 = vmul.f32 %v1491, 0.25
      %v1497 = vld [vmem:[%s11] sm:$0xf]
      %v1498 = vld [vmem:[%s11 + $0x4] sm:$0xf]
      %v1499 = vld [vmem:[%s11 + $0x8] sm:$0xf]
      %v1500 = vld [vmem:[%s11 + $0xc] sm:$0xf]
      %v1505 = vunpack.c.l.b16 %v1497
      %v1506 = vunpack.c.l.b16 %v1498
      %v1507 = vunpack.c.l.b16 %v1499
      %v1508 = vunpack.c.l.b16 %v1500
      %v1509 = vpack.c.b16 %v1506, %v1505
      %v1510 = vpack.c.b16 %v1508, %v1507
      %v1514 = vsel %vm749, %v1436, 0
      %1516 = vmatprep.subr.bf16.mxu0 0
      %1517 = vmatpush1.bf16.msra.mxu0 0
      %1518 = vmatprep.subr.bf16.mxu0 0
      %1519 = vmatpush1.bf16.msra.mxu0 0
      %1520 = vmatprep.subr.bf16.mxu0 0
      %1521 = vmatpush1.bf16.msra.mxu0 0
      %1522 = vmatprep.subr.bf16.mxu0 0
      %1523 = vmatpush1.bf16.msra.mxu0 0
      %1524 = vmatprep.subr.bf16.mxu0 0
      %1525 = vmatpush1.bf16.msra.mxu0 0
      %1526 = vmatprep.subr.bf16.mxu0 0
      %1527 = vmatpush1.bf16.msra.mxu0 0
      %1528 = vmatprep.subr.bf16.mxu0 0
      %1529 = vmatpush1.bf16.msra.mxu0 %v1510
      %1530 = vmatprep.subr.bf16.mxu0 0
      %1531 = vmatpush1.bf16.msra.mxu0 %v1509
      %1532 = vmatprep.subr.bf16.mxu0 0
      %1533 = vmatpush2.bf16.msra.mxu0 0
      %1534 = vmatprep.subr.bf16.mxu0 0
      %1535 = vmatpush2.bf16.msra.mxu0 0
      %1536 = vmatprep.subr.bf16.mxu0 0
      %1537 = vmatpush2.bf16.msra.mxu0 0
      %1538 = vmatprep.subr.bf16.mxu0 0
      %1539 = vmatpush2.bf16.msra.mxu0 0
      %1540 = vmatprep.subr.bf16.mxu0 0
      %1541 = vmatpush2.bf16.msra.mxu0 0
      %1542 = vmatprep.subr.bf16.mxu0 0
      %1543 = vmatpush2.bf16.msra.mxu0 0
      %1544 = vmatprep.subr.bf16.mxu0 0
      %1545 = vmatpush2.bf16.msra.mxu0 0
      %1546 = vmatprep.subr.bf16.mxu0 0
      %1547 = vmatpush2.bf16.msra.mxu0 0
      %1548 = vmatprep.mubr.bf16.mxu0 0
      %1549 = vmatmul.mubr.bf16.gmra.mxu0 %v1514
      %v1550 = vpop.f32.mrf.mxu0
      %v1551 = vadd.f32 0.0, %v1550
      %v1552 = vpop.f32.mrf.mxu0
      %v1553 = vpop.f32.mrf.mxu0
      %v1554 = vpop.f32.mrf.mxu0
      %1555 = vdwg.mxu0
      %v1556 = vld [vmem:[%s12] sm:$0xf]
      %v1557 = vld [vmem:[%s12 + $0x4] sm:$0xf]
      %v1558 = vld [vmem:[%s12 + $0x8] sm:$0xf]
      %v1559 = vld [vmem:[%s12 + $0xc] sm:$0xf]
      %v1564 = vunpack.c.l.b16 %v1556
      %v1565 = vunpack.c.l.b16 %v1557
      %v1566 = vunpack.c.l.b16 %v1558
      %v1567 = vunpack.c.l.b16 %v1559
      %v1568 = vpack.c.b16 %v1565, %v1564
      %v1569 = vpack.c.b16 %v1567, %v1566
      %1572 = vmatprep.subr.bf16.mxu0 0
      %1573 = vmatpush1.bf16.msra.mxu0 0
      %1574 = vmatprep.subr.bf16.mxu0 0
      %1575 = vmatpush1.bf16.msra.mxu0 0
      %1576 = vmatprep.subr.bf16.mxu0 0
      %1577 = vmatpush1.bf16.msra.mxu0 0
      %1578 = vmatprep.subr.bf16.mxu0 0
      %1579 = vmatpush1.bf16.msra.mxu0 0
      %1580 = vmatprep.subr.bf16.mxu0 0
      %1581 = vmatpush1.bf16.msra.mxu0 0
      %1582 = vmatprep.subr.bf16.mxu0 0
      %1583 = vmatpush1.bf16.msra.mxu0 0
      %1584 = vmatprep.subr.bf16.mxu0 0
      %1585 = vmatpush1.bf16.msra.mxu0 %v1569
      %1586 = vmatprep.subr.bf16.mxu0 0
      %1587 = vmatpush1.bf16.msra.mxu0 %v1568
      %1588 = vmatprep.subr.bf16.mxu0 0
      %1589 = vmatpush2.bf16.msra.mxu0 0
      %1590 = vmatprep.subr.bf16.mxu0 0
      %1591 = vmatpush2.bf16.msra.mxu0 0
      %1592 = vmatprep.subr.bf16.mxu0 0
      %1593 = vmatpush2.bf16.msra.mxu0 0
      %1594 = vmatprep.subr.bf16.mxu0 0
      %1595 = vmatpush2.bf16.msra.mxu0 0
      %1596 = vmatprep.subr.bf16.mxu0 0
      %1597 = vmatpush2.bf16.msra.mxu0 0
      %1598 = vmatprep.subr.bf16.mxu0 0
      %1599 = vmatpush2.bf16.msra.mxu0 0
      %1600 = vmatprep.subr.bf16.mxu0 0
      %1601 = vmatpush2.bf16.msra.mxu0 0
      %1602 = vmatprep.subr.bf16.mxu0 0
      %1603 = vmatpush2.bf16.msra.mxu0 0
      %1604 = vmatprep.mubr.bf16.mxu0 0
      %1605 = vmatmul.mubr.bf16.gmra.mxu0 %v1514
      %v1606 = vpop.f32.mrf.mxu0
      %v1607 = vadd.f32 0.0, %v1606
      %v1608 = vpop.f32.mrf.mxu0
      %v1609 = vpop.f32.mrf.mxu0
      %v1610 = vpop.f32.mrf.mxu0
      %1611 = vdwg.mxu0
      %v1612 = vpack.c.bf16 %v1496, %v1496
      %v1613 = vpack.c.bf16 %v1551, %v1551
      %v1615 = vsel %vm908, %v1612, 0
      %v1618 = vsel %vm908, %v1613, 0
      %1620 = vmatprep.subr.bf16.mxu0 0
      %1621 = vmatpush1.bf16.xpose.msra.mxu0 0
      %1622 = vmatprep.subr.bf16.mxu0 0
      %1623 = vmatpush1.bf16.xpose.msra.mxu0 0
      %1624 = vmatprep.subr.bf16.mxu0 0
      %1625 = vmatpush1.bf16.xpose.msra.mxu0 0
      %1626 = vmatprep.subr.bf16.mxu0 0
      %1627 = vmatpush1.bf16.xpose.msra.mxu0 0
      %1628 = vmatprep.subr.bf16.mxu0 0
      %1629 = vmatpush1.bf16.xpose.msra.mxu0 0
      %1630 = vmatprep.subr.bf16.mxu0 0
      %1631 = vmatpush1.bf16.xpose.msra.mxu0 0
      %1632 = vmatprep.subr.bf16.mxu0 0
      %1633 = vmatpush1.bf16.xpose.msra.mxu0 0
      %1634 = vmatprep.subr.bf16.mxu0 0
      %1635 = vmatpush1.bf16.xpose.msra.mxu0 %v1618
      %1636 = vmatprep.subr.bf16.mxu0 0
      %1637 = vmatpush2.bf16.xpose.msra.mxu0 0
      %1638 = vmatprep.subr.bf16.mxu0 0
      %1639 = vmatpush2.bf16.xpose.msra.mxu0 0
      %1640 = vmatprep.subr.bf16.mxu0 0
      %1641 = vmatpush2.bf16.xpose.msra.mxu0 0
      %1642 = vmatprep.subr.bf16.mxu0 0
      %1643 = vmatpush2.bf16.xpose.msra.mxu0 0
      %1644 = vmatprep.subr.bf16.mxu0 0
      %1645 = vmatpush2.bf16.xpose.msra.mxu0 0
      %1646 = vmatprep.subr.bf16.mxu0 0
      %1647 = vmatpush2.bf16.xpose.msra.mxu0 0
      %1648 = vmatprep.subr.bf16.mxu0 0
      %1649 = vmatpush2.bf16.xpose.msra.mxu0 0
      %1650 = vmatprep.subr.bf16.mxu0 0
      %1651 = vmatpush2.bf16.xpose.msra.mxu0 0
      %1652 = vmatprep.mubr.bf16.mxu0 0
      %1653 = vmatmul.mubr.bf16.gmra.mxu0 %v1615
      %v1654 = vpop.f32.mrf.mxu0
      %v1655 = vadd.f32 0.0, %v1654
      %v1656 = vpop.f32.mrf.mxu0
      %v1657 = vpop.f32.mrf.mxu0
      %v1658 = vpop.f32.mrf.mxu0
      %1659 = vdwg.mxu0
      %vm1660 = vcmp.eq.f32.partialorder %v731, 0.0
      %v1661 = vsel %vm1660, 1, 0
      %v1662 = vlaneseq
      %v1663 = vshrl.u32 %v1662, 7
      %v1664 = vsub.s32 0, %v1663
      %v1665 = vrot.slane %v1661, %v1664
      %vm1666 = vcmp.eq.s32.totalorder %v1665, 1
      %v1667 = vsel %vm1666, -1e+09, %v1655
      %v1668 = vsel %vm957, %v1667, -inf
      %1669 = vmax.xlane.f32.xlu0 %v1668
      %v1670 = vpop.xlane.xlu0 %1669
      %v1671 = vsub.f32 %v1667, %v1670
      %v1672 = vmul.f32 %v1671, 1.442695
      %v1673 = vpow.pop %v1672
      %v1674 = vsel %vm957, %v1673, 0.0
      %1675 = vadd.xlane.f32.xlu0 %v1674
      %v1676 = vpop.xlane.xlu0 %1675
      %v1677 = vrcp.pop %v1676
      %v1678 = vmul.f32 %v1673, %v1677
      %v1679 = vpack.c.bf16 %v1678, %v1678
      %v1680 = vpack.c.bf16 %v1607, %v1607
      %v1682 = vsel %vm957, %v1679, 0
      %v1685 = vsel %vm974, %v1680, 0
      %1687 = vmatprep.subr.bf16.mxu0 0
      %1688 = vmatpush1.bf16.msra.mxu0 0
      %1689 = vmatprep.subr.bf16.mxu0 0
      %1690 = vmatpush1.bf16.msra.mxu0 0
      %1691 = vmatprep.subr.bf16.mxu0 0
      %1692 = vmatpush1.bf16.msra.mxu0 0
      %1693 = vmatprep.subr.bf16.mxu0 0
      %1694 = vmatpush1.bf16.msra.mxu0 0
      %1695 = vmatprep.subr.bf16.mxu0 0
      %1696 = vmatpush1.bf16.msra.mxu0 0
      %1697 = vmatprep.subr.bf16.mxu0 0
      %1698 = vmatpush1.bf16.msra.mxu0 0
      %1699 = vmatprep.subr.bf16.mxu0 0
      %1700 = vmatpush1.bf16.msra.mxu0 0
      %1701 = vmatprep.subr.bf16.mxu0 0
      %1702 = vmatpush1.bf16.msra.mxu0 %v1685
      %1703 = vmatprep.subr.bf16.mxu0 0
      %1704 = vmatpush2.bf16.msra.mxu0 0
      %1705 = vmatprep.subr.bf16.mxu0 0
      %1706 = vmatpush2.bf16.msra.mxu0 0
      %1707 = vmatprep.subr.bf16.mxu0 0
      %1708 = vmatpush2.bf16.msra.mxu0 0
      %1709 = vmatprep.subr.bf16.mxu0 0
      %1710 = vmatpush2.bf16.msra.mxu0 0
      %1711 = vmatprep.subr.bf16.mxu0 0
      %1712 = vmatpush2.bf16.msra.mxu0 0
      %1713 = vmatprep.subr.bf16.mxu0 0
      %1714 = vmatpush2.bf16.msra.mxu0 0
      %1715 = vmatprep.subr.bf16.mxu0 0
      %1716 = vmatpush2.bf16.msra.mxu0 0
      %1717 = vmatprep.subr.bf16.mxu0 0
      %1718 = vmatpush2.bf16.msra.mxu0 0
      %1719 = vmatprep.mubr.bf16.mxu0 0
      %1720 = vmatmul.mubr.bf16.gmra.mxu0 %v1682
      %v1721 = vpop.f32.mrf.mxu0
      %v1722 = vadd.f32 0.0, %v1721
      %v1723 = vpop.f32.mrf.mxu0
      %v1724 = vpop.f32.mrf.mxu0
      %v1725 = vpop.f32.mrf.mxu0
      %1726 = vdwg.mxu0
      %v1727 = vpack.c.bf16 %v1722, %v1722
      %v1728 = vld [vmem:[%s13] sm:$0xf]
      %v1729 = vld [vmem:[%s13 + $0x4] sm:$0xf]
      %v1732 = vunpack.c.l.b16 %v1728
      %v1733 = vunpack.c.l.b16 %v1729
      %v1734 = vpack.c.b16 %v1733, %v1732
      %v1737 = vsel %vm908, %v1727, 0
      %1739 = vmatprep.subr.bf16.mxu0 0
      %1740 = vmatpush1.bf16.msra.mxu0 0
      %1741 = vmatprep.subr.bf16.mxu0 0
      %1742 = vmatpush1.bf16.msra.mxu0 0
      %1743 = vmatprep.subr.bf16.mxu0 0
      %1744 = vmatpush1.bf16.msra.mxu0 0
      %1745 = vmatprep.subr.bf16.mxu0 0
      %1746 = vmatpush1.bf16.msra.mxu0 0
      %1747 = vmatprep.subr.bf16.mxu0 0
      %1748 = vmatpush1.bf16.msra.mxu0 0
      %1749 = vmatprep.subr.bf16.mxu0 0
      %1750 = vmatpush1.bf16.msra.mxu0 0
      %1751 = vmatprep.subr.bf16.mxu0 0
      %1752 = vmatpush1.bf16.msra.mxu0 0
      %1753 = vmatprep.subr.bf16.mxu0 0
      %1754 = vmatpush1.bf16.msra.mxu0 %v1734
      %1755 = vmatprep.subr.bf16.mxu0 0
      %1756 = vmatpush2.bf16.msra.mxu0 0
      %1757 = vmatprep.subr.bf16.mxu0 0
      %1758 = vmatpush2.bf16.msra.mxu0 0
      %1759 = vmatprep.subr.bf16.mxu0 0
      %1760 = vmatpush2.bf16.msra.mxu0 0
      %1761 = vmatprep.subr.bf16.mxu0 0
      %1762 = vmatpush2.bf16.msra.mxu0 0
      %1763 = vmatprep.subr.bf16.mxu0 0
      %1764 = vmatpush2.bf16.msra.mxu0 0
      %1765 = vmatprep.subr.bf16.mxu0 0
      %1766 = vmatpush2.bf16.msra.mxu0 0
      %1767 = vmatprep.subr.bf16.mxu0 0
      %1768 = vmatpush2.bf16.msra.mxu0 0
      %1769 = vmatprep.subr.bf16.mxu0 0
      %1770 = vmatpush2.bf16.msra.mxu0 0
      %1771 = vmatprep.mubr.bf16.mxu0 0
      %1772 = vmatmul.mubr.bf16.gmra.mxu0 %v1737
      %v1773 = vpop.f32.mrf.mxu0
      %v1774 = vadd.f32 0.0, %v1773
      %v1775 = vpop.f32.mrf.mxu0
      %v1776 = vpop.f32.mrf.mxu0
      %v1777 = vpop.f32.mrf.mxu0
      %1778 = vdwg.mxu0
      %v1779 = vadd.f32 %v1434, %v1774
      %s1780 = scalar_lea.vmem %s10, 16
      %v1781 = vld [vmem:[%s1780] sm:$0xf]
      %v1782 = vld [vmem:[%s1780 + $0x4] sm:$0xf]
      %v1783 = vld [vmem:[%s1780 + $0x8] sm:$0xf]
      %v1784 = vld [vmem:[%s1780 + $0xc] sm:$0xf]
      %v1789 = vunpack.c.l.b16 %v1781
      %v1790 = vunpack.c.l.b16 %v1782
      %v1791 = vunpack.c.l.b16 %v1783
      %v1792 = vunpack.c.l.b16 %v1784
      %v1793 = vpack.c.b16 %v1790, %v1789
      %v1794 = vpack.c.b16 %v1792, %v1791
      %1797 = vmatprep.subr.bf16.mxu0 0
      %1798 = vmatpush1.bf16.msra.mxu0 0
      %1799 = vmatprep.subr.bf16.mxu0 0
      %1800 = vmatpush1.bf16.msra.mxu0 0
      %1801 = vmatprep.subr.bf16.mxu0 0
      %1802 = vmatpush1.bf16.msra.mxu0 0
      %1803 = vmatprep.subr.bf16.mxu0 0
      %1804 = vmatpush1.bf16.msra.mxu0 0
      %1805 = vmatprep.subr.bf16.mxu0 0
      %1806 = vmatpush1.bf16.msra.mxu0 0
      %1807 = vmatprep.subr.bf16.mxu0 0
      %1808 = vmatpush1.bf16.msra.mxu0 0
      %1809 = vmatprep.subr.bf16.mxu0 0
      %1810 = vmatpush1.bf16.msra.mxu0 %v1794
      %1811 = vmatprep.subr.bf16.mxu0 0
      %1812 = vmatpush1.bf16.msra.mxu0 %v1793
      %1813 = vmatprep.subr.bf16.mxu0 0
      %1814 = vmatpush2.bf16.msra.mxu0 0
      %1815 = vmatprep.subr.bf16.mxu0 0
      %1816 = vmatpush2.bf16.msra.mxu0 0
      %1817 = vmatprep.subr.bf16.mxu0 0
      %1818 = vmatpush2.bf16.msra.mxu0 0
      %1819 = vmatprep.subr.bf16.mxu0 0
      %1820 = vmatpush2.bf16.msra.mxu0 0
      %1821 = vmatprep.subr.bf16.mxu0 0
      %1822 = vmatpush2.bf16.msra.mxu0 0
      %1823 = vmatprep.subr.bf16.mxu0 0
      %1824 = vmatpush2.bf16.msra.mxu0 0
      %1825 = vmatprep.subr.bf16.mxu0 0
      %1826 = vmatpush2.bf16.msra.mxu0 0
      %1827 = vmatprep.subr.bf16.mxu0 0
      %1828 = vmatpush2.bf16.msra.mxu0 0
      %1829 = vmatprep.mubr.bf16.mxu0 0
      %1830 = vmatmul.mubr.bf16.gmra.mxu0 %v1454
      %v1831 = vpop.f32.mrf.mxu0
      %v1832 = vadd.f32 0.0, %v1831
      %v1833 = vpop.f32.mrf.mxu0
      %v1834 = vpop.f32.mrf.mxu0
      %v1835 = vpop.f32.mrf.mxu0
      %1836 = vdwg.mxu0
      %v1837 = vmul.f32 %v1832, 0.25
      %s1838 = scalar_lea.vmem %s11, 16
      %v1839 = vld [vmem:[%s1838] sm:$0xf]
      %v1840 = vld [vmem:[%s1838 + $0x4] sm:$0xf]
      %v1841 = vld [vmem:[%s1838 + $0x8] sm:$0xf]
      %v1842 = vld [vmem:[%s1838 + $0xc] sm:$0xf]
      %v1847 = vunpack.c.l.b16 %v1839
      %v1848 = vunpack.c.l.b16 %v1840
      %v1849 = vunpack.c.l.b16 %v1841
      %v1850 = vunpack.c.l.b16 %v1842
      %v1851 = vpack.c.b16 %v1848, %v1847
      %v1852 = vpack.c.b16 %v1850, %v1849
      %1855 = vmatprep.subr.bf16.mxu0 0
      %1856 = vmatpush1.bf16.msra.mxu0 0
      %1857 = vmatprep.subr.bf16.mxu0 0
      %1858 = vmatpush1.bf16.msra.mxu0 0
      %1859 = vmatprep.subr.bf16.mxu0 0
      %1860 = vmatpush1.bf16.msra.mxu0 0
      %1861 = vmatprep.subr.bf16.mxu0 0
      %1862 = vmatpush1.bf16.msra.mxu0 0
      %1863 = vmatprep.subr.bf16.mxu0 0
      %1864 = vmatpush1.bf16.msra.mxu0 0
      %1865 = vmatprep.subr.bf16.mxu0 0
      %1866 = vmatpush1.bf16.msra.mxu0 0
      %1867 = vmatprep.subr.bf16.mxu0 0
      %1868 = vmatpush1.bf16.msra.mxu0 %v1852
      %1869 = vmatprep.subr.bf16.mxu0 0
      %1870 = vmatpush1.bf16.msra.mxu0 %v1851
      %1871 = vmatprep.subr.bf16.mxu0 0
      %1872 = vmatpush2.bf16.msra.mxu0 0
      %1873 = vmatprep.subr.bf16.mxu0 0
      %1874 = vmatpush2.bf16.msra.mxu0 0
      %1875 = vmatprep.subr.bf16.mxu0 0
      %1876 = vmatpush2.bf16.msra.mxu0 0
      %1877 = vmatprep.subr.bf16.mxu0 0
      %1878 = vmatpush2.bf16.msra.mxu0 0
      %1879 = vmatprep.subr.bf16.mxu0 0
      %1880 = vmatpush2.bf16.msra.mxu0 0
      %1881 = vmatprep.subr.bf16.mxu0 0
      %1882 = vmatpush2.bf16.msra.mxu0 0
      %1883 = vmatprep.subr.bf16.mxu0 0
      %1884 = vmatpush2.bf16.msra.mxu0 0
      %1885 = vmatprep.subr.bf16.mxu0 0
      %1886 = vmatpush2.bf16.msra.mxu0 0
      %1887 = vmatprep.mubr.bf16.mxu0 0
      %1888 = vmatmul.mubr.bf16.gmra.mxu0 %v1514
      %v1889 = vpop.f32.mrf.mxu0
      %v1890 = vadd.f32 0.0, %v1889
      %v1891 = vpop.f32.mrf.mxu0
      %v1892 = vpop.f32.mrf.mxu0
      %v1893 = vpop.f32.mrf.mxu0
      %1894 = vdwg.mxu0
      %s1895 = scalar_lea.vmem %s12, 16
      %v1896 = vld [vmem:[%s1895] sm:$0xf]
      %v1897 = vld [vmem:[%s1895 + $0x4] sm:$0xf]
      %v1898 = vld [vmem:[%s1895 + $0x8] sm:$0xf]
      %v1899 = vld [vmem:[%s1895 + $0xc] sm:$0xf]
      %v1904 = vunpack.c.l.b16 %v1896
      %v1905 = vunpack.c.l.b16 %v1897
      %v1906 = vunpack.c.l.b16 %v1898
      %v1907 = vunpack.c.l.b16 %v1899
      %v1908 = vpack.c.b16 %v1905, %v1904
      %v1909 = vpack.c.b16 %v1907, %v1906
      %1912 = vmatprep.subr.bf16.mxu0 0
      %1913 = vmatpush1.bf16.msra.mxu0 0
      %1914 = vmatprep.subr.bf16.mxu0 0
      %1915 = vmatpush1.bf16.msra.mxu0 0
      %1916 = vmatprep.subr.bf16.mxu0 0
      %1917 = vmatpush1.bf16.msra.mxu0 0
      %1918 = vmatprep.subr.bf16.mxu0 0
      %1919 = vmatpush1.bf16.msra.mxu0 0
      %1920 = vmatprep.subr.bf16.mxu0 0
      %1921 = vmatpush1.bf16.msra.mxu0 0
      %1922 = vmatprep.subr.bf16.mxu0 0
      %1923 = vmatpush1.bf16.msra.mxu0 0
      %1924 = vmatprep.subr.bf16.mxu0 0
      %1925 = vmatpush1.bf16.msra.mxu0 %v1909
      %1926 = vmatprep.subr.bf16.mxu0 0
      %1927 = vmatpush1.bf16.msra.mxu0 %v1908
      %1928 = vmatprep.subr.bf16.mxu0 0
      %1929 = vmatpush2.bf16.msra.mxu0 0
      %1930 = vmatprep.subr.bf16.mxu0 0
      %1931 = vmatpush2.bf16.msra.mxu0 0
      %1932 = vmatprep.subr.bf16.mxu0 0
      %1933 = vmatpush2.bf16.msra.mxu0 0
      %1934 = vmatprep.subr.bf16.mxu0 0
      %1935 = vmatpush2.bf16.msra.mxu0 0
      %1936 = vmatprep.subr.bf16.mxu0 0
      %1937 = vmatpush2.bf16.msra.mxu0 0
      %1938 = vmatprep.subr.bf16.mxu0 0
      %1939 = vmatpush2.bf16.msra.mxu0 0
      %1940 = vmatprep.subr.bf16.mxu0 0
      %1941 = vmatpush2.bf16.msra.mxu0 0
      %1942 = vmatprep.subr.bf16.mxu0 0
      %1943 = vmatpush2.bf16.msra.mxu0 0
      %1944 = vmatprep.mubr.bf16.mxu0 0
      %1945 = vmatmul.mubr.bf16.gmra.mxu0 %v1514
      %v1946 = vpop.f32.mrf.mxu0
      %v1947 = vadd.f32 0.0, %v1946
      %v1948 = vpop.f32.mrf.mxu0
      %v1949 = vpop.f32.mrf.mxu0
      %v1950 = vpop.f32.mrf.mxu0
      %1951 = vdwg.mxu0
      %v1952 = vpack.c.bf16 %v1837, %v1837
      %v1953 = vpack.c.bf16 %v1890, %v1890
      %v1955 = vsel %vm908, %v1952, 0
      %v1958 = vsel %vm908, %v1953, 0
      %1960 = vmatprep.subr.bf16.mxu0 0
      %1961 = vmatpush1.bf16.xpose.msra.mxu0 0
      %1962 = vmatprep.subr.bf16.mxu0 0
      %1963 = vmatpush1.bf16.xpose.msra.mxu0 0
      %1964 = vmatprep.subr.bf16.mxu0 0
      %1965 = vmatpush1.bf16.xpose.msra.mxu0 0
      %1966 = vmatprep.subr.bf16.mxu0 0
      %1967 = vmatpush1.bf16.xpose.msra.mxu0 0
      %1968 = vmatprep.subr.bf16.mxu0 0
      %1969 = vmatpush1.bf16.xpose.msra.mxu0 0
      %1970 = vmatprep.subr.bf16.mxu0 0
      %1971 = vmatpush1.bf16.xpose.msra.mxu0 0
      %1972 = vmatprep.subr.bf16.mxu0 0
      %1973 = vmatpush1.bf16.xpose.msra.mxu0 0
      %1974 = vmatprep.subr.bf16.mxu0 0
      %1975 = vmatpush1.bf16.xpose.msra.mxu0 %v1958
      %1976 = vmatprep.subr.bf16.mxu0 0
      %1977 = vmatpush2.bf16.xpose.msra.mxu0 0
      %1978 = vmatprep.subr.bf16.mxu0 0
      %1979 = vmatpush2.bf16.xpose.msra.mxu0 0
      %1980 = vmatprep.subr.bf16.mxu0 0
      %1981 = vmatpush2.bf16.xpose.msra.mxu0 0
      %1982 = vmatprep.subr.bf16.mxu0 0
      %1983 = vmatpush2.bf16.xpose.msra.mxu0 0
      %1984 = vmatprep.subr.bf16.mxu0 0
      %1985 = vmatpush2.bf16.xpose.msra.mxu0 0
      %1986 = vmatprep.subr.bf16.mxu0 0
      %1987 = vmatpush2.bf16.xpose.msra.mxu0 0
      %1988 = vmatprep.subr.bf16.mxu0 0
      %1989 = vmatpush2.bf16.xpose.msra.mxu0 0
      %1990 = vmatprep.subr.bf16.mxu0 0
      %1991 = vmatpush2.bf16.xpose.msra.mxu0 0
      %1992 = vmatprep.mubr.bf16.mxu0 0
      %1993 = vmatmul.mubr.bf16.gmra.mxu0 %v1955
      %v1994 = vpop.f32.mrf.mxu0
      %v1995 = vadd.f32 0.0, %v1994
      %v1996 = vpop.f32.mrf.mxu0
      %v1997 = vpop.f32.mrf.mxu0
      %v1998 = vpop.f32.mrf.mxu0
      %1999 = vdwg.mxu0
      %v2000 = vsel %vm1666, -1e+09, %v1995
      %v2001 = vsel %vm957, %v2000, -inf
      %2002 = vmax.xlane.f32.xlu0 %v2001
      %v2003 = vpop.xlane.xlu0 %2002
      %v2004 = vsub.f32 %v2000, %v2003
      %v2005 = vmul.f32 %v2004, 1.442695
      %v2006 = vpow.pop %v2005
      %v2007 = vsel %vm957, %v2006, 0.0
      %2008 = vadd.xlane.f32.xlu0 %v2007
      %v2009 = vpop.xlane.xlu0 %2008
      %v2010 = vrcp.pop %v2009
      %v2011 = vmul.f32 %v2006, %v2010
      %v2012 = vpack.c.bf16 %v2011, %v2011
      %v2013 = vpack.c.bf16 %v1947, %v1947
      %v2015 = vsel %vm957, %v2012, 0
      %v2018 = vsel %vm974, %v2013, 0
      %2020 = vmatprep.subr.bf16.mxu0 0
      %2021 = vmatpush1.bf16.msra.mxu0 0
      %2022 = vmatprep.subr.bf16.mxu0 0
      %2023 = vmatpush1.bf16.msra.mxu0 0
      %2024 = vmatprep.subr.bf16.mxu0 0
      %2025 = vmatpush1.bf16.msra.mxu0 0
      %2026 = vmatprep.subr.bf16.mxu0 0
      %2027 = vmatpush1.bf16.msra.mxu0 0
      %2028 = vmatprep.subr.bf16.mxu0 0
      %2029 = vmatpush1.bf16.msra.mxu0 0
      %2030 = vmatprep.subr.bf16.mxu0 0
      %2031 = vmatpush1.bf16.msra.mxu0 0
      %2032 = vmatprep.subr.bf16.mxu0 0
      %2033 = vmatpush1.bf16.msra.mxu0 0
      %2034 = vmatprep.subr.bf16.mxu0 0
      %2035 = vmatpush1.bf16.msra.mxu0 %v2018
      %2036 = vmatprep.subr.bf16.mxu0 0
      %2037 = vmatpush2.bf16.msra.mxu0 0
      %2038 = vmatprep.subr.bf16.mxu0 0
      %2039 = vmatpush2.bf16.msra.mxu0 0
      %2040 = vmatprep.subr.bf16.mxu0 0
      %2041 = vmatpush2.bf16.msra.mxu0 0
      %2042 = vmatprep.subr.bf16.mxu0 0
      %2043 = vmatpush2.bf16.msra.mxu0 0
      %2044 = vmatprep.subr.bf16.mxu0 0
      %2045 = vmatpush2.bf16.msra.mxu0 0
      %2046 = vmatprep.subr.bf16.mxu0 0
      %2047 = vmatpush2.bf16.msra.mxu0 0
      %2048 = vmatprep.subr.bf16.mxu0 0
      %2049 = vmatpush2.bf16.msra.mxu0 0
      %2050 = vmatprep.subr.bf16.mxu0 0
      %2051 = vmatpush2.bf16.msra.mxu0 0
      %2052 = vmatprep.mubr.bf16.mxu0 0
      %2053 = vmatmul.mubr.bf16.gmra.mxu0 %v2015
      %v2054 = vpop.f32.mrf.mxu0
      %v2055 = vadd.f32 0.0, %v2054
      %v2056 = vpop.f32.mrf.mxu0
      %v2057 = vpop.f32.mrf.mxu0
      %v2058 = vpop.f32.mrf.mxu0
      %2059 = vdwg.mxu0
      %v2060 = vpack.c.bf16 %v2055, %v2055
      %s2061 = scalar_lea.vmem %s13, 8
      %v2062 = vld [vmem:[%s2061] sm:$0xf]
      %v2063 = vld [vmem:[%s2061 + $0x4] sm:$0xf]
      %v2066 = vunpack.c.l.b16 %v2062
      %v2067 = vunpack.c.l.b16 %v2063
      %v2068 = vpack.c.b16 %v2067, %v2066
      %v2071 = vsel %vm908, %v2060, 0
      %2073 = vmatprep.subr.bf16.mxu0 0
      %2074 = vmatpush1.bf16.msra.mxu0 0
      %2075 = vmatprep.subr.bf16.mxu0 0
      %2076 = vmatpush1.bf16.msra.mxu0 0
      %2077 = vmatprep.subr.bf16.mxu0 0
      %2078 = vmatpush1.bf16.msra.mxu0 0
      %2079 = vmatprep.subr.bf16.mxu0 0
      %2080 = vmatpush1.bf16.msra.mxu0 0
      %2081 = vmatprep.subr.bf16.mxu0 0
      %2082 = vmatpush1.bf16.msra.mxu0 0
      %2083 = vmatprep.subr.bf16.mxu0 0
      %2084 = vmatpush1.bf16.msra.mxu0 0
      %2085 = vmatprep.subr.bf16.mxu0 0
      %2086 = vmatpush1.bf16.msra.mxu0 0
      %2087 = vmatprep.subr.bf16.mxu0 0
      %2088 = vmatpush1.bf16.msra.mxu0 %v2068
      %2089 = vmatprep.subr.bf16.mxu0 0
      %2090 = vmatpush2.bf16.msra.mxu0 0
      %2091 = vmatprep.subr.bf16.mxu0 0
      %2092 = vmatpush2.bf16.msra.mxu0 0
      %2093 = vmatprep.subr.bf16.mxu0 0
      %2094 = vmatpush2.bf16.msra.mxu0 0
      %2095 = vmatprep.subr.bf16.mxu0 0
      %2096 = vmatpush2.bf16.msra.mxu0 0
      %2097 = vmatprep.subr.bf16.mxu0 0
      %2098 = vmatpush2.bf16.msra.mxu0 0
      %2099 = vmatprep.subr.bf16.mxu0 0
      %2100 = vmatpush2.bf16.msra.mxu0 0
      %2101 = vmatprep.subr.bf16.mxu0 0
      %2102 = vmatpush2.bf16.msra.mxu0 0
      %2103 = vmatprep.subr.bf16.mxu0 0
      %2104 = vmatpush2.bf16.msra.mxu0 0
      %2105 = vmatprep.mubr.bf16.mxu0 0
      %2106 = vmatmul.mubr.bf16.gmra.mxu0 %v2071
      %v2107 = vpop.f32.mrf.mxu0
      %v2108 = vadd.f32 0.0, %v2107
      %v2109 = vpop.f32.mrf.mxu0
      %v2110 = vpop.f32.mrf.mxu0
      %v2111 = vpop.f32.mrf.mxu0
      %2112 = vdwg.mxu0
      %v2113 = vadd.f32 %v1779, %v2108
      %v2114 = vsel %vm749, %v2113, 0.0
      %2115 = vadd.xlane.f32.xlu0 %v2114
      %v2116 = vpop.xlane.xlu0 %2115
      %v2117 = vmul.f32 %v2116, %v1408
      %v2118 = vsub.f32 %v2113, %v2117
      %v2119 = vmul.f32 %v2118, %v2118
      %v2120 = vsel %vm749, %v2119, 0.0
      %2121 = vadd.xlane.f32.xlu0 %v2120
      %v2122 = vpop.xlane.xlu0 %2121
      %v2123 = vmul.f32 %v2122, %v1408
      %v2124 = vadd.f32 %v2123, 1e-06
      %v2125 = vrsqrt.pop %v2124
      %v2126 = vmul.f32 %v2118, %v2125
      %v2127 = vld [vmem:[%s14] sm:$0x1]
      %v2129 = vlaneseq
      %v2130 = vshrl.u32 %v2129, 7
      %v2131 = vsub.s32 0, %v2130
      %v2132 = vrot.slane %v2127, %v2131
      %v2134 = vmul.f32 %v2126, %v2132
      %v2135 = vld [vmem:[%s15] sm:$0x1]
      %v2137 = vlaneseq
      %v2138 = vshrl.u32 %v2137, 7
      %v2139 = vsub.s32 0, %v2138
      %v2140 = vrot.slane %v2135, %v2139
      %v2142 = vadd.f32 %v2134, %v2140
      %v2143 = vpack.c.bf16 %v2142, %v2142
      %v2144 = vld [vmem:[%s16] sm:$0xf]
      %v2145 = vld [vmem:[%s16 + $0x4] sm:$0xf]
      %v2146 = vld [vmem:[%s16 + $0x8] sm:$0xf]
      %v2147 = vld [vmem:[%s16 + $0xc] sm:$0xf]
      %v2148 = vld [vmem:[%s17] sm:$0x1]
      %v2150 = vlaneseq
      %v2151 = vshrl.u32 %v2150, 7
      %v2152 = vsub.s32 0, %v2151
      %v2153 = vrot.slane %v2148, %v2152
      %v2159 = vunpack.c.l.b16 %v2144
      %v2160 = vunpack.c.l.b16 %v2145
      %v2161 = vunpack.c.l.b16 %v2146
      %v2162 = vunpack.c.l.b16 %v2147
      %v2163 = vpack.c.b16 %v2160, %v2159
      %v2164 = vpack.c.b16 %v2162, %v2161
      %v2168 = vsel %vm749, %v2143, 0
      %2170 = vmatprep.subr.bf16.mxu0 0
      %2171 = vmatpush1.bf16.msra.mxu0 0
      %2172 = vmatprep.subr.bf16.mxu0 0
      %2173 = vmatpush1.bf16.msra.mxu0 0
      %2174 = vmatprep.subr.bf16.mxu0 0
      %2175 = vmatpush1.bf16.msra.mxu0 0
      %2176 = vmatprep.subr.bf16.mxu0 0
      %2177 = vmatpush1.bf16.msra.mxu0 0
      %2178 = vmatprep.subr.bf16.mxu0 0
      %2179 = vmatpush1.bf16.msra.mxu0 0
      %2180 = vmatprep.subr.bf16.mxu0 0
      %2181 = vmatpush1.bf16.msra.mxu0 0
      %2182 = vmatprep.subr.bf16.mxu0 0
      %2183 = vmatpush1.bf16.msra.mxu0 %v2164
      %2184 = vmatprep.subr.bf16.mxu0 0
      %2185 = vmatpush1.bf16.msra.mxu0 %v2163
      %2186 = vmatprep.subr.bf16.mxu0 0
      %2187 = vmatpush2.bf16.msra.mxu0 0
      %2188 = vmatprep.subr.bf16.mxu0 0
      %2189 = vmatpush2.bf16.msra.mxu0 0
      %2190 = vmatprep.subr.bf16.mxu0 0
      %2191 = vmatpush2.bf16.msra.mxu0 0
      %2192 = vmatprep.subr.bf16.mxu0 0
      %2193 = vmatpush2.bf16.msra.mxu0 0
      %2194 = vmatprep.subr.bf16.mxu0 0
      %2195 = vmatpush2.bf16.msra.mxu0 0
      %2196 = vmatprep.subr.bf16.mxu0 0
      %2197 = vmatpush2.bf16.msra.mxu0 0
      %2198 = vmatprep.subr.bf16.mxu0 0
      %2199 = vmatpush2.bf16.msra.mxu0 0
      %2200 = vmatprep.subr.bf16.mxu0 0
      %2201 = vmatpush2.bf16.msra.mxu0 0
      %2202 = vmatprep.mubr.bf16.mxu0 0
      %2203 = vmatmul.mubr.bf16.gmra.mxu0 %v2168
      %v2204 = vpop.f32.mrf.mxu0
      %v2205 = vadd.f32 %v2153, %v2204
      %v2206 = vpop.f32.mrf.mxu0
      %v2207 = vpop.f32.mrf.mxu0
      %v2208 = vpop.f32.mrf.mxu0
      %2209 = vdwg.mxu0
      %v2210 = vmax.f32 %v2205, 0.0
      %v2211 = vpack.c.bf16 %v2210, %v2210
      %v2212 = vld [vmem:[%s18] sm:$0xf]
      %v2213 = vld [vmem:[%s18 + $0x4] sm:$0xf]
      %v2214 = vld [vmem:[%s18 + $0x8] sm:$0xf]
      %v2215 = vld [vmem:[%s18 + $0xc] sm:$0xf]
      %v2216 = vld [vmem:[%s18 + $0x10] sm:$0xf]
      %v2217 = vld [vmem:[%s18 + $0x14] sm:$0xf]
      %v2218 = vld [vmem:[%s18 + $0x18] sm:$0xf]
      %v2219 = vld [vmem:[%s18 + $0x1c] sm:$0xf]
      %v2220 = vld [vmem:[%s19] sm:$0x1]
      %v2222 = vlaneseq
      %v2223 = vshrl.u32 %v2222, 7
      %v2224 = vsub.s32 0, %v2223
      %v2225 = vrot.slane %v2220, %v2224
      %v2235 = vunpack.c.l.b16 %v2212
      %v2236 = vunpack.c.l.b16 %v2213
      %v2237 = vunpack.c.l.b16 %v2214
      %v2238 = vunpack.c.l.b16 %v2215
      %v2239 = vunpack.c.l.b16 %v2216
      %v2240 = vunpack.c.l.b16 %v2217
      %v2241 = vunpack.c.l.b16 %v2218
      %v2242 = vunpack.c.l.b16 %v2219
      %v2243 = vpack.c.b16 %v2236, %v2235
      %v2244 = vpack.c.b16 %v2238, %v2237
      %v2245 = vpack.c.b16 %v2240, %v2239
      %v2246 = vpack.c.b16 %v2242, %v2241
      %vm2251 = vcmask 523264
      %v2253 = vsel %vm2251, %v2211, 0
      %2255 = vmatprep.subr.bf16.mxu0 0
      %2256 = vmatpush1.bf16.msra.mxu0 0
      %2257 = vmatprep.subr.bf16.mxu0 0
      %2258 = vmatpush1.bf16.msra.mxu0 0
      %2259 = vmatprep.subr.bf16.mxu0 0
      %2260 = vmatpush1.bf16.msra.mxu0 0
      %2261 = vmatprep.subr.bf16.mxu0 0
      %2262 = vmatpush1.bf16.msra.mxu0 0
      %2263 = vmatprep.subr.bf16.mxu0 0
      %2264 = vmatpush1.bf16.msra.mxu0 %v2246
      %2265 = vmatprep.subr.bf16.mxu0 0
      %2266 = vmatpush1.bf16.msra.mxu0 %v2245
      %2267 = vmatprep.subr.bf16.mxu0 0
      %2268 = vmatpush1.bf16.msra.mxu0 %v2244
      %2269 = vmatprep.subr.bf16.mxu0 0
      %2270 = vmatpush1.bf16.msra.mxu0 %v2243
      %2271 = vmatprep.subr.bf16.mxu0 0
      %2272 = vmatpush2.bf16.msra.mxu0 0
      %2273 = vmatprep.subr.bf16.mxu0 0
      %2274 = vmatpush2.bf16.msra.mxu0 0
      %2275 = vmatprep.subr.bf16.mxu0 0
      %2276 = vmatpush2.bf16.msra.mxu0 0
      %2277 = vmatprep.subr.bf16.mxu0 0
      %2278 = vmatpush2.bf16.msra.mxu0 0
      %2279 = vmatprep.subr.bf16.mxu0 0
      %2280 = vmatpush2.bf16.msra.mxu0 0
      %2281 = vmatprep.subr.bf16.mxu0 0
      %2282 = vmatpush2.bf16.msra.mxu0 0
      %2283 = vmatprep.subr.bf16.mxu0 0
      %2284 = vmatpush2.bf16.msra.mxu0 0
      %2285 = vmatprep.subr.bf16.mxu0 0
      %2286 = vmatpush2.bf16.msra.mxu0 0
      %2287 = vmatprep.mubr.bf16.mxu0 0
      %2288 = vmatmul.mubr.bf16.gmra.mxu0 %v2253
      %v2289 = vpop.f32.mrf.mxu0
      %v2290 = vadd.f32 %v2225, %v2289
      %v2291 = vpop.f32.mrf.mxu0
      %v2292 = vpop.f32.mrf.mxu0
      %v2293 = vpop.f32.mrf.mxu0
      %2294 = vdwg.mxu0
      %v2295 = vadd.f32 %v2290, %v2142
      %v2296 = vsel %vm749, %v2295, 0.0
      %2297 = vadd.xlane.f32.xlu0 %v2296
      %v2298 = vpop.xlane.xlu0 %2297
      %v2299 = vmul.f32 %v2298, %v1408
      %v2300 = vsub.f32 %v2295, %v2299
      %v2301 = vmul.f32 %v2300, %v2300
      %v2302 = vsel %vm749, %v2301, 0.0
      %2303 = vadd.xlane.f32.xlu0 %v2302
      %v2304 = vpop.xlane.xlu0 %2303
      %v2305 = vmul.f32 %v2304, %v1408
      %v2306 = vadd.f32 %v2305, 1e-06
      %v2307 = vrsqrt.pop %v2306
      %v2308 = vmul.f32 %v2300, %v2307
      %v2309 = vld [vmem:[%s20] sm:$0x1]
      %v2311 = vlaneseq
      %v2312 = vshrl.u32 %v2311, 7
      %v2313 = vsub.s32 0, %v2312
      %v2314 = vrot.slane %v2309, %v2313
      %v2316 = vmul.f32 %v2308, %v2314
      %v2317 = vld [vmem:[%s21] sm:$0x1]
      %v2319 = vlaneseq
      %v2320 = vshrl.u32 %v2319, 7
      %v2321 = vsub.s32 0, %v2320
      %v2322 = vrot.slane %v2317, %v2321
      %v2324 = vadd.f32 %v2316, %v2322
      %2325 = vst.msk [vmem:[%s726] sm:$0xff] %vm749, %v2324
      %p2326 = scmp.lt.s32.totalorder %s33, 1
      %s2327 = scalar_select %p2326, %s33, 1
      %s2328 = smul.addr %s2327, 8
      %s2329 = scalar_lea.vmem %s22, %s2328
      // Predicated region
      $region109: #{_lambda_.4} parent=107 // pred_check
        %p2330 = pneg %p533
      $region110: #{_lambda_.4} parent=107 // pred_check_branch
        %2332 = sbr.rel (%p2330) target = $region112
      $region111: #{_lambda_.4} parent=107 // pred_region
        _
      $region112: #{_lambda_.4} parent=107 // pred_fallthru
        _
    $region108: #{_lambda_.4} parent=5 // pred_fallthru
      _
    %p2333 = scmp.le.s32.totalorder 2, %s28
    // Predicated region
    $region113: #{_lambda_.4} parent=5 // pred_check
      %p2334 = pneg %p2333
    $region114: #{_lambda_.4} parent=5 // pred_check_branch
      %2336 = sbr.rel (%p2334) target = $region116
    $region115: #{_lambda_.4} parent=5 // pred_region
      %s2337 = ssub.s32 %s28, 2
      // Predicated region
      $region117: #{_lambda_.4} parent=115 // pred_check
        %p2338 = pneg %p539
      $region118: #{_lambda_.4} parent=115 // pred_check_branch
        %2340 = sbr.rel (%p2338) target = $region120
      $region119: #{_lambda_.4} parent=115 // pred_region
        %p2341 = scmp.lt.s32.totalorder %s34, 1
        %s2342 = scalar_select %p2341, %s34, 1
        %s2343 = smul.addr %s2342, 8
        %s2344 = scalar_lea.vmem %s22, %s2343
      $region120: #{_lambda_.4} parent=115 // pred_fallthru
        _
    $region116: #{_lambda_.4} parent=5 // pred_fallthru
      _
  $region6: #{_lambda_.4} parent=0 // loop_footer
    %s32 = sadd.s32 1, %s28
  $region7: #{_lambda_.4} parent=0 // loop_footer_branch
    %27 = sbr.rel target = $region3
  $region8: #{_lambda_.4} parent=0 // loop_exit
    _

</llo_original>
